<compile_context>
chip_gen: v5e
topology: v5e:2x2
jax: 0.10.0
libtpu: 0.0.40
codegen_flags: <defaults>
</compile_context>

<pallas_src>
import jax
import jax.numpy as jnp
import numpy as np
from jax.experimental import pallas as pl
from jax.experimental.pallas import tpu as pltpu  # noqa: F401  (TPU backend)

# ----------------------------- config (small) --------------------------------
BATCH = 2
SEQ = 8
BERT_DIM = 32          # args.bert_feature_dim
GCN_DIM = 32           # args.gcn_dim
CLASS_NUM = 10         # args.class_num
NUM_HEADS = 2
EDGE_DIM = 2 * CLASS_NUM
NUM_LAYERS = 1
VOCAB = 50
POST_SIZE = 20
DEPREL_SIZE = 30
POSTAG_SIZE = 25
MAX_SEQ_LEN = 16


# ----------------------------- Pallas kernels --------------------------------
def _lstm_kernel(x_ref, wih_f_ref, whh_f_ref, b_f_ref,
                 wih_b_ref, whh_b_ref, b_b_ref,
                 hf_ref, hb_ref):
    """Bidirectional single-layer LSTM (hidden == input dim), fully in VMEM.

    x_ref: (S, B, D) time-major input.  Outputs hf/hb: (S, B, D)."""
    Hd = BERT_DIM

    def run(time_order, wih, whh, bias, out_ref):
        h = jnp.zeros((BATCH, Hd), jnp.float32)
        c = jnp.zeros((BATCH, Hd), jnp.float32)
        for t in time_order:                       # static unroll (S steps)
            xt = x_ref[t]                          # (B, D)
            gates = (jnp.dot(xt, wih, preferred_element_type=jnp.float32)
                     + jnp.dot(h, whh, preferred_element_type=jnp.float32)
                     + bias)                       # (B, 4H), gate order i,f,g,o
            i_g = jax.nn.sigmoid(gates[:, 0:Hd])
            f_g = jax.nn.sigmoid(gates[:, Hd:2 * Hd])
            g_g = jnp.tanh(gates[:, 2 * Hd:3 * Hd])
            o_g = jax.nn.sigmoid(gates[:, 3 * Hd:4 * Hd])
            c = f_g * c + i_g * g_g
            h = o_g * jnp.tanh(c)
            out_ref[t] = h

    run(range(SEQ), wih_f_ref[...], whh_f_ref[...], b_f_ref[...], hf_ref)
    run(range(SEQ - 1, -1, -1), wih_b_ref[...], whh_b_ref[...], b_b_ref[...], hb_ref)


def _main_kernel(
    # activations / per-call data
    x_ref,        # (M, 2D)   LSTM features, row order (b, t)
    embpm_ref,    # (P, C)    (sum of 4 pair-embeddings) * perturbed_matrix
    tm_ref,       # (P, 1)    tensor_masks
    loop_ref,     # (P, 1)    self-loop column (eye * mask)
    # constant selection / segment matrices
    selx_ref,     # (P, M)    broadcast token value along FIRST pair axis
    sely_ref,     # (P, M)    broadcast token value along SECOND pair axis
    seldiag_ref,  # (M, P)    extract pair-grid diagonal back to token space
    lx_ref,       # (S, S*S)  (64-col, within-batch) -> (S,S) matrix, row pick
    ry_ref,       # (S*S, S)  (64-col, within-batch) -> (S,S) matrix, col pick
    place_ref,    # (B, M, S) place per-batch (S, .) block into token rows
    seg_ref,      # (G, H)    per-head segmented lane sum
    # weights
    projw_ref,    # (2D, 98)  [ap_fc | 0 | op_fc | 0 | dense]
    projb_ref,    # (1, 98)   [ap_b | 1 | op_b | 1 | dense_b]
    wq2_ref,      # (G+1, C*(G+1)) permuted biaffine weight
    repb_ref,     # (G+1, C*(G+1)) block-repeat matrix
    rseg_ref,     # (C*(G+1), C)   segment-sum matrix
    linw_ref,     # (G, G)
    linb_ref,     # (1, G)
    fc1_ref,      # (1, G)
    fc2_ref,      # (1, G)
    emlp1_ref,    # (2, C, 128)  edge-MLP first layer split by wps half
    emlpb1_ref,   # (1, 128)
    emlp2_ref,    # (128, H)
    emlpb2_ref,   # (1, H)
    ww_ref,       # (H, hd, G)   GAT W split by input head block
    wb_ref,       # (1, G)
    lna_ref,      # (1, G)
    lnb_ref,      # (1, G)
    hwe_ref,      # (2, C, C)    RefiningStrategy W rows for edge   (halves)
    hwi_ref,      # (2, C, C)    ... for edge_i (diagonal, varies with y)
    hwj_ref,      # (2, C, C)    ... for edge_j (diagonal, varies with x)
    hwn1_ref,     # (G, C)       ... for node1 (varies with y)
    hwn2_ref,     # (G, C)       ... for node2 (varies with x)
    hwb_ref,      # (1, C)
    # outputs
    edge_out_ref,   # (P, C)
    bia_out_ref,    # (P, C)
    final_out_ref,  # (P, C)
):
    f32 = jnp.float32
    B, S, C, G, H = BATCH, SEQ, CLASS_NUM, GCN_DIM, NUM_HEADS
    hd = G // H
    M = B * S
    SS = S * S

    def mm(a, b):
        return jnp.dot(a, b, preferred_element_type=f32)

    def softmax_last(v):
        mx = jnp.max(v, axis=-1, keepdims=True)
        e = jnp.exp(v - mx)
        return e / jnp.sum(e, axis=-1, keepdims=True)

    selx = selx_ref[...]
    sely = sely_ref[...]

    # ---- fused ap/op/dense projections (ReLU epilogue); the extra "ones"
    #      columns give the biaffine bias augmentation without any concat -----
    proj = jnp.maximum(mm(x_ref[...], projw_ref[...]) + projb_ref[...], 0.0)   # (M, 98)
    in1_aug = proj[:, 0:G + 1]                     # [relu(ap_fc) | 1]
    in2_aug = proj[:, G + 1:2 * (G + 1)]           # [relu(op_fc) | 1]
    gcn_in = proj[:, 2 * (G + 1):2 * (G + 1) + G]  # relu(dense)  -> GAT input

    # ---- biaffine edge scores, computed directly in flattened pair space ----
    pair1 = mm(sely, in1_aug)                 # (P, G+1) ap side (2nd pair axis)
    pair2 = mm(selx, in2_aug)                 # (P, G+1) op side (1st pair axis)
    q2 = mm(pair2, wq2_ref[...])              # (P, C*(G+1))
    p1rep = mm(pair1, repb_ref[...])          # (P, C*(G+1))
    biaffine = mm(p1rep * q2, rseg_ref[...])  # (P, C)

    edge_emb = embpm_ref[...] + biaffine      # 'multiply' fusion embeddings
    edge_out_ref[...] = edge_emb
    bia_out_ref[...] = biaffine

    # ---- masked softmaxes + self loop ----------------------------------------
    tm = tm_ref[...]
    loop_col = loop_ref[...]
    wps_a = loop_col + softmax_last(edge_emb) * tm     # channels 0..C-1 of wps
    wps_b = loop_col + softmax_last(biaffine) * tm     # channels C..2C-1 of wps
    row_sum = (jnp.sum(wps_a, axis=-1, keepdims=True)
               + jnp.sum(wps_b, axis=-1, keepdims=True))
    maskf = jnp.where(row_sum == 0.0, 1.0, 0.0)        # (P, 1)

    # ---- GAT: edge MLP + per-head attention logits (all in pair space) -------
    hidden = jnp.maximum(
        mm(wps_a, emlp1_ref[0]) + mm(wps_b, emlp1_ref[1]) + emlpb1_ref[...], 0.0)
    a_pair = mm(hidden, emlp2_ref[...]) + emlpb2_ref[...]        # (P, H)

    feat = mm(gcn_in, linw_ref[...]) + linb_ref[...]             # (M, G)
    src_tok = mm(feat * fc1_ref[...], seg_ref[...])              # (M, H)
    dst_tok = mm(feat * fc2_ref[...], seg_ref[...])              # (M, H)
    logits = mm(selx, src_tok) + mm(sely, dst_tok) + a_pair      # (P, H)
    logits = jnp.where(logits >= 0.0, logits, 0.01 * logits)     # leaky_relu

    lx = lx_ref[...]
    ry = ry_ref[...]

    # ---- attention softmax + aggregation + W projection (token space) --------
    wout = jnp.zeros((M, G), f32) + wb_ref[...]
    for b in range(B):
        r0 = b * SS
        m_mat = mm(lx, maskf[r0:r0 + SS, :] * ry)                # (S, S) 0/1
        for h in range(H):
            z_mat = mm(lx, logits[r0:r0 + SS, h:h + 1] * ry)     # (S, S)
            z_mat = jnp.where(m_mat > 0.5, -1e30, z_mat)
            attn = softmax_last(z_mat)
            feat_bh = feat[b * S:(b + 1) * S, h * hd:(h + 1) * hd]   # (S, hd)
            gcn_bh = mm(attn, feat_bh)                               # (S, hd)
            wout = wout + mm(place_ref[b], mm(gcn_bh, ww_ref[h]))    # (M, G)

    # layernorm (torch.std semantics: unbiased var, eps added to std) + ReLU
    mean = jnp.mean(wout, axis=-1, keepdims=True)
    var = jnp.sum((wout - mean) ** 2, axis=-1, keepdims=True) / float(G - 1)
    std = jnp.sqrt(var)
    node = jnp.maximum(
        lna_ref[...] * (wout - mean) / (std + 1e-6) + lnb_ref[...], 0.0)   # (M, G)

    # ---- RefiningStrategy -----------------------------------------------------
    seldiag = seldiag_ref[...]
    diag_a = mm(seldiag, edge_emb)            # (M, C)  diag of weight_prob[:C]
    diag_b = mm(seldiag, biaffine)            # (M, C)  diag of weight_prob[C:]
    t_y = mm(diag_a, hwi_ref[0]) + mm(diag_b, hwi_ref[1]) + mm(node, hwn1_ref[...])
    t_x = mm(diag_a, hwj_ref[0]) + mm(diag_b, hwj_ref[1]) + mm(node, hwn2_ref[...])
    final_out_ref[...] = (mm(edge_emb, hwe_ref[0]) + mm(biaffine, hwe_ref[1])
                          + mm(sely, t_y) + mm(selx, t_x) + hwb_ref[...])


# ----------------------------- static constants ------------------------------
def build_constants():
    B, S, C, G, H = BATCH, SEQ, CLASS_NUM, GCN_DIM, NUM_HEADS
    hd = G // H
    M, P = B * S, B * S * S

    r = np.arange(P)
    rb, rx, ry_ = r // (S * S), (r // S) % S, r % S
    m = np.arange(M)
    mb, mt = m // S, m % S

    selx = ((rb[:, None] == mb[None, :]) & (rx[:, None] == mt[None, :])).astype(np.float32)
    sely = ((rb[:, None] == mb[None, :]) & (ry_[:, None] == mt[None, :])).astype(np.float32)
    seldiag = ((mb[:, None] == rb[None, :]) & (mt[:, None] == rx[None, :])
               & (mt[:, None] == ry_[None, :])).astype(np.float32)

    r64 = np.arange(S * S)
    lx = (np.arange(S)[:, None] == (r64[None, :] // S)).astype(np.float32)   # (S, S*S)
    ry = ((r64[:, None] % S) == np.arange(S)[None, :]).astype(np.float32)    # (S*S, S)

    place = np.zeros((B, M, S), np.float32)
    for b in range(B):
        place[b, b * S:(b + 1) * S, :] = np.eye(S, dtype=np.float32)

    seg = (np.arange(G)[:, None] // hd == np.arange(H)[None, :]).astype(np.float32)

    d1 = G + 1
    repb = np.zeros((d1, C * d1), np.float32)
    rseg = np.zeros((C * d1, C), np.float32)
    for c in range(C):
        repb[np.arange(d1), c * d1 + np.arange(d1)] = 1.0
        rseg[c * d1:(c + 1) * d1, c] = 1.0

    arrs = dict(selx=selx, sely=sely, seldiag=seldiag, lx=lx, ry=ry,
                place=place, seg=seg, repb=repb, rseg=rseg)
    return {k: jnp.asarray(v) for k, v in arrs.items()}


# ----------------------------- parameter init / packing ----------------------
def init_params(key):
    C, D, G, H = CLASS_NUM, BERT_DIM, GCN_DIM, NUM_HEADS
    hd = G // H
    E = 2 * C
    keys = iter(jax.random.split(key, 64))

    def nrm(shape, scale=0.05):
        return scale * jax.random.normal(next(keys), shape, jnp.float32)

    def emb_table(n):
        e = nrm((n, C), 0.5)
        return e.at[0].set(0.0)   # padding_idx=0

    p = {}
    p["bert_emb"] = nrm((VOCAB, D), 0.5)
    p["lstm"] = {
        "fwd": (nrm((4 * D, D)), nrm((4 * D, D)), nrm((4 * D,)), nrm((4 * D,))),
        "bwd": (nrm((4 * D, D)), nrm((4 * D, D)), nrm((4 * D,)), nrm((4 * D,))),
    }
    p["post_emb"] = emb_table(POST_SIZE)
    p["deprel_emb"] = emb_table(DEPREL_SIZE)
    p["postag_emb"] = emb_table(POSTAG_SIZE)
    p["synpost_emb"] = emb_table(MAX_SEQ_LEN)
    p["biaffine_w"] = nrm((G + 1, C * (G + 1)))          # stored (in, out)
    p["ap_fc_w"], p["ap_fc_b"] = nrm((2 * D, G)), nrm((G,))
    p["op_fc_w"], p["op_fc_b"] = nrm((2 * D, G)), nrm((G,))
    p["dense_w"], p["dense_b"] = nrm((2 * D, G)), nrm((G,))

    gat = {}
    gat["linear_w"], gat["linear_b"] = nrm((G, G)), nrm((G,))
    gat["fc_w1"] = nrm((1, 1, H, hd))
    gat["fc_w2"] = nrm((1, 1, H, hd))
    gat["edge_mlp_w1"], gat["edge_mlp_b1"] = nrm((E, 128)), nrm((128,))
    gat["edge_mlp_w2"], gat["edge_mlp_b2"] = nrm((128, H)), nrm((H,))
    gat["W_w"], gat["W_b"] = nrm((G, G)), nrm((G,))
    gat["ln_a"], gat["ln_b"] = jnp.ones((G,), jnp.float32), jnp.zeros((G,), jnp.float32)
    gat["hw_w"], gat["hw_b"] = nrm((2 * G + 3 * E, C)), nrm((C,))
    p["gat0"] = gat
    return p


def pack_params(p):
    """One-time re-layout of the weights into kernel-ready f32 arrays."""
    C, D, G, H = CLASS_NUM, BERT_DIM, GCN_DIM, NUM_HEADS
    hd = G // H
    E = 2 * C
    f32 = jnp.float32
    k = {}
    for n in ("bert_emb", "post_emb", "deprel_emb", "postag_emb", "synpost_emb"):
        k[n] = p[n].astype(f32)

    def pack_lstm(w_ih, w_hh, b_ih, b_hh, tag):
        k["lstm_wih_" + tag] = w_ih.T.astype(f32)
        k["lstm_whh_" + tag] = w_hh.T.astype(f32)
        k["lstm_b_" + tag] = (b_ih + b_hh).reshape(1, -1).astype(f32)

    pack_lstm(*p["lstm"]["fwd"], "f")
    pack_lstm(*p["lstm"]["bwd"], "b")

    zcol = jnp.zeros((2 * D, 1), f32)
    one = jnp.ones((1,), f32)
    k["proj_w"] = jnp.concatenate(
        [p["ap_fc_w"], zcol, p["op_fc_w"], zcol, p["dense_w"]], axis=1).astype(f32)
    k["proj_b"] = jnp.concatenate(
        [p["ap_fc_b"], one, p["op_fc_b"], one, p["dense_b"]]).reshape(1, -1).astype(f32)

    W = p["biaffine_w"].astype(f32)                     # (G+1, C*(G+1)): [d, c*(G+1)+e]
    k["wq2"] = jnp.transpose(
        W.reshape(G + 1, C, G + 1), (2, 1, 0)).reshape(G + 1, C * (G + 1))

    g = p["gat0"]
    k["lin_w"] = g["linear_w"].astype(f32)
    k["lin_b"] = g["linear_b"].reshape(1, -1).astype(f32)
    k["fc1"] = g["fc_w1"].reshape(1, G).astype(f32)
    k["fc2"] = g["fc_w2"].reshape(1, G).astype(f32)
    k["emlp1"] = jnp.stack([g["edge_mlp_w1"][:C, :], g["edge_mlp_w1"][C:, :]], 0).astype(f32)
    k["emlp_b1"] = g["edge_mlp_b1"].reshape(1, -1).astype(f32)
    k["emlp2"] = g["edge_mlp_w2"].astype(f32)
    k["emlp_b2"] = g["edge_mlp_b2"].reshape(1, -1).astype(f32)
    k["ww"] = jnp.stack([g["W_w"][:hd, :], g["W_w"][hd:, :]], 0).astype(f32)
    k["wb"] = g["W_b"].reshape(1, -1).astype(f32)
    k["ln_a"] = g["ln_a"].reshape(1, -1).astype(f32)
    k["ln_b"] = g["ln_b"].reshape(1, -1).astype(f32)

    hw = g["hw_w"].astype(f32)   # rows: [edge(2C), edge_i(2C), edge_j(2C), node1(G), node2(G)]
    k["hw_e"] = jnp.stack([hw[0:C, :], hw[C:E, :]], 0)
    k["hw_i"] = jnp.stack([hw[E:E + C, :], hw[E + C:2 * E, :]], 0)
    k["hw_j"] = jnp.stack([hw[2 * E:2 * E + C, :], hw[2 * E + C:3 * E, :]], 0)
    k["hw_n1"] = hw[3 * E:3 * E + G, :]
    k["hw_n2"] = hw[3 * E + G:3 * E + 2 * G, :]
    k["hw_b"] = g["hw_b"].reshape(1, -1).astype(f32)
    return k


# ----------------------------- forward ----------------------------------------
@jax.jit
def emcgcn_forward(kp, consts, tokens, masks, word_pair_position, word_pair_deprel,
                   word_pair_pos, word_pair_synpost, perturbed_matrix):
    B, S = masks.shape
    C = CLASS_NUM
    M = B * S
    P = B * S * S
    f32 = jnp.float32

    # "BERT" feature extractor stand-in (deterministic embedding lookup).
    bert_feature = kp["bert_emb"][tokens]                     # (B, S, D)
    x_time_major = jnp.transpose(bert_feature, (1, 0, 2))     # (S, B, D)

    hf, hb = pl.pallas_call(
        _lstm_kernel,
        out_shape=(jax.ShapeDtypeStruct((S, B, BERT_DIM), f32),
                   jax.ShapeDtypeStruct((S, B, BERT_DIM), f32)),
    )(x_time_major,
      kp["lstm_wih_f"], kp["lstm_whh_f"], kp["lstm_b_f"],
      kp["lstm_wih_b"], kp["lstm_whh_b"], kp["lstm_b_b"])
    lstm_out = jnp.concatenate([hf, hb], axis=-1)             # (S, B, 2D)
    x2 = jnp.transpose(lstm_out, (1, 0, 2)).reshape(M, 2 * BERT_DIM)

    # pair-feature embedding gathers ('multiply' fusion), flattened to (P, C)
    pm = perturbed_matrix[..., None]
    emb_pm = (kp["post_emb"][word_pair_position] * pm
              + kp["deprel_emb"][word_pair_deprel] * pm
              + kp["postag_emb"][word_pair_pos] * pm
              + kp["synpost_emb"][word_pair_synpost] * pm).reshape(P, C)

    maskf = masks.astype(f32)
    tm = jnp.broadcast_to(maskf[:, None, :], (B, S, S)).reshape(P, 1)
    eye = jnp.eye(S, dtype=f32)
    loop_col = (eye[None, :, :] * maskf[:, None, :]).reshape(P, 1)

    edge_flat, bia_flat, final_flat = pl.pallas_call(
        _main_kernel,
        out_shape=(jax.ShapeDtypeStruct((P, C), f32),) * 3,
    )(x2, emb_pm, tm, loop_col,
      consts["selx"], consts["sely"], consts["seldiag"],
      consts["lx"], consts["ry"], consts["place"], consts["seg"],
      kp["proj_w"], kp["proj_b"], kp["wq2"], consts["repb"], consts["rseg"],
      kp["lin_w"], kp["lin_b"], kp["fc1"], kp["fc2"],
      kp["emlp1"], kp["emlp_b1"], kp["emlp2"], kp["emlp_b2"],
      kp["ww"], kp["wb"], kp["ln_a"], kp["ln_b"],
      kp["hw_e"], kp["hw_i"], kp["hw_j"], kp["hw_n1"], kp["hw_n2"], kp["hw_b"])

    edge_emb = edge_flat.reshape(B, S, S, C)
    biaffine_edge = bia_flat.reshape(B, S, S, C)
    weight_prob = final_flat.reshape(B, S, S, C)
    # weight_prob_list = [edge_emb, biaffine_edge, layer-0 refined edges]
    return [edge_emb, biaffine_edge, weight_prob]


# ----------------------------- main -------------------------------------------
if __name__ == "__main__":
    key = jax.random.PRNGKey(0)
    kp_, k1, k2, k3, k4, k5, k6 = jax.random.split(key, 7)

    params = init_params(kp_)
    kernel_params = pack_params(params)
    consts = build_constants()

    tokens = jax.random.randint(k1, (BATCH, SEQ), 0, VOCAB, dtype=jnp.int32)
    masks = jnp.ones((BATCH, SEQ), dtype=jnp.int32)
    word_pair_position = jax.random.randint(k2, (BATCH, SEQ, SEQ), 0, POST_SIZE, dtype=jnp.int32)
    word_pair_deprel = jax.random.randint(k3, (BATCH, SEQ, SEQ), 0, DEPREL_SIZE, dtype=jnp.int32)
    word_pair_pos = jax.random.randint(k4, (BATCH, SEQ, SEQ), 0, POSTAG_SIZE, dtype=jnp.int32)
    word_pair_synpost = jax.random.randint(k5, (BATCH, SEQ, SEQ), 0, MAX_SEQ_LEN, dtype=jnp.int32)
    perturbed_matrix = jax.random.uniform(k6, (BATCH, SEQ, SEQ), jnp.float32)

    outs = emcgcn_forward(kernel_params, consts, tokens, masks, word_pair_position,
                          word_pair_deprel, word_pair_pos, word_pair_synpost,
                          perturbed_matrix)
    for o in outs:
        jax.block_until_ready(o)

    expected = [(BATCH, SEQ, SEQ, CLASS_NUM),
                (BATCH, SEQ, SEQ, CLASS_NUM),
                (BATCH, SEQ, SEQ, CLASS_NUM)]
    assert [tuple(o.shape) for o in outs] == expected, [o.shape for o in outs]
    assert all(bool(jnp.all(jnp.isfinite(o))) for o in outs)
    print("KERNEL_OK")
</pallas_src>

<mosaic_0001>
module attributes {stable_mosaic.version = 11 : i64} {
  func.func @_lstm_kernel(%arg0: memref<8x2x32xf32, #tpu.memory_space<vmem>>, %arg1: memref<32x128xf32, #tpu.memory_space<vmem>>, %arg2: memref<32x128xf32, #tpu.memory_space<vmem>>, %arg3: memref<1x128xf32, #tpu.memory_space<vmem>>, %arg4: memref<32x128xf32, #tpu.memory_space<vmem>>, %arg5: memref<32x128xf32, #tpu.memory_space<vmem>>, %arg6: memref<1x128xf32, #tpu.memory_space<vmem>>, %arg7: memref<8x2x32xf32, #tpu.memory_space<vmem>>, %arg8: memref<8x2x32xf32, #tpu.memory_space<vmem>>) attributes {dimension_semantics = [], scalar_prefetch = 0 : i64, scratch_operands = 0 : i64, tpu.core_type = #tpu.core_type<tc>} {
    %c0 = arith.constant 0 : index
    %c0_0 = arith.constant 0 : index
    %0 = vector.load %arg1[%c0, %c0_0] : memref<32x128xf32, #tpu.memory_space<vmem>>, vector<32x128xf32>
    %c0_1 = arith.constant 0 : index
    %c0_2 = arith.constant 0 : index
    %1 = vector.load %arg2[%c0_1, %c0_2] : memref<32x128xf32, #tpu.memory_space<vmem>>, vector<32x128xf32>
    %c0_3 = arith.constant 0 : index
    %c0_4 = arith.constant 0 : index
    %2 = vector.load %arg3[%c0_3, %c0_4] : memref<1x128xf32, #tpu.memory_space<vmem>>, vector<1x128xf32>
    %cst = arith.constant 0.000000e+00 : f32
    %3 = vector.broadcast %cst : f32 to vector<2x32xf32>
    %cst_5 = arith.constant 0.000000e+00 : f32
    %4 = vector.broadcast %cst_5 : f32 to vector<2x32xf32>
    %c0_6 = arith.constant 0 : index
    %c0_7 = arith.constant 0 : index
    %c0_8 = arith.constant 0 : index
    %5 = vector.load %arg0[%c0_6, %c0_7, %c0_8] : memref<8x2x32xf32, #tpu.memory_space<vmem>>, vector<1x2x32xf32>
    %6 = vector.shape_cast %5 : vector<1x2x32xf32> to vector<2x32xf32>
    %cst_9 = arith.constant dense<0.000000e+00> : vector<2x128xf32>
    %7 = tpu.matmul %6, %0, %cst_9 {dimension_numbers = #tpu.dot_dimension_numbers<[1], [0], [0], [1], [0, 0, 1, 1], [], []>} : vector<2x32xf32>, vector<32x128xf32>, vector<2x128xf32> -> vector<2x128xf32>
    %cst_10 = arith.constant dense<0.000000e+00> : vector<2x128xf32>
    %8 = tpu.matmul %3, %1, %cst_10 {dimension_numbers = #tpu.dot_dimension_numbers<[1], [0], [0], [1], [0, 0, 1, 1], [], []>} : vector<2x32xf32>, vector<32x128xf32>, vector<2x128xf32> -> vector<2x128xf32>
    %9 = arith.addf %7, %8 : vector<2x128xf32>
    %10 = vector.broadcast %2 : vector<1x128xf32> to vector<2x128xf32>
    %11 = arith.addf %9, %10 : vector<2x128xf32>
    %12 = vector.extract_strided_slice %11 {offsets = [0, 0], sizes = [2, 32], strides = [1, 1]} : vector<2x128xf32> to vector<2x32xf32>
    %13 = arith.negf %12 : vector<2x32xf32>
    %14 = math.exp %13 : vector<2x32xf32>
    %cst_11 = arith.constant 1.000000e+00 : f32
    %15 = vector.broadcast %cst_11 : f32 to vector<2x32xf32>
    %16 = arith.addf %15, %14 : vector<2x32xf32>
    %17 = arith.divf %15, %16 : vector<2x32xf32>
    %18 = vector.extract_strided_slice %11 {offsets = [0, 32], sizes = [2, 32], strides = [1, 1]} : vector<2x128xf32> to vector<2x32xf32>
    %19 = arith.negf %18 : vector<2x32xf32>
    %20 = math.exp %19 : vector<2x32xf32>
    %cst_12 = arith.constant 1.000000e+00 : f32
    %21 = vector.broadcast %cst_12 : f32 to vector<2x32xf32>
    %22 = arith.addf %21, %20 : vector<2x32xf32>
    %23 = arith.divf %21, %22 : vector<2x32xf32>
    %24 = vector.extract_strided_slice %11 {offsets = [0, 64], sizes = [2, 32], strides = [1, 1]} : vector<2x128xf32> to vector<2x32xf32>
    %25 = math.tanh %24 : vector<2x32xf32>
    %26 = vector.extract_strided_slice %11 {offsets = [0, 96], sizes = [2, 32], strides = [1, 1]} : vector<2x128xf32> to vector<2x32xf32>
    %27 = arith.negf %26 : vector<2x32xf32>
    %28 = math.exp %27 : vector<2x32xf32>
    %cst_13 = arith.constant 1.000000e+00 : f32
    %29 = vector.broadcast %cst_13 : f32 to vector<2x32xf32>
    %30 = arith.addf %29, %28 : vector<2x32xf32>
    %31 = arith.divf %29, %30 : vector<2x32xf32>
    %32 = arith.mulf %23, %4 : vector<2x32xf32>
    %33 = arith.mulf %17, %25 : vector<2x32xf32>
    %34 = arith.addf %32, %33 : vector<2x32xf32>
    %35 = math.tanh %34 : vector<2x32xf32>
    %36 = arith.mulf %31, %35 : vector<2x32xf32>
    %c0_14 = arith.constant 0 : index
    %c0_15 = arith.constant 0 : index
    %c0_16 = arith.constant 0 : index
    %37 = vector.load %arg7[%c0_14, %c0_15, %c0_16] : memref<8x2x32xf32, #tpu.memory_space<vmem>>, vector<1x2x32xf32>
    %38 = vector.shape_cast %37 : vector<1x2x32xf32> to vector<2x32xf32>
    %39 = vector.shape_cast %36 : vector<2x32xf32> to vector<1x2x32xf32>
    tpu.vector_store %arg7[%c0_14, %c0_15, %c0_16], %39 {strides = array<i32>} : memref<8x2x32xf32, #tpu.memory_space<vmem>>, vector<1x2x32xf32>,
    %c1 = arith.constant 1 : index
    %c0_17 = arith.constant 0 : index
    %c0_18 = arith.constant 0 : index
    %40 = vector.load %arg0[%c1, %c0_17, %c0_18] : memref<8x2x32xf32, #tpu.memory_space<vmem>>, vector<1x2x32xf32>
    %41 = vector.shape_cast %40 : vector<1x2x32xf32> to vector<2x32xf32>
    %cst_19 = arith.constant dense<0.000000e+00> : vector<2x128xf32>
    %42 = tpu.matmul %41, %0, %cst_19 {dimension_numbers = #tpu.dot_dimension_numbers<[1], [0], [0], [1], [0, 0, 1, 1], [], []>} : vector<2x32xf32>, vector<32x128xf32>, vector<2x128xf32> -> vector<2x128xf32>
    %cst_20 = arith.constant dense<0.000000e+00> : vector<2x128xf32>
    %43 = tpu.matmul %36, %1, %cst_20 {dimension_numbers = #tpu.dot_dimension_numbers<[1], [0], [0], [1], [0, 0, 1, 1], [], []>} : vector<2x32xf32>, vector<32x128xf32>, vector<2x128xf32> -> vector<2x128xf32>
    %44 = arith.addf %42, %43 : vector<2x128xf32>
    %45 = vector.broadcast %2 : vector<1x128xf32> to vector<2x128xf32>
    %46 = arith.addf %44, %45 : vector<2x128xf32>
    %47 = vector.extract_strided_slice %46 {offsets = [0, 0], sizes = [2, 32], strides = [1, 1]} : vector<2x128xf32> to vector<2x32xf32>
    %48 = arith.negf %47 : vector<2x32xf32>
    %49 = math.exp %48 : vector<2x32xf32>
    %cst_21 = arith.constant 1.000000e+00 : f32
    %50 = vector.broadcast %cst_21 : f32 to vector<2x32xf32>
    %51 = arith.addf %50, %49 : vector<2x32xf32>
    %52 = arith.divf %50, %51 : vector<2x32xf32>
    %53 = vector.extract_strided_slice %46 {offsets = [0, 32], sizes = [2, 32], strides = [1, 1]} : vector<2x128xf32> to vector<2x32xf32>
    %54 = arith.negf %53 : vector<2x32xf32>
    %55 = math.exp %54 : vector<2x32xf32>
    %cst_22 = arith.constant 1.000000e+00 : f32
    %56 = vector.broadcast %cst_22 : f32 to vector<2x32xf32>
    %57 = arith.addf %56, %55 : vector<2x32xf32>
    %58 = arith.divf %56, %57 : vector<2x32xf32>
    %59 = vector.extract_strided_slice %46 {offsets = [0, 64], sizes = [2, 32], strides = [1, 1]} : vector<2x128xf32> to vector<2x32xf32>
    %60 = math.tanh %59 : vector<2x32xf32>
    %61 = vector.extract_strided_slice %46 {offsets = [0, 96], sizes = [2, 32], strides = [1, 1]} : vector<2x128xf32> to vector<2x32xf32>
    %62 = arith.negf %61 : vector<2x32xf32>
    %63 = math.exp %62 : vector<2x32xf32>
    %cst_23 = arith.constant 1.000000e+00 : f32
    %64 = vector.broadcast %cst_23 : f32 to vector<2x32xf32>
    %65 = arith.addf %64, %63 : vector<2x32xf32>
    %66 = arith.divf %64, %65 : vector<2x32xf32>
    %67 = arith.mulf %58, %34 : vector<2x32xf32>
    %68 = arith.mulf %52, %60 : vector<2x32xf32>
    %69 = arith.addf %67, %68 : vector<2x32xf32>
    %70 = math.tanh %69 : vector<2x32xf32>
    %71 = arith.mulf %66, %70 : vector<2x32xf32>
    %c1_24 = arith.constant 1 : index
    %c0_25 = arith.constant 0 : index
    %c0_26 = arith.constant 0 : index
    %72 = vector.load %arg7[%c1_24, %c0_25, %c0_26] : memref<8x2x32xf32, #tpu.memory_space<vmem>>, vector<1x2x32xf32>
    %73 = vector.shape_cast %72 : vector<1x2x32xf32> to vector<2x32xf32>
    %74 = vector.shape_cast %71 : vector<2x32xf32> to vector<1x2x32xf32>
    tpu.vector_store %arg7[%c1_24, %c0_25, %c0_26], %74 {strides = array<i32>} : memref<8x2x32xf32, #tpu.memory_space<vmem>>, vector<1x2x32xf32>,
    %c2 = arith.constant 2 : index
    %c0_27 = arith.constant 0 : index
    %c0_28 = arith.constant 0 : index
    %75 = vector.load %arg0[%c2, %c0_27, %c0_28] : memref<8x2x32xf32, #tpu.memory_space<vmem>>, vector<1x2x32xf32>
    %76 = vector.shape_cast %75 : vector<1x2x32xf32> to vector<2x32xf32>
    %cst_29 = arith.constant dense<0.000000e+00> : vector<2x128xf32>
    %77 = tpu.matmul %76, %0, %cst_29 {dimension_numbers = #tpu.dot_dimension_numbers<[1], [0], [0], [1], [0, 0, 1, 1], [], []>} : vector<2x32xf32>, vector<32x128xf32>, vector<2x128xf32> -> vector<2x128xf32>
    %cst_30 = arith.constant dense<0.000000e+00> : vector<2x128xf32>
    %78 = tpu.matmul %71, %1, %cst_30 {dimension_numbers = #tpu.dot_dimension_numbers<[1], [0], [0], [1], [0, 0, 1, 1], [], []>} : vector<2x32xf32>, vector<32x128xf32>, vector<2x128xf32> -> vector<2x128xf32>
    %79 = arith.addf %77, %78 : vector<2x128xf32>
    %80 = vector.broadcast %2 : vector<1x128xf32> to vector<2x128xf32>
    %81 = arith.addf %79, %80 : vector<2x128xf32>
    %82 = vector.extract_strided_slice %81 {offsets = [0, 0], sizes = [2, 32], strides = [1, 1]} : vector<2x128xf32> to vector<2x32xf32>
    %83 = arith.negf %82 : vector<2x32xf32>
    %84 = math.exp %83 : vector<2x32xf32>
    %cst_31 = arith.constant 1.000000e+00 : f32
    %85 = vector.broadcast %cst_31 : f32 to vector<2x32xf32>
    %86 = arith.addf %85, %84 : vector<2x32xf32>
    %87 = arith.divf %85, %86 : vector<2x32xf32>
    %88 = vector.extract_strided_slice %81 {offsets = [0, 32], sizes = [2, 32], strides = [1, 1]} : vector<2x128xf32> to vector<2x32xf32>
    %89 = arith.negf %88 : vector<2x32xf32>
    %90 = math.exp %89 : vector<2x32xf32>
    %cst_32 = arith.constant 1.000000e+00 : f32
    %91 = vector.broadcast %cst_32 : f32 to vector<2x32xf32>
    %92 = arith.addf %91, %90 : vector<2x32xf32>
    %93 = arith.divf %91, %92 : vector<2x32xf32>
    %94 = vector.extract_strided_slice %81 {offsets = [0, 64], sizes = [2, 32], strides = [1, 1]} : vector<2x128xf32> to vector<2x32xf32>
    %95 = math.tanh %94 : vector<2x32xf32>
    %96 = vector.extract_strided_slice %81 {offsets = [0, 96], sizes = [2, 32], strides = [1, 1]} : vector<2x128xf32> to vector<2x32xf32>
    %97 = arith.negf %96 : vector<2x32xf32>
    %98 = math.exp %97 : vector<2x32xf32>
    %cst_33 = arith.constant 1.000000e+00 : f32
    %99 = vector.broadcast %cst_33 : f32 to vector<2x32xf32>
    %100 = arith.addf %99, %98 : vector<2x32xf32>
    %101 = arith.divf %99, %100 : vector<2x32xf32>
    %102 = arith.mulf %93, %69 : vector<2x32xf32>
    %103 = arith.mulf %87, %95 : vector<2x32xf32>
    %104 = arith.addf %102, %103 : vector<2x32xf32>
    %105 = math.tanh %104 : vector<2x32xf32>
    %106 = arith.mulf %101, %105 : vector<2x32xf32>
    %c2_34 = arith.constant 2 : index
    %c0_35 = arith.constant 0 : index
    %c0_36 = arith.constant 0 : index
    %107 = vector.load %arg7[%c2_34, %c0_35, %c0_36] : memref<8x2x32xf32, #tpu.memory_space<vmem>>, vector<1x2x32xf32>
    %108 = vector.shape_cast %107 : vector<1x2x32xf32> to vector<2x32xf32>
    %109 = vector.shape_cast %106 : vector<2x32xf32> to vector<1x2x32xf32>
    tpu.vector_store %arg7[%c2_34, %c0_35, %c0_36], %109 {strides = array<i32>} : memref<8x2x32xf32, #tpu.memory_space<vmem>>, vector<1x2x32xf32>,
    %c3 = arith.constant 3 : index
    %c0_37 = arith.constant 0 : index
    %c0_38 = arith.constant 0 : index
    %110 = vector.load %arg0[%c3, %c0_37, %c0_38] : memref<8x2x32xf32, #tpu.memory_space<vmem>>, vector<1x2x32xf32>
    %111 = vector.shape_cast %110 : vector<1x2x32xf32> to vector<2x32xf32>
    %cst_39 = arith.constant dense<0.000000e+00> : vector<2x128xf32>
    %112 = tpu.matmul %111, %0, %cst_39 {dimension_numbers = #tpu.dot_dimension_numbers<[1], [0], [0], [1], [0, 0, 1, 1], [], []>} : vector<2x32xf32>, vector<32x128xf32>, vector<2x128xf32> -> vector<2x128xf32>
    %cst_40 = arith.constant dense<0.000000e+00> : vector<2x128xf32>
    %113 = tpu.matmul %106, %1, %cst_40 {dimension_numbers = #tpu.dot_dimension_numbers<[1], [0], [0], [1], [0, 0, 1, 1], [], []>} : vector<2x32xf32>, vector<32x128xf32>, vector<2x128xf32> -> vector<2x128xf32>
    %114 = arith.addf %112, %113 : vector<2x128xf32>
    %115 = vector.broadcast %2 : vector<1x128xf32> to vector<2x128xf32>
    %116 = arith.addf %114, %115 : vector<2x128xf32>
    %117 = vector.extract_strided_slice %116 {offsets = [0, 0], sizes = [2, 32], strides = [1, 1]} : vector<2x128xf32> to vector<2x32xf32>
    %118 = arith.negf %117 : vector<2x32xf32>
    %119 = math.exp %118 : vector<2x32xf32>
    %cst_41 = arith.constant 1.000000e+00 : f32
    %120 = vector.broadcast %cst_41 : f32 to vector<2x32xf32>
    %121 = arith.addf %120, %119 : vector<2x32xf32>
    %122 = arith.divf %120, %121 : vector<2x32xf32>
    %123 = vector.extract_strided_slice %116 {offsets = [0, 32], sizes = [2, 32], strides = [1, 1]} : vector<2x128xf32> to vector<2x32xf32>
    %124 = arith.negf %123 : vector<2x32xf32>
    %125 = math.exp %124 : vector<2x32xf32>
    %cst_42 = arith.constant 1.000000e+00 : f32
    %126 = vector.broadcast %cst_42 : f32 to vector<2x32xf32>
    %127 = arith.addf %126, %125 : vector<2x32xf32>
    %128 = arith.divf %126, %127 : vector<2x32xf32>
    %129 = vector.extract_strided_slice %116 {offsets = [0, 64], sizes = [2, 32], strides = [1, 1]} : vector<2x128xf32> to vector<2x32xf32>
    %130 = math.tanh %129 : vector<2x32xf32>
    %131 = vector.extract_strided_slice %116 {offsets = [0, 96], sizes = [2, 32], strides = [1, 1]} : vector<2x128xf32> to vector<2x32xf32>
    %132 = arith.negf %131 : vector<2x32xf32>
    %133 = math.exp %132 : vector<2x32xf32>
    %cst_43 = arith.constant 1.000000e+00 : f32
    %134 = vector.broadcast %cst_43 : f32 to vector<2x32xf32>
    %135 = arith.addf %134, %133 : vector<2x32xf32>
    %136 = arith.divf %134, %135 : vector<2x32xf32>
    %137 = arith.mulf %128, %104 : vector<2x32xf32>
    %138 = arith.mulf %122, %130 : vector<2x32xf32>
    %139 = arith.addf %137, %138 : vector<2x32xf32>
    %140 = math.tanh %139 : vector<2x32xf32>
    %141 = arith.mulf %136, %140 : vector<2x32xf32>
    %c3_44 = arith.constant 3 : index
    %c0_45 = arith.constant 0 : index
    %c0_46 = arith.constant 0 : index
    %142 = vector.load %arg7[%c3_44, %c0_45, %c0_46] : memref<8x2x32xf32, #tpu.memory_space<vmem>>, vector<1x2x32xf32>
    %143 = vector.shape_cast %142 : vector<1x2x32xf32> to vector<2x32xf32>
    %144 = vector.shape_cast %141 : vector<2x32xf32> to vector<1x2x32xf32>
    tpu.vector_store %arg7[%c3_44, %c0_45, %c0_46], %144 {strides = array<i32>} : memref<8x2x32xf32, #tpu.memory_space<vmem>>, vector<1x2x32xf32>,
    %c4 = arith.constant 4 : index
    %c0_47 = arith.constant 0 : index
    %c0_48 = arith.constant 0 : index
    %145 = vector.load %arg0[%c4, %c0_47, %c0_48] : memref<8x2x32xf32, #tpu.memory_space<vmem>>, vector<1x2x32xf32>
    %146 = vector.shape_cast %145 : vector<1x2x32xf32> to vector<2x32xf32>
    %cst_49 = arith.constant dense<0.000000e+00> : vector<2x128xf32>
    %147 = tpu.matmul %146, %0, %cst_49 {dimension_numbers = #tpu.dot_dimension_numbers<[1], [0], [0], [1], [0, 0, 1, 1], [], []>} : vector<2x32xf32>, vector<32x128xf32>, vector<2x128xf32> -> vector<2x128xf32>
    %cst_50 = arith.constant dense<0.000000e+00> : vector<2x128xf32>
    %148 = tpu.matmul %141, %1, %cst_50 {dimension_numbers = #tpu.dot_dimension_numbers<[1], [0], [0], [1], [0, 0, 1, 1], [], []>} : vector<2x32xf32>, vector<32x128xf32>, vector<2x128xf32> -> vector<2x128xf32>
    %149 = arith.addf %147, %148 : vector<2x128xf32>
    %150 = vector.broadcast %2 : vector<1x128xf32> to vector<2x128xf32>
    %151 = arith.addf %149, %150 : vector<2x128xf32>
    %152 = vector.extract_strided_slice %151 {offsets = [0, 0], sizes = [2, 32], strides = [1, 1]} : vector<2x128xf32> to vector<2x32xf32>
    %153 = arith.negf %152 : vector<2x32xf32>
    %154 = math.exp %153 : vector<2x32xf32>
    %cst_51 = arith.constant 1.000000e+00 : f32
    %155 = vector.broadcast %cst_51 : f32 to vector<2x32xf32>
    %156 = arith.addf %155, %154 : vector<2x32xf32>
    %157 = arith.divf %155, %156 : vector<2x32xf32>
    %158 = vector.extract_strided_slice %151 {offsets = [0, 32], sizes = [2, 32], strides = [1, 1]} : vector<2x128xf32> to vector<2x32xf32>
    %159 = arith.negf %158 : vector<2x32xf32>
    %160 = math.exp %159 : vector<2x32xf32>
    %cst_52 = arith.constant 1.000000e+00 : f32
    %161 = vector.broadcast %cst_52 : f32 to vector<2x32xf32>
    %162 = arith.addf %161, %160 : vector<2x32xf32>
    %163 = arith.divf %161, %162 : vector<2x32xf32>
    %164 = vector.extract_strided_slice %151 {offsets = [0, 64], sizes = [2, 32], strides = [1, 1]} : vector<2x128xf32> to vector<2x32xf32>
    %165 = math.tanh %164 : vector<2x32xf32>
    %166 = vector.extract_strided_slice %151 {offsets = [0, 96], sizes = [2, 32], strides = [1, 1]} : vector<2x128xf32> to vector<2x32xf32>
    %167 = arith.negf %166 : vector<2x32xf32>
    %168 = math.exp %167 : vector<2x32xf32>
    %cst_53 = arith.constant 1.000000e+00 : f32
    %169 = vector.broadcast %cst_53 : f32 to vector<2x32xf32>
    %170 = arith.addf %169, %168 : vector<2x32xf32>
    %171 = arith.divf %169, %170 : vector<2x32xf32>
    %172 = arith.mulf %163, %139 : vector<2x32xf32>
    %173 = arith.mulf %157, %165 : vector<2x32xf32>
    %174 = arith.addf %172, %173 : vector<2x32xf32>
    %175 = math.tanh %174 : vector<2x32xf32>
    %176 = arith.mulf %171, %175 : vector<2x32xf32>
    %c4_54 = arith.constant 4 : index
    %c0_55 = arith.constant 0 : index
    %c0_56 = arith.constant 0 : index
    %177 = vector.load %arg7[%c4_54, %c0_55, %c0_56] : memref<8x2x32xf32, #tpu.memory_space<vmem>>, vector<1x2x32xf32>
    %178 = vector.shape_cast %177 : vector<1x2x32xf32> to vector<2x32xf32>
    %179 = vector.shape_cast %176 : vector<2x32xf32> to vector<1x2x32xf32>
    tpu.vector_store %arg7[%c4_54, %c0_55, %c0_56], %179 {strides = array<i32>} : memref<8x2x32xf32, #tpu.memory_space<vmem>>, vector<1x2x32xf32>,
    %c5 = arith.constant 5 : index
    %c0_57 = arith.constant 0 : index
    %c0_58 = arith.constant 0 : index
    %180 = vector.load %arg0[%c5, %c0_57, %c0_58] : memref<8x2x32xf32, #tpu.memory_space<vmem>>, vector<1x2x32xf32>
    %181 = vector.shape_cast %180 : vector<1x2x32xf32> to vector<2x32xf32>
    %cst_59 = arith.constant dense<0.000000e+00> : vector<2x128xf32>
    %182 = tpu.matmul %181, %0, %cst_59 {dimension_numbers = #tpu.dot_dimension_numbers<[1], [0], [0], [1], [0, 0, 1, 1], [], []>} : vector<2x32xf32>, vector<32x128xf32>, vector<2x128xf32> -> vector<2x128xf32>
    %cst_60 = arith.constant dense<0.000000e+00> : vector<2x128xf32>
    %183 = tpu.matmul %176, %1, %cst_60 {dimension_numbers = #tpu.dot_dimension_numbers<[1], [0], [0], [1], [0, 0, 1, 1], [], []>} : vector<2x32xf32>, vector<32x128xf32>, vector<2x128xf32> -> vector<2x128xf32>
    %184 = arith.addf %182, %183 : vector<2x128xf32>
    %185 = vector.broadcast %2 : vector<1x128xf32> to vector<2x128xf32>
    %186 = arith.addf %184, %185 : vector<2x128xf32>
    %187 = vector.extract_strided_slice %186 {offsets = [0, 0], sizes = [2, 32], strides = [1, 1]} : vector<2x128xf32> to vector<2x32xf32>
    %188 = arith.negf %187 : vector<2x32xf32>
    %189 = math.exp %188 : vector<2x32xf32>
    %cst_61 = arith.constant 1.000000e+00 : f32
    %190 = vector.broadcast %cst_61 : f32 to vector<2x32xf32>
    %191 = arith.addf %190, %189 : vector<2x32xf32>
    %192 = arith.divf %190, %191 : vector<2x32xf32>
    %193 = vector.extract_strided_slice %186 {offsets = [0, 32], sizes = [2, 32], strides = [1, 1]} : vector<2x128xf32> to vector<2x32xf32>
    %194 = arith.negf %193 : vector<2x32xf32>
    %195 = math.exp %194 : vector<2x32xf32>
    %cst_62 = arith.constant 1.000000e+00 : f32
    %196 = vector.broadcast %cst_62 : f32 to vector<2x32xf32>
    %197 = arith.addf %196, %195 : vector<2x32xf32>
    %198 = arith.divf %196, %197 : vector<2x32xf32>
    %199 = vector.extract_strided_slice %186 {offsets = [0, 64], sizes = [2, 32], strides = [1, 1]} : vector<2x128xf32> to vector<2x32xf32>
    %200 = math.tanh %199 : vector<2x32xf32>
    %201 = vector.extract_strided_slice %186 {offsets = [0, 96], sizes = [2, 32], strides = [1, 1]} : vector<2x128xf32> to vector<2x32xf32>
    %202 = arith.negf %201 : vector<2x32xf32>
    %203 = math.exp %202 : vector<2x32xf32>
    %cst_63 = arith.constant 1.000000e+00 : f32
    %204 = vector.broadcast %cst_63 : f32 to vector<2x32xf32>
    %205 = arith.addf %204, %203 : vector<2x32xf32>
    %206 = arith.divf %204, %205 : vector<2x32xf32>
    %207 = arith.mulf %198, %174 : vector<2x32xf32>
    %208 = arith.mulf %192, %200 : vector<2x32xf32>
    %209 = arith.addf %207, %208 : vector<2x32xf32>
    %210 = math.tanh %209 : vector<2x32xf32>
    %211 = arith.mulf %206, %210 : vector<2x32xf32>
    %c5_64 = arith.constant 5 : index
    %c0_65 = arith.constant 0 : index
    %c0_66 = arith.constant 0 : index
    %212 = vector.load %arg7[%c5_64, %c0_65, %c0_66] : memref<8x2x32xf32, #tpu.memory_space<vmem>>, vector<1x2x32xf32>
    %213 = vector.shape_cast %212 : vector<1x2x32xf32> to vector<2x32xf32>
    %214 = vector.shape_cast %211 : vector<2x32xf32> to vector<1x2x32xf32>
    tpu.vector_store %arg7[%c5_64, %c0_65, %c0_66], %214 {strides = array<i32>} : memref<8x2x32xf32, #tpu.memory_space<vmem>>, vector<1x2x32xf32>,
    %c6 = arith.constant 6 : index
    %c0_67 = arith.constant 0 : index
    %c0_68 = arith.constant 0 : index
    %215 = vector.load %arg0[%c6, %c0_67, %c0_68] : memref<8x2x32xf32, #tpu.memory_space<vmem>>, vector<1x2x32xf32>
    %216 = vector.shape_cast %215 : vector<1x2x32xf32> to vector<2x32xf32>
    %cst_69 = arith.constant dense<0.000000e+00> : vector<2x128xf32>
    %217 = tpu.matmul %216, %0, %cst_69 {dimension_numbers = #tpu.dot_dimension_numbers<[1], [0], [0], [1], [0, 0, 1, 1], [], []>} : vector<2x32xf32>, vector<32x128xf32>, vector<2x128xf32> -> vector<2x128xf32>
    %cst_70 = arith.constant dense<0.000000e+00> : vector<2x128xf32>
    %218 = tpu.matmul %211, %1, %cst_70 {dimension_numbers = #tpu.dot_dimension_numbers<[1], [0], [0], [1], [0, 0, 1, 1], [], []>} : vector<2x32xf32>, vector<32x128xf32>, vector<2x128xf32> -> vector<2x128xf32>
    %219 = arith.addf %217, %218 : vector<2x128xf32>
    %220 = vector.broadcast %2 : vector<1x128xf32> to vector<2x128xf32>
    %221 = arith.addf %219, %220 : vector<2x128xf32>
    %222 = vector.extract_strided_slice %221 {offsets = [0, 0], sizes = [2, 32], strides = [1, 1]} : vector<2x128xf32> to vector<2x32xf32>
    %223 = arith.negf %222 : vector<2x32xf32>
    %224 = math.exp %223 : vector<2x32xf32>
    %cst_71 = arith.constant 1.000000e+00 : f32
    %225 = vector.broadcast %cst_71 : f32 to vector<2x32xf32>
    %226 = arith.addf %225, %224 : vector<2x32xf32>
    %227 = arith.divf %225, %226 : vector<2x32xf32>
    %228 = vector.extract_strided_slice %221 {offsets = [0, 32], sizes = [2, 32], strides = [1, 1]} : vector<2x128xf32> to vector<2x32xf32>
    %229 = arith.negf %228 : vector<2x32xf32>
    %230 = math.exp %229 : vector<2x32xf32>
    %cst_72 = arith.constant 1.000000e+00 : f32
    %231 = vector.broadcast %cst_72 : f32 to vector<2x32xf32>
    %232 = arith.addf %231, %230 : vector<2x32xf32>
    %233 = arith.divf %231, %232 : vector<2x32xf32>
    %234 = vector.extract_strided_slice %221 {offsets = [0, 64], sizes = [2, 32], strides = [1, 1]} : vector<2x128xf32> to vector<2x32xf32>
    %235 = math.tanh %234 : vector<2x32xf32>
    %236 = vector.extract_strided_slice %221 {offsets = [0, 96], sizes = [2, 32], strides = [1, 1]} : vector<2x128xf32> to vector<2x32xf32>
    %237 = arith.negf %236 : vector<2x32xf32>
    %238 = math.exp %237 : vector<2x32xf32>
    %cst_73 = arith.constant 1.000000e+00 : f32
    %239 = vector.broadcast %cst_73 : f32 to vector<2x32xf32>
    %240 = arith.addf %239, %238 : vector<2x32xf32>
    %241 = arith.divf %239, %240 : vector<2x32xf32>
    %242 = arith.mulf %233, %209 : vector<2x32xf32>
    %243 = arith.mulf %227, %235 : vector<2x32xf32>
    %244 = arith.addf %242, %243 : vector<2x32xf32>
    %245 = math.tanh %244 : vector<2x32xf32>
    %246 = arith.mulf %241, %245 : vector<2x32xf32>
    %c6_74 = arith.constant 6 : index
    %c0_75 = arith.constant 0 : index
    %c0_76 = arith.constant 0 : index
    %247 = vector.load %arg7[%c6_74, %c0_75, %c0_76] : memref<8x2x32xf32, #tpu.memory_space<vmem>>, vector<1x2x32xf32>
    %248 = vector.shape_cast %247 : vector<1x2x32xf32> to vector<2x32xf32>
    %249 = vector.shape_cast %246 : vector<2x32xf32> to vector<1x2x32xf32>
    tpu.vector_store %arg7[%c6_74, %c0_75, %c0_76], %249 {strides = array<i32>} : memref<8x2x32xf32, #tpu.memory_space<vmem>>, vector<1x2x32xf32>,
    %c7 = arith.constant 7 : index
    %c0_77 = arith.constant 0 : index
    %c0_78 = arith.constant 0 : index
    %250 = vector.load %arg0[%c7, %c0_77, %c0_78] : memref<8x2x32xf32, #tpu.memory_space<vmem>>, vector<1x2x32xf32>
    %251 = vector.shape_cast %250 : vector<1x2x32xf32> to vector<2x32xf32>
    %cst_79 = arith.constant dense<0.000000e+00> : vector<2x128xf32>
    %252 = tpu.matmul %251, %0, %cst_79 {dimension_numbers = #tpu.dot_dimension_numbers<[1], [0], [0], [1], [0, 0, 1, 1], [], []>} : vector<2x32xf32>, vector<32x128xf32>, vector<2x128xf32> -> vector<2x128xf32>
    %cst_80 = arith.constant dense<0.000000e+00> : vector<2x128xf32>
    %253 = tpu.matmul %246, %1, %cst_80 {dimension_numbers = #tpu.dot_dimension_numbers<[1], [0], [0], [1], [0, 0, 1, 1], [], []>} : vector<2x32xf32>, vector<32x128xf32>, vector<2x128xf32> -> vector<2x128xf32>
    %254 = arith.addf %252, %253 : vector<2x128xf32>
    %255 = vector.broadcast %2 : vector<1x128xf32> to vector<2x128xf32>
    %256 = arith.addf %254, %255 : vector<2x128xf32>
    %257 = vector.extract_strided_slice %256 {offsets = [0, 0], sizes = [2, 32], strides = [1, 1]} : vector<2x128xf32> to vector<2x32xf32>
    %258 = arith.negf %257 : vector<2x32xf32>
    %259 = math.exp %258 : vector<2x32xf32>
    %cst_81 = arith.constant 1.000000e+00 : f32
    %260 = vector.broadcast %cst_81 : f32 to vector<2x32xf32>
    %261 = arith.addf %260, %259 : vector<2x32xf32>
    %262 = arith.divf %260, %261 : vector<2x32xf32>
    %263 = vector.extract_strided_slice %256 {offsets = [0, 32], sizes = [2, 32], strides = [1, 1]} : vector<2x128xf32> to vector<2x32xf32>
    %264 = arith.negf %263 : vector<2x32xf32>
    %265 = math.exp %264 : vector<2x32xf32>
    %cst_82 = arith.constant 1.000000e+00 : f32
    %266 = vector.broadcast %cst_82 : f32 to vector<2x32xf32>
    %267 = arith.addf %266, %265 : vector<2x32xf32>
    %268 = arith.divf %266, %267 : vector<2x32xf32>
    %269 = vector.extract_strided_slice %256 {offsets = [0, 64], sizes = [2, 32], strides = [1, 1]} : vector<2x128xf32> to vector<2x32xf32>
    %270 = math.tanh %269 : vector<2x32xf32>
    %271 = vector.extract_strided_slice %256 {offsets = [0, 96], sizes = [2, 32], strides = [1, 1]} : vector<2x128xf32> to vector<2x32xf32>
    %272 = arith.negf %271 : vector<2x32xf32>
    %273 = math.exp %272 : vector<2x32xf32>
    %cst_83 = arith.constant 1.000000e+00 : f32
    %274 = vector.broadcast %cst_83 : f32 to vector<2x32xf32>
    %275 = arith.addf %274, %273 : vector<2x32xf32>
    %276 = arith.divf %274, %275 : vector<2x32xf32>
    %277 = arith.mulf %268, %244 : vector<2x32xf32>
    %278 = arith.mulf %262, %270 : vector<2x32xf32>
    %279 = arith.addf %277, %278 : vector<2x32xf32>
    %280 = math.tanh %279 : vector<2x32xf32>
    %281 = arith.mulf %276, %280 : vector<2x32xf32>
    %c7_84 = arith.constant 7 : index
    %c0_85 = arith.constant 0 : index
    %c0_86 = arith.constant 0 : index
    %282 = vector.load %arg7[%c7_84, %c0_85, %c0_86] : memref<8x2x32xf32, #tpu.memory_space<vmem>>, vector<1x2x32xf32>
    %283 = vector.shape_cast %282 : vector<1x2x32xf32> to vector<2x32xf32>
    %284 = vector.shape_cast %281 : vector<2x32xf32> to vector<1x2x32xf32>
    tpu.vector_store %arg7[%c7_84, %c0_85, %c0_86], %284 {strides = array<i32>} : memref<8x2x32xf32, #tpu.memory_space<vmem>>, vector<1x2x32xf32>,
    %c0_87 = arith.constant 0 : index
    %c0_88 = arith.constant 0 : index
    %285 = vector.load %arg4[%c0_87, %c0_88] : memref<32x128xf32, #tpu.memory_space<vmem>>, vector<32x128xf32>
    %c0_89 = arith.constant 0 : index
    %c0_90 = arith.constant 0 : index
    %286 = vector.load %arg5[%c0_89, %c0_90] : memref<32x128xf32, #tpu.memory_space<vmem>>, vector<32x128xf32>
    %c0_91 = arith.constant 0 : index
    %c0_92 = arith.constant 0 : index
    %287 = vector.load %arg6[%c0_91, %c0_92] : memref<1x128xf32, #tpu.memory_space<vmem>>, vector<1x128xf32>
    %cst_93 = arith.constant 0.000000e+00 : f32
    %288 = vector.broadcast %cst_93 : f32 to vector<2x32xf32>
    %cst_94 = arith.constant 0.000000e+00 : f32
    %289 = vector.broadcast %cst_94 : f32 to vector<2x32xf32>
    %c7_95 = arith.constant 7 : index
    %c0_96 = arith.constant 0 : index
    %c0_97 = arith.constant 0 : index
    %290 = vector.load %arg0[%c7_95, %c0_96, %c0_97] : memref<8x2x32xf32, #tpu.memory_space<vmem>>, vector<1x2x32xf32>
    %291 = vector.shape_cast %290 : vector<1x2x32xf32> to vector<2x32xf32>
    %cst_98 = arith.constant dense<0.000000e+00> : vector<2x128xf32>
    %292 = tpu.matmul %291, %285, %cst_98 {dimension_numbers = #tpu.dot_dimension_numbers<[1], [0], [0], [1], [0, 0, 1, 1], [], []>} : vector<2x32xf32>, vector<32x128xf32>, vector<2x128xf32> -> vector<2x128xf32>
    %cst_99 = arith.constant dense<0.000000e+00> : vector<2x128xf32>
    %293 = tpu.matmul %288, %286, %cst_99 {dimension_numbers = #tpu.dot_dimension_numbers<[1], [0], [0], [1], [0, 0, 1, 1], [], []>} : vector<2x32xf32>, vector<32x128xf32>, vector<2x128xf32> -> vector<2x128xf32>
    %294 = arith.addf %292, %293 : vector<2x128xf32>
    %295 = vector.broadcast %287 : vector<1x128xf32> to vector<2x128xf32>
    %296 = arith.addf %294, %295 : vector<2x128xf32>
    %297 = vector.extract_strided_slice %296 {offsets = [0, 0], sizes = [2, 32], strides = [1, 1]} : vector<2x128xf32> to vector<2x32xf32>
    %298 = arith.negf %297 : vector<2x32xf32>
    %299 = math.exp %298 : vector<2x32xf32>
    %cst_100 = arith.constant 1.000000e+00 : f32
    %300 = vector.broadcast %cst_100 : f32 to vector<2x32xf32>
    %301 = arith.addf %300, %299 : vector<2x32xf32>
    %302 = arith.divf %300, %301 : vector<2x32xf32>
    %303 = vector.extract_strided_slice %296 {offsets = [0, 32], sizes = [2, 32], strides = [1, 1]} : vector<2x128xf32> to vector<2x32xf32>
    %304 = arith.negf %303 : vector<2x32xf32>
    %305 = math.exp %304 : vector<2x32xf32>
    %cst_101 = arith.constant 1.000000e+00 : f32
    %306 = vector.broadcast %cst_101 : f32 to vector<2x32xf32>
    %307 = arith.addf %306, %305 : vector<2x32xf32>
    %308 = arith.divf %306, %307 : vector<2x32xf32>
    %309 = vector.extract_strided_slice %296 {offsets = [0, 64], sizes = [2, 32], strides = [1, 1]} : vector<2x128xf32> to vector<2x32xf32>
    %310 = math.tanh %309 : vector<2x32xf32>
    %311 = vector.extract_strided_slice %296 {offsets = [0, 96], sizes = [2, 32], strides = [1, 1]} : vector<2x128xf32> to vector<2x32xf32>
    %312 = arith.negf %311 : vector<2x32xf32>
    %313 = math.exp %312 : vector<2x32xf32>
    %cst_102 = arith.constant 1.000000e+00 : f32
    %314 = vector.broadcast %cst_102 : f32 to vector<2x32xf32>
    %315 = arith.addf %314, %313 : vector<2x32xf32>
    %316 = arith.divf %314, %315 : vector<2x32xf32>
    %317 = arith.mulf %308, %289 : vector<2x32xf32>
    %318 = arith.mulf %302, %310 : vector<2x32xf32>
    %319 = arith.addf %317, %318 : vector<2x32xf32>
    %320 = math.tanh %319 : vector<2x32xf32>
    %321 = arith.mulf %316, %320 : vector<2x32xf32>
    %c7_103 = arith.constant 7 : index
    %c0_104 = arith.constant 0 : index
    %c0_105 = arith.constant 0 : index
    %322 = vector.load %arg8[%c7_103, %c0_104, %c0_105] : memref<8x2x32xf32, #tpu.memory_space<vmem>>, vector<1x2x32xf32>
    %323 = vector.shape_cast %322 : vector<1x2x32xf32> to vector<2x32xf32>
    %324 = vector.shape_cast %321 : vector<2x32xf32> to vector<1x2x32xf32>
    tpu.vector_store %arg8[%c7_103, %c0_104, %c0_105], %324 {strides = array<i32>} : memref<8x2x32xf32, #tpu.memory_space<vmem>>, vector<1x2x32xf32>,
    %c6_106 = arith.constant 6 : index
    %c0_107 = arith.constant 0 : index
    %c0_108 = arith.constant 0 : index
    %325 = vector.load %arg0[%c6_106, %c0_107, %c0_108] : memref<8x2x32xf32, #tpu.memory_space<vmem>>, vector<1x2x32xf32>
    %326 = vector.shape_cast %325 : vector<1x2x32xf32> to vector<2x32xf32>
    %cst_109 = arith.constant dense<0.000000e+00> : vector<2x128xf32>
    %327 = tpu.matmul %326, %285, %cst_109 {dimension_numbers = #tpu.dot_dimension_numbers<[1], [0], [0], [1], [0, 0, 1, 1], [], []>} : vector<2x32xf32>, vector<32x128xf32>, vector<2x128xf32> -> vector<2x128xf32>
    %cst_110 = arith.constant dense<0.000000e+00> : vector<2x128xf32>
    %328 = tpu.matmul %321, %286, %cst_110 {dimension_numbers = #tpu.dot_dimension_numbers<[1], [0], [0], [1], [0, 0, 1, 1], [], []>} : vector<2x32xf32>, vector<32x128xf32>, vector<2x128xf32> -> vector<2x128xf32>
    %329 = arith.addf %327, %328 : vector<2x128xf32>
    %330 = vector.broadcast %287 : vector<1x128xf32> to vector<2x128xf32>
    %331 = arith.addf %329, %330 : vector<2x128xf32>
    %332 = vector.extract_strided_slice %331 {offsets = [0, 0], sizes = [2, 32], strides = [1, 1]} : vector<2x128xf32> to vector<2x32xf32>
    %333 = arith.negf %332 : vector<2x32xf32>
    %334 = math.exp %333 : vector<2x32xf32>
    %cst_111 = arith.constant 1.000000e+00 : f32
    %335 = vector.broadcast %cst_111 : f32 to vector<2x32xf32>
    %336 = arith.addf %335, %334 : vector<2x32xf32>
    %337 = arith.divf %335, %336 : vector<2x32xf32>
    %338 = vector.extract_strided_slice %331 {offsets = [0, 32], sizes = [2, 32], strides = [1, 1]} : vector<2x128xf32> to vector<2x32xf32>
    %339 = arith.negf %338 : vector<2x32xf32>
    %340 = math.exp %339 : vector<2x32xf32>
    %cst_112 = arith.constant 1.000000e+00 : f32
    %341 = vector.broadcast %cst_112 : f32 to vector<2x32xf32>
    %342 = arith.addf %341, %340 : vector<2x32xf32>
    %343 = arith.divf %341, %342 : vector<2x32xf32>
    %344 = vector.extract_strided_slice %331 {offsets = [0, 64], sizes = [2, 32], strides = [1, 1]} : vector<2x128xf32> to vector<2x32xf32>
    %345 = math.tanh %344 : vector<2x32xf32>
    %346 = vector.extract_strided_slice %331 {offsets = [0, 96], sizes = [2, 32], strides = [1, 1]} : vector<2x128xf32> to vector<2x32xf32>
    %347 = arith.negf %346 : vector<2x32xf32>
    %348 = math.exp %347 : vector<2x32xf32>
    %cst_113 = arith.constant 1.000000e+00 : f32
    %349 = vector.broadcast %cst_113 : f32 to vector<2x32xf32>
    %350 = arith.addf %349, %348 : vector<2x32xf32>
    %351 = arith.divf %349, %350 : vector<2x32xf32>
    %352 = arith.mulf %343, %319 : vector<2x32xf32>
    %353 = arith.mulf %337, %345 : vector<2x32xf32>
    %354 = arith.addf %352, %353 : vector<2x32xf32>
    %355 = math.tanh %354 : vector<2x32xf32>
    %356 = arith.mulf %351, %355 : vector<2x32xf32>
    %c6_114 = arith.constant 6 : index
    %c0_115 = arith.constant 0 : index
    %c0_116 = arith.constant 0 : index
    %357 = vector.load %arg8[%c6_114, %c0_115, %c0_116] : memref<8x2x32xf32, #tpu.memory_space<vmem>>, vector<1x2x32xf32>
    %358 = vector.shape_cast %357 : vector<1x2x32xf32> to vector<2x32xf32>
    %359 = vector.shape_cast %356 : vector<2x32xf32> to vector<1x2x32xf32>
    tpu.vector_store %arg8[%c6_114, %c0_115, %c0_116], %359 {strides = array<i32>} : memref<8x2x32xf32, #tpu.memory_space<vmem>>, vector<1x2x32xf32>,
    %c5_117 = arith.constant 5 : index
    %c0_118 = arith.constant 0 : index
    %c0_119 = arith.constant 0 : index
    %360 = vector.load %arg0[%c5_117, %c0_118, %c0_119] : memref<8x2x32xf32, #tpu.memory_space<vmem>>, vector<1x2x32xf32>
    %361 = vector.shape_cast %360 : vector<1x2x32xf32> to vector<2x32xf32>
    %cst_120 = arith.constant dense<0.000000e+00> : vector<2x128xf32>
    %362 = tpu.matmul %361, %285, %cst_120 {dimension_numbers = #tpu.dot_dimension_numbers<[1], [0], [0], [1], [0, 0, 1, 1], [], []>} : vector<2x32xf32>, vector<32x128xf32>, vector<2x128xf32> -> vector<2x128xf32>
    %cst_121 = arith.constant dense<0.000000e+00> : vector<2x128xf32>
    %363 = tpu.matmul %356, %286, %cst_121 {dimension_numbers = #tpu.dot_dimension_numbers<[1], [0], [0], [1], [0, 0, 1, 1], [], []>} : vector<2x32xf32>, vector<32x128xf32>, vector<2x128xf32> -> vector<2x128xf32>
    %364 = arith.addf %362, %363 : vector<2x128xf32>
    %365 = vector.broadcast %287 : vector<1x128xf32> to vector<2x128xf32>
    %366 = arith.addf %364, %365 : vector<2x128xf32>
    %367 = vector.extract_strided_slice %366 {offsets = [0, 0], sizes = [2, 32], strides = [1, 1]} : vector<2x128xf32> to vector<2x32xf32>
    %368 = arith.negf %367 : vector<2x32xf32>
    %369 = math.exp %368 : vector<2x32xf32>
    %cst_122 = arith.constant 1.000000e+00 : f32
    %370 = vector.broadcast %cst_122 : f32 to vector<2x32xf32>
    %371 = arith.addf %370, %369 : vector<2x32xf32>
    %372 = arith.divf %370, %371 : vector<2x32xf32>
    %373 = vector.extract_strided_slice %366 {offsets = [0, 32], sizes = [2, 32], strides = [1, 1]} : vector<2x128xf32> to vector<2x32xf32>
    %374 = arith.negf %373 : vector<2x32xf32>
    %375 = math.exp %374 : vector<2x32xf32>
    %cst_123 = arith.constant 1.000000e+00 : f32
    %376 = vector.broadcast %cst_123 : f32 to vector<2x32xf32>
    %377 = arith.addf %376, %375 : vector<2x32xf32>
    %378 = arith.divf %376, %377 : vector<2x32xf32>
    %379 = vector.extract_strided_slice %366 {offsets = [0, 64], sizes = [2, 32], strides = [1, 1]} : vector<2x128xf32> to vector<2x32xf32>
    %380 = math.tanh %379 : vector<2x32xf32>
    %381 = vector.extract_strided_slice %366 {offsets = [0, 96], sizes = [2, 32], strides = [1, 1]} : vector<2x128xf32> to vector<2x32xf32>
    %382 = arith.negf %381 : vector<2x32xf32>
    %383 = math.exp %382 : vector<2x32xf32>
    %cst_124 = arith.constant 1.000000e+00 : f32
    %384 = vector.broadcast %cst_124 : f32 to vector<2x32xf32>
    %385 = arith.addf %384, %383 : vector<2x32xf32>
    %386 = arith.divf %384, %385 : vector<2x32xf32>
    %387 = arith.mulf %378, %354 : vector<2x32xf32>
    %388 = arith.mulf %372, %380 : vector<2x32xf32>
    %389 = arith.addf %387, %388 : vector<2x32xf32>
    %390 = math.tanh %389 : vector<2x32xf32>
    %391 = arith.mulf %386, %390 : vector<2x32xf32>
    %c5_125 = arith.constant 5 : index
    %c0_126 = arith.constant 0 : index
    %c0_127 = arith.constant 0 : index
    %392 = vector.load %arg8[%c5_125, %c0_126, %c0_127] : memref<8x2x32xf32, #tpu.memory_space<vmem>>, vector<1x2x32xf32>
    %393 = vector.shape_cast %392 : vector<1x2x32xf32> to vector<2x32xf32>
    %394 = vector.shape_cast %391 : vector<2x32xf32> to vector<1x2x32xf32>
    tpu.vector_store %arg8[%c5_125, %c0_126, %c0_127], %394 {strides = array<i32>} : memref<8x2x32xf32, #tpu.memory_space<vmem>>, vector<1x2x32xf32>,
    %c4_128 = arith.constant 4 : index
    %c0_129 = arith.constant 0 : index
    %c0_130 = arith.constant 0 : index
    %395 = vector.load %arg0[%c4_128, %c0_129, %c0_130] : memref<8x2x32xf32, #tpu.memory_space<vmem>>, vector<1x2x32xf32>
    %396 = vector.shape_cast %395 : vector<1x2x32xf32> to vector<2x32xf32>
    %cst_131 = arith.constant dense<0.000000e+00> : vector<2x128xf32>
    %397 = tpu.matmul %396, %285, %cst_131 {dimension_numbers = #tpu.dot_dimension_numbers<[1], [0], [0], [1], [0, 0, 1, 1], [], []>} : vector<2x32xf32>, vector<32x128xf32>, vector<2x128xf32> -> vector<2x128xf32>
    %cst_132 = arith.constant dense<0.000000e+00> : vector<2x128xf32>
    %398 = tpu.matmul %391, %286, %cst_132 {dimension_numbers = #tpu.dot_dimension_numbers<[1], [0], [0], [1], [0, 0, 1, 1], [], []>} : vector<2x32xf32>, vector<32x128xf32>, vector<2x128xf32> -> vector<2x128xf32>
    %399 = arith.addf %397, %398 : vector<2x128xf32>
    %400 = vector.broadcast %287 : vector<1x128xf32> to vector<2x128xf32>
    %401 = arith.addf %399, %400 : vector<2x128xf32>
    %402 = vector.extract_strided_slice %401 {offsets = [0, 0], sizes = [2, 32], strides = [1, 1]} : vector<2x128xf32> to vector<2x32xf32>
    %403 = arith.negf %402 : vector<2x32xf32>
    %404 = math.exp %403 : vector<2x32xf32>
    %cst_133 = arith.constant 1.000000e+00 : f32
    %405 = vector.broadcast %cst_133 : f32 to vector<2x32xf32>
    %406 = arith.addf %405, %404 : vector<2x32xf32>
    %407 = arith.divf %405, %406 : vector<2x32xf32>
    %408 = vector.extract_strided_slice %401 {offsets = [0, 32], sizes = [2, 32], strides = [1, 1]} : vector<2x128xf32> to vector<2x32xf32>
    %409 = arith.negf %408 : vector<2x32xf32>
    %410 = math.exp %409 : vector<2x32xf32>
    %cst_134 = arith.constant 1.000000e+00 : f32
    %411 = vector.broadcast %cst_134 : f32 to vector<2x32xf32>
    %412 = arith.addf %411, %410 : vector<2x32xf32>
    %413 = arith.divf %411, %412 : vector<2x32xf32>
    %414 = vector.extract_strided_slice %401 {offsets = [0, 64], sizes = [2, 32], strides = [1, 1]} : vector<2x128xf32> to vector<2x32xf32>
    %415 = math.tanh %414 : vector<2x32xf32>
    %416 = vector.extract_strided_slice %401 {offsets = [0, 96], sizes = [2, 32], strides = [1, 1]} : vector<2x128xf32> to vector<2x32xf32>
    %417 = arith.negf %416 : vector<2x32xf32>
    %418 = math.exp %417 : vector<2x32xf32>
    %cst_135 = arith.constant 1.000000e+00 : f32
    %419 = vector.broadcast %cst_135 : f32 to vector<2x32xf32>
    %420 = arith.addf %419, %418 : vector<2x32xf32>
    %421 = arith.divf %419, %420 : vector<2x32xf32>
    %422 = arith.mulf %413, %389 : vector<2x32xf32>
    %423 = arith.mulf %407, %415 : vector<2x32xf32>
    %424 = arith.addf %422, %423 : vector<2x32xf32>
    %425 = math.tanh %424 : vector<2x32xf32>
    %426 = arith.mulf %421, %425 : vector<2x32xf32>
    %c4_136 = arith.constant 4 : index
    %c0_137 = arith.constant 0 : index
    %c0_138 = arith.constant 0 : index
    %427 = vector.load %arg8[%c4_136, %c0_137, %c0_138] : memref<8x2x32xf32, #tpu.memory_space<vmem>>, vector<1x2x32xf32>
    %428 = vector.shape_cast %427 : vector<1x2x32xf32> to vector<2x32xf32>
    %429 = vector.shape_cast %426 : vector<2x32xf32> to vector<1x2x32xf32>
    tpu.vector_store %arg8[%c4_136, %c0_137, %c0_138], %429 {strides = array<i32>} : memref<8x2x32xf32, #tpu.memory_space<vmem>>, vector<1x2x32xf32>,
    %c3_139 = arith.constant 3 : index
    %c0_140 = arith.constant 0 : index
    %c0_141 = arith.constant 0 : index
    %430 = vector.load %arg0[%c3_139, %c0_140, %c0_141] : memref<8x2x32xf32, #tpu.memory_space<vmem>>, vector<1x2x32xf32>
    %431 = vector.shape_cast %430 : vector<1x2x32xf32> to vector<2x32xf32>
    %cst_142 = arith.constant dense<0.000000e+00> : vector<2x128xf32>
    %432 = tpu.matmul %431, %285, %cst_142 {dimension_numbers = #tpu.dot_dimension_numbers<[1], [0], [0], [1], [0, 0, 1, 1], [], []>} : vector<2x32xf32>, vector<32x128xf32>, vector<2x128xf32> -> vector<2x128xf32>
    %cst_143 = arith.constant dense<0.000000e+00> : vector<2x128xf32>
    %433 = tpu.matmul %426, %286, %cst_143 {dimension_numbers = #tpu.dot_dimension_numbers<[1], [0], [0], [1], [0, 0, 1, 1], [], []>} : vector<2x32xf32>, vector<32x128xf32>, vector<2x128xf32> -> vector<2x128xf32>
    %434 = arith.addf %432, %433 : vector<2x128xf32>
    %435 = vector.broadcast %287 : vector<1x128xf32> to vector<2x128xf32>
    %436 = arith.addf %434, %435 : vector<2x128xf32>
    %437 = vector.extract_strided_slice %436 {offsets = [0, 0], sizes = [2, 32], strides = [1, 1]} : vector<2x128xf32> to vector<2x32xf32>
    %438 = arith.negf %437 : vector<2x32xf32>
    %439 = math.exp %438 : vector<2x32xf32>
    %cst_144 = arith.constant 1.000000e+00 : f32
    %440 = vector.broadcast %cst_144 : f32 to vector<2x32xf32>
    %441 = arith.addf %440, %439 : vector<2x32xf32>
    %442 = arith.divf %440, %441 : vector<2x32xf32>
    %443 = vector.extract_strided_slice %436 {offsets = [0, 32], sizes = [2, 32], strides = [1, 1]} : vector<2x128xf32> to vector<2x32xf32>
    %444 = arith.negf %443 : vector<2x32xf32>
    %445 = math.exp %444 : vector<2x32xf32>
    %cst_145 = arith.constant 1.000000e+00 : f32
    %446 = vector.broadcast %cst_145 : f32 to vector<2x32xf32>
    %447 = arith.addf %446, %445 : vector<2x32xf32>
    %448 = arith.divf %446, %447 : vector<2x32xf32>
    %449 = vector.extract_strided_slice %436 {offsets = [0, 64], sizes = [2, 32], strides = [1, 1]} : vector<2x128xf32> to vector<2x32xf32>
    %450 = math.tanh %449 : vector<2x32xf32>
    %451 = vector.extract_strided_slice %436 {offsets = [0, 96], sizes = [2, 32], strides = [1, 1]} : vector<2x128xf32> to vector<2x32xf32>
    %452 = arith.negf %451 : vector<2x32xf32>
    %453 = math.exp %452 : vector<2x32xf32>
    %cst_146 = arith.constant 1.000000e+00 : f32
    %454 = vector.broadcast %cst_146 : f32 to vector<2x32xf32>
    %455 = arith.addf %454, %453 : vector<2x32xf32>
    %456 = arith.divf %454, %455 : vector<2x32xf32>
    %457 = arith.mulf %448, %424 : vector<2x32xf32>
    %458 = arith.mulf %442, %450 : vector<2x32xf32>
    %459 = arith.addf %457, %458 : vector<2x32xf32>
    %460 = math.tanh %459 : vector<2x32xf32>
    %461 = arith.mulf %456, %460 : vector<2x32xf32>
    %c3_147 = arith.constant 3 : index
    %c0_148 = arith.constant 0 : index
    %c0_149 = arith.constant 0 : index
    %462 = vector.load %arg8[%c3_147, %c0_148, %c0_149] : memref<8x2x32xf32, #tpu.memory_space<vmem>>, vector<1x2x32xf32>
    %463 = vector.shape_cast %462 : vector<1x2x32xf32> to vector<2x32xf32>
    %464 = vector.shape_cast %461 : vector<2x32xf32> to vector<1x2x32xf32>
    tpu.vector_store %arg8[%c3_147, %c0_148, %c0_149], %464 {strides = array<i32>} : memref<8x2x32xf32, #tpu.memory_space<vmem>>, vector<1x2x32xf32>,
    %c2_150 = arith.constant 2 : index
    %c0_151 = arith.constant 0 : index
    %c0_152 = arith.constant 0 : index
    %465 = vector.load %arg0[%c2_150, %c0_151, %c0_152] : memref<8x2x32xf32, #tpu.memory_space<vmem>>, vector<1x2x32xf32>
    %466 = vector.shape_cast %465 : vector<1x2x32xf32> to vector<2x32xf32>
    %cst_153 = arith.constant dense<0.000000e+00> : vector<2x128xf32>
    %467 = tpu.matmul %466, %285, %cst_153 {dimension_numbers = #tpu.dot_dimension_numbers<[1], [0], [0], [1], [0, 0, 1, 1], [], []>} : vector<2x32xf32>, vector<32x128xf32>, vector<2x128xf32> -> vector<2x128xf32>
    %cst_154 = arith.constant dense<0.000000e+00> : vector<2x128xf32>
    %468 = tpu.matmul %461, %286, %cst_154 {dimension_numbers = #tpu.dot_dimension_numbers<[1], [0], [0], [1], [0, 0, 1, 1], [], []>} : vector<2x32xf32>, vector<32x128xf32>, vector<2x128xf32> -> vector<2x128xf32>
    %469 = arith.addf %467, %468 : vector<2x128xf32>
    %470 = vector.broadcast %287 : vector<1x128xf32> to vector<2x128xf32>
    %471 = arith.addf %469, %470 : vector<2x128xf32>
    %472 = vector.extract_strided_slice %471 {offsets = [0, 0], sizes = [2, 32], strides = [1, 1]} : vector<2x128xf32> to vector<2x32xf32>
    %473 = arith.negf %472 : vector<2x32xf32>
    %474 = math.exp %473 : vector<2x32xf32>
    %cst_155 = arith.constant 1.000000e+00 : f32
    %475 = vector.broadcast %cst_155 : f32 to vector<2x32xf32>
    %476 = arith.addf %475, %474 : vector<2x32xf32>
    %477 = arith.divf %475, %476 : vector<2x32xf32>
    %478 = vector.extract_strided_slice %471 {offsets = [0, 32], sizes = [2, 32], strides = [1, 1]} : vector<2x128xf32> to vector<2x32xf32>
    %479 = arith.negf %478 : vector<2x32xf32>
    %480 = math.exp %479 : vector<2x32xf32>
    %cst_156 = arith.constant 1.000000e+00 : f32
    %481 = vector.broadcast %cst_156 : f32 to vector<2x32xf32>
    %482 = arith.addf %481, %480 : vector<2x32xf32>
    %483 = arith.divf %481, %482 : vector<2x32xf32>
    %484 = vector.extract_strided_slice %471 {offsets = [0, 64], sizes = [2, 32], strides = [1, 1]} : vector<2x128xf32> to vector<2x32xf32>
    %485 = math.tanh %484 : vector<2x32xf32>
    %486 = vector.extract_strided_slice %471 {offsets = [0, 96], sizes = [2, 32], strides = [1, 1]} : vector<2x128xf32> to vector<2x32xf32>
    %487 = arith.negf %486 : vector<2x32xf32>
    %488 = math.exp %487 : vector<2x32xf32>
    %cst_157 = arith.constant 1.000000e+00 : f32
    %489 = vector.broadcast %cst_157 : f32 to vector<2x32xf32>
    %490 = arith.addf %489, %488 : vector<2x32xf32>
    %491 = arith.divf %489, %490 : vector<2x32xf32>
    %492 = arith.mulf %483, %459 : vector<2x32xf32>
    %493 = arith.mulf %477, %485 : vector<2x32xf32>
    %494 = arith.addf %492, %493 : vector<2x32xf32>
    %495 = math.tanh %494 : vector<2x32xf32>
    %496 = arith.mulf %491, %495 : vector<2x32xf32>
    %c2_158 = arith.constant 2 : index
    %c0_159 = arith.constant 0 : index
    %c0_160 = arith.constant 0 : index
    %497 = vector.load %arg8[%c2_158, %c0_159, %c0_160] : memref<8x2x32xf32, #tpu.memory_space<vmem>>, vector<1x2x32xf32>
    %498 = vector.shape_cast %497 : vector<1x2x32xf32> to vector<2x32xf32>
    %499 = vector.shape_cast %496 : vector<2x32xf32> to vector<1x2x32xf32>
    tpu.vector_store %arg8[%c2_158, %c0_159, %c0_160], %499 {strides = array<i32>} : memref<8x2x32xf32, #tpu.memory_space<vmem>>, vector<1x2x32xf32>,
    %c1_161 = arith.constant 1 : index
    %c0_162 = arith.constant 0 : index
    %c0_163 = arith.constant 0 : index
    %500 = vector.load %arg0[%c1_161, %c0_162, %c0_163] : memref<8x2x32xf32, #tpu.memory_space<vmem>>, vector<1x2x32xf32>
    %501 = vector.shape_cast %500 : vector<1x2x32xf32> to vector<2x32xf32>
    %cst_164 = arith.constant dense<0.000000e+00> : vector<2x128xf32>
    %502 = tpu.matmul %501, %285, %cst_164 {dimension_numbers = #tpu.dot_dimension_numbers<[1], [0], [0], [1], [0, 0, 1, 1], [], []>} : vector<2x32xf32>, vector<32x128xf32>, vector<2x128xf32> -> vector<2x128xf32>
    %cst_165 = arith.constant dense<0.000000e+00> : vector<2x128xf32>
    %503 = tpu.matmul %496, %286, %cst_165 {dimension_numbers = #tpu.dot_dimension_numbers<[1], [0], [0], [1], [0, 0, 1, 1], [], []>} : vector<2x32xf32>, vector<32x128xf32>, vector<2x128xf32> -> vector<2x128xf32>
    %504 = arith.addf %502, %503 : vector<2x128xf32>
    %505 = vector.broadcast %287 : vector<1x128xf32> to vector<2x128xf32>
    %506 = arith.addf %504, %505 : vector<2x128xf32>
    %507 = vector.extract_strided_slice %506 {offsets = [0, 0], sizes = [2, 32], strides = [1, 1]} : vector<2x128xf32> to vector<2x32xf32>
    %508 = arith.negf %507 : vector<2x32xf32>
    %509 = math.exp %508 : vector<2x32xf32>
    %cst_166 = arith.constant 1.000000e+00 : f32
    %510 = vector.broadcast %cst_166 : f32 to vector<2x32xf32>
    %511 = arith.addf %510, %509 : vector<2x32xf32>
    %512 = arith.divf %510, %511 : vector<2x32xf32>
    %513 = vector.extract_strided_slice %506 {offsets = [0, 32], sizes = [2, 32], strides = [1, 1]} : vector<2x128xf32> to vector<2x32xf32>
    %514 = arith.negf %513 : vector<2x32xf32>
    %515 = math.exp %514 : vector<2x32xf32>
    %cst_167 = arith.constant 1.000000e+00 : f32
    %516 = vector.broadcast %cst_167 : f32 to vector<2x32xf32>
    %517 = arith.addf %516, %515 : vector<2x32xf32>
    %518 = arith.divf %516, %517 : vector<2x32xf32>
    %519 = vector.extract_strided_slice %506 {offsets = [0, 64], sizes = [2, 32], strides = [1, 1]} : vector<2x128xf32> to vector<2x32xf32>
    %520 = math.tanh %519 : vector<2x32xf32>
    %521 = vector.extract_strided_slice %506 {offsets = [0, 96], sizes = [2, 32], strides = [1, 1]} : vector<2x128xf32> to vector<2x32xf32>
    %522 = arith.negf %521 : vector<2x32xf32>
    %523 = math.exp %522 : vector<2x32xf32>
    %cst_168 = arith.constant 1.000000e+00 : f32
    %524 = vector.broadcast %cst_168 : f32 to vector<2x32xf32>
    %525 = arith.addf %524, %523 : vector<2x32xf32>
    %526 = arith.divf %524, %525 : vector<2x32xf32>
    %527 = arith.mulf %518, %494 : vector<2x32xf32>
    %528 = arith.mulf %512, %520 : vector<2x32xf32>
    %529 = arith.addf %527, %528 : vector<2x32xf32>
    %530 = math.tanh %529 : vector<2x32xf32>
    %531 = arith.mulf %526, %530 : vector<2x32xf32>
    %c1_169 = arith.constant 1 : index
    %c0_170 = arith.constant 0 : index
    %c0_171 = arith.constant 0 : index
    %532 = vector.load %arg8[%c1_169, %c0_170, %c0_171] : memref<8x2x32xf32, #tpu.memory_space<vmem>>, vector<1x2x32xf32>
    %533 = vector.shape_cast %532 : vector<1x2x32xf32> to vector<2x32xf32>
    %534 = vector.shape_cast %531 : vector<2x32xf32> to vector<1x2x32xf32>
    tpu.vector_store %arg8[%c1_169, %c0_170, %c0_171], %534 {strides = array<i32>} : memref<8x2x32xf32, #tpu.memory_space<vmem>>, vector<1x2x32xf32>,
    %c0_172 = arith.constant 0 : index
    %c0_173 = arith.constant 0 : index
    %c0_174 = arith.constant 0 : index
    %535 = vector.load %arg0[%c0_172, %c0_173, %c0_174] : memref<8x2x32xf32, #tpu.memory_space<vmem>>, vector<1x2x32xf32>
    %536 = vector.shape_cast %535 : vector<1x2x32xf32> to vector<2x32xf32>
    %cst_175 = arith.constant dense<0.000000e+00> : vector<2x128xf32>
    %537 = tpu.matmul %536, %285, %cst_175 {dimension_numbers = #tpu.dot_dimension_numbers<[1], [0], [0], [1], [0, 0, 1, 1], [], []>} : vector<2x32xf32>, vector<32x128xf32>, vector<2x128xf32> -> vector<2x128xf32>
    %cst_176 = arith.constant dense<0.000000e+00> : vector<2x128xf32>
    %538 = tpu.matmul %531, %286, %cst_176 {dimension_numbers = #tpu.dot_dimension_numbers<[1], [0], [0], [1], [0, 0, 1, 1], [], []>} : vector<2x32xf32>, vector<32x128xf32>, vector<2x128xf32> -> vector<2x128xf32>
    %539 = arith.addf %537, %538 : vector<2x128xf32>
    %540 = vector.broadcast %287 : vector<1x128xf32> to vector<2x128xf32>
    %541 = arith.addf %539, %540 : vector<2x128xf32>
    %542 = vector.extract_strided_slice %541 {offsets = [0, 0], sizes = [2, 32], strides = [1, 1]} : vector<2x128xf32> to vector<2x32xf32>
    %543 = arith.negf %542 : vector<2x32xf32>
    %544 = math.exp %543 : vector<2x32xf32>
    %cst_177 = arith.constant 1.000000e+00 : f32
    %545 = vector.broadcast %cst_177 : f32 to vector<2x32xf32>
    %546 = arith.addf %545, %544 : vector<2x32xf32>
    %547 = arith.divf %545, %546 : vector<2x32xf32>
    %548 = vector.extract_strided_slice %541 {offsets = [0, 32], sizes = [2, 32], strides = [1, 1]} : vector<2x128xf32> to vector<2x32xf32>
    %549 = arith.negf %548 : vector<2x32xf32>
    %550 = math.exp %549 : vector<2x32xf32>
    %cst_178 = arith.constant 1.000000e+00 : f32
    %551 = vector.broadcast %cst_178 : f32 to vector<2x32xf32>
    %552 = arith.addf %551, %550 : vector<2x32xf32>
    %553 = arith.divf %551, %552 : vector<2x32xf32>
    %554 = vector.extract_strided_slice %541 {offsets = [0, 64], sizes = [2, 32], strides = [1, 1]} : vector<2x128xf32> to vector<2x32xf32>
    %555 = math.tanh %554 : vector<2x32xf32>
    %556 = vector.extract_strided_slice %541 {offsets = [0, 96], sizes = [2, 32], strides = [1, 1]} : vector<2x128xf32> to vector<2x32xf32>
    %557 = arith.negf %556 : vector<2x32xf32>
    %558 = math.exp %557 : vector<2x32xf32>
    %cst_179 = arith.constant 1.000000e+00 : f32
    %559 = vector.broadcast %cst_179 : f32 to vector<2x32xf32>
    %560 = arith.addf %559, %558 : vector<2x32xf32>
    %561 = arith.divf %559, %560 : vector<2x32xf32>
    %562 = arith.mulf %553, %529 : vector<2x32xf32>
    %563 = arith.mulf %547, %555 : vector<2x32xf32>
    %564 = arith.addf %562, %563 : vector<2x32xf32>
    %565 = math.tanh %564 : vector<2x32xf32>
    %566 = arith.mulf %561, %565 : vector<2x32xf32>
    %c0_180 = arith.constant 0 : index
    %c0_181 = arith.constant 0 : index
    %c0_182 = arith.constant 0 : index
    %567 = vector.load %arg8[%c0_180, %c0_181, %c0_182] : memref<8x2x32xf32, #tpu.memory_space<vmem>>, vector<1x2x32xf32>
    %568 = vector.shape_cast %567 : vector<1x2x32xf32> to vector<2x32xf32>
    %569 = vector.shape_cast %566 : vector<2x32xf32> to vector<1x2x32xf32>
    tpu.vector_store %arg8[%c0_180, %c0_181, %c0_182], %569 {strides = array<i32>} : memref<8x2x32xf32, #tpu.memory_space<vmem>>, vector<1x2x32xf32>,
    return
  }
}

module attributes {stable_mosaic.version = 11 : i64} {
  func.func @_main_kernel(%arg0: memref<16x64xf32, #tpu.memory_space<vmem>>, %arg1: memref<128x10xf32, #tpu.memory_space<vmem>>, %arg2: memref<128x1xf32, #tpu.memory_space<vmem>>, %arg3: memref<128x1xf32, #tpu.memory_space<vmem>>, %arg4: memref<128x16xf32, #tpu.memory_space<vmem>>, %arg5: memref<128x16xf32, #tpu.memory_space<vmem>>, %arg6: memref<16x128xf32, #tpu.memory_space<vmem>>, %arg7: memref<8x64xf32, #tpu.memory_space<vmem>>, %arg8: memref<64x8xf32, #tpu.memory_space<vmem>>, %arg9: memref<2x16x8xf32, #tpu.memory_space<vmem>>, %arg10: memref<32x2xf32, #tpu.memory_space<vmem>>, %arg11: memref<64x98xf32, #tpu.memory_space<vmem>>, %arg12: memref<1x98xf32, #tpu.memory_space<vmem>>, %arg13: memref<33x330xf32, #tpu.memory_space<vmem>>, %arg14: memref<33x330xf32, #tpu.memory_space<vmem>>, %arg15: memref<330x10xf32, #tpu.memory_space<vmem>>, %arg16: memref<32x32xf32, #tpu.memory_space<vmem>>, %arg17: memref<1x32xf32, #tpu.memory_space<vmem>>, %arg18: memref<1x32xf32, #tpu.memory_space<vmem>>, %arg19: memref<1x32xf32, #tpu.memory_space<vmem>>, %arg20: memref<2x10x128xf32, #tpu.memory_space<vmem>>, %arg21: memref<1x128xf32, #tpu.memory_space<vmem>>, %arg22: memref<128x2xf32, #tpu.memory_space<vmem>>, %arg23: memref<1x2xf32, #tpu.memory_space<vmem>>, %arg24: memref<2x16x32xf32, #tpu.memory_space<vmem>>, %arg25: memref<1x32xf32, #tpu.memory_space<vmem>>, %arg26: memref<1x32xf32, #tpu.memory_space<vmem>>, %arg27: memref<1x32xf32, #tpu.memory_space<vmem>>, %arg28: memref<2x10x10xf32, #tpu.memory_space<vmem>>, %arg29: memref<2x10x10xf32, #tpu.memory_space<vmem>>, %arg30: memref<2x10x10xf32, #tpu.memory_space<vmem>>, %arg31: memref<32x10xf32, #tpu.memory_space<vmem>>, %arg32: memref<32x10xf32, #tpu.memory_space<vmem>>, %arg33: memref<1x10xf32, #tpu.memory_space<vmem>>, %arg34: memref<128x10xf32, #tpu.memory_space<vmem>>, %arg35: memref<128x10xf32, #tpu.memory_space<vmem>>, %arg36: memref<128x10xf32, #tpu.memory_space<vmem>>) attributes {dimension_semantics = [], scalar_prefetch = 0 : i64, scratch_operands = 0 : i64, tpu.core_type = #tpu.core_type<tc>} {
    %c0 = arith.constant 0 : index
    %c0_0 = arith.constant 0 : index
    %0 = vector.load %arg4[%c0, %c0_0] : memref<128x16xf32, #tpu.memory_space<vmem>>, vector<128x16xf32>
    %c0_1 = arith.constant 0 : index
    %c0_2 = arith.constant 0 : index
    %1 = vector.load %arg5[%c0_1, %c0_2] : memref<128x16xf32, #tpu.memory_space<vmem>>, vector<128x16xf32>
    %c0_3 = arith.constant 0 : index
    %c0_4 = arith.constant 0 : index
    %2 = vector.load %arg0[%c0_3, %c0_4] : memref<16x64xf32, #tpu.memory_space<vmem>>, vector<16x64xf32>
    %c0_5 = arith.constant 0 : index
    %c0_6 = arith.constant 0 : index
    %3 = vector.load %arg11[%c0_5, %c0_6] : memref<64x98xf32, #tpu.memory_space<vmem>>, vector<64x98xf32>
    %cst = arith.constant dense<0.000000e+00> : vector<16x98xf32>
    %4 = tpu.matmul %2, %3, %cst {dimension_numbers = #tpu.dot_dimension_numbers<[1], [0], [0], [1], [0, 0, 1, 1], [], []>} : vector<16x64xf32>, vector<64x98xf32>, vector<16x98xf32> -> vector<16x98xf32>
    %c0_7 = arith.constant 0 : index
    %c0_8 = arith.constant 0 : index
    %5 = vector.load %arg12[%c0_7, %c0_8] : memref<1x98xf32, #tpu.memory_space<vmem>>, vector<1x98xf32>
    %6 = vector.broadcast %5 : vector<1x98xf32> to vector<16x98xf32>
    %7 = arith.addf %4, %6 : vector<16x98xf32>
    %cst_9 = arith.constant 0.000000e+00 : f32
    %8 = vector.broadcast %cst_9 : f32 to vector<16x98xf32>
    %9 = arith.maximumf %7, %8 : vector<16x98xf32>
    %10 = vector.extract_strided_slice %9 {offsets = [0, 0], sizes = [16, 33], strides = [1, 1]} : vector<16x98xf32> to vector<16x33xf32>
    %11 = vector.extract_strided_slice %9 {offsets = [0, 33], sizes = [16, 33], strides = [1, 1]} : vector<16x98xf32> to vector<16x33xf32>
    %12 = vector.extract_strided_slice %9 {offsets = [0, 66], sizes = [16, 32], strides = [1, 1]} : vector<16x98xf32> to vector<16x32xf32>
    %cst_10 = arith.constant dense<0.000000e+00> : vector<128x33xf32>
    %13 = tpu.matmul %1, %10, %cst_10 {dimension_numbers = #tpu.dot_dimension_numbers<[1], [0], [0], [1], [0, 0, 1, 1], [], []>} : vector<128x16xf32>, vector<16x33xf32>, vector<128x33xf32> -> vector<128x33xf32>
    %cst_11 = arith.constant dense<0.000000e+00> : vector<128x33xf32>
    %14 = tpu.matmul %0, %11, %cst_11 {dimension_numbers = #tpu.dot_dimension_numbers<[1], [0], [0], [1], [0, 0, 1, 1], [], []>} : vector<128x16xf32>, vector<16x33xf32>, vector<128x33xf32> -> vector<128x33xf32>
    %c0_12 = arith.constant 0 : index
    %c0_13 = arith.constant 0 : index
    %15 = vector.load %arg13[%c0_12, %c0_13] : memref<33x330xf32, #tpu.memory_space<vmem>>, vector<33x330xf32>
    %cst_14 = arith.constant dense<0.000000e+00> : vector<128x330xf32>
    %16 = tpu.matmul %14, %15, %cst_14 {dimension_numbers = #tpu.dot_dimension_numbers<[1], [0], [0], [1], [0, 0, 1, 1], [], []>} : vector<128x33xf32>, vector<33x330xf32>, vector<128x330xf32> -> vector<128x330xf32>
    %c0_15 = arith.constant 0 : index
    %c0_16 = arith.constant 0 : index
    %17 = vector.load %arg14[%c0_15, %c0_16] : memref<33x330xf32, #tpu.memory_space<vmem>>, vector<33x330xf32>
    %cst_17 = arith.constant dense<0.000000e+00> : vector<128x330xf32>
    %18 = tpu.matmul %13, %17, %cst_17 {dimension_numbers = #tpu.dot_dimension_numbers<[1], [0], [0], [1], [0, 0, 1, 1], [], []>} : vector<128x33xf32>, vector<33x330xf32>, vector<128x330xf32> -> vector<128x330xf32>
    %19 = arith.mulf %18, %16 : vector<128x330xf32>
    %c0_18 = arith.constant 0 : index
    %c0_19 = arith.constant 0 : index
    %20 = vector.load %arg15[%c0_18, %c0_19] : memref<330x10xf32, #tpu.memory_space<vmem>>, vector<330x10xf32>
    %cst_20 = arith.constant dense<0.000000e+00> : vector<128x10xf32>
    %21 = tpu.matmul %19, %20, %cst_20 {dimension_numbers = #tpu.dot_dimension_numbers<[1], [0], [0], [1], [0, 0, 1, 1], [], []>} : vector<128x330xf32>, vector<330x10xf32>, vector<128x10xf32> -> vector<128x10xf32>
    %c0_21 = arith.constant 0 : index
    %c0_22 = arith.constant 0 : index
    %22 = vector.load %arg1[%c0_21, %c0_22] : memref<128x10xf32, #tpu.memory_space<vmem>>, vector<128x10xf32>
    %23 = arith.addf %22, %21 : vector<128x10xf32>
    %c0_23 = arith.constant 0 : index
    %c0_24 = arith.constant 0 : index
    %24 = vector.load %arg34[%c0_23, %c0_24] : memref<128x10xf32, #tpu.memory_space<vmem>>, vector<128x10xf32>
    tpu.vector_store %arg34[%c0_23, %c0_24], %23 {strides = array<i32>} : memref<128x10xf32, #tpu.memory_space<vmem>>, vector<128x10xf32>,
    %c0_25 = arith.constant 0 : index
    %c0_26 = arith.constant 0 : index
    %25 = vector.load %arg35[%c0_25, %c0_26] : memref<128x10xf32, #tpu.memory_space<vmem>>, vector<128x10xf32>
    tpu.vector_store %arg35[%c0_25, %c0_26], %21 {strides = array<i32>} : memref<128x10xf32, #tpu.memory_space<vmem>>, vector<128x10xf32>,
    %c0_27 = arith.constant 0 : index
    %c0_28 = arith.constant 0 : index
    %26 = vector.load %arg2[%c0_27, %c0_28] : memref<128x1xf32, #tpu.memory_space<vmem>>, vector<128x1xf32>
    %c0_29 = arith.constant 0 : index
    %c0_30 = arith.constant 0 : index
    %27 = vector.load %arg3[%c0_29, %c0_30] : memref<128x1xf32, #tpu.memory_space<vmem>>, vector<128x1xf32>
    %cst_31 = arith.constant dense<0xFF800000> : vector<128xf32>
    %28 = vector.multi_reduction <maximumf>, %23, %cst_31 [1] : vector<128x10xf32> to vector<128xf32>
    %29 = vector.shape_cast %28 : vector<128xf32> to vector<128x1xf32>
    %30 = vector.broadcast %29 : vector<128x1xf32> to vector<128x10xf32>
    %31 = arith.subf %23, %30 : vector<128x10xf32>
    %32 = math.exp %31 : vector<128x10xf32>
    %cst_32 = arith.constant dense<0.000000e+00> : vector<128xf32>
    %33 = vector.multi_reduction <add>, %32, %cst_32 [1] : vector<128x10xf32> to vector<128xf32>
    %34 = vector.shape_cast %33 : vector<128xf32> to vector<128x1xf32>
    %35 = vector.broadcast %34 : vector<128x1xf32> to vector<128x10xf32>
    %36 = arith.divf %32, %35 : vector<128x10xf32>
    %37 = vector.broadcast %26 : vector<128x1xf32> to vector<128x10xf32>
    %38 = arith.mulf %36, %37 : vector<128x10xf32>
    %39 = vector.broadcast %27 : vector<128x1xf32> to vector<128x10xf32>
    %40 = arith.addf %39, %38 : vector<128x10xf32>
    %cst_33 = arith.constant dense<0xFF800000> : vector<128xf32>
    %41 = vector.multi_reduction <maximumf>, %21, %cst_33 [1] : vector<128x10xf32> to vector<128xf32>
    %42 = vector.shape_cast %41 : vector<128xf32> to vector<128x1xf32>
    %43 = vector.broadcast %42 : vector<128x1xf32> to vector<128x10xf32>
    %44 = arith.subf %21, %43 : vector<128x10xf32>
    %45 = math.exp %44 : vector<128x10xf32>
    %cst_34 = arith.constant dense<0.000000e+00> : vector<128xf32>
    %46 = vector.multi_reduction <add>, %45, %cst_34 [1] : vector<128x10xf32> to vector<128xf32>
    %47 = vector.shape_cast %46 : vector<128xf32> to vector<128x1xf32>
    %48 = vector.broadcast %47 : vector<128x1xf32> to vector<128x10xf32>
    %49 = arith.divf %45, %48 : vector<128x10xf32>
    %50 = vector.broadcast %26 : vector<128x1xf32> to vector<128x10xf32>
    %51 = arith.mulf %49, %50 : vector<128x10xf32>
    %52 = vector.broadcast %27 : vector<128x1xf32> to vector<128x10xf32>
    %53 = arith.addf %52, %51 : vector<128x10xf32>
    %cst_35 = arith.constant dense<0.000000e+00> : vector<128xf32>
    %54 = vector.multi_reduction <add>, %40, %cst_35 [1] : vector<128x10xf32> to vector<128xf32>
    %55 = vector.shape_cast %54 : vector<128xf32> to vector<128x1xf32>
    %cst_36 = arith.constant dense<0.000000e+00> : vector<128xf32>
    %56 = vector.multi_reduction <add>, %53, %cst_36 [1] : vector<128x10xf32> to vector<128xf32>
    %57 = vector.shape_cast %56 : vector<128xf32> to vector<128x1xf32>
    %58 = arith.addf %55, %57 : vector<128x1xf32>
    %cst_37 = arith.constant 0.000000e+00 : f32
    %59 = vector.broadcast %cst_37 : f32 to vector<128x1xf32>
    %60 = arith.cmpf oeq, %58, %59 : vector<128x1xf32>
    %cst_38 = arith.constant 1.000000e+00 : f32
    %cst_39 = arith.constant 0.000000e+00 : f32
    %61 = vector.broadcast %cst_38 : f32 to vector<128x1xf32>
    %62 = vector.broadcast %cst_39 : f32 to vector<128x1xf32>
    %63 = arith.select %60, %61, %62 : vector<128x1xi1>, vector<128x1xf32>
    %c0_40 = arith.constant 0 : index
    %c0_41 = arith.constant 0 : index
    %c0_42 = arith.constant 0 : index
    %64 = vector.load %arg20[%c0_40, %c0_41, %c0_42] : memref<2x10x128xf32, #tpu.memory_space<vmem>>, vector<1x10x128xf32>
    %65 = vector.shape_cast %64 : vector<1x10x128xf32> to vector<10x128xf32>
    %cst_43 = arith.constant dense<0.000000e+00> : vector<128x128xf32>
    %66 = tpu.matmul %40, %65, %cst_43 {dimension_numbers = #tpu.dot_dimension_numbers<[1], [0], [0], [1], [0, 0, 1, 1], [], []>} : vector<128x10xf32>, vector<10x128xf32>, vector<128x128xf32> -> vector<128x128xf32>
    %c1 = arith.constant 1 : index
    %c0_44 = arith.constant 0 : index
    %c0_45 = arith.constant 0 : index
    %67 = vector.load %arg20[%c1, %c0_44, %c0_45] : memref<2x10x128xf32, #tpu.memory_space<vmem>>, vector<1x10x128xf32>
    %68 = vector.shape_cast %67 : vector<1x10x128xf32> to vector<10x128xf32>
    %cst_46 = arith.constant dense<0.000000e+00> : vector<128x128xf32>
    %69 = tpu.matmul %53, %68, %cst_46 {dimension_numbers = #tpu.dot_dimension_numbers<[1], [0], [0], [1], [0, 0, 1, 1], [], []>} : vector<128x10xf32>, vector<10x128xf32>, vector<128x128xf32> -> vector<128x128xf32>
    %70 = arith.addf %66, %69 : vector<128x128xf32>
    %c0_47 = arith.constant 0 : index
    %c0_48 = arith.constant 0 : index
    %71 = vector.load %arg21[%c0_47, %c0_48] : memref<1x128xf32, #tpu.memory_space<vmem>>, vector<1x128xf32>
    %72 = vector.broadcast %71 : vector<1x128xf32> to vector<128x128xf32>
    %73 = arith.addf %70, %72 : vector<128x128xf32>
    %cst_49 = arith.constant 0.000000e+00 : f32
    %74 = vector.broadcast %cst_49 : f32 to vector<128x128xf32>
    %75 = arith.maximumf %73, %74 : vector<128x128xf32>
    %c0_50 = arith.constant 0 : index
    %c0_51 = arith.constant 0 : index
    %76 = vector.load %arg22[%c0_50, %c0_51] : memref<128x2xf32, #tpu.memory_space<vmem>>, vector<128x2xf32>
    %cst_52 = arith.constant dense<0.000000e+00> : vector<128x2xf32>
    %77 = tpu.matmul %75, %76, %cst_52 {dimension_numbers = #tpu.dot_dimension_numbers<[1], [0], [0], [1], [0, 0, 1, 1], [], []>} : vector<128x128xf32>, vector<128x2xf32>, vector<128x2xf32> -> vector<128x2xf32>
    %c0_53 = arith.constant 0 : index
    %c0_54 = arith.constant 0 : index
    %78 = vector.load %arg23[%c0_53, %c0_54] : memref<1x2xf32, #tpu.memory_space<vmem>>, vector<1x2xf32>
    %79 = vector.broadcast %78 : vector<1x2xf32> to vector<128x2xf32>
    %80 = arith.addf %77, %79 : vector<128x2xf32>
    %c0_55 = arith.constant 0 : index
    %c0_56 = arith.constant 0 : index
    %81 = vector.load %arg16[%c0_55, %c0_56] : memref<32x32xf32, #tpu.memory_space<vmem>>, vector<32x32xf32>
    %cst_57 = arith.constant dense<0.000000e+00> : vector<16x32xf32>
    %82 = tpu.matmul %12, %81, %cst_57 {dimension_numbers = #tpu.dot_dimension_numbers<[1], [0], [0], [1], [0, 0, 1, 1], [], []>} : vector<16x32xf32>, vector<32x32xf32>, vector<16x32xf32> -> vector<16x32xf32>
    %c0_58 = arith.constant 0 : index
    %c0_59 = arith.constant 0 : index
    %83 = vector.load %arg17[%c0_58, %c0_59] : memref<1x32xf32, #tpu.memory_space<vmem>>, vector<1x32xf32>
    %84 = vector.broadcast %83 : vector<1x32xf32> to vector<16x32xf32>
    %85 = arith.addf %82, %84 : vector<16x32xf32>
    %c0_60 = arith.constant 0 : index
    %c0_61 = arith.constant 0 : index
    %86 = vector.load %arg18[%c0_60, %c0_61] : memref<1x32xf32, #tpu.memory_space<vmem>>, vector<1x32xf32>
    %87 = vector.broadcast %86 : vector<1x32xf32> to vector<16x32xf32>
    %88 = arith.mulf %85, %87 : vector<16x32xf32>
    %c0_62 = arith.constant 0 : index
    %c0_63 = arith.constant 0 : index
    %89 = vector.load %arg10[%c0_62, %c0_63] : memref<32x2xf32, #tpu.memory_space<vmem>>, vector<32x2xf32>
    %cst_64 = arith.constant dense<0.000000e+00> : vector<16x2xf32>
    %90 = tpu.matmul %88, %89, %cst_64 {dimension_numbers = #tpu.dot_dimension_numbers<[1], [0], [0], [1], [0, 0, 1, 1], [], []>} : vector<16x32xf32>, vector<32x2xf32>, vector<16x2xf32> -> vector<16x2xf32>
    %c0_65 = arith.constant 0 : index
    %c0_66 = arith.constant 0 : index
    %91 = vector.load %arg19[%c0_65, %c0_66] : memref<1x32xf32, #tpu.memory_space<vmem>>, vector<1x32xf32>
    %92 = vector.broadcast %91 : vector<1x32xf32> to vector<16x32xf32>
    %93 = arith.mulf %85, %92 : vector<16x32xf32>
    %c0_67 = arith.constant 0 : index
    %c0_68 = arith.constant 0 : index
    %94 = vector.load %arg10[%c0_67, %c0_68] : memref<32x2xf32, #tpu.memory_space<vmem>>, vector<32x2xf32>
    %cst_69 = arith.constant dense<0.000000e+00> : vector<16x2xf32>
    %95 = tpu.matmul %93, %94, %cst_69 {dimension_numbers = #tpu.dot_dimension_numbers<[1], [0], [0], [1], [0, 0, 1, 1], [], []>} : vector<16x32xf32>, vector<32x2xf32>, vector<16x2xf32> -> vector<16x2xf32>
    %cst_70 = arith.constant dense<0.000000e+00> : vector<128x2xf32>
    %96 = tpu.matmul %0, %90, %cst_70 {dimension_numbers = #tpu.dot_dimension_numbers<[1], [0], [0], [1], [0, 0, 1, 1], [], []>} : vector<128x16xf32>, vector<16x2xf32>, vector<128x2xf32> -> vector<128x2xf32>
    %cst_71 = arith.constant dense<0.000000e+00> : vector<128x2xf32>
    %97 = tpu.matmul %1, %95, %cst_71 {dimension_numbers = #tpu.dot_dimension_numbers<[1], [0], [0], [1], [0, 0, 1, 1], [], []>} : vector<128x16xf32>, vector<16x2xf32>, vector<128x2xf32> -> vector<128x2xf32>
    %98 = arith.addf %96, %97 : vector<128x2xf32>
    %99 = arith.addf %98, %80 : vector<128x2xf32>
    %cst_72 = arith.constant 0.000000e+00 : f32
    %100 = vector.broadcast %cst_72 : f32 to vector<128x2xf32>
    %101 = arith.cmpf oge, %99, %100 : vector<128x2xf32>
    %cst_73 = arith.constant 0.00999999977 : f32
    %102 = vector.broadcast %cst_73 : f32 to vector<128x2xf32>
    %103 = arith.mulf %102, %99 : vector<128x2xf32>
    %104 = arith.select %101, %99, %103 : vector<128x2xi1>, vector<128x2xf32>
    %c0_74 = arith.constant 0 : index
    %c0_75 = arith.constant 0 : index
    %105 = vector.load %arg7[%c0_74, %c0_75] : memref<8x64xf32, #tpu.memory_space<vmem>>, vector<8x64xf32>
    %c0_76 = arith.constant 0 : index
    %c0_77 = arith.constant 0 : index
    %106 = vector.load %arg8[%c0_76, %c0_77] : memref<64x8xf32, #tpu.memory_space<vmem>>, vector<64x8xf32>
    %cst_78 = arith.constant 0.000000e+00 : f32
    %107 = vector.broadcast %cst_78 : f32 to vector<16x32xf32>
    %c0_79 = arith.constant 0 : index
    %c0_80 = arith.constant 0 : index
    %108 = vector.load %arg25[%c0_79, %c0_80] : memref<1x32xf32, #tpu.memory_space<vmem>>, vector<1x32xf32>
    %109 = vector.broadcast %108 : vector<1x32xf32> to vector<16x32xf32>
    %110 = arith.addf %107, %109 : vector<16x32xf32>
    %111 = vector.extract_strided_slice %63 {offsets = [0, 0], sizes = [64, 1], strides = [1, 1]} : vector<128x1xf32> to vector<64x1xf32>
    %112 = vector.broadcast %111 : vector<64x1xf32> to vector<64x8xf32>
    %113 = arith.mulf %112, %106 : vector<64x8xf32>
    %cst_81 = arith.constant dense<0.000000e+00> : vector<8x8xf32>
    %114 = tpu.matmul %105, %113, %cst_81 {dimension_numbers = #tpu.dot_dimension_numbers<[1], [0], [0], [1], [0, 0, 1, 1], [], []>} : vector<8x64xf32>, vector<64x8xf32>, vector<8x8xf32> -> vector<8x8xf32>
    %115 = vector.extract_strided_slice %104 {offsets = [0, 0], sizes = [64, 1], strides = [1, 1]} : vector<128x2xf32> to vector<64x1xf32>
    %116 = vector.broadcast %115 : vector<64x1xf32> to vector<64x8xf32>
    %117 = arith.mulf %116, %106 : vector<64x8xf32>
    %cst_82 = arith.constant dense<0.000000e+00> : vector<8x8xf32>
    %118 = tpu.matmul %105, %117, %cst_82 {dimension_numbers = #tpu.dot_dimension_numbers<[1], [0], [0], [1], [0, 0, 1, 1], [], []>} : vector<8x64xf32>, vector<64x8xf32>, vector<8x8xf32> -> vector<8x8xf32>
    %cst_83 = arith.constant 5.000000e-01 : f32
    %119 = vector.broadcast %cst_83 : f32 to vector<8x8xf32>
    %120 = arith.cmpf ogt, %114, %119 : vector<8x8xf32>
    %cst_84 = arith.constant -1.000000e+30 : f32
    %121 = vector.broadcast %cst_84 : f32 to vector<8x8xf32>
    %122 = arith.select %120, %121, %118 : vector<8x8xi1>, vector<8x8xf32>
    %cst_85 = arith.constant dense<0xFF800000> : vector<8xf32>
    %123 = vector.multi_reduction <maximumf>, %122, %cst_85 [1] : vector<8x8xf32> to vector<8xf32>
    %124 = vector.shape_cast %123 : vector<8xf32> to vector<8x1xf32>
    %125 = vector.broadcast %124 : vector<8x1xf32> to vector<8x8xf32>
    %126 = arith.subf %122, %125 : vector<8x8xf32>
    %127 = math.exp %126 : vector<8x8xf32>
    %cst_86 = arith.constant dense<0.000000e+00> : vector<8xf32>
    %128 = vector.multi_reduction <add>, %127, %cst_86 [1] : vector<8x8xf32> to vector<8xf32>
    %129 = vector.shape_cast %128 : vector<8xf32> to vector<8x1xf32>
    %130 = vector.broadcast %129 : vector<8x1xf32> to vector<8x8xf32>
    %131 = arith.divf %127, %130 : vector<8x8xf32>
    %132 = vector.extract_strided_slice %85 {offsets = [0, 0], sizes = [8, 16], strides = [1, 1]} : vector<16x32xf32> to vector<8x16xf32>
    %cst_87 = arith.constant dense<0.000000e+00> : vector<8x16xf32>
    %133 = tpu.matmul %131, %132, %cst_87 {dimension_numbers = #tpu.dot_dimension_numbers<[1], [0], [0], [1], [0, 0, 1, 1], [], []>} : vector<8x8xf32>, vector<8x16xf32>, vector<8x16xf32> -> vector<8x16xf32>
    %c0_88 = arith.constant 0 : index
    %c0_89 = arith.constant 0 : index
    %c0_90 = arith.constant 0 : index
    %134 = vector.load %arg9[%c0_88, %c0_89, %c0_90] : memref<2x16x8xf32, #tpu.memory_space<vmem>>, vector<1x16x8xf32>
    %135 = vector.shape_cast %134 : vector<1x16x8xf32> to vector<16x8xf32>
    %c0_91 = arith.constant 0 : index
    %c0_92 = arith.constant 0 : index
    %c0_93 = arith.constant 0 : index
    %136 = vector.load %arg24[%c0_91, %c0_92, %c0_93] : memref<2x16x32xf32, #tpu.memory_space<vmem>>, vector<1x16x32xf32>
    %137 = vector.shape_cast %136 : vector<1x16x32xf32> to vector<16x32xf32>
    %cst_94 = arith.constant dense<0.000000e+00> : vector<8x32xf32>
    %138 = tpu.matmul %133, %137, %cst_94 {dimension_numbers = #tpu.dot_dimension_numbers<[1], [0], [0], [1], [0, 0, 1, 1], [], []>} : vector<8x16xf32>, vector<16x32xf32>, vector<8x32xf32> -> vector<8x32xf32>
    %cst_95 = arith.constant dense<0.000000e+00> : vector<16x32xf32>
    %139 = tpu.matmul %135, %138, %cst_95 {dimension_numbers = #tpu.dot_dimension_numbers<[1], [0], [0], [1], [0, 0, 1, 1], [], []>} : vector<16x8xf32>, vector<8x32xf32>, vector<16x32xf32> -> vector<16x32xf32>
    %140 = arith.addf %110, %139 : vector<16x32xf32>
    %141 = vector.extract_strided_slice %104 {offsets = [0, 1], sizes = [64, 1], strides = [1, 1]} : vector<128x2xf32> to vector<64x1xf32>
    %142 = vector.broadcast %141 : vector<64x1xf32> to vector<64x8xf32>
    %143 = arith.mulf %142, %106 : vector<64x8xf32>
    %cst_96 = arith.constant dense<0.000000e+00> : vector<8x8xf32>
    %144 = tpu.matmul %105, %143, %cst_96 {dimension_numbers = #tpu.dot_dimension_numbers<[1], [0], [0], [1], [0, 0, 1, 1], [], []>} : vector<8x64xf32>, vector<64x8xf32>, vector<8x8xf32> -> vector<8x8xf32>
    %cst_97 = arith.constant 5.000000e-01 : f32
    %145 = vector.broadcast %cst_97 : f32 to vector<8x8xf32>
    %146 = arith.cmpf ogt, %114, %145 : vector<8x8xf32>
    %cst_98 = arith.constant -1.000000e+30 : f32
    %147 = vector.broadcast %cst_98 : f32 to vector<8x8xf32>
    %148 = arith.select %146, %147, %144 : vector<8x8xi1>, vector<8x8xf32>
    %cst_99 = arith.constant dense<0xFF800000> : vector<8xf32>
    %149 = vector.multi_reduction <maximumf>, %148, %cst_99 [1] : vector<8x8xf32> to vector<8xf32>
    %150 = vector.shape_cast %149 : vector<8xf32> to vector<8x1xf32>
    %151 = vector.broadcast %150 : vector<8x1xf32> to vector<8x8xf32>
    %152 = arith.subf %148, %151 : vector<8x8xf32>
    %153 = math.exp %152 : vector<8x8xf32>
    %cst_100 = arith.constant dense<0.000000e+00> : vector<8xf32>
    %154 = vector.multi_reduction <add>, %153, %cst_100 [1] : vector<8x8xf32> to vector<8xf32>
    %155 = vector.shape_cast %154 : vector<8xf32> to vector<8x1xf32>
    %156 = vector.broadcast %155 : vector<8x1xf32> to vector<8x8xf32>
    %157 = arith.divf %153, %156 : vector<8x8xf32>
    %158 = vector.extract_strided_slice %85 {offsets = [0, 16], sizes = [8, 16], strides = [1, 1]} : vector<16x32xf32> to vector<8x16xf32>
    %cst_101 = arith.constant dense<0.000000e+00> : vector<8x16xf32>
    %159 = tpu.matmul %157, %158, %cst_101 {dimension_numbers = #tpu.dot_dimension_numbers<[1], [0], [0], [1], [0, 0, 1, 1], [], []>} : vector<8x8xf32>, vector<8x16xf32>, vector<8x16xf32> -> vector<8x16xf32>
    %c0_102 = arith.constant 0 : index
    %c0_103 = arith.constant 0 : index
    %c0_104 = arith.constant 0 : index
    %160 = vector.load %arg9[%c0_102, %c0_103, %c0_104] : memref<2x16x8xf32, #tpu.memory_space<vmem>>, vector<1x16x8xf32>
    %161 = vector.shape_cast %160 : vector<1x16x8xf32> to vector<16x8xf32>
    %c1_105 = arith.constant 1 : index
    %c0_106 = arith.constant 0 : index
    %c0_107 = arith.constant 0 : index
    %162 = vector.load %arg24[%c1_105, %c0_106, %c0_107] : memref<2x16x32xf32, #tpu.memory_space<vmem>>, vector<1x16x32xf32>
    %163 = vector.shape_cast %162 : vector<1x16x32xf32> to vector<16x32xf32>
    %cst_108 = arith.constant dense<0.000000e+00> : vector<8x32xf32>
    %164 = tpu.matmul %159, %163, %cst_108 {dimension_numbers = #tpu.dot_dimension_numbers<[1], [0], [0], [1], [0, 0, 1, 1], [], []>} : vector<8x16xf32>, vector<16x32xf32>, vector<8x32xf32> -> vector<8x32xf32>
    %cst_109 = arith.constant dense<0.000000e+00> : vector<16x32xf32>
    %165 = tpu.matmul %161, %164, %cst_109 {dimension_numbers = #tpu.dot_dimension_numbers<[1], [0], [0], [1], [0, 0, 1, 1], [], []>} : vector<16x8xf32>, vector<8x32xf32>, vector<16x32xf32> -> vector<16x32xf32>
    %166 = arith.addf %140, %165 : vector<16x32xf32>
    %167 = vector.extract_strided_slice %63 {offsets = [64, 0], sizes = [64, 1], strides = [1, 1]} : vector<128x1xf32> to vector<64x1xf32>
    %168 = vector.broadcast %167 : vector<64x1xf32> to vector<64x8xf32>
    %169 = arith.mulf %168, %106 : vector<64x8xf32>
    %cst_110 = arith.constant dense<0.000000e+00> : vector<8x8xf32>
    %170 = tpu.matmul %105, %169, %cst_110 {dimension_numbers = #tpu.dot_dimension_numbers<[1], [0], [0], [1], [0, 0, 1, 1], [], []>} : vector<8x64xf32>, vector<64x8xf32>, vector<8x8xf32> -> vector<8x8xf32>
    %171 = vector.extract_strided_slice %104 {offsets = [64, 0], sizes = [64, 1], strides = [1, 1]} : vector<128x2xf32> to vector<64x1xf32>
    %172 = vector.broadcast %171 : vector<64x1xf32> to vector<64x8xf32>
    %173 = arith.mulf %172, %106 : vector<64x8xf32>
    %cst_111 = arith.constant dense<0.000000e+00> : vector<8x8xf32>
    %174 = tpu.matmul %105, %173, %cst_111 {dimension_numbers = #tpu.dot_dimension_numbers<[1], [0], [0], [1], [0, 0, 1, 1], [], []>} : vector<8x64xf32>, vector<64x8xf32>, vector<8x8xf32> -> vector<8x8xf32>
    %cst_112 = arith.constant 5.000000e-01 : f32
    %175 = vector.broadcast %cst_112 : f32 to vector<8x8xf32>
    %176 = arith.cmpf ogt, %170, %175 : vector<8x8xf32>
    %cst_113 = arith.constant -1.000000e+30 : f32
    %177 = vector.broadcast %cst_113 : f32 to vector<8x8xf32>
    %178 = arith.select %176, %177, %174 : vector<8x8xi1>, vector<8x8xf32>
    %cst_114 = arith.constant dense<0xFF800000> : vector<8xf32>
    %179 = vector.multi_reduction <maximumf>, %178, %cst_114 [1] : vector<8x8xf32> to vector<8xf32>
    %180 = vector.shape_cast %179 : vector<8xf32> to vector<8x1xf32>
    %181 = vector.broadcast %180 : vector<8x1xf32> to vector<8x8xf32>
    %182 = arith.subf %178, %181 : vector<8x8xf32>
    %183 = math.exp %182 : vector<8x8xf32>
    %cst_115 = arith.constant dense<0.000000e+00> : vector<8xf32>
    %184 = vector.multi_reduction <add>, %183, %cst_115 [1] : vector<8x8xf32> to vector<8xf32>
    %185 = vector.shape_cast %184 : vector<8xf32> to vector<8x1xf32>
    %186 = vector.broadcast %185 : vector<8x1xf32> to vector<8x8xf32>
    %187 = arith.divf %183, %186 : vector<8x8xf32>
    %188 = vector.extract_strided_slice %85 {offsets = [8, 0], sizes = [8, 16], strides = [1, 1]} : vector<16x32xf32> to vector<8x16xf32>
    %cst_116 = arith.constant dense<0.000000e+00> : vector<8x16xf32>
    %189 = tpu.matmul %187, %188, %cst_116 {dimension_numbers = #tpu.dot_dimension_numbers<[1], [0], [0], [1], [0, 0, 1, 1], [], []>} : vector<8x8xf32>, vector<8x16xf32>, vector<8x16xf32> -> vector<8x16xf32>
    %c1_117 = arith.constant 1 : index
    %c0_118 = arith.constant 0 : index
    %c0_119 = arith.constant 0 : index
    %190 = vector.load %arg9[%c1_117, %c0_118, %c0_119] : memref<2x16x8xf32, #tpu.memory_space<vmem>>, vector<1x16x8xf32>
    %191 = vector.shape_cast %190 : vector<1x16x8xf32> to vector<16x8xf32>
    %c0_120 = arith.constant 0 : index
    %c0_121 = arith.constant 0 : index
    %c0_122 = arith.constant 0 : index
    %192 = vector.load %arg24[%c0_120, %c0_121, %c0_122] : memref<2x16x32xf32, #tpu.memory_space<vmem>>, vector<1x16x32xf32>
    %193 = vector.shape_cast %192 : vector<1x16x32xf32> to vector<16x32xf32>
    %cst_123 = arith.constant dense<0.000000e+00> : vector<8x32xf32>
    %194 = tpu.matmul %189, %193, %cst_123 {dimension_numbers = #tpu.dot_dimension_numbers<[1], [0], [0], [1], [0, 0, 1, 1], [], []>} : vector<8x16xf32>, vector<16x32xf32>, vector<8x32xf32> -> vector<8x32xf32>
    %cst_124 = arith.constant dense<0.000000e+00> : vector<16x32xf32>
    %195 = tpu.matmul %191, %194, %cst_124 {dimension_numbers = #tpu.dot_dimension_numbers<[1], [0], [0], [1], [0, 0, 1, 1], [], []>} : vector<16x8xf32>, vector<8x32xf32>, vector<16x32xf32> -> vector<16x32xf32>
    %196 = arith.addf %166, %195 : vector<16x32xf32>
    %197 = vector.extract_strided_slice %104 {offsets = [64, 1], sizes = [64, 1], strides = [1, 1]} : vector<128x2xf32> to vector<64x1xf32>
    %198 = vector.broadcast %197 : vector<64x1xf32> to vector<64x8xf32>
    %199 = arith.mulf %198, %106 : vector<64x8xf32>
    %cst_125 = arith.constant dense<0.000000e+00> : vector<8x8xf32>
    %200 = tpu.matmul %105, %199, %cst_125 {dimension_numbers = #tpu.dot_dimension_numbers<[1], [0], [0], [1], [0, 0, 1, 1], [], []>} : vector<8x64xf32>, vector<64x8xf32>, vector<8x8xf32> -> vector<8x8xf32>
    %cst_126 = arith.constant 5.000000e-01 : f32
    %201 = vector.broadcast %cst_126 : f32 to vector<8x8xf32>
    %202 = arith.cmpf ogt, %170, %201 : vector<8x8xf32>
    %cst_127 = arith.constant -1.000000e+30 : f32
    %203 = vector.broadcast %cst_127 : f32 to vector<8x8xf32>
    %204 = arith.select %202, %203, %200 : vector<8x8xi1>, vector<8x8xf32>
    %cst_128 = arith.constant dense<0xFF800000> : vector<8xf32>
    %205 = vector.multi_reduction <maximumf>, %204, %cst_128 [1] : vector<8x8xf32> to vector<8xf32>
    %206 = vector.shape_cast %205 : vector<8xf32> to vector<8x1xf32>
    %207 = vector.broadcast %206 : vector<8x1xf32> to vector<8x8xf32>
    %208 = arith.subf %204, %207 : vector<8x8xf32>
    %209 = math.exp %208 : vector<8x8xf32>
    %cst_129 = arith.constant dense<0.000000e+00> : vector<8xf32>
    %210 = vector.multi_reduction <add>, %209, %cst_129 [1] : vector<8x8xf32> to vector<8xf32>
    %211 = vector.shape_cast %210 : vector<8xf32> to vector<8x1xf32>
    %212 = vector.broadcast %211 : vector<8x1xf32> to vector<8x8xf32>
    %213 = arith.divf %209, %212 : vector<8x8xf32>
    %214 = vector.extract_strided_slice %85 {offsets = [8, 16], sizes = [8, 16], strides = [1, 1]} : vector<16x32xf32> to vector<8x16xf32>
    %cst_130 = arith.constant dense<0.000000e+00> : vector<8x16xf32>
    %215 = tpu.matmul %213, %214, %cst_130 {dimension_numbers = #tpu.dot_dimension_numbers<[1], [0], [0], [1], [0, 0, 1, 1], [], []>} : vector<8x8xf32>, vector<8x16xf32>, vector<8x16xf32> -> vector<8x16xf32>
    %c1_131 = arith.constant 1 : index
    %c0_132 = arith.constant 0 : index
    %c0_133 = arith.constant 0 : index
    %216 = vector.load %arg9[%c1_131, %c0_132, %c0_133] : memref<2x16x8xf32, #tpu.memory_space<vmem>>, vector<1x16x8xf32>
    %217 = vector.shape_cast %216 : vector<1x16x8xf32> to vector<16x8xf32>
    %c1_134 = arith.constant 1 : index
    %c0_135 = arith.constant 0 : index
    %c0_136 = arith.constant 0 : index
    %218 = vector.load %arg24[%c1_134, %c0_135, %c0_136] : memref<2x16x32xf32, #tpu.memory_space<vmem>>, vector<1x16x32xf32>
    %219 = vector.shape_cast %218 : vector<1x16x32xf32> to vector<16x32xf32>
    %cst_137 = arith.constant dense<0.000000e+00> : vector<8x32xf32>
    %220 = tpu.matmul %215, %219, %cst_137 {dimension_numbers = #tpu.dot_dimension_numbers<[1], [0], [0], [1], [0, 0, 1, 1], [], []>} : vector<8x16xf32>, vector<16x32xf32>, vector<8x32xf32> -> vector<8x32xf32>
    %cst_138 = arith.constant dense<0.000000e+00> : vector<16x32xf32>
    %221 = tpu.matmul %217, %220, %cst_138 {dimension_numbers = #tpu.dot_dimension_numbers<[1], [0], [0], [1], [0, 0, 1, 1], [], []>} : vector<16x8xf32>, vector<8x32xf32>, vector<16x32xf32> -> vector<16x32xf32>
    %222 = arith.addf %196, %221 : vector<16x32xf32>
    %cst_139 = arith.constant dense<0.000000e+00> : vector<16xf32>
    %223 = vector.multi_reduction <add>, %222, %cst_139 [1] : vector<16x32xf32> to vector<16xf32>
    %224 = vector.shape_cast %223 : vector<16xf32> to vector<16x1xf32>
    %cst_140 = arith.constant 3.200000e+01 : f32
    %225 = vector.broadcast %cst_140 : f32 to vector<16x1xf32>
    %226 = arith.divf %224, %225 : vector<16x1xf32>
    %227 = vector.broadcast %226 : vector<16x1xf32> to vector<16x32xf32>
    %228 = arith.subf %222, %227 : vector<16x32xf32>
    %229 = arith.mulf %228, %228 : vector<16x32xf32>
    %cst_141 = arith.constant dense<0.000000e+00> : vector<16xf32>
    %230 = vector.multi_reduction <add>, %229, %cst_141 [1] : vector<16x32xf32> to vector<16xf32>
    %231 = vector.shape_cast %230 : vector<16xf32> to vector<16x1xf32>
    %cst_142 = arith.constant 3.100000e+01 : f32
    %232 = vector.broadcast %cst_142 : f32 to vector<16x1xf32>
    %233 = arith.divf %231, %232 : vector<16x1xf32>
    %234 = math.sqrt %233 : vector<16x1xf32>
    %c0_143 = arith.constant 0 : index
    %c0_144 = arith.constant 0 : index
    %235 = vector.load %arg26[%c0_143, %c0_144] : memref<1x32xf32, #tpu.memory_space<vmem>>, vector<1x32xf32>
    %236 = vector.broadcast %226 : vector<16x1xf32> to vector<16x32xf32>
    %237 = arith.subf %222, %236 : vector<16x32xf32>
    %238 = vector.broadcast %235 : vector<1x32xf32> to vector<16x32xf32>
    %239 = arith.mulf %238, %237 : vector<16x32xf32>
    %cst_145 = arith.constant 9.99999997E-7 : f32
    %240 = vector.broadcast %cst_145 : f32 to vector<16x1xf32>
    %241 = arith.addf %234, %240 : vector<16x1xf32>
    %242 = vector.broadcast %241 : vector<16x1xf32> to vector<16x32xf32>
    %243 = arith.divf %239, %242 : vector<16x32xf32>
    %c0_146 = arith.constant 0 : index
    %c0_147 = arith.constant 0 : index
    %244 = vector.load %arg27[%c0_146, %c0_147] : memref<1x32xf32, #tpu.memory_space<vmem>>, vector<1x32xf32>
    %245 = vector.broadcast %244 : vector<1x32xf32> to vector<16x32xf32>
    %246 = arith.addf %243, %245 : vector<16x32xf32>
    %cst_148 = arith.constant 0.000000e+00 : f32
    %247 = vector.broadcast %cst_148 : f32 to vector<16x32xf32>
    %248 = arith.maximumf %246, %247 : vector<16x32xf32>
    %c0_149 = arith.constant 0 : index
    %c0_150 = arith.constant 0 : index
    %249 = vector.load %arg6[%c0_149, %c0_150] : memref<16x128xf32, #tpu.memory_space<vmem>>, vector<16x128xf32>
    %cst_151 = arith.constant dense<0.000000e+00> : vector<16x10xf32>
    %250 = tpu.matmul %249, %23, %cst_151 {dimension_numbers = #tpu.dot_dimension_numbers<[1], [0], [0], [1], [0, 0, 1, 1], [], []>} : vector<16x128xf32>, vector<128x10xf32>, vector<16x10xf32> -> vector<16x10xf32>
    %cst_152 = arith.constant dense<0.000000e+00> : vector<16x10xf32>
    %251 = tpu.matmul %249, %21, %cst_152 {dimension_numbers = #tpu.dot_dimension_numbers<[1], [0], [0], [1], [0, 0, 1, 1], [], []>} : vector<16x128xf32>, vector<128x10xf32>, vector<16x10xf32> -> vector<16x10xf32>
    %c0_153 = arith.constant 0 : index
    %c0_154 = arith.constant 0 : index
    %c0_155 = arith.constant 0 : index
    %252 = vector.load %arg29[%c0_153, %c0_154, %c0_155] : memref<2x10x10xf32, #tpu.memory_space<vmem>>, vector<1x10x10xf32>
    %253 = vector.shape_cast %252 : vector<1x10x10xf32> to vector<10x10xf32>
    %cst_156 = arith.constant dense<0.000000e+00> : vector<16x10xf32>
    %254 = tpu.matmul %250, %253, %cst_156 {dimension_numbers = #tpu.dot_dimension_numbers<[1], [0], [0], [1], [0, 0, 1, 1], [], []>} : vector<16x10xf32>, vector<10x10xf32>, vector<16x10xf32> -> vector<16x10xf32>
    %c1_157 = arith.constant 1 : index
    %c0_158 = arith.constant 0 : index
    %c0_159 = arith.constant 0 : index
    %255 = vector.load %arg29[%c1_157, %c0_158, %c0_159] : memref<2x10x10xf32, #tpu.memory_space<vmem>>, vector<1x10x10xf32>
    %256 = vector.shape_cast %255 : vector<1x10x10xf32> to vector<10x10xf32>
    %cst_160 = arith.constant dense<0.000000e+00> : vector<16x10xf32>
    %257 = tpu.matmul %251, %256, %cst_160 {dimension_numbers = #tpu.dot_dimension_numbers<[1], [0], [0], [1], [0, 0, 1, 1], [], []>} : vector<16x10xf32>, vector<10x10xf32>, vector<16x10xf32> -> vector<16x10xf32>
    %258 = arith.addf %254, %257 : vector<16x10xf32>
    %c0_161 = arith.constant 0 : index
    %c0_162 = arith.constant 0 : index
    %259 = vector.load %arg31[%c0_161, %c0_162] : memref<32x10xf32, #tpu.memory_space<vmem>>, vector<32x10xf32>
    %cst_163 = arith.constant dense<0.000000e+00> : vector<16x10xf32>
    %260 = tpu.matmul %248, %259, %cst_163 {dimension_numbers = #tpu.dot_dimension_numbers<[1], [0], [0], [1], [0, 0, 1, 1], [], []>} : vector<16x32xf32>, vector<32x10xf32>, vector<16x10xf32> -> vector<16x10xf32>
    %261 = arith.addf %258, %260 : vector<16x10xf32>
    %c0_164 = arith.constant 0 : index
    %c0_165 = arith.constant 0 : index
    %c0_166 = arith.constant 0 : index
    %262 = vector.load %arg30[%c0_164, %c0_165, %c0_166] : memref<2x10x10xf32, #tpu.memory_space<vmem>>, vector<1x10x10xf32>
    %263 = vector.shape_cast %262 : vector<1x10x10xf32> to vector<10x10xf32>
    %cst_167 = arith.constant dense<0.000000e+00> : vector<16x10xf32>
    %264 = tpu.matmul %250, %263, %cst_167 {dimension_numbers = #tpu.dot_dimension_numbers<[1], [0], [0], [1], [0, 0, 1, 1], [], []>} : vector<16x10xf32>, vector<10x10xf32>, vector<16x10xf32> -> vector<16x10xf32>
    %c1_168 = arith.constant 1 : index
    %c0_169 = arith.constant 0 : index
    %c0_170 = arith.constant 0 : index
    %265 = vector.load %arg30[%c1_168, %c0_169, %c0_170] : memref<2x10x10xf32, #tpu.memory_space<vmem>>, vector<1x10x10xf32>
    %266 = vector.shape_cast %265 : vector<1x10x10xf32> to vector<10x10xf32>
    %cst_171 = arith.constant dense<0.000000e+00> : vector<16x10xf32>
    %267 = tpu.matmul %251, %266, %cst_171 {dimension_numbers = #tpu.dot_dimension_numbers<[1], [0], [0], [1], [0, 0, 1, 1], [], []>} : vector<16x10xf32>, vector<10x10xf32>, vector<16x10xf32> -> vector<16x10xf32>
    %268 = arith.addf %264, %267 : vector<16x10xf32>
    %c0_172 = arith.constant 0 : index
    %c0_173 = arith.constant 0 : index
    %269 = vector.load %arg32[%c0_172, %c0_173] : memref<32x10xf32, #tpu.memory_space<vmem>>, vector<32x10xf32>
    %cst_174 = arith.constant dense<0.000000e+00> : vector<16x10xf32>
    %270 = tpu.matmul %248, %269, %cst_174 {dimension_numbers = #tpu.dot_dimension_numbers<[1], [0], [0], [1], [0, 0, 1, 1], [], []>} : vector<16x32xf32>, vector<32x10xf32>, vector<16x10xf32> -> vector<16x10xf32>
    %271 = arith.addf %268, %270 : vector<16x10xf32>
    %c0_175 = arith.constant 0 : index
    %c0_176 = arith.constant 0 : index
    %c0_177 = arith.constant 0 : index
    %272 = vector.load %arg28[%c0_175, %c0_176, %c0_177] : memref<2x10x10xf32, #tpu.memory_space<vmem>>, vector<1x10x10xf32>
    %273 = vector.shape_cast %272 : vector<1x10x10xf32> to vector<10x10xf32>
    %cst_178 = arith.constant dense<0.000000e+00> : vector<128x10xf32>
    %274 = tpu.matmul %23, %273, %cst_178 {dimension_numbers = #tpu.dot_dimension_numbers<[1], [0], [0], [1], [0, 0, 1, 1], [], []>} : vector<128x10xf32>, vector<10x10xf32>, vector<128x10xf32> -> vector<128x10xf32>
    %c1_179 = arith.constant 1 : index
    %c0_180 = arith.constant 0 : index
    %c0_181 = arith.constant 0 : index
    %275 = vector.load %arg28[%c1_179, %c0_180, %c0_181] : memref<2x10x10xf32, #tpu.memory_space<vmem>>, vector<1x10x10xf32>
    %276 = vector.shape_cast %275 : vector<1x10x10xf32> to vector<10x10xf32>
    %cst_182 = arith.constant dense<0.000000e+00> : vector<128x10xf32>
    %277 = tpu.matmul %21, %276, %cst_182 {dimension_numbers = #tpu.dot_dimension_numbers<[1], [0], [0], [1], [0, 0, 1, 1], [], []>} : vector<128x10xf32>, vector<10x10xf32>, vector<128x10xf32> -> vector<128x10xf32>
    %278 = arith.addf %274, %277 : vector<128x10xf32>
    %cst_183 = arith.constant dense<0.000000e+00> : vector<128x10xf32>
    %279 = tpu.matmul %1, %261, %cst_183 {dimension_numbers = #tpu.dot_dimension_numbers<[1], [0], [0], [1], [0, 0, 1, 1], [], []>} : vector<128x16xf32>, vector<16x10xf32>, vector<128x10xf32> -> vector<128x10xf32>
    %280 = arith.addf %278, %279 : vector<128x10xf32>
    %cst_184 = arith.constant dense<0.000000e+00> : vector<128x10xf32>
    %281 = tpu.matmul %0, %271, %cst_184 {dimension_numbers = #tpu.dot_dimension_numbers<[1], [0], [0], [1], [0, 0, 1, 1], [], []>} : vector<128x16xf32>, vector<16x10xf32>, vector<128x10xf32> -> vector<128x10xf32>
    %282 = arith.addf %280, %281 : vector<128x10xf32>
    %c0_185 = arith.constant 0 : index
    %c0_186 = arith.constant 0 : index
    %283 = vector.load %arg33[%c0_185, %c0_186] : memref<1x10xf32, #tpu.memory_space<vmem>>, vector<1x10xf32>
    %284 = vector.broadcast %283 : vector<1x10xf32> to vector<128x10xf32>
    %285 = arith.addf %282, %284 : vector<128x10xf32>
    %c0_187 = arith.constant 0 : index
    %c0_188 = arith.constant 0 : index
    %286 = vector.load %arg36[%c0_187, %c0_188] : memref<128x10xf32, #tpu.memory_space<vmem>>, vector<128x10xf32>
    tpu.vector_store %arg36[%c0_187, %c0_188], %285 {strides = array<i32>} : memref<128x10xf32, #tpu.memory_space<vmem>>, vector<128x10xf32>,
    return
  }
}

</mosaic_0001>

<llo_original>
// kernel: mul.4
$region0: #{mul.4}
  #allocation0 [shape = 's32[1]{0}', space=sflag, size = 0x4, scoped, tag = 'scoped memory for mul.4']
  %s0 = inlined_call_operand.vmem [shape: f32[128,1], index: 0, kind: input, shape index: {}]
  %s1 = inlined_call_operand.vmem [shape: f32[128,1], index: 1, kind: input, shape index: {}]
  %s2 = inlined_call_operand.vmem [shape: f32[128,1], index: 2, kind: output, shape index: {}]
  %v3 = vld [vmem:[%s0] sm:$0x1]
  %v4 = vld [vmem:[%s1] sm:$0x1]
  %5 = xla_tuple %v3, %v4
  %6 = xla_tuple %5
  %v7 = vmul.f32 %v3, %v4
  %8 = xla_tuple %v7
  %9 = vst [vmem:[%s2] sm:$0x1] %v7

// kernel: emcgcn_forward.2
$region0: #{emcgcn_forward.2}
  #allocation0 [shape = 'u32[]', space=smem, size = 0x4, offset = 0x4, fixed_abs, tag = 'smem constant byte address 0x4 - core index']
  #allocation1 [shape = 'u32[72,128]{1,0:T(1,128)}', space=vmem, size = 0x9000, scoped, tag = 'internal scratch']
  %s0 = inlined_call_operand.vmem [shape: f32[8,2,32], index: 0, kind: input, shape index: {}]
  %s1 = inlined_call_operand.vmem [shape: f32[32,128], index: 1, kind: input, shape index: {}]
  %s2 = inlined_call_operand.vmem [shape: f32[32,128], index: 2, kind: input, shape index: {}]
  %s3 = inlined_call_operand.vmem [shape: f32[1,128], index: 3, kind: input, shape index: {}]
  %s4 = inlined_call_operand.vmem [shape: f32[32,128], index: 4, kind: input, shape index: {}]
  %s5 = inlined_call_operand.vmem [shape: f32[32,128], index: 5, kind: input, shape index: {}]
  %s6 = inlined_call_operand.vmem [shape: f32[1,128], index: 6, kind: input, shape index: {}]
  %s7 = inlined_call_operand.vmem [shape: f32[8,2,32], index: 7, kind: output, shape index: {0}]
  %s8 = inlined_call_operand.vmem [shape: f32[8,2,32], index: 8, kind: output, shape index: {1}]
  %9 = xla_tuple %s7, %s8
  %s10 = sld [smem:[#allocation0]]
  $region46: #{emcgcn_forward.2} parent=0
    _
  %s12 = ssub.s32 1, %s10
  %s13 = scalar_select 0, %s12, %s10
  // Predicated region
  $region2: #{emcgcn_forward.2} parent=0 // pred_check
    _
  $region3: #{emcgcn_forward.2} parent=0 // pred_check_branch
    %15 = sbr.rel (0) target = $region5
  $region4: #{emcgcn_forward.2} parent=0 // pred_region
    _
  $region5: #{emcgcn_forward.2} parent=0 // pred_fallthru
    _
  // Predicated region
  $region6: #{emcgcn_forward.2} parent=0 // pred_check
    _
  $region7: #{emcgcn_forward.2} parent=0 // pred_check_branch
    %17 = sbr.rel (0) target = $region9
  $region8: #{emcgcn_forward.2} parent=0 // pred_region
    _
  $region9: #{emcgcn_forward.2} parent=0 // pred_fallthru
    _
  // Predicated region
  $region10: #{emcgcn_forward.2} parent=0 // pred_check
    _
  $region11: #{emcgcn_forward.2} parent=0 // pred_check_branch
    %19 = sbr.rel (0) target = $region13
  $region12: #{emcgcn_forward.2} parent=0 // pred_region
    _
  $region13: #{emcgcn_forward.2} parent=0 // pred_fallthru
    _
  // Predicated region
  $region14: #{emcgcn_forward.2} parent=0 // pred_check
    _
  $region15: #{emcgcn_forward.2} parent=0 // pred_check_branch
    %21 = sbr.rel (0) target = $region17
  $region16: #{emcgcn_forward.2} parent=0 // pred_region
    _
  $region17: #{emcgcn_forward.2} parent=0 // pred_fallthru
    _
  // Predicated region
  $region18: #{emcgcn_forward.2} parent=0 // pred_check
    _
  $region19: #{emcgcn_forward.2} parent=0 // pred_check_branch
    %23 = sbr.rel (0) target = $region21
  $region20: #{emcgcn_forward.2} parent=0 // pred_region
    _
  $region21: #{emcgcn_forward.2} parent=0 // pred_fallthru
    _
  // Predicated region
  $region22: #{emcgcn_forward.2} parent=0 // pred_check
    _
  $region23: #{emcgcn_forward.2} parent=0 // pred_check_branch
    %25 = sbr.rel (0) target = $region25
  $region24: #{emcgcn_forward.2} parent=0 // pred_region
    _
  $region25: #{emcgcn_forward.2} parent=0 // pred_fallthru
    _
  // Predicated region
  $region26: #{emcgcn_forward.2} parent=0 // pred_check
    _
  $region27: #{emcgcn_forward.2} parent=0 // pred_check_branch
    %27 = sbr.rel (0) target = $region29
  $region28: #{emcgcn_forward.2} parent=0 // pred_region
    _
  $region29: #{emcgcn_forward.2} parent=0 // pred_fallthru
    _
  %v28 = vld [vmem:[%s1] sm:$0xff]
  %v29 = vld [vmem:[%s1 + $0x8] sm:$0xff]
  %v30 = vld [vmem:[%s1 + $0x10] sm:$0xff]
  %v31 = vld [vmem:[%s1 + $0x18] sm:$0xff]
  %v32 = vld [vmem:[%s2] sm:$0xff]
  %v33 = vld [vmem:[%s2 + $0x8] sm:$0xff]
  %v34 = vld [vmem:[%s2 + $0x10] sm:$0xff]
  %v35 = vld [vmem:[%s2 + $0x18] sm:$0xff]
  %v36 = vld [vmem:[%s3] sm:$0x1]
  %v37 = vld [vmem:[%s0] sm:$0x3]
  %vm38 = vcmask 261120
  %v40 = vsel %vm38, 0.0, 0
  %42 = vmatpush.msra.mxu0 0.0
  %43 = vmatpush.msra.mxu0 0.0
  %44 = vmatpush.msra.mxu0 0.0
  %45 = vmatpush.msra.mxu0 0.0
  %46 = vmatpush.msra.mxu0 0.0
  %47 = vmatpush.msra.mxu0 0.0
  %48 = vmatpush.msra.mxu0 0.0
  %49 = vmatpush.msra.mxu0 0.0
  %50 = vmatpush.msra.mxu0 0.0
  %51 = vmatpush.msra.mxu0 0.0
  %52 = vmatpush.msra.mxu0 0.0
  %53 = vmatpush.msra.mxu0 0.0
  %54 = vmatpush.msra.mxu0 %v35
  %55 = vmatpush.msra.mxu0 %v34
  %56 = vmatpush.msra.mxu0 %v33
  %57 = vmatpush.msra.mxu0 %v32
  %58 = vmatmul.f32.gmra.mxu0 %v40
  %v59 = vpop.f32.mrf.mxu0
  %v60 = vadd.f32 0.0, %v59
  %61 = vdwg.mxu0
  %v63 = vsel %vm38, %v37, 0
  %65 = vmatpush.msra.mxu0 0.0
  %66 = vmatpush.msra.mxu0 0.0
  %67 = vmatpush.msra.mxu0 0.0
  %68 = vmatpush.msra.mxu0 0.0
  %69 = vmatpush.msra.mxu0 0.0
  %70 = vmatpush.msra.mxu0 0.0
  %71 = vmatpush.msra.mxu0 0.0
  %72 = vmatpush.msra.mxu0 0.0
  %73 = vmatpush.msra.mxu0 0.0
  %74 = vmatpush.msra.mxu0 0.0
  %75 = vmatpush.msra.mxu0 0.0
  %76 = vmatpush.msra.mxu0 0.0
  %77 = vmatpush.msra.mxu0 %v31
  %78 = vmatpush.msra.mxu0 %v30
  %79 = vmatpush.msra.mxu0 %v29
  %80 = vmatpush.msra.mxu0 %v28
  %81 = vmatmul.f32.gmra.mxu0 %v63
  %v82 = vpop.f32.mrf.mxu0
  %v83 = vadd.f32 %v60, %v82
  %84 = vdwg.mxu0
  %v86 = vperm.slane %v36, 0
  %v88 = vadd.f32 %v83, %v86
  %v89 = vxor.u32 %v88, 2147483648
  %v90 = vmul.f32 %v89, 1.442695
  %v91 = vpow.pop %v90
  %v92 = vadd.f32 %v91, 1.0
  %v93 = vrcp.pop %v92
  %v94 = vmul.f32 %v92, %v93
  %v95 = vsub.f32 1.0, %v94
  %v96 = vmul.f32 %v93, %v95
  %v97 = vadd.f32 %v93, %v96
  %vm98 = vweird.f32 %v92
  %vm99 = vweird.f32 %v93
  %vm100 = vmor %vm98, %vm99
  %v101 = vsel %vm100, %v93, %v97
  %v102 = vand.u32 2147483647, %v92
  %vm103 = vcmp.eq.f32.partialorder %v102, 8.507059e+37
  %v104 = vand.u32 %v92, 2147483648
  %v105 = vor.u32 1.1754944e-38, %v104
  %v106 = vsel %vm103, %v105, %v101
  %v107 = vmul.f32 1.0, %v106
  %v108 = vtanh.pop %v88
  %v109 = vmul.f32 %v107, 0.0
  %111 = vrot.lane.b32.xlu0 %v108, 64
  %v112 = vpop.permute.xlu0 %111
  %v114 = vmul.f32 %v107, %v112
  %116 = vrot.lane.b32.xlu0 %v114, 32
  %v117 = vpop.permute.xlu0 %116
  %v119 = vadd.f32 %v109, %v117
  %v120 = vtanh.pop %v119
  %122 = vrot.lane.b32.xlu0 %v120, 64
  %v123 = vpop.permute.xlu0 %122
  %v125 = vmul.f32 %v107, %v123
  %127 = vrot.lane.b32.xlu0 %v125, 32
  %v128 = vpop.permute.xlu0 %127
  %vm130 = vcmask 254976
  %131 = vst.msk [vmem:[%s7] sm:$0x3] %vm130, %v128
  %s132 = scalar_lea.vmem %s0, 2
  %v133 = vld [vmem:[%s132] sm:$0x3]
  %v134 = vsel %vm38, %v128, 0
  %136 = vmatpush.msra.mxu0 0.0
  %137 = vmatpush.msra.mxu0 0.0
  %138 = vmatpush.msra.mxu0 0.0
  %139 = vmatpush.msra.mxu0 0.0
  %140 = vmatpush.msra.mxu0 0.0
  %141 = vmatpush.msra.mxu0 0.0
  %142 = vmatpush.msra.mxu0 0.0
  %143 = vmatpush.msra.mxu0 0.0
  %144 = vmatpush.msra.mxu0 0.0
  %145 = vmatpush.msra.mxu0 0.0
  %146 = vmatpush.msra.mxu0 0.0
  %147 = vmatpush.msra.mxu0 0.0
  %148 = vmatpush.msra.mxu0 %v35
  %149 = vmatpush.msra.mxu0 %v34
  %150 = vmatpush.msra.mxu0 %v33
  %151 = vmatpush.msra.mxu0 %v32
  %152 = vmatmul.f32.gmra.mxu0 %v134
  %v153 = vpop.f32.mrf.mxu0
  %v154 = vadd.f32 0.0, %v153
  %155 = vdwg.mxu0
  %v157 = vsel %vm38, %v133, 0
  %159 = vmatpush.msra.mxu0 0.0
  %160 = vmatpush.msra.mxu0 0.0
  %161 = vmatpush.msra.mxu0 0.0
  %162 = vmatpush.msra.mxu0 0.0
  %163 = vmatpush.msra.mxu0 0.0
  %164 = vmatpush.msra.mxu0 0.0
  %165 = vmatpush.msra.mxu0 0.0
  %166 = vmatpush.msra.mxu0 0.0
  %167 = vmatpush.msra.mxu0 0.0
  %168 = vmatpush.msra.mxu0 0.0
  %169 = vmatpush.msra.mxu0 0.0
  %170 = vmatpush.msra.mxu0 0.0
  %171 = vmatpush.msra.mxu0 %v31
  %172 = vmatpush.msra.mxu0 %v30
  %173 = vmatpush.msra.mxu0 %v29
  %174 = vmatpush.msra.mxu0 %v28
  %175 = vmatmul.f32.gmra.mxu0 %v157
  %v176 = vpop.f32.mrf.mxu0
  %v177 = vadd.f32 %v154, %v176
  %178 = vdwg.mxu0
  %v179 = vadd.f32 %v177, %v86
  %v180 = vxor.u32 %v179, 2147483648
  %v181 = vmul.f32 %v180, 1.442695
  %v182 = vpow.pop %v181
  %v183 = vadd.f32 %v182, 1.0
  %v184 = vrcp.pop %v183
  %v185 = vmul.f32 %v183, %v184
  %v186 = vsub.f32 1.0, %v185
  %v187 = vmul.f32 %v184, %v186
  %v188 = vadd.f32 %v184, %v187
  %vm189 = vweird.f32 %v183
  %vm190 = vweird.f32 %v184
  %vm191 = vmor %vm189, %vm190
  %v192 = vsel %vm191, %v184, %v188
  %v193 = vand.u32 2147483647, %v183
  %vm194 = vcmp.eq.f32.partialorder %v193, 8.507059e+37
  %v195 = vand.u32 %v183, 2147483648
  %v196 = vor.u32 1.1754944e-38, %v195
  %v197 = vsel %vm194, %v196, %v192
  %v198 = vmul.f32 1.0, %v197
  %v199 = vtanh.pop %v179
  %v200 = vmul.f32 %v198, %v119
  %202 = vrot.lane.b32.xlu0 %v199, 64
  %v203 = vpop.permute.xlu0 %202
  %v205 = vmul.f32 %v198, %v203
  %207 = vrot.lane.b32.xlu0 %v205, 32
  %v208 = vpop.permute.xlu0 %207
  %v210 = vadd.f32 %v200, %v208
  %v211 = vtanh.pop %v210
  %213 = vrot.lane.b32.xlu0 %v211, 64
  %v214 = vpop.permute.xlu0 %213
  %v216 = vmul.f32 %v198, %v214
  %218 = vrot.lane.b32.xlu0 %v216, 32
  %v219 = vpop.permute.xlu0 %218
  %s221 = scalar_lea.vmem %s7, 2
  %222 = vst.msk [vmem:[%s221] sm:$0x3] %vm130, %v219
  %s223 = scalar_lea.vmem %s0, 4
  %v224 = vld [vmem:[%s223] sm:$0x3]
  %v225 = vsel %vm38, %v219, 0
  %227 = vmatpush.msra.mxu0 0.0
  %228 = vmatpush.msra.mxu0 0.0
  %229 = vmatpush.msra.mxu0 0.0
  %230 = vmatpush.msra.mxu0 0.0
  %231 = vmatpush.msra.mxu0 0.0
  %232 = vmatpush.msra.mxu0 0.0
  %233 = vmatpush.msra.mxu0 0.0
  %234 = vmatpush.msra.mxu0 0.0
  %235 = vmatpush.msra.mxu0 0.0
  %236 = vmatpush.msra.mxu0 0.0
  %237 = vmatpush.msra.mxu0 0.0
  %238 = vmatpush.msra.mxu0 0.0
  %239 = vmatpush.msra.mxu0 %v35
  %240 = vmatpush.msra.mxu0 %v34
  %241 = vmatpush.msra.mxu0 %v33
  %242 = vmatpush.msra.mxu0 %v32
  %243 = vmatmul.f32.gmra.mxu0 %v225
  %v244 = vpop.f32.mrf.mxu0
  %v245 = vadd.f32 0.0, %v244
  %246 = vdwg.mxu0
  %v248 = vsel %vm38, %v224, 0
  %250 = vmatpush.msra.mxu0 0.0
  %251 = vmatpush.msra.mxu0 0.0
  %252 = vmatpush.msra.mxu0 0.0
  %253 = vmatpush.msra.mxu0 0.0
  %254 = vmatpush.msra.mxu0 0.0
  %255 = vmatpush.msra.mxu0 0.0
  %256 = vmatpush.msra.mxu0 0.0
  %257 = vmatpush.msra.mxu0 0.0
  %258 = vmatpush.msra.mxu0 0.0
  %259 = vmatpush.msra.mxu0 0.0
  %260 = vmatpush.msra.mxu0 0.0
  %261 = vmatpush.msra.mxu0 0.0
  %262 = vmatpush.msra.mxu0 %v31
  %263 = vmatpush.msra.mxu0 %v30
  %264 = vmatpush.msra.mxu0 %v29
  %265 = vmatpush.msra.mxu0 %v28
  %266 = vmatmul.f32.gmra.mxu0 %v248
  %v267 = vpop.f32.mrf.mxu0
  %v268 = vadd.f32 %v245, %v267
  %269 = vdwg.mxu0
  %v270 = vadd.f32 %v268, %v86
  %v271 = vxor.u32 %v270, 2147483648
  %v272 = vmul.f32 %v271, 1.442695
  %v273 = vpow.pop %v272
  %v274 = vadd.f32 %v273, 1.0
  %v275 = vrcp.pop %v274
  %v276 = vmul.f32 %v274, %v275
  %v277 = vsub.f32 1.0, %v276
  %v278 = vmul.f32 %v275, %v277
  %v279 = vadd.f32 %v275, %v278
  %vm280 = vweird.f32 %v274
  %vm281 = vweird.f32 %v275
  %vm282 = vmor %vm280, %vm281
  %v283 = vsel %vm282, %v275, %v279
  %v284 = vand.u32 2147483647, %v274
  %vm285 = vcmp.eq.f32.partialorder %v284, 8.507059e+37
  %v286 = vand.u32 %v274, 2147483648
  %v287 = vor.u32 1.1754944e-38, %v286
  %v288 = vsel %vm285, %v287, %v283
  %v289 = vmul.f32 1.0, %v288
  %v290 = vtanh.pop %v270
  %v291 = vmul.f32 %v289, %v210
  %293 = vrot.lane.b32.xlu0 %v290, 64
  %v294 = vpop.permute.xlu0 %293
  %v296 = vmul.f32 %v289, %v294
  %298 = vrot.lane.b32.xlu0 %v296, 32
  %v299 = vpop.permute.xlu0 %298
  %v301 = vadd.f32 %v291, %v299
  %v302 = vtanh.pop %v301
  %304 = vrot.lane.b32.xlu0 %v302, 64
  %v305 = vpop.permute.xlu0 %304
  %v307 = vmul.f32 %v289, %v305
  %309 = vrot.lane.b32.xlu0 %v307, 32
  %v310 = vpop.permute.xlu0 %309
  %s312 = scalar_lea.vmem %s7, 4
  %313 = vst.msk [vmem:[%s312] sm:$0x3] %vm130, %v310
  %s314 = scalar_lea.vmem %s0, 6
  %v315 = vld [vmem:[%s314] sm:$0x3]
  %v316 = vsel %vm38, %v310, 0
  %318 = vmatpush.msra.mxu0 0.0
  %319 = vmatpush.msra.mxu0 0.0
  %320 = vmatpush.msra.mxu0 0.0
  %321 = vmatpush.msra.mxu0 0.0
  %322 = vmatpush.msra.mxu0 0.0
  %323 = vmatpush.msra.mxu0 0.0
  %324 = vmatpush.msra.mxu0 0.0
  %325 = vmatpush.msra.mxu0 0.0
  %326 = vmatpush.msra.mxu0 0.0
  %327 = vmatpush.msra.mxu0 0.0
  %328 = vmatpush.msra.mxu0 0.0
  %329 = vmatpush.msra.mxu0 0.0
  %330 = vmatpush.msra.mxu0 %v35
  %331 = vmatpush.msra.mxu0 %v34
  %332 = vmatpush.msra.mxu0 %v33
  %333 = vmatpush.msra.mxu0 %v32
  %334 = vmatmul.f32.gmra.mxu0 %v316
  %v335 = vpop.f32.mrf.mxu0
  %v336 = vadd.f32 0.0, %v335
  %337 = vdwg.mxu0
  %v339 = vsel %vm38, %v315, 0
  %341 = vmatpush.msra.mxu0 0.0
  %342 = vmatpush.msra.mxu0 0.0
  %343 = vmatpush.msra.mxu0 0.0
  %344 = vmatpush.msra.mxu0 0.0
  %345 = vmatpush.msra.mxu0 0.0
  %346 = vmatpush.msra.mxu0 0.0
  %347 = vmatpush.msra.mxu0 0.0
  %348 = vmatpush.msra.mxu0 0.0
  %349 = vmatpush.msra.mxu0 0.0
  %350 = vmatpush.msra.mxu0 0.0
  %351 = vmatpush.msra.mxu0 0.0
  %352 = vmatpush.msra.mxu0 0.0
  %353 = vmatpush.msra.mxu0 %v31
  %354 = vmatpush.msra.mxu0 %v30
  %355 = vmatpush.msra.mxu0 %v29
  %356 = vmatpush.msra.mxu0 %v28
  %357 = vmatmul.f32.gmra.mxu0 %v339
  %v358 = vpop.f32.mrf.mxu0
  %v359 = vadd.f32 %v336, %v358
  %360 = vdwg.mxu0
  %v361 = vadd.f32 %v359, %v86
  %v362 = vxor.u32 %v361, 2147483648
  %v363 = vmul.f32 %v362, 1.442695
  %v364 = vpow.pop %v363
  %v365 = vadd.f32 %v364, 1.0
  %v366 = vrcp.pop %v365
  %v367 = vmul.f32 %v365, %v366
  %v368 = vsub.f32 1.0, %v367
  %v369 = vmul.f32 %v366, %v368
  %v370 = vadd.f32 %v366, %v369
  %vm371 = vweird.f32 %v365
  %vm372 = vweird.f32 %v366
  %vm373 = vmor %vm371, %vm372
  %v374 = vsel %vm373, %v366, %v370
  %v375 = vand.u32 2147483647, %v365
  %vm376 = vcmp.eq.f32.partialorder %v375, 8.507059e+37
  %v377 = vand.u32 %v365, 2147483648
  %v378 = vor.u32 1.1754944e-38, %v377
  %v379 = vsel %vm376, %v378, %v374
  %v380 = vmul.f32 1.0, %v379
  %v381 = vtanh.pop %v361
  %v382 = vmul.f32 %v380, %v301
  %384 = vrot.lane.b32.xlu0 %v381, 64
  %v385 = vpop.permute.xlu0 %384
  %v387 = vmul.f32 %v380, %v385
  %389 = vrot.lane.b32.xlu0 %v387, 32
  %v390 = vpop.permute.xlu0 %389
  %v392 = vadd.f32 %v382, %v390
  %v393 = vtanh.pop %v392
  %395 = vrot.lane.b32.xlu0 %v393, 64
  %v396 = vpop.permute.xlu0 %395
  %v398 = vmul.f32 %v380, %v396
  %400 = vrot.lane.b32.xlu0 %v398, 32
  %v401 = vpop.permute.xlu0 %400
  %s403 = scalar_lea.vmem %s7, 6
  %404 = vst.msk [vmem:[%s403] sm:$0x3] %vm130, %v401
  %s405 = scalar_lea.vmem %s0, 8
  %v406 = vld [vmem:[%s405] sm:$0x3]
  %v407 = vsel %vm38, %v401, 0
  %409 = vmatpush.msra.mxu0 0.0
  %410 = vmatpush.msra.mxu0 0.0
  %411 = vmatpush.msra.mxu0 0.0
  %412 = vmatpush.msra.mxu0 0.0
  %413 = vmatpush.msra.mxu0 0.0
  %414 = vmatpush.msra.mxu0 0.0
  %415 = vmatpush.msra.mxu0 0.0
  %416 = vmatpush.msra.mxu0 0.0
  %417 = vmatpush.msra.mxu0 0.0
  %418 = vmatpush.msra.mxu0 0.0
  %419 = vmatpush.msra.mxu0 0.0
  %420 = vmatpush.msra.mxu0 0.0
  %421 = vmatpush.msra.mxu0 %v35
  %422 = vmatpush.msra.mxu0 %v34
  %423 = vmatpush.msra.mxu0 %v33
  %424 = vmatpush.msra.mxu0 %v32
  %425 = vmatmul.f32.gmra.mxu0 %v407
  %v426 = vpop.f32.mrf.mxu0
  %v427 = vadd.f32 0.0, %v426
  %428 = vdwg.mxu0
  %v430 = vsel %vm38, %v406, 0
  %432 = vmatpush.msra.mxu0 0.0
  %433 = vmatpush.msra.mxu0 0.0
  %434 = vmatpush.msra.mxu0 0.0
  %435 = vmatpush.msra.mxu0 0.0
  %436 = vmatpush.msra.mxu0 0.0
  %437 = vmatpush.msra.mxu0 0.0
  %438 = vmatpush.msra.mxu0 0.0
  %439 = vmatpush.msra.mxu0 0.0
  %440 = vmatpush.msra.mxu0 0.0
  %441 = vmatpush.msra.mxu0 0.0
  %442 = vmatpush.msra.mxu0 0.0
  %443 = vmatpush.msra.mxu0 0.0
  %444 = vmatpush.msra.mxu0 %v31
  %445 = vmatpush.msra.mxu0 %v30
  %446 = vmatpush.msra.mxu0 %v29
  %447 = vmatpush.msra.mxu0 %v28
  %448 = vmatmul.f32.gmra.mxu0 %v430
  %v449 = vpop.f32.mrf.mxu0
  %v450 = vadd.f32 %v427, %v449
  %451 = vdwg.mxu0
  %v452 = vadd.f32 %v450, %v86
  %v453 = vxor.u32 %v452, 2147483648
  %v454 = vmul.f32 %v453, 1.442695
  %v455 = vpow.pop %v454
  %v456 = vadd.f32 %v455, 1.0
  %v457 = vrcp.pop %v456
  %v458 = vmul.f32 %v456, %v457
  %v459 = vsub.f32 1.0, %v458
  %v460 = vmul.f32 %v457, %v459
  %v461 = vadd.f32 %v457, %v460
  %vm462 = vweird.f32 %v456
  %vm463 = vweird.f32 %v457
  %vm464 = vmor %vm462, %vm463
  %v465 = vsel %vm464, %v457, %v461
  %v466 = vand.u32 2147483647, %v456
  %vm467 = vcmp.eq.f32.partialorder %v466, 8.507059e+37
  %v468 = vand.u32 %v456, 2147483648
  %v469 = vor.u32 1.1754944e-38, %v468
  %v470 = vsel %vm467, %v469, %v465
  %v471 = vmul.f32 1.0, %v470
  %v472 = vtanh.pop %v452
  %v473 = vmul.f32 %v471, %v392
  %475 = vrot.lane.b32.xlu0 %v472, 64
  %v476 = vpop.permute.xlu0 %475
  %v478 = vmul.f32 %v471, %v476
  %480 = vrot.lane.b32.xlu0 %v478, 32
  %v481 = vpop.permute.xlu0 %480
  %v483 = vadd.f32 %v473, %v481
  %v484 = vtanh.pop %v483
  %486 = vrot.lane.b32.xlu0 %v484, 64
  %v487 = vpop.permute.xlu0 %486
  %v489 = vmul.f32 %v471, %v487
  %491 = vrot.lane.b32.xlu0 %v489, 32
  %v492 = vpop.permute.xlu0 %491
  %s494 = scalar_lea.vmem %s7, 8
  %495 = vst.msk [vmem:[%s494] sm:$0x3] %vm130, %v492
  %s496 = scalar_lea.vmem %s0, 10
  %v497 = vld [vmem:[%s496] sm:$0x3]
  %v498 = vsel %vm38, %v492, 0
  %500 = vmatpush.msra.mxu0 0.0
  %501 = vmatpush.msra.mxu0 0.0
  %502 = vmatpush.msra.mxu0 0.0
  %503 = vmatpush.msra.mxu0 0.0
  %504 = vmatpush.msra.mxu0 0.0
  %505 = vmatpush.msra.mxu0 0.0
  %506 = vmatpush.msra.mxu0 0.0
  %507 = vmatpush.msra.mxu0 0.0
  %508 = vmatpush.msra.mxu0 0.0
  %509 = vmatpush.msra.mxu0 0.0
  %510 = vmatpush.msra.mxu0 0.0
  %511 = vmatpush.msra.mxu0 0.0
  %512 = vmatpush.msra.mxu0 %v35
  %513 = vmatpush.msra.mxu0 %v34
  %514 = vmatpush.msra.mxu0 %v33
  %515 = vmatpush.msra.mxu0 %v32
  %516 = vmatmul.f32.gmra.mxu0 %v498
  %v517 = vpop.f32.mrf.mxu0
  %v518 = vadd.f32 0.0, %v517
  %519 = vdwg.mxu0
  %v521 = vsel %vm38, %v497, 0
  %523 = vmatpush.msra.mxu0 0.0
  %524 = vmatpush.msra.mxu0 0.0
  %525 = vmatpush.msra.mxu0 0.0
  %526 = vmatpush.msra.mxu0 0.0
  %527 = vmatpush.msra.mxu0 0.0
  %528 = vmatpush.msra.mxu0 0.0
  %529 = vmatpush.msra.mxu0 0.0
  %530 = vmatpush.msra.mxu0 0.0
  %531 = vmatpush.msra.mxu0 0.0
  %532 = vmatpush.msra.mxu0 0.0
  %533 = vmatpush.msra.mxu0 0.0
  %534 = vmatpush.msra.mxu0 0.0
  %535 = vmatpush.msra.mxu0 %v31
  %536 = vmatpush.msra.mxu0 %v30
  %537 = vmatpush.msra.mxu0 %v29
  %538 = vmatpush.msra.mxu0 %v28
  %539 = vmatmul.f32.gmra.mxu0 %v521
  %v540 = vpop.f32.mrf.mxu0
  %v541 = vadd.f32 %v518, %v540
  %542 = vdwg.mxu0
  %v543 = vadd.f32 %v541, %v86
  %v544 = vxor.u32 %v543, 2147483648
  %v545 = vmul.f32 %v544, 1.442695
  %v546 = vpow.pop %v545
  %v547 = vadd.f32 %v546, 1.0
  %v548 = vrcp.pop %v547
  %v549 = vmul.f32 %v547, %v548
  %v550 = vsub.f32 1.0, %v549
  %v551 = vmul.f32 %v548, %v550
  %v552 = vadd.f32 %v548, %v551
  %vm553 = vweird.f32 %v547
  %vm554 = vweird.f32 %v548
  %vm555 = vmor %vm553, %vm554
  %v556 = vsel %vm555, %v548, %v552
  %v557 = vand.u32 2147483647, %v547
  %vm558 = vcmp.eq.f32.partialorder %v557, 8.507059e+37
  %v559 = vand.u32 %v547, 2147483648
  %v560 = vor.u32 1.1754944e-38, %v559
  %v561 = vsel %vm558, %v560, %v556
  %v562 = vmul.f32 1.0, %v561
  %v563 = vtanh.pop %v543
  %v564 = vmul.f32 %v562, %v483
  %566 = vrot.lane.b32.xlu0 %v563, 64
  %v567 = vpop.permute.xlu0 %566
  %v569 = vmul.f32 %v562, %v567
  %571 = vrot.lane.b32.xlu0 %v569, 32
  %v572 = vpop.permute.xlu0 %571
  %v574 = vadd.f32 %v564, %v572
  %v575 = vtanh.pop %v574
  %577 = vrot.lane.b32.xlu0 %v575, 64
  %v578 = vpop.permute.xlu0 %577
  %v580 = vmul.f32 %v562, %v578
  %582 = vrot.lane.b32.xlu0 %v580, 32
  %v583 = vpop.permute.xlu0 %582
  %s585 = scalar_lea.vmem %s7, 10
  %586 = vst.msk [vmem:[%s585] sm:$0x3] %vm130, %v583
  %s587 = scalar_lea.vmem %s0, 12
  %v588 = vld [vmem:[%s587] sm:$0x3]
  %v589 = vsel %vm38, %v583, 0
  %591 = vmatpush.msra.mxu0 0.0
  %592 = vmatpush.msra.mxu0 0.0
  %593 = vmatpush.msra.mxu0 0.0
  %594 = vmatpush.msra.mxu0 0.0
  %595 = vmatpush.msra.mxu0 0.0
  %596 = vmatpush.msra.mxu0 0.0
  %597 = vmatpush.msra.mxu0 0.0
  %598 = vmatpush.msra.mxu0 0.0
  %599 = vmatpush.msra.mxu0 0.0
  %600 = vmatpush.msra.mxu0 0.0
  %601 = vmatpush.msra.mxu0 0.0
  %602 = vmatpush.msra.mxu0 0.0
  %603 = vmatpush.msra.mxu0 %v35
  %604 = vmatpush.msra.mxu0 %v34
  %605 = vmatpush.msra.mxu0 %v33
  %606 = vmatpush.msra.mxu0 %v32
  %607 = vmatmul.f32.gmra.mxu0 %v589
  %v608 = vpop.f32.mrf.mxu0
  %v609 = vadd.f32 0.0, %v608
  %610 = vdwg.mxu0
  %v612 = vsel %vm38, %v588, 0
  %614 = vmatpush.msra.mxu0 0.0
  %615 = vmatpush.msra.mxu0 0.0
  %616 = vmatpush.msra.mxu0 0.0
  %617 = vmatpush.msra.mxu0 0.0
  %618 = vmatpush.msra.mxu0 0.0
  %619 = vmatpush.msra.mxu0 0.0
  %620 = vmatpush.msra.mxu0 0.0
  %621 = vmatpush.msra.mxu0 0.0
  %622 = vmatpush.msra.mxu0 0.0
  %623 = vmatpush.msra.mxu0 0.0
  %624 = vmatpush.msra.mxu0 0.0
  %625 = vmatpush.msra.mxu0 0.0
  %626 = vmatpush.msra.mxu0 %v31
  %627 = vmatpush.msra.mxu0 %v30
  %628 = vmatpush.msra.mxu0 %v29
  %629 = vmatpush.msra.mxu0 %v28
  %630 = vmatmul.f32.gmra.mxu0 %v612
  %v631 = vpop.f32.mrf.mxu0
  %v632 = vadd.f32 %v609, %v631
  %633 = vdwg.mxu0
  %v634 = vadd.f32 %v632, %v86
  %v635 = vxor.u32 %v634, 2147483648
  %v636 = vmul.f32 %v635, 1.442695
  %v637 = vpow.pop %v636
  %v638 = vadd.f32 %v637, 1.0
  %v639 = vrcp.pop %v638
  %v640 = vmul.f32 %v638, %v639
  %v641 = vsub.f32 1.0, %v640
  %v642 = vmul.f32 %v639, %v641
  %v643 = vadd.f32 %v639, %v642
  %vm644 = vweird.f32 %v638
  %vm645 = vweird.f32 %v639
  %vm646 = vmor %vm644, %vm645
  %v647 = vsel %vm646, %v639, %v643
  %v648 = vand.u32 2147483647, %v638
  %vm649 = vcmp.eq.f32.partialorder %v648, 8.507059e+37
  %v650 = vand.u32 %v638, 2147483648
  %v651 = vor.u32 1.1754944e-38, %v650
  %v652 = vsel %vm649, %v651, %v647
  %v653 = vmul.f32 1.0, %v652
  %v654 = vtanh.pop %v634
  %v655 = vmul.f32 %v653, %v574
  %657 = vrot.lane.b32.xlu0 %v654, 64
  %v658 = vpop.permute.xlu0 %657
  %v660 = vmul.f32 %v653, %v658
  %662 = vrot.lane.b32.xlu0 %v660, 32
  %v663 = vpop.permute.xlu0 %662
  %v665 = vadd.f32 %v655, %v663
  %v666 = vtanh.pop %v665
  %668 = vrot.lane.b32.xlu0 %v666, 64
  %v669 = vpop.permute.xlu0 %668
  %v671 = vmul.f32 %v653, %v669
  %673 = vrot.lane.b32.xlu0 %v671, 32
  %v674 = vpop.permute.xlu0 %673
  %s676 = scalar_lea.vmem %s7, 12
  %677 = vst.msk [vmem:[%s676] sm:$0x3] %vm130, %v674
  %s678 = scalar_lea.vmem %s0, 14
  %v679 = vld [vmem:[%s678] sm:$0x3]
  %v680 = vsel %vm38, %v674, 0
  %682 = vmatpush.msra.mxu0 0.0
  %683 = vmatpush.msra.mxu0 0.0
  %684 = vmatpush.msra.mxu0 0.0
  %685 = vmatpush.msra.mxu0 0.0
  %686 = vmatpush.msra.mxu0 0.0
  %687 = vmatpush.msra.mxu0 0.0
  %688 = vmatpush.msra.mxu0 0.0
  %689 = vmatpush.msra.mxu0 0.0
  %690 = vmatpush.msra.mxu0 0.0
  %691 = vmatpush.msra.mxu0 0.0
  %692 = vmatpush.msra.mxu0 0.0
  %693 = vmatpush.msra.mxu0 0.0
  %694 = vmatpush.msra.mxu0 %v35
  %695 = vmatpush.msra.mxu0 %v34
  %696 = vmatpush.msra.mxu0 %v33
  %697 = vmatpush.msra.mxu0 %v32
  %698 = vmatmul.f32.gmra.mxu0 %v680
  %v699 = vpop.f32.mrf.mxu0
  %v700 = vadd.f32 0.0, %v699
  %701 = vdwg.mxu0
  %v703 = vsel %vm38, %v679, 0
  %705 = vmatpush.msra.mxu0 0.0
  %706 = vmatpush.msra.mxu0 0.0
  %707 = vmatpush.msra.mxu0 0.0
  %708 = vmatpush.msra.mxu0 0.0
  %709 = vmatpush.msra.mxu0 0.0
  %710 = vmatpush.msra.mxu0 0.0
  %711 = vmatpush.msra.mxu0 0.0
  %712 = vmatpush.msra.mxu0 0.0
  %713 = vmatpush.msra.mxu0 0.0
  %714 = vmatpush.msra.mxu0 0.0
  %715 = vmatpush.msra.mxu0 0.0
  %716 = vmatpush.msra.mxu0 0.0
  %717 = vmatpush.msra.mxu0 %v31
  %718 = vmatpush.msra.mxu0 %v30
  %719 = vmatpush.msra.mxu0 %v29
  %720 = vmatpush.msra.mxu0 %v28
  %721 = vmatmul.f32.gmra.mxu0 %v703
  %v722 = vpop.f32.mrf.mxu0
  %v723 = vadd.f32 %v700, %v722
  %724 = vdwg.mxu0
  %v725 = vadd.f32 %v723, %v86
  %v726 = vxor.u32 %v725, 2147483648
  %v727 = vmul.f32 %v726, 1.442695
  %v728 = vpow.pop %v727
  %v729 = vadd.f32 %v728, 1.0
  %v730 = vrcp.pop %v729
  %v731 = vmul.f32 %v729, %v730
  %v732 = vsub.f32 1.0, %v731
  %v733 = vmul.f32 %v730, %v732
  %v734 = vadd.f32 %v730, %v733
  %vm735 = vweird.f32 %v729
  %vm736 = vweird.f32 %v730
  %vm737 = vmor %vm735, %vm736
  %v738 = vsel %vm737, %v730, %v734
  %v739 = vand.u32 2147483647, %v729
  %vm740 = vcmp.eq.f32.partialorder %v739, 8.507059e+37
  %v741 = vand.u32 %v729, 2147483648
  %v742 = vor.u32 1.1754944e-38, %v741
  %v743 = vsel %vm740, %v742, %v738
  %v744 = vmul.f32 1.0, %v743
  %v745 = vtanh.pop %v725
  %v746 = vmul.f32 %v744, %v665
  %748 = vrot.lane.b32.xlu0 %v745, 64
  %v749 = vpop.permute.xlu0 %748
  %v751 = vmul.f32 %v744, %v749
  %753 = vrot.lane.b32.xlu0 %v751, 32
  %v754 = vpop.permute.xlu0 %753
  %v756 = vadd.f32 %v746, %v754
  %v757 = vtanh.pop %v756
  %759 = vrot.lane.b32.xlu0 %v757, 64
  %v760 = vpop.permute.xlu0 %759
  %v762 = vmul.f32 %v744, %v760
  %764 = vrot.lane.b32.xlu0 %v762, 32
  %v765 = vpop.permute.xlu0 %764
  %s767 = scalar_lea.vmem %s7, 14
  %768 = vst.msk [vmem:[%s767] sm:$0x3] %vm130, %v765
  %v769 = vld [vmem:[%s4] sm:$0xff]
  %v770 = vld [vmem:[%s4 + $0x8] sm:$0xff]
  %v771 = vld [vmem:[%s4 + $0x10] sm:$0xff]
  %v772 = vld [vmem:[%s4 + $0x18] sm:$0xff]
  %v773 = vld [vmem:[%s5] sm:$0xff]
  %v774 = vld [vmem:[%s5 + $0x8] sm:$0xff]
  %v775 = vld [vmem:[%s5 + $0x10] sm:$0xff]
  %v776 = vld [vmem:[%s5 + $0x18] sm:$0xff]
  %v777 = vld [vmem:[%s6] sm:$0x1]
  %v778 = vld [vmem:[%s678] sm:$0x3]
  %779 = vmatpush.msra.mxu0 0.0
  %780 = vmatpush.msra.mxu0 0.0
  %781 = vmatpush.msra.mxu0 0.0
  %782 = vmatpush.msra.mxu0 0.0
  %783 = vmatpush.msra.mxu0 0.0
  %784 = vmatpush.msra.mxu0 0.0
  %785 = vmatpush.msra.mxu0 0.0
  %786 = vmatpush.msra.mxu0 0.0
  %787 = vmatpush.msra.mxu0 0.0
  %788 = vmatpush.msra.mxu0 0.0
  %789 = vmatpush.msra.mxu0 0.0
  %790 = vmatpush.msra.mxu0 0.0
  %791 = vmatpush.msra.mxu0 %v776
  %792 = vmatpush.msra.mxu0 %v775
  %793 = vmatpush.msra.mxu0 %v774
  %794 = vmatpush.msra.mxu0 %v773
  %795 = vmatmul.f32.gmra.mxu0 %v40
  %v796 = vpop.f32.mrf.mxu0
  %v797 = vadd.f32 0.0, %v796
  %798 = vdwg.mxu0
  %v800 = vsel %vm38, %v778, 0
  %802 = vmatpush.msra.mxu0 0.0
  %803 = vmatpush.msra.mxu0 0.0
  %804 = vmatpush.msra.mxu0 0.0
  %805 = vmatpush.msra.mxu0 0.0
  %806 = vmatpush.msra.mxu0 0.0
  %807 = vmatpush.msra.mxu0 0.0
  %808 = vmatpush.msra.mxu0 0.0
  %809 = vmatpush.msra.mxu0 0.0
  %810 = vmatpush.msra.mxu0 0.0
  %811 = vmatpush.msra.mxu0 0.0
  %812 = vmatpush.msra.mxu0 0.0
  %813 = vmatpush.msra.mxu0 0.0
  %814 = vmatpush.msra.mxu0 %v772
  %815 = vmatpush.msra.mxu0 %v771
  %816 = vmatpush.msra.mxu0 %v770
  %817 = vmatpush.msra.mxu0 %v769
  %818 = vmatmul.f32.gmra.mxu0 %v800
  %v819 = vpop.f32.mrf.mxu0
  %v820 = vadd.f32 %v797, %v819
  %821 = vdwg.mxu0
  %v823 = vperm.slane %v777, 0
  %v825 = vadd.f32 %v820, %v823
  %v826 = vxor.u32 %v825, 2147483648
  %v827 = vmul.f32 %v826, 1.442695
  %v828 = vpow.pop %v827
  %v829 = vadd.f32 %v828, 1.0
  %v830 = vrcp.pop %v829
  %v831 = vmul.f32 %v829, %v830
  %v832 = vsub.f32 1.0, %v831
  %v833 = vmul.f32 %v830, %v832
  %v834 = vadd.f32 %v830, %v833
  %vm835 = vweird.f32 %v829
  %vm836 = vweird.f32 %v830
  %vm837 = vmor %vm835, %vm836
  %v838 = vsel %vm837, %v830, %v834
  %v839 = vand.u32 2147483647, %v829
  %vm840 = vcmp.eq.f32.partialorder %v839, 8.507059e+37
  %v841 = vand.u32 %v829, 2147483648
  %v842 = vor.u32 1.1754944e-38, %v841
  %v843 = vsel %vm840, %v842, %v838
  %v844 = vmul.f32 1.0, %v843
  %v845 = vtanh.pop %v825
  %v846 = vmul.f32 %v844, 0.0
  %848 = vrot.lane.b32.xlu0 %v845, 64
  %v849 = vpop.permute.xlu0 %848
  %v851 = vmul.f32 %v844, %v849
  %853 = vrot.lane.b32.xlu0 %v851, 32
  %v854 = vpop.permute.xlu0 %853
  %v856 = vadd.f32 %v846, %v854
  %v857 = vtanh.pop %v856
  %859 = vrot.lane.b32.xlu0 %v857, 64
  %v860 = vpop.permute.xlu0 %859
  %v862 = vmul.f32 %v844, %v860
  %864 = vrot.lane.b32.xlu0 %v862, 32
  %v865 = vpop.permute.xlu0 %864
  %s867 = scalar_lea.vmem %s8, 14
  %868 = vst.msk [vmem:[%s867] sm:$0x3] %vm130, %v865
  %v869 = vld [vmem:[%s587] sm:$0x3]
  %v870 = vsel %vm38, %v865, 0
  %872 = vmatpush.msra.mxu0 0.0
  %873 = vmatpush.msra.mxu0 0.0
  %874 = vmatpush.msra.mxu0 0.0
  %875 = vmatpush.msra.mxu0 0.0
  %876 = vmatpush.msra.mxu0 0.0
  %877 = vmatpush.msra.mxu0 0.0
  %878 = vmatpush.msra.mxu0 0.0
  %879 = vmatpush.msra.mxu0 0.0
  %880 = vmatpush.msra.mxu0 0.0
  %881 = vmatpush.msra.mxu0 0.0
  %882 = vmatpush.msra.mxu0 0.0
  %883 = vmatpush.msra.mxu0 0.0
  %884 = vmatpush.msra.mxu0 %v776
  %885 = vmatpush.msra.mxu0 %v775
  %886 = vmatpush.msra.mxu0 %v774
  %887 = vmatpush.msra.mxu0 %v773
  %888 = vmatmul.f32.gmra.mxu0 %v870
  %v889 = vpop.f32.mrf.mxu0
  %v890 = vadd.f32 0.0, %v889
  %891 = vdwg.mxu0
  %v893 = vsel %vm38, %v869, 0
  %895 = vmatpush.msra.mxu0 0.0
  %896 = vmatpush.msra.mxu0 0.0
  %897 = vmatpush.msra.mxu0 0.0
  %898 = vmatpush.msra.mxu0 0.0
  %899 = vmatpush.msra.mxu0 0.0
  %900 = vmatpush.msra.mxu0 0.0
  %901 = vmatpush.msra.mxu0 0.0
  %902 = vmatpush.msra.mxu0 0.0
  %903 = vmatpush.msra.mxu0 0.0
  %904 = vmatpush.msra.mxu0 0.0
  %905 = vmatpush.msra.mxu0 0.0
  %906 = vmatpush.msra.mxu0 0.0
  %907 = vmatpush.msra.mxu0 %v772
  %908 = vmatpush.msra.mxu0 %v771
  %909 = vmatpush.msra.mxu0 %v770
  %910 = vmatpush.msra.mxu0 %v769
  %911 = vmatmul.f32.gmra.mxu0 %v893
  %v912 = vpop.f32.mrf.mxu0
  %v913 = vadd.f32 %v890, %v912
  %914 = vdwg.mxu0
  %v915 = vadd.f32 %v913, %v823
  %v916 = vxor.u32 %v915, 2147483648
  %v917 = vmul.f32 %v916, 1.442695
  %v918 = vpow.pop %v917
  %v919 = vadd.f32 %v918, 1.0
  %v920 = vrcp.pop %v919
  %v921 = vmul.f32 %v919, %v920
  %v922 = vsub.f32 1.0, %v921
  %v923 = vmul.f32 %v920, %v922
  %v924 = vadd.f32 %v920, %v923
  %vm925 = vweird.f32 %v919
  %vm926 = vweird.f32 %v920
  %vm927 = vmor %vm925, %vm926
  %v928 = vsel %vm927, %v920, %v924
  %v929 = vand.u32 2147483647, %v919
  %vm930 = vcmp.eq.f32.partialorder %v929, 8.507059e+37
  %v931 = vand.u32 %v919, 2147483648
  %v932 = vor.u32 1.1754944e-38, %v931
  %v933 = vsel %vm930, %v932, %v928
  %v934 = vmul.f32 1.0, %v933
  %v935 = vtanh.pop %v915
  %v936 = vmul.f32 %v934, %v856
  %938 = vrot.lane.b32.xlu0 %v935, 64
  %v939 = vpop.permute.xlu0 %938
  %v941 = vmul.f32 %v934, %v939
  %943 = vrot.lane.b32.xlu0 %v941, 32
  %v944 = vpop.permute.xlu0 %943
  %v946 = vadd.f32 %v936, %v944
  %v947 = vtanh.pop %v946
  %949 = vrot.lane.b32.xlu0 %v947, 64
  %v950 = vpop.permute.xlu0 %949
  %v952 = vmul.f32 %v934, %v950
  %954 = vrot.lane.b32.xlu0 %v952, 32
  %v955 = vpop.permute.xlu0 %954
  %s957 = scalar_lea.vmem %s8, 12
  %958 = vst.msk [vmem:[%s957] sm:$0x3] %vm130, %v955
  %v959 = vld [vmem:[%s496] sm:$0x3]
  %v960 = vsel %vm38, %v955, 0
  %962 = vmatpush.msra.mxu0 0.0
  %963 = vmatpush.msra.mxu0 0.0
  %964 = vmatpush.msra.mxu0 0.0
  %965 = vmatpush.msra.mxu0 0.0
  %966 = vmatpush.msra.mxu0 0.0
  %967 = vmatpush.msra.mxu0 0.0
  %968 = vmatpush.msra.mxu0 0.0
  %969 = vmatpush.msra.mxu0 0.0
  %970 = vmatpush.msra.mxu0 0.0
  %971 = vmatpush.msra.mxu0 0.0
  %972 = vmatpush.msra.mxu0 0.0
  %973 = vmatpush.msra.mxu0 0.0
  %974 = vmatpush.msra.mxu0 %v776
  %975 = vmatpush.msra.mxu0 %v775
  %976 = vmatpush.msra.mxu0 %v774
  %977 = vmatpush.msra.mxu0 %v773
  %978 = vmatmul.f32.gmra.mxu0 %v960
  %v979 = vpop.f32.mrf.mxu0
  %v980 = vadd.f32 0.0, %v979
  %981 = vdwg.mxu0
  %v983 = vsel %vm38, %v959, 0
  %985 = vmatpush.msra.mxu0 0.0
  %986 = vmatpush.msra.mxu0 0.0
  %987 = vmatpush.msra.mxu0 0.0
  %988 = vmatpush.msra.mxu0 0.0
  %989 = vmatpush.msra.mxu0 0.0
  %990 = vmatpush.msra.mxu0 0.0
  %991 = vmatpush.msra.mxu0 0.0
  %992 = vmatpush.msra.mxu0 0.0
  %993 = vmatpush.msra.mxu0 0.0
  %994 = vmatpush.msra.mxu0 0.0
  %995 = vmatpush.msra.mxu0 0.0
  %996 = vmatpush.msra.mxu0 0.0
  %997 = vmatpush.msra.mxu0 %v772
  %998 = vmatpush.msra.mxu0 %v771
  %999 = vmatpush.msra.mxu0 %v770
  %1000 = vmatpush.msra.mxu0 %v769
  %1001 = vmatmul.f32.gmra.mxu0 %v983
  %v1002 = vpop.f32.mrf.mxu0
  %v1003 = vadd.f32 %v980, %v1002
  %1004 = vdwg.mxu0
  %v1005 = vadd.f32 %v1003, %v823
  %v1006 = vxor.u32 %v1005, 2147483648
  %v1007 = vmul.f32 %v1006, 1.442695
  %v1008 = vpow.pop %v1007
  %v1009 = vadd.f32 %v1008, 1.0
  %v1010 = vrcp.pop %v1009
  %v1011 = vmul.f32 %v1009, %v1010
  %v1012 = vsub.f32 1.0, %v1011
  %v1013 = vmul.f32 %v1010, %v1012
  %v1014 = vadd.f32 %v1010, %v1013
  %vm1015 = vweird.f32 %v1009
  %vm1016 = vweird.f32 %v1010
  %vm1017 = vmor %vm1015, %vm1016
  %v1018 = vsel %vm1017, %v1010, %v1014
  %v1019 = vand.u32 2147483647, %v1009
  %vm1020 = vcmp.eq.f32.partialorder %v1019, 8.507059e+37
  %v1021 = vand.u32 %v1009, 2147483648
  %v1022 = vor.u32 1.1754944e-38, %v1021
  %v1023 = vsel %vm1020, %v1022, %v1018
  %v1024 = vmul.f32 1.0, %v1023
  %v1025 = vtanh.pop %v1005
  %v1026 = vmul.f32 %v1024, %v946
  %1028 = vrot.lane.b32.xlu0 %v1025, 64
  %v1029 = vpop.permute.xlu0 %1028
  %v1031 = vmul.f32 %v1024, %v1029
  %1033 = vrot.lane.b32.xlu0 %v1031, 32
  %v1034 = vpop.permute.xlu0 %1033
  %v1036 = vadd.f32 %v1026, %v1034
  %v1037 = vtanh.pop %v1036
  %1039 = vrot.lane.b32.xlu0 %v1037, 64
  %v1040 = vpop.permute.xlu0 %1039
  %v1042 = vmul.f32 %v1024, %v1040
  %1044 = vrot.lane.b32.xlu0 %v1042, 32
  %v1045 = vpop.permute.xlu0 %1044
  %s1047 = scalar_lea.vmem %s8, 10
  %1048 = vst.msk [vmem:[%s1047] sm:$0x3] %vm130, %v1045
  %v1049 = vld [vmem:[%s405] sm:$0x3]
  %v1050 = vsel %vm38, %v1045, 0
  %1052 = vmatpush.msra.mxu0 0.0
  %1053 = vmatpush.msra.mxu0 0.0
  %1054 = vmatpush.msra.mxu0 0.0
  %1055 = vmatpush.msra.mxu0 0.0
  %1056 = vmatpush.msra.mxu0 0.0
  %1057 = vmatpush.msra.mxu0 0.0
  %1058 = vmatpush.msra.mxu0 0.0
  %1059 = vmatpush.msra.mxu0 0.0
  %1060 = vmatpush.msra.mxu0 0.0
  %1061 = vmatpush.msra.mxu0 0.0
  %1062 = vmatpush.msra.mxu0 0.0
  %1063 = vmatpush.msra.mxu0 0.0
  %1064 = vmatpush.msra.mxu0 %v776
  %1065 = vmatpush.msra.mxu0 %v775
  %1066 = vmatpush.msra.mxu0 %v774
  %1067 = vmatpush.msra.mxu0 %v773
  %1068 = vmatmul.f32.gmra.mxu0 %v1050
  %v1069 = vpop.f32.mrf.mxu0
  %v1070 = vadd.f32 0.0, %v1069
  %1071 = vdwg.mxu0
  %v1073 = vsel %vm38, %v1049, 0
  %1075 = vmatpush.msra.mxu0 0.0
  %1076 = vmatpush.msra.mxu0 0.0
  %1077 = vmatpush.msra.mxu0 0.0
  %1078 = vmatpush.msra.mxu0 0.0
  %1079 = vmatpush.msra.mxu0 0.0
  %1080 = vmatpush.msra.mxu0 0.0
  %1081 = vmatpush.msra.mxu0 0.0
  %1082 = vmatpush.msra.mxu0 0.0
  %1083 = vmatpush.msra.mxu0 0.0
  %1084 = vmatpush.msra.mxu0 0.0
  %1085 = vmatpush.msra.mxu0 0.0
  %1086 = vmatpush.msra.mxu0 0.0
  %1087 = vmatpush.msra.mxu0 %v772
  %1088 = vmatpush.msra.mxu0 %v771
  %1089 = vmatpush.msra.mxu0 %v770
  %1090 = vmatpush.msra.mxu0 %v769
  %1091 = vmatmul.f32.gmra.mxu0 %v1073
  %v1092 = vpop.f32.mrf.mxu0
  %v1093 = vadd.f32 %v1070, %v1092
  %1094 = vdwg.mxu0
  %v1095 = vadd.f32 %v1093, %v823
  %v1096 = vxor.u32 %v1095, 2147483648
  %v1097 = vmul.f32 %v1096, 1.442695
  %v1098 = vpow.pop %v1097
  %v1099 = vadd.f32 %v1098, 1.0
  %v1100 = vrcp.pop %v1099
  %v1101 = vmul.f32 %v1099, %v1100
  %v1102 = vsub.f32 1.0, %v1101
  %v1103 = vmul.f32 %v1100, %v1102
  %v1104 = vadd.f32 %v1100, %v1103
  %vm1105 = vweird.f32 %v1099
  %vm1106 = vweird.f32 %v1100
  %vm1107 = vmor %vm1105, %vm1106
  %v1108 = vsel %vm1107, %v1100, %v1104
  %v1109 = vand.u32 2147483647, %v1099
  %vm1110 = vcmp.eq.f32.partialorder %v1109, 8.507059e+37
  %v1111 = vand.u32 %v1099, 2147483648
  %v1112 = vor.u32 1.1754944e-38, %v1111
  %v1113 = vsel %vm1110, %v1112, %v1108
  %v1114 = vmul.f32 1.0, %v1113
  %v1115 = vtanh.pop %v1095
  %v1116 = vmul.f32 %v1114, %v1036
  %1118 = vrot.lane.b32.xlu0 %v1115, 64
  %v1119 = vpop.permute.xlu0 %1118
  %v1121 = vmul.f32 %v1114, %v1119
  %1123 = vrot.lane.b32.xlu0 %v1121, 32
  %v1124 = vpop.permute.xlu0 %1123
  %v1126 = vadd.f32 %v1116, %v1124
  %v1127 = vtanh.pop %v1126
  %1129 = vrot.lane.b32.xlu0 %v1127, 64
  %v1130 = vpop.permute.xlu0 %1129
  %v1132 = vmul.f32 %v1114, %v1130
  %1134 = vrot.lane.b32.xlu0 %v1132, 32
  %v1135 = vpop.permute.xlu0 %1134
  %s1137 = scalar_lea.vmem %s8, 8
  %1138 = vst.msk [vmem:[%s1137] sm:$0x3] %vm130, %v1135
  %v1139 = vld [vmem:[%s314] sm:$0x3]
  %v1140 = vsel %vm38, %v1135, 0
  %1142 = vmatpush.msra.mxu0 0.0
  %1143 = vmatpush.msra.mxu0 0.0
  %1144 = vmatpush.msra.mxu0 0.0
  %1145 = vmatpush.msra.mxu0 0.0
  %1146 = vmatpush.msra.mxu0 0.0
  %1147 = vmatpush.msra.mxu0 0.0
  %1148 = vmatpush.msra.mxu0 0.0
  %1149 = vmatpush.msra.mxu0 0.0
  %1150 = vmatpush.msra.mxu0 0.0
  %1151 = vmatpush.msra.mxu0 0.0
  %1152 = vmatpush.msra.mxu0 0.0
  %1153 = vmatpush.msra.mxu0 0.0
  %1154 = vmatpush.msra.mxu0 %v776
  %1155 = vmatpush.msra.mxu0 %v775
  %1156 = vmatpush.msra.mxu0 %v774
  %1157 = vmatpush.msra.mxu0 %v773
  %1158 = vmatmul.f32.gmra.mxu0 %v1140
  %v1159 = vpop.f32.mrf.mxu0
  %v1160 = vadd.f32 0.0, %v1159
  %1161 = vdwg.mxu0
  %v1163 = vsel %vm38, %v1139, 0
  %1165 = vmatpush.msra.mxu0 0.0
  %1166 = vmatpush.msra.mxu0 0.0
  %1167 = vmatpush.msra.mxu0 0.0
  %1168 = vmatpush.msra.mxu0 0.0
  %1169 = vmatpush.msra.mxu0 0.0
  %1170 = vmatpush.msra.mxu0 0.0
  %1171 = vmatpush.msra.mxu0 0.0
  %1172 = vmatpush.msra.mxu0 0.0
  %1173 = vmatpush.msra.mxu0 0.0
  %1174 = vmatpush.msra.mxu0 0.0
  %1175 = vmatpush.msra.mxu0 0.0
  %1176 = vmatpush.msra.mxu0 0.0
  %1177 = vmatpush.msra.mxu0 %v772
  %1178 = vmatpush.msra.mxu0 %v771
  %1179 = vmatpush.msra.mxu0 %v770
  %1180 = vmatpush.msra.mxu0 %v769
  %1181 = vmatmul.f32.gmra.mxu0 %v1163
  %v1182 = vpop.f32.mrf.mxu0
  %v1183 = vadd.f32 %v1160, %v1182
  %1184 = vdwg.mxu0
  %v1185 = vadd.f32 %v1183, %v823
  %v1186 = vxor.u32 %v1185, 2147483648
  %v1187 = vmul.f32 %v1186, 1.442695
  %v1188 = vpow.pop %v1187
  %v1189 = vadd.f32 %v1188, 1.0
  %v1190 = vrcp.pop %v1189
  %v1191 = vmul.f32 %v1189, %v1190
  %v1192 = vsub.f32 1.0, %v1191
  %v1193 = vmul.f32 %v1190, %v1192
  %v1194 = vadd.f32 %v1190, %v1193
  %vm1195 = vweird.f32 %v1189
  %vm1196 = vweird.f32 %v1190
  %vm1197 = vmor %vm1195, %vm1196
  %v1198 = vsel %vm1197, %v1190, %v1194
  %v1199 = vand.u32 2147483647, %v1189
  %vm1200 = vcmp.eq.f32.partialorder %v1199, 8.507059e+37
  %v1201 = vand.u32 %v1189, 2147483648
  %v1202 = vor.u32 1.1754944e-38, %v1201
  %v1203 = vsel %vm1200, %v1202, %v1198
  %v1204 = vmul.f32 1.0, %v1203
  %v1205 = vtanh.pop %v1185
  %v1206 = vmul.f32 %v1204, %v1126
  %1208 = vrot.lane.b32.xlu0 %v1205, 64
  %v1209 = vpop.permute.xlu0 %1208
  %v1211 = vmul.f32 %v1204, %v1209
  %1213 = vrot.lane.b32.xlu0 %v1211, 32
  %v1214 = vpop.permute.xlu0 %1213
  %v1216 = vadd.f32 %v1206, %v1214
  %v1217 = vtanh.pop %v1216
  %1219 = vrot.lane.b32.xlu0 %v1217, 64
  %v1220 = vpop.permute.xlu0 %1219
  %v1222 = vmul.f32 %v1204, %v1220
  %1224 = vrot.lane.b32.xlu0 %v1222, 32
  %v1225 = vpop.permute.xlu0 %1224
  %s1227 = scalar_lea.vmem %s8, 6
  %1228 = vst.msk [vmem:[%s1227] sm:$0x3] %vm130, %v1225
  %v1229 = vld [vmem:[%s223] sm:$0x3]
  %v1230 = vsel %vm38, %v1225, 0
  %1232 = vmatpush.msra.mxu0 0.0
  %1233 = vmatpush.msra.mxu0 0.0
  %1234 = vmatpush.msra.mxu0 0.0
  %1235 = vmatpush.msra.mxu0 0.0
  %1236 = vmatpush.msra.mxu0 0.0
  %1237 = vmatpush.msra.mxu0 0.0
  %1238 = vmatpush.msra.mxu0 0.0
  %1239 = vmatpush.msra.mxu0 0.0
  %1240 = vmatpush.msra.mxu0 0.0
  %1241 = vmatpush.msra.mxu0 0.0
  %1242 = vmatpush.msra.mxu0 0.0
  %1243 = vmatpush.msra.mxu0 0.0
  %1244 = vmatpush.msra.mxu0 %v776
  %1245 = vmatpush.msra.mxu0 %v775
  %1246 = vmatpush.msra.mxu0 %v774
  %1247 = vmatpush.msra.mxu0 %v773
  %1248 = vmatmul.f32.gmra.mxu0 %v1230
  %v1249 = vpop.f32.mrf.mxu0
  %v1250 = vadd.f32 0.0, %v1249
  %1251 = vdwg.mxu0
  %v1253 = vsel %vm38, %v1229, 0
  %1255 = vmatpush.msra.mxu0 0.0
  %1256 = vmatpush.msra.mxu0 0.0
  %1257 = vmatpush.msra.mxu0 0.0
  %1258 = vmatpush.msra.mxu0 0.0
  %1259 = vmatpush.msra.mxu0 0.0
  %1260 = vmatpush.msra.mxu0 0.0
  %1261 = vmatpush.msra.mxu0 0.0
  %1262 = vmatpush.msra.mxu0 0.0
  %1263 = vmatpush.msra.mxu0 0.0
  %1264 = vmatpush.msra.mxu0 0.0
  %1265 = vmatpush.msra.mxu0 0.0
  %1266 = vmatpush.msra.mxu0 0.0
  %1267 = vmatpush.msra.mxu0 %v772
  %1268 = vmatpush.msra.mxu0 %v771
  %1269 = vmatpush.msra.mxu0 %v770
  %1270 = vmatpush.msra.mxu0 %v769
  %1271 = vmatmul.f32.gmra.mxu0 %v1253
  %v1272 = vpop.f32.mrf.mxu0
  %v1273 = vadd.f32 %v1250, %v1272
  %1274 = vdwg.mxu0
  %v1275 = vadd.f32 %v1273, %v823
  %v1276 = vxor.u32 %v1275, 2147483648
  %v1277 = vmul.f32 %v1276, 1.442695
  %v1278 = vpow.pop %v1277
  %v1279 = vadd.f32 %v1278, 1.0
  %v1280 = vrcp.pop %v1279
  %v1281 = vmul.f32 %v1279, %v1280
  %v1282 = vsub.f32 1.0, %v1281
  %v1283 = vmul.f32 %v1280, %v1282
  %v1284 = vadd.f32 %v1280, %v1283
  %vm1285 = vweird.f32 %v1279
  %vm1286 = vweird.f32 %v1280
  %vm1287 = vmor %vm1285, %vm1286
  %v1288 = vsel %vm1287, %v1280, %v1284
  %v1289 = vand.u32 2147483647, %v1279
  %vm1290 = vcmp.eq.f32.partialorder %v1289, 8.507059e+37
  %v1291 = vand.u32 %v1279, 2147483648
  %v1292 = vor.u32 1.1754944e-38, %v1291
  %v1293 = vsel %vm1290, %v1292, %v1288
  %v1294 = vmul.f32 1.0, %v1293
  %v1295 = vtanh.pop %v1275
  %v1296 = vmul.f32 %v1294, %v1216
  %1298 = vrot.lane.b32.xlu0 %v1295, 64
  %v1299 = vpop.permute.xlu0 %1298
  %v1301 = vmul.f32 %v1294, %v1299
  %1303 = vrot.lane.b32.xlu0 %v1301, 32
  %v1304 = vpop.permute.xlu0 %1303
  %v1306 = vadd.f32 %v1296, %v1304
  %v1307 = vtanh.pop %v1306
  %1309 = vrot.lane.b32.xlu0 %v1307, 64
  %v1310 = vpop.permute.xlu0 %1309
  %v1312 = vmul.f32 %v1294, %v1310
  %1314 = vrot.lane.b32.xlu0 %v1312, 32
  %v1315 = vpop.permute.xlu0 %1314
  %s1317 = scalar_lea.vmem %s8, 4
  %1318 = vst.msk [vmem:[%s1317] sm:$0x3] %vm130, %v1315
  %v1319 = vld [vmem:[%s132] sm:$0x3]
  %v1320 = vsel %vm38, %v1315, 0
  %1322 = vmatpush.msra.mxu0 0.0
  %1323 = vmatpush.msra.mxu0 0.0
  %1324 = vmatpush.msra.mxu0 0.0
  %1325 = vmatpush.msra.mxu0 0.0
  %1326 = vmatpush.msra.mxu0 0.0
  %1327 = vmatpush.msra.mxu0 0.0
  %1328 = vmatpush.msra.mxu0 0.0
  %1329 = vmatpush.msra.mxu0 0.0
  %1330 = vmatpush.msra.mxu0 0.0
  %1331 = vmatpush.msra.mxu0 0.0
  %1332 = vmatpush.msra.mxu0 0.0
  %1333 = vmatpush.msra.mxu0 0.0
  %1334 = vmatpush.msra.mxu0 %v776
  %1335 = vmatpush.msra.mxu0 %v775
  %1336 = vmatpush.msra.mxu0 %v774
  %1337 = vmatpush.msra.mxu0 %v773
  %1338 = vmatmul.f32.gmra.mxu0 %v1320
  %v1339 = vpop.f32.mrf.mxu0
  %v1340 = vadd.f32 0.0, %v1339
  %1341 = vdwg.mxu0
  %v1343 = vsel %vm38, %v1319, 0
  %1345 = vmatpush.msra.mxu0 0.0
  %1346 = vmatpush.msra.mxu0 0.0
  %1347 = vmatpush.msra.mxu0 0.0
  %1348 = vmatpush.msra.mxu0 0.0
  %1349 = vmatpush.msra.mxu0 0.0
  %1350 = vmatpush.msra.mxu0 0.0
  %1351 = vmatpush.msra.mxu0 0.0
  %1352 = vmatpush.msra.mxu0 0.0
  %1353 = vmatpush.msra.mxu0 0.0
  %1354 = vmatpush.msra.mxu0 0.0
  %1355 = vmatpush.msra.mxu0 0.0
  %1356 = vmatpush.msra.mxu0 0.0
  %1357 = vmatpush.msra.mxu0 %v772
  %1358 = vmatpush.msra.mxu0 %v771
  %1359 = vmatpush.msra.mxu0 %v770
  %1360 = vmatpush.msra.mxu0 %v769
  %1361 = vmatmul.f32.gmra.mxu0 %v1343
  %v1362 = vpop.f32.mrf.mxu0
  %v1363 = vadd.f32 %v1340, %v1362
  %1364 = vdwg.mxu0
  %v1365 = vadd.f32 %v1363, %v823
  %v1366 = vxor.u32 %v1365, 2147483648
  %v1367 = vmul.f32 %v1366, 1.442695
  %v1368 = vpow.pop %v1367
  %v1369 = vadd.f32 %v1368, 1.0
  %v1370 = vrcp.pop %v1369
  %v1371 = vmul.f32 %v1369, %v1370
  %v1372 = vsub.f32 1.0, %v1371
  %v1373 = vmul.f32 %v1370, %v1372
  %v1374 = vadd.f32 %v1370, %v1373
  %vm1375 = vweird.f32 %v1369
  %vm1376 = vweird.f32 %v1370
  %vm1377 = vmor %vm1375, %vm1376
  %v1378 = vsel %vm1377, %v1370, %v1374
  %v1379 = vand.u32 2147483647, %v1369
  %vm1380 = vcmp.eq.f32.partialorder %v1379, 8.507059e+37
  %v1381 = vand.u32 %v1369, 2147483648
  %v1382 = vor.u32 1.1754944e-38, %v1381
  %v1383 = vsel %vm1380, %v1382, %v1378
  %v1384 = vmul.f32 1.0, %v1383
  %v1385 = vtanh.pop %v1365
  %v1386 = vmul.f32 %v1384, %v1306
  %1388 = vrot.lane.b32.xlu0 %v1385, 64
  %v1389 = vpop.permute.xlu0 %1388
  %v1391 = vmul.f32 %v1384, %v1389
  %1393 = vrot.lane.b32.xlu0 %v1391, 32
  %v1394 = vpop.permute.xlu0 %1393
  %v1396 = vadd.f32 %v1386, %v1394
  %v1397 = vtanh.pop %v1396
  %1399 = vrot.lane.b32.xlu0 %v1397, 64
  %v1400 = vpop.permute.xlu0 %1399
  %v1402 = vmul.f32 %v1384, %v1400
  %1404 = vrot.lane.b32.xlu0 %v1402, 32
  %v1405 = vpop.permute.xlu0 %1404
  %s1407 = scalar_lea.vmem %s8, 2
  %1408 = vst.msk [vmem:[%s1407] sm:$0x3] %vm130, %v1405
  %v1409 = vld [vmem:[%s0] sm:$0x3]
  %v1410 = vsel %vm38, %v1405, 0
  %1412 = vmatpush.msra.mxu0 0.0
  %1413 = vmatpush.msra.mxu0 0.0
  %1414 = vmatpush.msra.mxu0 0.0
  %1415 = vmatpush.msra.mxu0 0.0
  %1416 = vmatpush.msra.mxu0 0.0
  %1417 = vmatpush.msra.mxu0 0.0
  %1418 = vmatpush.msra.mxu0 0.0
  %1419 = vmatpush.msra.mxu0 0.0
  %1420 = vmatpush.msra.mxu0 0.0
  %1421 = vmatpush.msra.mxu0 0.0
  %1422 = vmatpush.msra.mxu0 0.0
  %1423 = vmatpush.msra.mxu0 0.0
  %1424 = vmatpush.msra.mxu0 %v776
  %1425 = vmatpush.msra.mxu0 %v775
  %1426 = vmatpush.msra.mxu0 %v774
  %1427 = vmatpush.msra.mxu0 %v773
  %1428 = vmatmul.f32.gmra.mxu0 %v1410
  %v1429 = vpop.f32.mrf.mxu0
  %v1430 = vadd.f32 0.0, %v1429
  %1431 = vdwg.mxu0
  %v1433 = vsel %vm38, %v1409, 0
  %1435 = vmatpush.msra.mxu0 0.0
  %1436 = vmatpush.msra.mxu0 0.0
  %1437 = vmatpush.msra.mxu0 0.0
  %1438 = vmatpush.msra.mxu0 0.0
  %1439 = vmatpush.msra.mxu0 0.0
  %1440 = vmatpush.msra.mxu0 0.0
  %1441 = vmatpush.msra.mxu0 0.0
  %1442 = vmatpush.msra.mxu0 0.0
  %1443 = vmatpush.msra.mxu0 0.0
  %1444 = vmatpush.msra.mxu0 0.0
  %1445 = vmatpush.msra.mxu0 0.0
  %1446 = vmatpush.msra.mxu0 0.0
  %1447 = vmatpush.msra.mxu0 %v772
  %1448 = vmatpush.msra.mxu0 %v771
  %1449 = vmatpush.msra.mxu0 %v770
  %1450 = vmatpush.msra.mxu0 %v769
  %1451 = vmatmul.f32.gmra.mxu0 %v1433
  %v1452 = vpop.f32.mrf.mxu0
  %v1453 = vadd.f32 %v1430, %v1452
  %1454 = vdwg.mxu0
  %v1455 = vadd.f32 %v1453, %v823
  %v1456 = vxor.u32 %v1455, 2147483648
  %v1457 = vmul.f32 %v1456, 1.442695
  %v1458 = vpow.pop %v1457
  %v1459 = vadd.f32 %v1458, 1.0
  %v1460 = vrcp.pop %v1459
  %v1461 = vmul.f32 %v1459, %v1460
  %v1462 = vsub.f32 1.0, %v1461
  %v1463 = vmul.f32 %v1460, %v1462
  %v1464 = vadd.f32 %v1460, %v1463
  %vm1465 = vweird.f32 %v1459
  %vm1466 = vweird.f32 %v1460
  %vm1467 = vmor %vm1465, %vm1466
  %v1468 = vsel %vm1467, %v1460, %v1464
  %v1469 = vand.u32 2147483647, %v1459
  %vm1470 = vcmp.eq.f32.partialorder %v1469, 8.507059e+37
  %v1471 = vand.u32 %v1459, 2147483648
  %v1472 = vor.u32 1.1754944e-38, %v1471
  %v1473 = vsel %vm1470, %v1472, %v1468
  %v1474 = vmul.f32 1.0, %v1473
  %v1475 = vtanh.pop %v1455
  %v1476 = vmul.f32 %v1474, %v1396
  %1478 = vrot.lane.b32.xlu0 %v1475, 64
  %v1479 = vpop.permute.xlu0 %1478
  %v1481 = vmul.f32 %v1474, %v1479
  %1483 = vrot.lane.b32.xlu0 %v1481, 32
  %v1484 = vpop.permute.xlu0 %1483
  %v1486 = vadd.f32 %v1476, %v1484
  %v1487 = vtanh.pop %v1486
  %1489 = vrot.lane.b32.xlu0 %v1487, 64
  %v1490 = vpop.permute.xlu0 %1489
  %v1492 = vmul.f32 %v1474, %v1490
  %1494 = vrot.lane.b32.xlu0 %v1492, 32
  %v1495 = vpop.permute.xlu0 %1494
  %1497 = vst.msk [vmem:[%s8] sm:$0x3] %vm130, %v1495
  // Predicated region
  $region30: #{emcgcn_forward.2} parent=0 // pred_check
    _
  $region31: #{emcgcn_forward.2} parent=0 // pred_check_branch
    %1499 = sbr.rel (0) target = $region33
  $region32: #{emcgcn_forward.2} parent=0 // pred_region
    _
  $region33: #{emcgcn_forward.2} parent=0 // pred_fallthru
    _
  // Predicated region
  $region34: #{emcgcn_forward.2} parent=0 // pred_check
    _
  $region35: #{emcgcn_forward.2} parent=0 // pred_check_branch
    %1501 = sbr.rel (0) target = $region37
  $region36: #{emcgcn_forward.2} parent=0 // pred_region
    _
  $region37: #{emcgcn_forward.2} parent=0 // pred_fallthru
    _
  // Predicated region
  $region38: #{emcgcn_forward.2} parent=0 // pred_check
    _
  $region39: #{emcgcn_forward.2} parent=0 // pred_check_branch
    %1503 = sbr.rel (0) target = $region41
  $region40: #{emcgcn_forward.2} parent=0 // pred_region
    _
  $region41: #{emcgcn_forward.2} parent=0 // pred_fallthru
    _
  // Predicated region
  $region42: #{emcgcn_forward.2} parent=0 // pred_check
    _
  $region43: #{emcgcn_forward.2} parent=0 // pred_check_branch
    %1505 = sbr.rel (0) target = $region45
  $region44: #{emcgcn_forward.2} parent=0 // pred_region
    _
  $region45: #{emcgcn_forward.2} parent=0 // pred_fallthru
    _

// kernel: emcgcn_forward.3
$region0: #{emcgcn_forward.3}
  #allocation0 [shape = 'u32[]', space=smem, size = 0x4, offset = 0x4, fixed_abs, tag = 'smem constant byte address 0x4 - core index']
  #allocation1 [shape = 'u32[72,128]{1,0:T(1,128)}', space=vmem, size = 0x9000, scoped, tag = 'internal scratch']
  %s0 = inlined_call_operand.smem [shape: u32[37], index: -1, kind: input, shape index: {}]
  %s1 = sld [smem:[%s0]]
  %s2 = scalar_lea.smem %s0, 1
  %s3 = sld [smem:[%s2]]
  %s4 = scalar_lea.smem %s0, 2
  %s5 = sld [smem:[%s4]]
  %s6 = scalar_lea.smem %s0, 3
  %s7 = sld [smem:[%s6]]
  %s8 = scalar_lea.smem %s0, 4
  %s9 = sld [smem:[%s8]]
  %s10 = scalar_lea.smem %s0, 5
  %s11 = sld [smem:[%s10]]
  %s12 = scalar_lea.smem %s0, 6
  %s13 = sld [smem:[%s12]]
  %s14 = scalar_lea.smem %s0, 7
  %s15 = sld [smem:[%s14]]
  %s16 = scalar_lea.smem %s0, 8
  %s17 = sld [smem:[%s16]]
  %s18 = scalar_lea.smem %s0, 9
  %s19 = sld [smem:[%s18]]
  %s20 = scalar_lea.smem %s0, 10
  %s21 = sld [smem:[%s20]]
  %s22 = scalar_lea.smem %s0, 11
  %s23 = sld [smem:[%s22]]
  %s24 = scalar_lea.smem %s0, 12
  %s25 = sld [smem:[%s24]]
  %s26 = scalar_lea.smem %s0, 13
  %s27 = sld [smem:[%s26]]
  %s28 = scalar_lea.smem %s0, 14
  %s29 = sld [smem:[%s28]]
  %s30 = scalar_lea.smem %s0, 15
  %s31 = sld [smem:[%s30]]
  %s32 = scalar_lea.smem %s0, 16
  %s33 = sld [smem:[%s32]]
  %s34 = scalar_lea.smem %s0, 17
  %s35 = sld [smem:[%s34]]
  %s36 = scalar_lea.smem %s0, 18
  %s37 = sld [smem:[%s36]]
  %s38 = scalar_lea.smem %s0, 19
  %s39 = sld [smem:[%s38]]
  %s40 = scalar_lea.smem %s0, 20
  %s41 = sld [smem:[%s40]]
  %s42 = scalar_lea.smem %s0, 21
  %s43 = sld [smem:[%s42]]
  %s44 = scalar_lea.smem %s0, 22
  %s45 = sld [smem:[%s44]]
  %s46 = scalar_lea.smem %s0, 23
  %s47 = sld [smem:[%s46]]
  %s48 = scalar_lea.smem %s0, 24
  %s49 = sld [smem:[%s48]]
  %s50 = scalar_lea.smem %s0, 25
  %s51 = sld [smem:[%s50]]
  %s52 = scalar_lea.smem %s0, 26
  %s53 = sld [smem:[%s52]]
  %s54 = scalar_lea.smem %s0, 27
  %s55 = sld [smem:[%s54]]
  %s56 = scalar_lea.smem %s0, 28
  %s57 = sld [smem:[%s56]]
  %s58 = scalar_lea.smem %s0, 29
  %s59 = sld [smem:[%s58]]
  %s60 = scalar_lea.smem %s0, 30
  %s61 = sld [smem:[%s60]]
  %s62 = scalar_lea.smem %s0, 31
  %s63 = sld [smem:[%s62]]
  %s64 = scalar_lea.smem %s0, 32
  %s65 = sld [smem:[%s64]]
  %s66 = scalar_lea.smem %s0, 33
  %s67 = sld [smem:[%s66]]
  %s68 = scalar_lea.smem %s0, 34
  %s69 = sld [smem:[%s68]]
  %s70 = scalar_lea.smem %s0, 35
  %s71 = sld [smem:[%s70]]
  %s72 = scalar_lea.smem %s0, 36
  %s73 = sld [smem:[%s72]]
  %74 = xla_tuple %s69, %s71, %s73
  %s75 = sld [smem:[#allocation0]]
  $region162: #{emcgcn_forward.3} parent=0
    _
  %s77 = ssub.s32 1, %s75
  %s78 = scalar_select 0, %s77, %s75
  $region1: #{emcgcn_forward.3} parent=0
    #allocation2 [shape = 'u8[65536]{0}', space=vmem, size = 0x10000, scoped, tag = 'output window, operand 0, single buffered']
    #allocation3 [shape = 's32[1]{0}', space=sflag, size = 0x4, scoped, tag = 'scoped memory for emcgcn_forward.3']
    #allocation4 [shape = 'u8[65536]{0}', space=vmem, size = 0x10000, scoped, tag = 'output window, operand 1, single buffered']
    #allocation5 [shape = 's32[1]{0}', space=sflag, size = 0x4, scoped, tag = 'scoped memory for emcgcn_forward.3']
    #allocation6 [shape = 'u8[65536]{0}', space=vmem, size = 0x10000, scoped, tag = 'output window, operand 2, single buffered']
    %79 = vsyncpa [#allocation3], 0
    %80 = vsyncpa [#allocation5], 0
    // Predicated region
    $region2: #{emcgcn_forward.3} parent=1 // pred_check
      _
    $region3: #{emcgcn_forward.3} parent=1 // pred_check_branch
      %82 = sbr.rel (0) target = $region5
    $region4: #{emcgcn_forward.3} parent=1 // pred_region
      _
    $region5: #{emcgcn_forward.3} parent=1 // pred_fallthru
      _
    // Predicated region
    $region6: #{emcgcn_forward.3} parent=1 // pred_check
      _
    $region7: #{emcgcn_forward.3} parent=1 // pred_check_branch
      %84 = sbr.rel (0) target = $region9
    $region8: #{emcgcn_forward.3} parent=1 // pred_region
      _
    $region9: #{emcgcn_forward.3} parent=1 // pred_fallthru
      _
    // Predicated region
    $region10: #{emcgcn_forward.3} parent=1 // pred_check
      _
    $region11: #{emcgcn_forward.3} parent=1 // pred_check_branch
      %86 = sbr.rel (0) target = $region13
    $region12: #{emcgcn_forward.3} parent=1 // pred_region
      _
    $region13: #{emcgcn_forward.3} parent=1 // pred_fallthru
      _
    // Predicated region
    $region14: #{emcgcn_forward.3} parent=1 // pred_check
      _
    $region15: #{emcgcn_forward.3} parent=1 // pred_check_branch
      %88 = sbr.rel (0) target = $region17
    $region16: #{emcgcn_forward.3} parent=1 // pred_region
      _
    $region17: #{emcgcn_forward.3} parent=1 // pred_fallthru
      _
    // Predicated region
    $region18: #{emcgcn_forward.3} parent=1 // pred_check
      _
    $region19: #{emcgcn_forward.3} parent=1 // pred_check_branch
      %90 = sbr.rel (0) target = $region21
    $region20: #{emcgcn_forward.3} parent=1 // pred_region
      _
    $region21: #{emcgcn_forward.3} parent=1 // pred_fallthru
      _
    // Predicated region
    $region22: #{emcgcn_forward.3} parent=1 // pred_check
      _
    $region23: #{emcgcn_forward.3} parent=1 // pred_check_branch
      %92 = sbr.rel (0) target = $region25
    $region24: #{emcgcn_forward.3} parent=1 // pred_region
      _
    $region25: #{emcgcn_forward.3} parent=1 // pred_fallthru
      _
    // Predicated region
    $region26: #{emcgcn_forward.3} parent=1 // pred_check
      _
    $region27: #{emcgcn_forward.3} parent=1 // pred_check_branch
      %94 = sbr.rel (0) target = $region29
    $region28: #{emcgcn_forward.3} parent=1 // pred_region
      _
    $region29: #{emcgcn_forward.3} parent=1 // pred_fallthru
      _
    // Predicated region
    $region30: #{emcgcn_forward.3} parent=1 // pred_check
      _
    $region31: #{emcgcn_forward.3} parent=1 // pred_check_branch
      %96 = sbr.rel (0) target = $region33
    $region32: #{emcgcn_forward.3} parent=1 // pred_region
      _
    $region33: #{emcgcn_forward.3} parent=1 // pred_fallthru
      _
    // Predicated region
    $region34: #{emcgcn_forward.3} parent=1 // pred_check
      _
    $region35: #{emcgcn_forward.3} parent=1 // pred_check_branch
      %98 = sbr.rel (0) target = $region37
    $region36: #{emcgcn_forward.3} parent=1 // pred_region
      _
    $region37: #{emcgcn_forward.3} parent=1 // pred_fallthru
      _
    // Predicated region
    $region38: #{emcgcn_forward.3} parent=1 // pred_check
      _
    $region39: #{emcgcn_forward.3} parent=1 // pred_check_branch
      %100 = sbr.rel (0) target = $region41
    $region40: #{emcgcn_forward.3} parent=1 // pred_region
      _
    $region41: #{emcgcn_forward.3} parent=1 // pred_fallthru
      _
    // Predicated region
    $region42: #{emcgcn_forward.3} parent=1 // pred_check
      _
    $region43: #{emcgcn_forward.3} parent=1 // pred_check_branch
      %102 = sbr.rel (0) target = $region45
    $region44: #{emcgcn_forward.3} parent=1 // pred_region
      _
    $region45: #{emcgcn_forward.3} parent=1 // pred_fallthru
      _
    // Predicated region
    $region46: #{emcgcn_forward.3} parent=1 // pred_check
      _
    $region47: #{emcgcn_forward.3} parent=1 // pred_check_branch
      %104 = sbr.rel (0) target = $region49
    $region48: #{emcgcn_forward.3} parent=1 // pred_region
      _
    $region49: #{emcgcn_forward.3} parent=1 // pred_fallthru
      _
    // Predicated region
    $region50: #{emcgcn_forward.3} parent=1 // pred_check
      _
    $region51: #{emcgcn_forward.3} parent=1 // pred_check_branch
      %106 = sbr.rel (0) target = $region53
    $region52: #{emcgcn_forward.3} parent=1 // pred_region
      _
    $region53: #{emcgcn_forward.3} parent=1 // pred_fallthru
      _
    // Predicated region
    $region54: #{emcgcn_forward.3} parent=1 // pred_check
      _
    $region55: #{emcgcn_forward.3} parent=1 // pred_check_branch
      %108 = sbr.rel (0) target = $region57
    $region56: #{emcgcn_forward.3} parent=1 // pred_region
      _
    $region57: #{emcgcn_forward.3} parent=1 // pred_fallthru
      _
    // Predicated region
    $region58: #{emcgcn_forward.3} parent=1 // pred_check
      _
    $region59: #{emcgcn_forward.3} parent=1 // pred_check_branch
      %110 = sbr.rel (0) target = $region61
    $region60: #{emcgcn_forward.3} parent=1 // pred_region
      _
    $region61: #{emcgcn_forward.3} parent=1 // pred_fallthru
      _
    // Predicated region
    $region62: #{emcgcn_forward.3} parent=1 // pred_check
      _
    $region63: #{emcgcn_forward.3} parent=1 // pred_check_branch
      %112 = sbr.rel (0) target = $region65
    $region64: #{emcgcn_forward.3} parent=1 // pred_region
      _
    $region65: #{emcgcn_forward.3} parent=1 // pred_fallthru
      _
    // Predicated region
    $region66: #{emcgcn_forward.3} parent=1 // pred_check
      _
    $region67: #{emcgcn_forward.3} parent=1 // pred_check_branch
      %114 = sbr.rel (0) target = $region69
    $region68: #{emcgcn_forward.3} parent=1 // pred_region
      _
    $region69: #{emcgcn_forward.3} parent=1 // pred_fallthru
      _
    // Predicated region
    $region70: #{emcgcn_forward.3} parent=1 // pred_check
      _
    $region71: #{emcgcn_forward.3} parent=1 // pred_check_branch
      %116 = sbr.rel (0) target = $region73
    $region72: #{emcgcn_forward.3} parent=1 // pred_region
      _
    $region73: #{emcgcn_forward.3} parent=1 // pred_fallthru
      _
    // Predicated region
    $region74: #{emcgcn_forward.3} parent=1 // pred_check
      _
    $region75: #{emcgcn_forward.3} parent=1 // pred_check_branch
      %118 = sbr.rel (0) target = $region77
    $region76: #{emcgcn_forward.3} parent=1 // pred_region
      _
    $region77: #{emcgcn_forward.3} parent=1 // pred_fallthru
      _
    // Predicated region
    $region78: #{emcgcn_forward.3} parent=1 // pred_check
      _
    $region79: #{emcgcn_forward.3} parent=1 // pred_check_branch
      %120 = sbr.rel (0) target = $region81
    $region80: #{emcgcn_forward.3} parent=1 // pred_region
      _
    $region81: #{emcgcn_forward.3} parent=1 // pred_fallthru
      _
    // Predicated region
    $region82: #{emcgcn_forward.3} parent=1 // pred_check
      _
    $region83: #{emcgcn_forward.3} parent=1 // pred_check_branch
      %122 = sbr.rel (0) target = $region85
    $region84: #{emcgcn_forward.3} parent=1 // pred_region
      _
    $region85: #{emcgcn_forward.3} parent=1 // pred_fallthru
      _
    // Predicated region
    $region86: #{emcgcn_forward.3} parent=1 // pred_check
      _
    $region87: #{emcgcn_forward.3} parent=1 // pred_check_branch
      %124 = sbr.rel (0) target = $region89
    $region88: #{emcgcn_forward.3} parent=1 // pred_region
      _
    $region89: #{emcgcn_forward.3} parent=1 // pred_fallthru
      _
    // Predicated region
    $region90: #{emcgcn_forward.3} parent=1 // pred_check
      _
    $region91: #{emcgcn_forward.3} parent=1 // pred_check_branch
      %126 = sbr.rel (0) target = $region93
    $region92: #{emcgcn_forward.3} parent=1 // pred_region
      _
    $region93: #{emcgcn_forward.3} parent=1 // pred_fallthru
      _
    // Predicated region
    $region94: #{emcgcn_forward.3} parent=1 // pred_check
      _
    $region95: #{emcgcn_forward.3} parent=1 // pred_check_branch
      %128 = sbr.rel (0) target = $region97
    $region96: #{emcgcn_forward.3} parent=1 // pred_region
      _
    $region97: #{emcgcn_forward.3} parent=1 // pred_fallthru
      _
    // Predicated region
    $region98: #{emcgcn_forward.3} parent=1 // pred_check
      _
    $region99: #{emcgcn_forward.3} parent=1 // pred_check_branch
      %130 = sbr.rel (0) target = $region101
    $region100: #{emcgcn_forward.3} parent=1 // pred_region
      _
    $region101: #{emcgcn_forward.3} parent=1 // pred_fallthru
      _
    // Predicated region
    $region102: #{emcgcn_forward.3} parent=1 // pred_check
      _
    $region103: #{emcgcn_forward.3} parent=1 // pred_check_branch
      %132 = sbr.rel (0) target = $region105
    $region104: #{emcgcn_forward.3} parent=1 // pred_region
      _
    $region105: #{emcgcn_forward.3} parent=1 // pred_fallthru
      _
    // Predicated region
    $region106: #{emcgcn_forward.3} parent=1 // pred_check
      _
    $region107: #{emcgcn_forward.3} parent=1 // pred_check_branch
      %134 = sbr.rel (0) target = $region109
    $region108: #{emcgcn_forward.3} parent=1 // pred_region
      _
    $region109: #{emcgcn_forward.3} parent=1 // pred_fallthru
      _
    // Predicated region
    $region110: #{emcgcn_forward.3} parent=1 // pred_check
      _
    $region111: #{emcgcn_forward.3} parent=1 // pred_check_branch
      %136 = sbr.rel (0) target = $region113
    $region112: #{emcgcn_forward.3} parent=1 // pred_region
      _
    $region113: #{emcgcn_forward.3} parent=1 // pred_fallthru
      _
    // Predicated region
    $region114: #{emcgcn_forward.3} parent=1 // pred_check
      _
    $region115: #{emcgcn_forward.3} parent=1 // pred_check_branch
      %138 = sbr.rel (0) target = $region117
    $region116: #{emcgcn_forward.3} parent=1 // pred_region
      _
    $region117: #{emcgcn_forward.3} parent=1 // pred_fallthru
      _
    // Predicated region
    $region118: #{emcgcn_forward.3} parent=1 // pred_check
      _
    $region119: #{emcgcn_forward.3} parent=1 // pred_check_branch
      %140 = sbr.rel (0) target = $region121
    $region120: #{emcgcn_forward.3} parent=1 // pred_region
      _
    $region121: #{emcgcn_forward.3} parent=1 // pred_fallthru
      _
    // Predicated region
    $region122: #{emcgcn_forward.3} parent=1 // pred_check
      _
    $region123: #{emcgcn_forward.3} parent=1 // pred_check_branch
      %142 = sbr.rel (0) target = $region125
    $region124: #{emcgcn_forward.3} parent=1 // pred_region
      _
    $region125: #{emcgcn_forward.3} parent=1 // pred_fallthru
      _
    // Predicated region
    $region126: #{emcgcn_forward.3} parent=1 // pred_check
      _
    $region127: #{emcgcn_forward.3} parent=1 // pred_check_branch
      %144 = sbr.rel (0) target = $region129
    $region128: #{emcgcn_forward.3} parent=1 // pred_region
      _
    $region129: #{emcgcn_forward.3} parent=1 // pred_fallthru
      _
    // Predicated region
    $region130: #{emcgcn_forward.3} parent=1 // pred_check
      _
    $region131: #{emcgcn_forward.3} parent=1 // pred_check_branch
      %146 = sbr.rel (0) target = $region133
    $region132: #{emcgcn_forward.3} parent=1 // pred_region
      _
    $region133: #{emcgcn_forward.3} parent=1 // pred_fallthru
      _
    // Predicated region
    $region134: #{emcgcn_forward.3} parent=1 // pred_check
      _
    $region135: #{emcgcn_forward.3} parent=1 // pred_check_branch
      %148 = sbr.rel (0) target = $region137
    $region136: #{emcgcn_forward.3} parent=1 // pred_region
      _
    $region137: #{emcgcn_forward.3} parent=1 // pred_fallthru
      _
    %v149 = vld [vmem:[%s9] sm:$0xff]
    %v150 = vld [vmem:[%s9 + $0x8] sm:$0xff]
    %v151 = vld [vmem:[%s9 + $0x10] sm:$0xff]
    %v152 = vld [vmem:[%s9 + $0x18] sm:$0xff]
    %v153 = vld [vmem:[%s9 + $0x20] sm:$0xff]
    %v154 = vld [vmem:[%s9 + $0x28] sm:$0xff]
    %v155 = vld [vmem:[%s9 + $0x30] sm:$0xff]
    %v156 = vld [vmem:[%s9 + $0x38] sm:$0xff]
    %v157 = vld [vmem:[%s9 + $0x40] sm:$0xff]
    %v158 = vld [vmem:[%s9 + $0x48] sm:$0xff]
    %v159 = vld [vmem:[%s9 + $0x50] sm:$0xff]
    %v160 = vld [vmem:[%s9 + $0x58] sm:$0xff]
    %v161 = vld [vmem:[%s9 + $0x60] sm:$0xff]
    %v162 = vld [vmem:[%s9 + $0x68] sm:$0xff]
    %v163 = vld [vmem:[%s9 + $0x70] sm:$0xff]
    %v164 = vld [vmem:[%s9 + $0x78] sm:$0xff]
    %v165 = vld [vmem:[%s11] sm:$0xff]
    %v166 = vld [vmem:[%s11 + $0x8] sm:$0xff]
    %v167 = vld [vmem:[%s11 + $0x10] sm:$0xff]
    %v168 = vld [vmem:[%s11 + $0x18] sm:$0xff]
    %v169 = vld [vmem:[%s11 + $0x20] sm:$0xff]
    %v170 = vld [vmem:[%s11 + $0x28] sm:$0xff]
    %v171 = vld [vmem:[%s11 + $0x30] sm:$0xff]
    %v172 = vld [vmem:[%s11 + $0x38] sm:$0xff]
    %v173 = vld [vmem:[%s11 + $0x40] sm:$0xff]
    %v174 = vld [vmem:[%s11 + $0x48] sm:$0xff]
    %v175 = vld [vmem:[%s11 + $0x50] sm:$0xff]
    %v176 = vld [vmem:[%s11 + $0x58] sm:$0xff]
    %v177 = vld [vmem:[%s11 + $0x60] sm:$0xff]
    %v178 = vld [vmem:[%s11 + $0x68] sm:$0xff]
    %v179 = vld [vmem:[%s11 + $0x70] sm:$0xff]
    %v180 = vld [vmem:[%s11 + $0x78] sm:$0xff]
    %v181 = vld [vmem:[%s1] sm:$0xff]
    %v182 = vld [vmem:[%s1 + $0x8] sm:$0xff]
    %v183 = vld [vmem:[%s23] sm:$0xff]
    %v184 = vld [vmem:[%s23 + $0x8] sm:$0xff]
    %v185 = vld [vmem:[%s23 + $0x10] sm:$0xff]
    %v186 = vld [vmem:[%s23 + $0x18] sm:$0xff]
    %v187 = vld [vmem:[%s23 + $0x20] sm:$0xff]
    %v188 = vld [vmem:[%s23 + $0x28] sm:$0xff]
    %v189 = vld [vmem:[%s23 + $0x30] sm:$0xff]
    %v190 = vld [vmem:[%s23 + $0x38] sm:$0xff]
    %v191 = vld [vmem:[%s25] sm:$0x1]
    %v193 = vperm.slane %v191, 0
    %vm195 = vcmask 523264
    %v197 = vsel %vm195, %v181, 0
    %v200 = vsel %vm195, %v182, 0
    %202 = vmatpush.msra.mxu0 0.0
    %203 = vmatpush.msra.mxu0 0.0
    %204 = vmatpush.msra.mxu0 0.0
    %205 = vmatpush.msra.mxu0 0.0
    %206 = vmatpush.msra.mxu0 0.0
    %207 = vmatpush.msra.mxu0 0.0
    %208 = vmatpush.msra.mxu0 0.0
    %209 = vmatpush.msra.mxu0 0.0
    %210 = vmatpush.msra.mxu0 %v190
    %211 = vmatpush.msra.mxu0 %v189
    %212 = vmatpush.msra.mxu0 %v188
    %213 = vmatpush.msra.mxu0 %v187
    %214 = vmatpush.msra.mxu0 %v186
    %215 = vmatpush.msra.mxu0 %v185
    %216 = vmatpush.msra.mxu0 %v184
    %217 = vmatpush.msra.mxu0 %v183
    %218 = vmatmul.f32.gmra.mxu0 %v197
    %v219 = vpop.f32.mrf.mxu0
    %v220 = vadd.f32 %v193, %v219
    %221 = vmatmul.f32.gmra.mxu0 %v200
    %v222 = vpop.f32.mrf.mxu0
    %v223 = vadd.f32 %v193, %v222
    %224 = vdwg.mxu0
    %v225 = vmax.f32 %v220, 0.0
    %v226 = vmax.f32 %v223, 0.0
    %vm227 = vcmask 130048
    %v229 = vsel %vm227, %v165, 0
    %v232 = vsel %vm227, %v166, 0
    %v235 = vsel %vm227, %v167, 0
    %v238 = vsel %vm227, %v168, 0
    %v241 = vsel %vm227, %v169, 0
    %v244 = vsel %vm227, %v170, 0
    %v247 = vsel %vm227, %v171, 0
    %v250 = vsel %vm227, %v172, 0
    %v253 = vsel %vm227, %v173, 0
    %v256 = vsel %vm227, %v174, 0
    %v259 = vsel %vm227, %v175, 0
    %v262 = vsel %vm227, %v176, 0
    %v265 = vsel %vm227, %v177, 0
    %v268 = vsel %vm227, %v178, 0
    %v271 = vsel %vm227, %v179, 0
    %v274 = vsel %vm227, %v180, 0
    %276 = vmatpush.msra.mxu0 0.0
    %277 = vmatpush.msra.mxu0 0.0
    %278 = vmatpush.msra.mxu0 0.0
    %279 = vmatpush.msra.mxu0 0.0
    %280 = vmatpush.msra.mxu0 0.0
    %281 = vmatpush.msra.mxu0 0.0
    %282 = vmatpush.msra.mxu0 0.0
    %283 = vmatpush.msra.mxu0 0.0
    %284 = vmatpush.msra.mxu0 0.0
    %285 = vmatpush.msra.mxu0 0.0
    %286 = vmatpush.msra.mxu0 0.0
    %287 = vmatpush.msra.mxu0 0.0
    %288 = vmatpush.msra.mxu0 0.0
    %289 = vmatpush.msra.mxu0 0.0
    %290 = vmatpush.msra.mxu0 %v226
    %291 = vmatpush.msra.mxu0 %v225
    %292 = vmatmul.f32.gmra.mxu0 %v229
    %v293 = vpop.f32.mrf.mxu0
    %v294 = vadd.f32 0.0, %v293
    %295 = vmatmul.f32.gmra.mxu0 %v232
    %v296 = vpop.f32.mrf.mxu0
    %v297 = vadd.f32 0.0, %v296
    %298 = vmatmul.f32.gmra.mxu0 %v235
    %v299 = vpop.f32.mrf.mxu0
    %v300 = vadd.f32 0.0, %v299
    %301 = vmatmul.f32.gmra.mxu0 %v238
    %v302 = vpop.f32.mrf.mxu0
    %v303 = vadd.f32 0.0, %v302
    %304 = vmatmul.f32.gmra.mxu0 %v241
    %v305 = vpop.f32.mrf.mxu0
    %v306 = vadd.f32 0.0, %v305
    %307 = vmatmul.f32.gmra.mxu0 %v244
    %v308 = vpop.f32.mrf.mxu0
    %v309 = vadd.f32 0.0, %v308
    %310 = vmatmul.f32.gmra.mxu0 %v247
    %v311 = vpop.f32.mrf.mxu0
    %v312 = vadd.f32 0.0, %v311
    %313 = vmatmul.f32.gmra.mxu0 %v250
    %v314 = vpop.f32.mrf.mxu0
    %v315 = vadd.f32 0.0, %v314
    %316 = vmatmul.f32.gmra.mxu0 %v253
    %v317 = vpop.f32.mrf.mxu0
    %v318 = vadd.f32 0.0, %v317
    %319 = vmatmul.f32.gmra.mxu0 %v256
    %v320 = vpop.f32.mrf.mxu0
    %v321 = vadd.f32 0.0, %v320
    %322 = vmatmul.f32.gmra.mxu0 %v259
    %v323 = vpop.f32.mrf.mxu0
    %v324 = vadd.f32 0.0, %v323
    %325 = vmatmul.f32.gmra.mxu0 %v262
    %v326 = vpop.f32.mrf.mxu0
    %v327 = vadd.f32 0.0, %v326
    %328 = vmatmul.f32.gmra.mxu0 %v265
    %v329 = vpop.f32.mrf.mxu0
    %v330 = vadd.f32 0.0, %v329
    %331 = vmatmul.f32.gmra.mxu0 %v268
    %v332 = vpop.f32.mrf.mxu0
    %v333 = vadd.f32 0.0, %v332
    %334 = vmatmul.f32.gmra.mxu0 %v271
    %v335 = vpop.f32.mrf.mxu0
    %v336 = vadd.f32 0.0, %v335
    %337 = vmatmul.f32.gmra.mxu0 %v274
    %v338 = vpop.f32.mrf.mxu0
    %v339 = vadd.f32 0.0, %v338
    %340 = vdwg.mxu0
    %343 = vrot.lane.b32.xlu0 %v225, 95
    %v344 = vpop.permute.xlu0 %343
    %345 = vrot.lane.b32.xlu0 %v226, 95
    %v346 = vpop.permute.xlu0 %345
    %v350 = vsel %vm227, %v149, 0
    %v353 = vsel %vm227, %v150, 0
    %v356 = vsel %vm227, %v151, 0
    %v359 = vsel %vm227, %v152, 0
    %v362 = vsel %vm227, %v153, 0
    %v365 = vsel %vm227, %v154, 0
    %v368 = vsel %vm227, %v155, 0
    %v371 = vsel %vm227, %v156, 0
    %v374 = vsel %vm227, %v157, 0
    %v377 = vsel %vm227, %v158, 0
    %v380 = vsel %vm227, %v159, 0
    %v383 = vsel %vm227, %v160, 0
    %v386 = vsel %vm227, %v161, 0
    %v389 = vsel %vm227, %v162, 0
    %v392 = vsel %vm227, %v163, 0
    %v395 = vsel %vm227, %v164, 0
    %397 = vmatpush.msra.mxu0 0.0
    %398 = vmatpush.msra.mxu0 0.0
    %399 = vmatpush.msra.mxu0 0.0
    %400 = vmatpush.msra.mxu0 0.0
    %401 = vmatpush.msra.mxu0 0.0
    %402 = vmatpush.msra.mxu0 0.0
    %403 = vmatpush.msra.mxu0 0.0
    %404 = vmatpush.msra.mxu0 0.0
    %405 = vmatpush.msra.mxu0 0.0
    %406 = vmatpush.msra.mxu0 0.0
    %407 = vmatpush.msra.mxu0 0.0
    %408 = vmatpush.msra.mxu0 0.0
    %409 = vmatpush.msra.mxu0 0.0
    %410 = vmatpush.msra.mxu0 0.0
    %411 = vmatpush.msra.mxu0 %v346
    %412 = vmatpush.msra.mxu0 %v344
    %413 = vmatmul.f32.gmra.mxu0 %v350
    %v414 = vpop.f32.mrf.mxu0
    %v415 = vadd.f32 0.0, %v414
    %416 = vmatmul.f32.gmra.mxu0 %v353
    %v417 = vpop.f32.mrf.mxu0
    %v418 = vadd.f32 0.0, %v417
    %419 = vmatmul.f32.gmra.mxu0 %v356
    %v420 = vpop.f32.mrf.mxu0
    %v421 = vadd.f32 0.0, %v420
    %422 = vmatmul.f32.gmra.mxu0 %v359
    %v423 = vpop.f32.mrf.mxu0
    %v424 = vadd.f32 0.0, %v423
    %425 = vmatmul.f32.gmra.mxu0 %v362
    %v426 = vpop.f32.mrf.mxu0
    %v427 = vadd.f32 0.0, %v426
    %428 = vmatmul.f32.gmra.mxu0 %v365
    %v429 = vpop.f32.mrf.mxu0
    %v430 = vadd.f32 0.0, %v429
    %431 = vmatmul.f32.gmra.mxu0 %v368
    %v432 = vpop.f32.mrf.mxu0
    %v433 = vadd.f32 0.0, %v432
    %434 = vmatmul.f32.gmra.mxu0 %v371
    %v435 = vpop.f32.mrf.mxu0
    %v436 = vadd.f32 0.0, %v435
    %437 = vmatmul.f32.gmra.mxu0 %v374
    %v438 = vpop.f32.mrf.mxu0
    %v439 = vadd.f32 0.0, %v438
    %440 = vmatmul.f32.gmra.mxu0 %v377
    %v441 = vpop.f32.mrf.mxu0
    %v442 = vadd.f32 0.0, %v441
    %443 = vmatmul.f32.gmra.mxu0 %v380
    %v444 = vpop.f32.mrf.mxu0
    %v445 = vadd.f32 0.0, %v444
    %446 = vmatmul.f32.gmra.mxu0 %v383
    %v447 = vpop.f32.mrf.mxu0
    %v448 = vadd.f32 0.0, %v447
    %449 = vmatmul.f32.gmra.mxu0 %v386
    %v450 = vpop.f32.mrf.mxu0
    %v451 = vadd.f32 0.0, %v450
    %452 = vmatmul.f32.gmra.mxu0 %v389
    %v453 = vpop.f32.mrf.mxu0
    %v454 = vadd.f32 0.0, %v453
    %455 = vmatmul.f32.gmra.mxu0 %v392
    %v456 = vpop.f32.mrf.mxu0
    %v457 = vadd.f32 0.0, %v456
    %458 = vmatmul.f32.gmra.mxu0 %v395
    %v459 = vpop.f32.mrf.mxu0
    %v460 = vadd.f32 0.0, %v459
    %461 = vdwg.mxu0
    %v462 = vld [vmem:[%s27] sm:$0xff]
    %v463 = vld [vmem:[%s27 + $0x8] sm:$0xff]
    %v464 = vld [vmem:[%s27 + $0x10] sm:$0xff]
    %v465 = vld [vmem:[%s27 + $0x18] sm:$0xff]
    %v466 = vld [vmem:[%s27 + $0x20] sm:$0xff]
    %v467 = vld [vmem:[%s27 + $0x28] sm:$0xff]
    %v468 = vld [vmem:[%s27 + $0x30] sm:$0xff]
    %v469 = vld [vmem:[%s27 + $0x38] sm:$0xff]
    %v470 = vld [vmem:[%s27 + $0x40] sm:$0xff]
    %v471 = vld [vmem:[%s27 + $0x48] sm:$0xff]
    %v472 = vld [vmem:[%s27 + $0x50] sm:$0xff]
    %v473 = vld [vmem:[%s27 + $0x58] sm:$0xff]
    %v474 = vld [vmem:[%s27 + $0x60] sm:$0x1]
    %v475 = vld [vmem:[%s27 + $0x68] sm:$0x1]
    %v476 = vld [vmem:[%s27 + $0x70] sm:$0x1]
    %vm477 = vcmask 269312
    %v479 = vsel %vm477, %v415, 0
    %v482 = vsel %vm477, %v418, 0
    %v485 = vsel %vm477, %v421, 0
    %v488 = vsel %vm477, %v424, 0
    %v491 = vsel %vm477, %v427, 0
    %v494 = vsel %vm477, %v430, 0
    %v497 = vsel %vm477, %v433, 0
    %v500 = vsel %vm477, %v436, 0
    %v503 = vsel %vm477, %v439, 0
    %v506 = vsel %vm477, %v442, 0
    %v509 = vsel %vm477, %v445, 0
    %v512 = vsel %vm477, %v448, 0
    %v515 = vsel %vm477, %v451, 0
    %v518 = vsel %vm477, %v454, 0
    %v521 = vsel %vm477, %v457, 0
    %v524 = vsel %vm477, %v460, 0
    %vm526 = vcmask 1040384
    %v528 = vsel %vm526, %v474, 0
    %v531 = vsel %vm526, %v475, 0
    %v534 = vsel %vm526, %v476, 0
    %536 = vmatpush.msra.mxu0 0.0
    %537 = vmatpush.msra.mxu0 0.0
    %538 = vmatpush.msra.mxu0 0.0
    %539 = vmatpush.msra.mxu0 0.0
    %540 = vmatpush.msra.mxu0 0.0
    %541 = vmatpush.msra.mxu0 0.0
    %542 = vmatpush.msra.mxu0 0.0
    %543 = vmatpush.msra.mxu0 0.0
    %544 = vmatpush.msra.mxu0 0.0
    %545 = vmatpush.msra.mxu0 0.0
    %546 = vmatpush.msra.mxu0 0.0
    %547 = vmatpush.msra.mxu0 %v528
    %548 = vmatpush.msra.mxu0 %v471
    %549 = vmatpush.msra.mxu0 %v468
    %550 = vmatpush.msra.mxu0 %v465
    %551 = vmatpush.msra.mxu0 %v462
    %552 = vmatmul.f32.gmra.mxu0 %v479
    %v553 = vpop.f32.mrf.mxu0
    %v554 = vadd.f32 0.0, %v553
    %555 = vmatmul.f32.gmra.mxu0 %v482
    %v556 = vpop.f32.mrf.mxu0
    %v557 = vadd.f32 0.0, %v556
    %558 = vmatmul.f32.gmra.mxu0 %v485
    %v559 = vpop.f32.mrf.mxu0
    %v560 = vadd.f32 0.0, %v559
    %561 = vmatmul.f32.gmra.mxu0 %v488
    %v562 = vpop.f32.mrf.mxu0
    %v563 = vadd.f32 0.0, %v562
    %564 = vmatmul.f32.gmra.mxu0 %v491
    %v565 = vpop.f32.mrf.mxu0
    %v566 = vadd.f32 0.0, %v565
    %567 = vmatmul.f32.gmra.mxu0 %v494
    %v568 = vpop.f32.mrf.mxu0
    %v569 = vadd.f32 0.0, %v568
    %570 = vmatmul.f32.gmra.mxu0 %v497
    %v571 = vpop.f32.mrf.mxu0
    %v572 = vadd.f32 0.0, %v571
    %573 = vmatmul.f32.gmra.mxu0 %v500
    %v574 = vpop.f32.mrf.mxu0
    %v575 = vadd.f32 0.0, %v574
    %576 = vmatmul.f32.gmra.mxu0 %v503
    %v577 = vpop.f32.mrf.mxu0
    %v578 = vadd.f32 0.0, %v577
    %579 = vmatmul.f32.gmra.mxu0 %v506
    %v580 = vpop.f32.mrf.mxu0
    %v581 = vadd.f32 0.0, %v580
    %582 = vmatmul.f32.gmra.mxu0 %v509
    %v583 = vpop.f32.mrf.mxu0
    %v584 = vadd.f32 0.0, %v583
    %585 = vmatmul.f32.gmra.mxu0 %v512
    %v586 = vpop.f32.mrf.mxu0
    %v587 = vadd.f32 0.0, %v586
    %588 = vmatmul.f32.gmra.mxu0 %v515
    %v589 = vpop.f32.mrf.mxu0
    %v590 = vadd.f32 0.0, %v589
    %591 = vmatmul.f32.gmra.mxu0 %v518
    %v592 = vpop.f32.mrf.mxu0
    %v593 = vadd.f32 0.0, %v592
    %594 = vmatmul.f32.gmra.mxu0 %v521
    %v595 = vpop.f32.mrf.mxu0
    %v596 = vadd.f32 0.0, %v595
    %597 = vmatmul.f32.gmra.mxu0 %v524
    %v598 = vpop.f32.mrf.mxu0
    %v599 = vadd.f32 0.0, %v598
    %600 = vdwg.mxu0
    %601 = vmatpush.msra.mxu0 0.0
    %602 = vmatpush.msra.mxu0 0.0
    %603 = vmatpush.msra.mxu0 0.0
    %604 = vmatpush.msra.mxu0 0.0
    %605 = vmatpush.msra.mxu0 0.0
    %606 = vmatpush.msra.mxu0 0.0
    %607 = vmatpush.msra.mxu0 0.0
    %608 = vmatpush.msra.mxu0 0.0
    %609 = vmatpush.msra.mxu0 0.0
    %610 = vmatpush.msra.mxu0 0.0
    %611 = vmatpush.msra.mxu0 0.0
    %612 = vmatpush.msra.mxu0 %v531
    %613 = vmatpush.msra.mxu0 %v472
    %614 = vmatpush.msra.mxu0 %v469
    %615 = vmatpush.msra.mxu0 %v466
    %616 = vmatpush.msra.mxu0 %v463
    %617 = vmatmul.f32.gmra.mxu0 %v479
    %v618 = vpop.f32.mrf.mxu0
    %v619 = vadd.f32 0.0, %v618
    %620 = vmatmul.f32.gmra.mxu0 %v482
    %v621 = vpop.f32.mrf.mxu0
    %v622 = vadd.f32 0.0, %v621
    %623 = vmatmul.f32.gmra.mxu0 %v485
    %v624 = vpop.f32.mrf.mxu0
    %v625 = vadd.f32 0.0, %v624
    %626 = vmatmul.f32.gmra.mxu0 %v488
    %v627 = vpop.f32.mrf.mxu0
    %v628 = vadd.f32 0.0, %v627
    %629 = vmatmul.f32.gmra.mxu0 %v491
    %v630 = vpop.f32.mrf.mxu0
    %v631 = vadd.f32 0.0, %v630
    %632 = vmatmul.f32.gmra.mxu0 %v494
    %v633 = vpop.f32.mrf.mxu0
    %v634 = vadd.f32 0.0, %v633
    %635 = vmatmul.f32.gmra.mxu0 %v497
    %v636 = vpop.f32.mrf.mxu0
    %v637 = vadd.f32 0.0, %v636
    %638 = vmatmul.f32.gmra.mxu0 %v500
    %v639 = vpop.f32.mrf.mxu0
    %v640 = vadd.f32 0.0, %v639
    %641 = vmatmul.f32.gmra.mxu0 %v503
    %v642 = vpop.f32.mrf.mxu0
    %v643 = vadd.f32 0.0, %v642
    %644 = vmatmul.f32.gmra.mxu0 %v506
    %v645 = vpop.f32.mrf.mxu0
    %v646 = vadd.f32 0.0, %v645
    %647 = vmatmul.f32.gmra.mxu0 %v509
    %v648 = vpop.f32.mrf.mxu0
    %v649 = vadd.f32 0.0, %v648
    %650 = vmatmul.f32.gmra.mxu0 %v512
    %v651 = vpop.f32.mrf.mxu0
    %v652 = vadd.f32 0.0, %v651
    %653 = vmatmul.f32.gmra.mxu0 %v515
    %v654 = vpop.f32.mrf.mxu0
    %v655 = vadd.f32 0.0, %v654
    %656 = vmatmul.f32.gmra.mxu0 %v518
    %v657 = vpop.f32.mrf.mxu0
    %v658 = vadd.f32 0.0, %v657
    %659 = vmatmul.f32.gmra.mxu0 %v521
    %v660 = vpop.f32.mrf.mxu0
    %v661 = vadd.f32 0.0, %v660
    %662 = vmatmul.f32.gmra.mxu0 %v524
    %v663 = vpop.f32.mrf.mxu0
    %v664 = vadd.f32 0.0, %v663
    %665 = vdwg.mxu0
    %666 = vmatpush.msra.mxu0 0.0
    %667 = vmatpush.msra.mxu0 0.0
    %668 = vmatpush.msra.mxu0 0.0
    %669 = vmatpush.msra.mxu0 0.0
    %670 = vmatpush.msra.mxu0 0.0
    %671 = vmatpush.msra.mxu0 0.0
    %672 = vmatpush.msra.mxu0 0.0
    %673 = vmatpush.msra.mxu0 0.0
    %674 = vmatpush.msra.mxu0 0.0
    %675 = vmatpush.msra.mxu0 0.0
    %676 = vmatpush.msra.mxu0 0.0
    %677 = vmatpush.msra.mxu0 %v534
    %678 = vmatpush.msra.mxu0 %v473
    %679 = vmatpush.msra.mxu0 %v470
    %680 = vmatpush.msra.mxu0 %v467
    %681 = vmatpush.msra.mxu0 %v464
    %682 = vmatmul.f32.gmra.mxu0 %v479
    %v683 = vpop.f32.mrf.mxu0
    %v684 = vadd.f32 0.0, %v683
    %685 = vmatmul.f32.gmra.mxu0 %v482
    %v686 = vpop.f32.mrf.mxu0
    %v687 = vadd.f32 0.0, %v686
    %688 = vmatmul.f32.gmra.mxu0 %v485
    %v689 = vpop.f32.mrf.mxu0
    %v690 = vadd.f32 0.0, %v689
    %691 = vmatmul.f32.gmra.mxu0 %v488
    %v692 = vpop.f32.mrf.mxu0
    %v693 = vadd.f32 0.0, %v692
    %694 = vmatmul.f32.gmra.mxu0 %v491
    %v695 = vpop.f32.mrf.mxu0
    %v696 = vadd.f32 0.0, %v695
    %697 = vmatmul.f32.gmra.mxu0 %v494
    %v698 = vpop.f32.mrf.mxu0
    %v699 = vadd.f32 0.0, %v698
    %700 = vmatmul.f32.gmra.mxu0 %v497
    %v701 = vpop.f32.mrf.mxu0
    %v702 = vadd.f32 0.0, %v701
    %703 = vmatmul.f32.gmra.mxu0 %v500
    %v704 = vpop.f32.mrf.mxu0
    %v705 = vadd.f32 0.0, %v704
    %706 = vmatmul.f32.gmra.mxu0 %v503
    %v707 = vpop.f32.mrf.mxu0
    %v708 = vadd.f32 0.0, %v707
    %709 = vmatmul.f32.gmra.mxu0 %v506
    %v710 = vpop.f32.mrf.mxu0
    %v711 = vadd.f32 0.0, %v710
    %712 = vmatmul.f32.gmra.mxu0 %v509
    %v713 = vpop.f32.mrf.mxu0
    %v714 = vadd.f32 0.0, %v713
    %715 = vmatmul.f32.gmra.mxu0 %v512
    %v716 = vpop.f32.mrf.mxu0
    %v717 = vadd.f32 0.0, %v716
    %718 = vmatmul.f32.gmra.mxu0 %v515
    %v719 = vpop.f32.mrf.mxu0
    %v720 = vadd.f32 0.0, %v719
    %721 = vmatmul.f32.gmra.mxu0 %v518
    %v722 = vpop.f32.mrf.mxu0
    %v723 = vadd.f32 0.0, %v722
    %724 = vmatmul.f32.gmra.mxu0 %v521
    %v725 = vpop.f32.mrf.mxu0
    %v726 = vadd.f32 0.0, %v725
    %727 = vmatmul.f32.gmra.mxu0 %v524
    %v728 = vpop.f32.mrf.mxu0
    %v729 = vadd.f32 0.0, %v728
    %730 = vdwg.mxu0
    %v731 = vld [vmem:[%s29] sm:$0xff]
    %v732 = vld [vmem:[%s29 + $0x8] sm:$0xff]
    %v733 = vld [vmem:[%s29 + $0x10] sm:$0xff]
    %v734 = vld [vmem:[%s29 + $0x18] sm:$0xff]
    %v735 = vld [vmem:[%s29 + $0x20] sm:$0xff]
    %v736 = vld [vmem:[%s29 + $0x28] sm:$0xff]
    %v737 = vld [vmem:[%s29 + $0x30] sm:$0xff]
    %v738 = vld [vmem:[%s29 + $0x38] sm:$0xff]
    %v739 = vld [vmem:[%s29 + $0x40] sm:$0xff]
    %v740 = vld [vmem:[%s29 + $0x48] sm:$0xff]
    %v741 = vld [vmem:[%s29 + $0x50] sm:$0xff]
    %v742 = vld [vmem:[%s29 + $0x58] sm:$0xff]
    %v743 = vld [vmem:[%s29 + $0x60] sm:$0x1]
    %v744 = vld [vmem:[%s29 + $0x68] sm:$0x1]
    %v745 = vld [vmem:[%s29 + $0x70] sm:$0x1]
    %v747 = vsel %vm477, %v294, 0
    %v750 = vsel %vm477, %v297, 0
    %v753 = vsel %vm477, %v300, 0
    %v756 = vsel %vm477, %v303, 0
    %v759 = vsel %vm477, %v306, 0
    %v762 = vsel %vm477, %v309, 0
    %v765 = vsel %vm477, %v312, 0
    %v768 = vsel %vm477, %v315, 0
    %v771 = vsel %vm477, %v318, 0
    %v774 = vsel %vm477, %v321, 0
    %v777 = vsel %vm477, %v324, 0
    %v780 = vsel %vm477, %v327, 0
    %v783 = vsel %vm477, %v330, 0
    %v786 = vsel %vm477, %v333, 0
    %v789 = vsel %vm477, %v336, 0
    %v792 = vsel %vm477, %v339, 0
    %v795 = vsel %vm526, %v743, 0
    %v798 = vsel %vm526, %v744, 0
    %v801 = vsel %vm526, %v745, 0
    %803 = vmatpush.msra.mxu0 0.0
    %804 = vmatpush.msra.mxu0 0.0
    %805 = vmatpush.msra.mxu0 0.0
    %806 = vmatpush.msra.mxu0 0.0
    %807 = vmatpush.msra.mxu0 0.0
    %808 = vmatpush.msra.mxu0 0.0
    %809 = vmatpush.msra.mxu0 0.0
    %810 = vmatpush.msra.mxu0 0.0
    %811 = vmatpush.msra.mxu0 0.0
    %812 = vmatpush.msra.mxu0 0.0
    %813 = vmatpush.msra.mxu0 0.0
    %814 = vmatpush.msra.mxu0 %v795
    %815 = vmatpush.msra.mxu0 %v740
    %816 = vmatpush.msra.mxu0 %v737
    %817 = vmatpush.msra.mxu0 %v734
    %818 = vmatpush.msra.mxu0 %v731
    %819 = vmatmul.f32.gmra.mxu0 %v747
    %v820 = vpop.f32.mrf.mxu0
    %v821 = vadd.f32 0.0, %v820
    %822 = vmatmul.f32.gmra.mxu0 %v750
    %v823 = vpop.f32.mrf.mxu0
    %v824 = vadd.f32 0.0, %v823
    %825 = vmatmul.f32.gmra.mxu0 %v753
    %v826 = vpop.f32.mrf.mxu0
    %v827 = vadd.f32 0.0, %v826
    %828 = vmatmul.f32.gmra.mxu0 %v756
    %v829 = vpop.f32.mrf.mxu0
    %v830 = vadd.f32 0.0, %v829
    %831 = vmatmul.f32.gmra.mxu0 %v759
    %v832 = vpop.f32.mrf.mxu0
    %v833 = vadd.f32 0.0, %v832
    %834 = vmatmul.f32.gmra.mxu0 %v762
    %v835 = vpop.f32.mrf.mxu0
    %v836 = vadd.f32 0.0, %v835
    %837 = vmatmul.f32.gmra.mxu0 %v765
    %v838 = vpop.f32.mrf.mxu0
    %v839 = vadd.f32 0.0, %v838
    %840 = vmatmul.f32.gmra.mxu0 %v768
    %v841 = vpop.f32.mrf.mxu0
    %v842 = vadd.f32 0.0, %v841
    %843 = vmatmul.f32.gmra.mxu0 %v771
    %v844 = vpop.f32.mrf.mxu0
    %v845 = vadd.f32 0.0, %v844
    %846 = vmatmul.f32.gmra.mxu0 %v774
    %v847 = vpop.f32.mrf.mxu0
    %v848 = vadd.f32 0.0, %v847
    %849 = vmatmul.f32.gmra.mxu0 %v777
    %v850 = vpop.f32.mrf.mxu0
    %v851 = vadd.f32 0.0, %v850
    %852 = vmatmul.f32.gmra.mxu0 %v780
    %v853 = vpop.f32.mrf.mxu0
    %v854 = vadd.f32 0.0, %v853
    %855 = vmatmul.f32.gmra.mxu0 %v783
    %v856 = vpop.f32.mrf.mxu0
    %v857 = vadd.f32 0.0, %v856
    %858 = vmatmul.f32.gmra.mxu0 %v786
    %v859 = vpop.f32.mrf.mxu0
    %v860 = vadd.f32 0.0, %v859
    %861 = vmatmul.f32.gmra.mxu0 %v789
    %v862 = vpop.f32.mrf.mxu0
    %v863 = vadd.f32 0.0, %v862
    %864 = vmatmul.f32.gmra.mxu0 %v792
    %v865 = vpop.f32.mrf.mxu0
    %v866 = vadd.f32 0.0, %v865
    %867 = vdwg.mxu0
    %868 = vmatpush.msra.mxu0 0.0
    %869 = vmatpush.msra.mxu0 0.0
    %870 = vmatpush.msra.mxu0 0.0
    %871 = vmatpush.msra.mxu0 0.0
    %872 = vmatpush.msra.mxu0 0.0
    %873 = vmatpush.msra.mxu0 0.0
    %874 = vmatpush.msra.mxu0 0.0
    %875 = vmatpush.msra.mxu0 0.0
    %876 = vmatpush.msra.mxu0 0.0
    %877 = vmatpush.msra.mxu0 0.0
    %878 = vmatpush.msra.mxu0 0.0
    %879 = vmatpush.msra.mxu0 %v798
    %880 = vmatpush.msra.mxu0 %v741
    %881 = vmatpush.msra.mxu0 %v738
    %882 = vmatpush.msra.mxu0 %v735
    %883 = vmatpush.msra.mxu0 %v732
    %884 = vmatmul.f32.gmra.mxu0 %v747
    %v885 = vpop.f32.mrf.mxu0
    %v886 = vadd.f32 0.0, %v885
    %887 = vmatmul.f32.gmra.mxu0 %v750
    %v888 = vpop.f32.mrf.mxu0
    %v889 = vadd.f32 0.0, %v888
    %890 = vmatmul.f32.gmra.mxu0 %v753
    %v891 = vpop.f32.mrf.mxu0
    %v892 = vadd.f32 0.0, %v891
    %893 = vmatmul.f32.gmra.mxu0 %v756
    %v894 = vpop.f32.mrf.mxu0
    %v895 = vadd.f32 0.0, %v894
    %896 = vmatmul.f32.gmra.mxu0 %v759
    %v897 = vpop.f32.mrf.mxu0
    %v898 = vadd.f32 0.0, %v897
    %899 = vmatmul.f32.gmra.mxu0 %v762
    %v900 = vpop.f32.mrf.mxu0
    %v901 = vadd.f32 0.0, %v900
    %902 = vmatmul.f32.gmra.mxu0 %v765
    %v903 = vpop.f32.mrf.mxu0
    %v904 = vadd.f32 0.0, %v903
    %905 = vmatmul.f32.gmra.mxu0 %v768
    %v906 = vpop.f32.mrf.mxu0
    %v907 = vadd.f32 0.0, %v906
    %908 = vmatmul.f32.gmra.mxu0 %v771
    %v909 = vpop.f32.mrf.mxu0
    %v910 = vadd.f32 0.0, %v909
    %911 = vmatmul.f32.gmra.mxu0 %v774
    %v912 = vpop.f32.mrf.mxu0
    %v913 = vadd.f32 0.0, %v912
    %914 = vmatmul.f32.gmra.mxu0 %v777
    %v915 = vpop.f32.mrf.mxu0
    %v916 = vadd.f32 0.0, %v915
    %917 = vmatmul.f32.gmra.mxu0 %v780
    %v918 = vpop.f32.mrf.mxu0
    %v919 = vadd.f32 0.0, %v918
    %920 = vmatmul.f32.gmra.mxu0 %v783
    %v921 = vpop.f32.mrf.mxu0
    %v922 = vadd.f32 0.0, %v921
    %923 = vmatmul.f32.gmra.mxu0 %v786
    %v924 = vpop.f32.mrf.mxu0
    %v925 = vadd.f32 0.0, %v924
    %926 = vmatmul.f32.gmra.mxu0 %v789
    %v927 = vpop.f32.mrf.mxu0
    %v928 = vadd.f32 0.0, %v927
    %929 = vmatmul.f32.gmra.mxu0 %v792
    %v930 = vpop.f32.mrf.mxu0
    %v931 = vadd.f32 0.0, %v930
    %932 = vdwg.mxu0
    %933 = vmatpush.msra.mxu0 0.0
    %934 = vmatpush.msra.mxu0 0.0
    %935 = vmatpush.msra.mxu0 0.0
    %936 = vmatpush.msra.mxu0 0.0
    %937 = vmatpush.msra.mxu0 0.0
    %938 = vmatpush.msra.mxu0 0.0
    %939 = vmatpush.msra.mxu0 0.0
    %940 = vmatpush.msra.mxu0 0.0
    %941 = vmatpush.msra.mxu0 0.0
    %942 = vmatpush.msra.mxu0 0.0
    %943 = vmatpush.msra.mxu0 0.0
    %944 = vmatpush.msra.mxu0 %v801
    %945 = vmatpush.msra.mxu0 %v742
    %946 = vmatpush.msra.mxu0 %v739
    %947 = vmatpush.msra.mxu0 %v736
    %948 = vmatpush.msra.mxu0 %v733
    %949 = vmatmul.f32.gmra.mxu0 %v747
    %v950 = vpop.f32.mrf.mxu0
    %v951 = vadd.f32 0.0, %v950
    %952 = vmatmul.f32.gmra.mxu0 %v750
    %v953 = vpop.f32.mrf.mxu0
    %v954 = vadd.f32 0.0, %v953
    %955 = vmatmul.f32.gmra.mxu0 %v753
    %v956 = vpop.f32.mrf.mxu0
    %v957 = vadd.f32 0.0, %v956
    %958 = vmatmul.f32.gmra.mxu0 %v756
    %v959 = vpop.f32.mrf.mxu0
    %v960 = vadd.f32 0.0, %v959
    %961 = vmatmul.f32.gmra.mxu0 %v759
    %v962 = vpop.f32.mrf.mxu0
    %v963 = vadd.f32 0.0, %v962
    %964 = vmatmul.f32.gmra.mxu0 %v762
    %v965 = vpop.f32.mrf.mxu0
    %v966 = vadd.f32 0.0, %v965
    %967 = vmatmul.f32.gmra.mxu0 %v765
    %v968 = vpop.f32.mrf.mxu0
    %v969 = vadd.f32 0.0, %v968
    %970 = vmatmul.f32.gmra.mxu0 %v768
    %v971 = vpop.f32.mrf.mxu0
    %v972 = vadd.f32 0.0, %v971
    %973 = vmatmul.f32.gmra.mxu0 %v771
    %v974 = vpop.f32.mrf.mxu0
    %v975 = vadd.f32 0.0, %v974
    %976 = vmatmul.f32.gmra.mxu0 %v774
    %v977 = vpop.f32.mrf.mxu0
    %v978 = vadd.f32 0.0, %v977
    %979 = vmatmul.f32.gmra.mxu0 %v777
    %v980 = vpop.f32.mrf.mxu0
    %v981 = vadd.f32 0.0, %v980
    %982 = vmatmul.f32.gmra.mxu0 %v780
    %v983 = vpop.f32.mrf.mxu0
    %v984 = vadd.f32 0.0, %v983
    %985 = vmatmul.f32.gmra.mxu0 %v783
    %v986 = vpop.f32.mrf.mxu0
    %v987 = vadd.f32 0.0, %v986
    %988 = vmatmul.f32.gmra.mxu0 %v786
    %v989 = vpop.f32.mrf.mxu0
    %v990 = vadd.f32 0.0, %v989
    %991 = vmatmul.f32.gmra.mxu0 %v789
    %v992 = vpop.f32.mrf.mxu0
    %v993 = vadd.f32 0.0, %v992
    %994 = vmatmul.f32.gmra.mxu0 %v792
    %v995 = vpop.f32.mrf.mxu0
    %v996 = vadd.f32 0.0, %v995
    %997 = vdwg.mxu0
    %v998 = vmul.f32 %v821, %v554
    %v999 = vmul.f32 %v886, %v619
    %v1000 = vmul.f32 %v951, %v684
    %v1001 = vmul.f32 %v824, %v557
    %v1002 = vmul.f32 %v889, %v622
    %v1003 = vmul.f32 %v954, %v687
    %v1004 = vmul.f32 %v827, %v560
    %v1005 = vmul.f32 %v892, %v625
    %v1006 = vmul.f32 %v957, %v690
    %v1007 = vmul.f32 %v830, %v563
    %v1008 = vmul.f32 %v895, %v628
    %v1009 = vmul.f32 %v960, %v693
    %v1010 = vmul.f32 %v833, %v566
    %v1011 = vmul.f32 %v898, %v631
    %v1012 = vmul.f32 %v963, %v696
    %v1013 = vmul.f32 %v836, %v569
    %v1014 = vmul.f32 %v901, %v634
    %v1015 = vmul.f32 %v966, %v699
    %v1016 = vmul.f32 %v839, %v572
    %v1017 = vmul.f32 %v904, %v637
    %v1018 = vmul.f32 %v969, %v702
    %v1019 = vmul.f32 %v842, %v575
    %v1020 = vmul.f32 %v907, %v640
    %v1021 = vmul.f32 %v972, %v705
    %v1022 = vmul.f32 %v845, %v578
    %v1023 = vmul.f32 %v910, %v643
    %v1024 = vmul.f32 %v975, %v708
    %v1025 = vmul.f32 %v848, %v581
    %v1026 = vmul.f32 %v913, %v646
    %v1027 = vmul.f32 %v978, %v711
    %v1028 = vmul.f32 %v851, %v584
    %v1029 = vmul.f32 %v916, %v649
    %v1030 = vmul.f32 %v981, %v714
    %v1031 = vmul.f32 %v854, %v587
    %v1032 = vmul.f32 %v919, %v652
    %v1033 = vmul.f32 %v984, %v717
    %v1034 = vmul.f32 %v857, %v590
    %v1035 = vmul.f32 %v922, %v655
    %v1036 = vmul.f32 %v987, %v720
    %v1037 = vmul.f32 %v860, %v593
    %v1038 = vmul.f32 %v925, %v658
    %v1039 = vmul.f32 %v990, %v723
    %v1040 = vmul.f32 %v863, %v596
    %v1041 = vmul.f32 %v928, %v661
    %v1042 = vmul.f32 %v993, %v726
    %v1043 = vmul.f32 %v866, %v599
    %v1044 = vmul.f32 %v931, %v664
    %v1045 = vmul.f32 %v996, %v729
    %v1046 = vld [vmem:[%s31] sm:$0xff]
    %v1047 = vld [vmem:[%s31 + $0x8] sm:$0xff]
    %v1048 = vld [vmem:[%s31 + $0x10] sm:$0xff]
    %v1049 = vld [vmem:[%s31 + $0x18] sm:$0xff]
    %v1050 = vld [vmem:[%s31 + $0x20] sm:$0xff]
    %v1051 = vld [vmem:[%s31 + $0x28] sm:$0xff]
    %v1052 = vld [vmem:[%s31 + $0x30] sm:$0xff]
    %v1053 = vld [vmem:[%s31 + $0x38] sm:$0xff]
    %v1054 = vld [vmem:[%s31 + $0x40] sm:$0xff]
    %v1055 = vld [vmem:[%s31 + $0x48] sm:$0xff]
    %v1056 = vld [vmem:[%s31 + $0x50] sm:$0xff]
    %v1057 = vld [vmem:[%s31 + $0x58] sm:$0xff]
    %v1058 = vld [vmem:[%s31 + $0x60] sm:$0xff]
    %v1059 = vld [vmem:[%s31 + $0x68] sm:$0xff]
    %v1060 = vld [vmem:[%s31 + $0x70] sm:$0xff]
    %v1061 = vld [vmem:[%s31 + $0x78] sm:$0xff]
    %v1062 = vld [vmem:[%s31 + $0x80] sm:$0xff]
    %v1063 = vld [vmem:[%s31 + $0x88] sm:$0xff]
    %v1064 = vld [vmem:[%s31 + $0x90] sm:$0xff]
    %v1065 = vld [vmem:[%s31 + $0x98] sm:$0xff]
    %v1066 = vld [vmem:[%s31 + $0xa0] sm:$0xff]
    %v1067 = vld [vmem:[%s31 + $0xa8] sm:$0xff]
    %v1068 = vld [vmem:[%s31 + $0xb0] sm:$0xff]
    %v1069 = vld [vmem:[%s31 + $0xb8] sm:$0xff]
    %v1070 = vld [vmem:[%s31 + $0xc0] sm:$0xff]
    %v1071 = vld [vmem:[%s31 + $0xc8] sm:$0xff]
    %v1072 = vld [vmem:[%s31 + $0xd0] sm:$0xff]
    %v1073 = vld [vmem:[%s31 + $0xd8] sm:$0xff]
    %v1074 = vld [vmem:[%s31 + $0xe0] sm:$0xff]
    %v1075 = vld [vmem:[%s31 + $0xe8] sm:$0xff]
    %v1076 = vld [vmem:[%s31 + $0xf0] sm:$0xff]
    %v1077 = vld [vmem:[%s31 + $0xf8] sm:$0xff]
    %v1078 = vld [vmem:[%s31 + $0x100] sm:$0xff]
    %v1079 = vld [vmem:[%s31 + $0x108] sm:$0xff]
    %v1080 = vld [vmem:[%s31 + $0x110] sm:$0xff]
    %v1081 = vld [vmem:[%s31 + $0x118] sm:$0xff]
    %v1082 = vld [vmem:[%s31 + $0x120] sm:$0xff]
    %v1083 = vld [vmem:[%s31 + $0x128] sm:$0xff]
    %v1084 = vld [vmem:[%s31 + $0x130] sm:$0xff]
    %v1085 = vld [vmem:[%s31 + $0x138] sm:$0xff]
    %v1086 = vld [vmem:[%s31 + $0x140] sm:$0xff]
    %v1087 = vld [vmem:[%s31 + $0x148] sm:$0x3]
    %vm1088 = vcmask 605184
    %v1090 = vsel %vm1088, %v1000, 0
    %v1093 = vsel %vm1088, %v1003, 0
    %v1096 = vsel %vm1088, %v1006, 0
    %v1099 = vsel %vm1088, %v1009, 0
    %v1102 = vsel %vm1088, %v1012, 0
    %v1105 = vsel %vm1088, %v1015, 0
    %v1108 = vsel %vm1088, %v1018, 0
    %v1111 = vsel %vm1088, %v1021, 0
    %v1114 = vsel %vm1088, %v1024, 0
    %v1117 = vsel %vm1088, %v1027, 0
    %v1120 = vsel %vm1088, %v1030, 0
    %v1123 = vsel %vm1088, %v1033, 0
    %v1126 = vsel %vm1088, %v1036, 0
    %v1129 = vsel %vm1088, %v1039, 0
    %v1132 = vsel %vm1088, %v1042, 0
    %v1135 = vsel %vm1088, %v1045, 0
    %vm1137 = vcmask 1041408
    %v1139 = vsel %vm1137, %v1087, 0
    %1141 = vmatpush.msra.mxu0 %v1061
    %1142 = vmatpush.msra.mxu0 %v1060
    %1143 = vmatpush.msra.mxu0 %v1059
    %1144 = vmatpush.msra.mxu0 %v1058
    %1145 = vmatpush.msra.mxu0 %v1057
    %1146 = vmatpush.msra.mxu0 %v1056
    %1147 = vmatpush.msra.mxu0 %v1055
    %1148 = vmatpush.msra.mxu0 %v1054
    %1149 = vmatpush.msra.mxu0 %v1053
    %1150 = vmatpush.msra.mxu0 %v1052
    %1151 = vmatpush.msra.mxu0 %v1051
    %1152 = vmatpush.msra.mxu0 %v1050
    %1153 = vmatpush.msra.mxu0 %v1049
    %1154 = vmatpush.msra.mxu0 %v1048
    %1155 = vmatpush.msra.mxu0 %v1047
    %1156 = vmatpush.msra.mxu0 %v1046
    %1157 = vmatmul.f32.gmra.mxu0 %v998
    %v1158 = vpop.f32.mrf.mxu0
    %v1159 = vadd.f32 0.0, %v1158
    %1160 = vmatmul.f32.gmra.mxu0 %v1001
    %v1161 = vpop.f32.mrf.mxu0
    %v1162 = vadd.f32 0.0, %v1161
    %1163 = vmatmul.f32.gmra.mxu0 %v1004
    %v1164 = vpop.f32.mrf.mxu0
    %v1165 = vadd.f32 0.0, %v1164
    %1166 = vmatmul.f32.gmra.mxu0 %v1007
    %v1167 = vpop.f32.mrf.mxu0
    %v1168 = vadd.f32 0.0, %v1167
    %1169 = vmatmul.f32.gmra.mxu0 %v1010
    %v1170 = vpop.f32.mrf.mxu0
    %v1171 = vadd.f32 0.0, %v1170
    %1172 = vmatmul.f32.gmra.mxu0 %v1013
    %v1173 = vpop.f32.mrf.mxu0
    %v1174 = vadd.f32 0.0, %v1173
    %1175 = vmatmul.f32.gmra.mxu0 %v1016
    %v1176 = vpop.f32.mrf.mxu0
    %v1177 = vadd.f32 0.0, %v1176
    %1178 = vmatmul.f32.gmra.mxu0 %v1019
    %v1179 = vpop.f32.mrf.mxu0
    %v1180 = vadd.f32 0.0, %v1179
    %1181 = vmatmul.f32.gmra.mxu0 %v1022
    %v1182 = vpop.f32.mrf.mxu0
    %v1183 = vadd.f32 0.0, %v1182
    %1184 = vmatmul.f32.gmra.mxu0 %v1025
    %v1185 = vpop.f32.mrf.mxu0
    %v1186 = vadd.f32 0.0, %v1185
    %1187 = vmatmul.f32.gmra.mxu0 %v1028
    %v1188 = vpop.f32.mrf.mxu0
    %v1189 = vadd.f32 0.0, %v1188
    %1190 = vmatmul.f32.gmra.mxu0 %v1031
    %v1191 = vpop.f32.mrf.mxu0
    %v1192 = vadd.f32 0.0, %v1191
    %1193 = vmatmul.f32.gmra.mxu0 %v1034
    %v1194 = vpop.f32.mrf.mxu0
    %v1195 = vadd.f32 0.0, %v1194
    %1196 = vmatmul.f32.gmra.mxu0 %v1037
    %v1197 = vpop.f32.mrf.mxu0
    %v1198 = vadd.f32 0.0, %v1197
    %1199 = vmatmul.f32.gmra.mxu0 %v1040
    %v1200 = vpop.f32.mrf.mxu0
    %v1201 = vadd.f32 0.0, %v1200
    %1202 = vmatmul.f32.gmra.mxu0 %v1043
    %v1203 = vpop.f32.mrf.mxu0
    %v1204 = vadd.f32 0.0, %v1203
    %1205 = vdwg.mxu0
    %1206 = vmatpush.msra.mxu0 %v1077
    %1207 = vmatpush.msra.mxu0 %v1076
    %1208 = vmatpush.msra.mxu0 %v1075
    %1209 = vmatpush.msra.mxu0 %v1074
    %1210 = vmatpush.msra.mxu0 %v1073
    %1211 = vmatpush.msra.mxu0 %v1072
    %1212 = vmatpush.msra.mxu0 %v1071
    %1213 = vmatpush.msra.mxu0 %v1070
    %1214 = vmatpush.msra.mxu0 %v1069
    %1215 = vmatpush.msra.mxu0 %v1068
    %1216 = vmatpush.msra.mxu0 %v1067
    %1217 = vmatpush.msra.mxu0 %v1066
    %1218 = vmatpush.msra.mxu0 %v1065
    %1219 = vmatpush.msra.mxu0 %v1064
    %1220 = vmatpush.msra.mxu0 %v1063
    %1221 = vmatpush.msra.mxu0 %v1062
    %1222 = vmatmul.f32.gmra.mxu0 %v999
    %v1223 = vpop.f32.mrf.mxu0
    %v1224 = vadd.f32 %v1159, %v1223
    %1225 = vmatmul.f32.gmra.mxu0 %v1002
    %v1226 = vpop.f32.mrf.mxu0
    %v1227 = vadd.f32 %v1162, %v1226
    %1228 = vmatmul.f32.gmra.mxu0 %v1005
    %v1229 = vpop.f32.mrf.mxu0
    %v1230 = vadd.f32 %v1165, %v1229
    %1231 = vmatmul.f32.gmra.mxu0 %v1008
    %v1232 = vpop.f32.mrf.mxu0
    %v1233 = vadd.f32 %v1168, %v1232
    %1234 = vmatmul.f32.gmra.mxu0 %v1011
    %v1235 = vpop.f32.mrf.mxu0
    %v1236 = vadd.f32 %v1171, %v1235
    %1237 = vmatmul.f32.gmra.mxu0 %v1014
    %v1238 = vpop.f32.mrf.mxu0
    %v1239 = vadd.f32 %v1174, %v1238
    %1240 = vmatmul.f32.gmra.mxu0 %v1017
    %v1241 = vpop.f32.mrf.mxu0
    %v1242 = vadd.f32 %v1177, %v1241
    %1243 = vmatmul.f32.gmra.mxu0 %v1020
    %v1244 = vpop.f32.mrf.mxu0
    %v1245 = vadd.f32 %v1180, %v1244
    %1246 = vmatmul.f32.gmra.mxu0 %v1023
    %v1247 = vpop.f32.mrf.mxu0
    %v1248 = vadd.f32 %v1183, %v1247
    %1249 = vmatmul.f32.gmra.mxu0 %v1026
    %v1250 = vpop.f32.mrf.mxu0
    %v1251 = vadd.f32 %v1186, %v1250
    %1252 = vmatmul.f32.gmra.mxu0 %v1029
    %v1253 = vpop.f32.mrf.mxu0
    %v1254 = vadd.f32 %v1189, %v1253
    %1255 = vmatmul.f32.gmra.mxu0 %v1032
    %v1256 = vpop.f32.mrf.mxu0
    %v1257 = vadd.f32 %v1192, %v1256
    %1258 = vmatmul.f32.gmra.mxu0 %v1035
    %v1259 = vpop.f32.mrf.mxu0
    %v1260 = vadd.f32 %v1195, %v1259
    %1261 = vmatmul.f32.gmra.mxu0 %v1038
    %v1262 = vpop.f32.mrf.mxu0
    %v1263 = vadd.f32 %v1198, %v1262
    %1264 = vmatmul.f32.gmra.mxu0 %v1041
    %v1265 = vpop.f32.mrf.mxu0
    %v1266 = vadd.f32 %v1201, %v1265
    %1267 = vmatmul.f32.gmra.mxu0 %v1044
    %v1268 = vpop.f32.mrf.mxu0
    %v1269 = vadd.f32 %v1204, %v1268
    %1270 = vdwg.mxu0
    %1271 = vmatpush.msra.mxu0 0.0
    %1272 = vmatpush.msra.mxu0 0.0
    %1273 = vmatpush.msra.mxu0 0.0
    %1274 = vmatpush.msra.mxu0 0.0
    %1275 = vmatpush.msra.mxu0 0.0
    %1276 = vmatpush.msra.mxu0 0.0
    %1277 = vmatpush.msra.mxu0 %v1139
    %1278 = vmatpush.msra.mxu0 %v1086
    %1279 = vmatpush.msra.mxu0 %v1085
    %1280 = vmatpush.msra.mxu0 %v1084
    %1281 = vmatpush.msra.mxu0 %v1083
    %1282 = vmatpush.msra.mxu0 %v1082
    %1283 = vmatpush.msra.mxu0 %v1081
    %1284 = vmatpush.msra.mxu0 %v1080
    %1285 = vmatpush.msra.mxu0 %v1079
    %1286 = vmatpush.msra.mxu0 %v1078
    %1287 = vmatmul.f32.gmra.mxu0 %v1090
    %v1288 = vpop.f32.mrf.mxu0
    %v1289 = vadd.f32 %v1224, %v1288
    %1290 = vmatmul.f32.gmra.mxu0 %v1093
    %v1291 = vpop.f32.mrf.mxu0
    %v1292 = vadd.f32 %v1227, %v1291
    %1293 = vmatmul.f32.gmra.mxu0 %v1096
    %v1294 = vpop.f32.mrf.mxu0
    %v1295 = vadd.f32 %v1230, %v1294
    %1296 = vmatmul.f32.gmra.mxu0 %v1099
    %v1297 = vpop.f32.mrf.mxu0
    %v1298 = vadd.f32 %v1233, %v1297
    %1299 = vmatmul.f32.gmra.mxu0 %v1102
    %v1300 = vpop.f32.mrf.mxu0
    %v1301 = vadd.f32 %v1236, %v1300
    %1302 = vmatmul.f32.gmra.mxu0 %v1105
    %v1303 = vpop.f32.mrf.mxu0
    %v1304 = vadd.f32 %v1239, %v1303
    %1305 = vmatmul.f32.gmra.mxu0 %v1108
    %v1306 = vpop.f32.mrf.mxu0
    %v1307 = vadd.f32 %v1242, %v1306
    %1308 = vmatmul.f32.gmra.mxu0 %v1111
    %v1309 = vpop.f32.mrf.mxu0
    %v1310 = vadd.f32 %v1245, %v1309
    %1311 = vmatmul.f32.gmra.mxu0 %v1114
    %v1312 = vpop.f32.mrf.mxu0
    %v1313 = vadd.f32 %v1248, %v1312
    %1314 = vmatmul.f32.gmra.mxu0 %v1117
    %v1315 = vpop.f32.mrf.mxu0
    %v1316 = vadd.f32 %v1251, %v1315
    %1317 = vmatmul.f32.gmra.mxu0 %v1120
    %v1318 = vpop.f32.mrf.mxu0
    %v1319 = vadd.f32 %v1254, %v1318
    %1320 = vmatmul.f32.gmra.mxu0 %v1123
    %v1321 = vpop.f32.mrf.mxu0
    %v1322 = vadd.f32 %v1257, %v1321
    %1323 = vmatmul.f32.gmra.mxu0 %v1126
    %v1324 = vpop.f32.mrf.mxu0
    %v1325 = vadd.f32 %v1260, %v1324
    %1326 = vmatmul.f32.gmra.mxu0 %v1129
    %v1327 = vpop.f32.mrf.mxu0
    %v1328 = vadd.f32 %v1263, %v1327
    %1329 = vmatmul.f32.gmra.mxu0 %v1132
    %v1330 = vpop.f32.mrf.mxu0
    %v1331 = vadd.f32 %v1266, %v1330
    %1332 = vmatmul.f32.gmra.mxu0 %v1135
    %v1333 = vpop.f32.mrf.mxu0
    %v1334 = vadd.f32 %v1269, %v1333
    %1335 = vdwg.mxu0
    %v1336 = vld [vmem:[%s3] sm:$0xff]
    %v1337 = vld [vmem:[%s3 + $0x8] sm:$0xff]
    %v1338 = vld [vmem:[%s3 + $0x10] sm:$0xff]
    %v1339 = vld [vmem:[%s3 + $0x18] sm:$0xff]
    %v1340 = vld [vmem:[%s3 + $0x20] sm:$0xff]
    %v1341 = vld [vmem:[%s3 + $0x28] sm:$0xff]
    %v1342 = vld [vmem:[%s3 + $0x30] sm:$0xff]
    %v1343 = vld [vmem:[%s3 + $0x38] sm:$0xff]
    %v1344 = vld [vmem:[%s3 + $0x40] sm:$0xff]
    %v1345 = vld [vmem:[%s3 + $0x48] sm:$0xff]
    %v1346 = vld [vmem:[%s3 + $0x50] sm:$0xff]
    %v1347 = vld [vmem:[%s3 + $0x58] sm:$0xff]
    %v1348 = vld [vmem:[%s3 + $0x60] sm:$0xff]
    %v1349 = vld [vmem:[%s3 + $0x68] sm:$0xff]
    %v1350 = vld [vmem:[%s3 + $0x70] sm:$0xff]
    %v1351 = vld [vmem:[%s3 + $0x78] sm:$0xff]
    %v1352 = vadd.f32 %v1336, %v1289
    %v1353 = vadd.f32 %v1337, %v1292
    %v1354 = vadd.f32 %v1338, %v1295
    %v1355 = vadd.f32 %v1339, %v1298
    %v1356 = vadd.f32 %v1340, %v1301
    %v1357 = vadd.f32 %v1341, %v1304
    %v1358 = vadd.f32 %v1342, %v1307
    %v1359 = vadd.f32 %v1343, %v1310
    %v1360 = vadd.f32 %v1344, %v1313
    %v1361 = vadd.f32 %v1345, %v1316
    %v1362 = vadd.f32 %v1346, %v1319
    %v1363 = vadd.f32 %v1347, %v1322
    %v1364 = vadd.f32 %v1348, %v1325
    %v1365 = vadd.f32 %v1349, %v1328
    %v1366 = vadd.f32 %v1350, %v1331
    %v1367 = vadd.f32 %v1351, %v1334
    %vm1368 = vcmask 80896
    %1369 = vst.msk [vmem:[#allocation2] sm:$0xff] %vm1368, %v1352
    %1370 = vst.msk [vmem:[#allocation2 + $0x8] sm:$0xff] %vm1368, %v1353
    %1371 = vst.msk [vmem:[#allocation2 + $0x10] sm:$0xff] %vm1368, %v1354
    %1372 = vst.msk [vmem:[#allocation2 + $0x18] sm:$0xff] %vm1368, %v1355
    %1373 = vst.msk [vmem:[#allocation2 + $0x20] sm:$0xff] %vm1368, %v1356
    %1374 = vst.msk [vmem:[#allocation2 + $0x28] sm:$0xff] %vm1368, %v1357
    %1375 = vst.msk [vmem:[#allocation2 + $0x30] sm:$0xff] %vm1368, %v1358
    %1376 = vst.msk [vmem:[#allocation2 + $0x38] sm:$0xff] %vm1368, %v1359
    %1377 = vst.msk [vmem:[#allocation2 + $0x40] sm:$0xff] %vm1368, %v1360
    %1378 = vst.msk [vmem:[#allocation2 + $0x48] sm:$0xff] %vm1368, %v1361
    %1379 = vst.msk [vmem:[#allocation2 + $0x50] sm:$0xff] %vm1368, %v1362
    %1380 = vst.msk [vmem:[#allocation2 + $0x58] sm:$0xff] %vm1368, %v1363
    %1381 = vst.msk [vmem:[#allocation2 + $0x60] sm:$0xff] %vm1368, %v1364
    %1382 = vst.msk [vmem:[#allocation2 + $0x68] sm:$0xff] %vm1368, %v1365
    %1383 = vst.msk [vmem:[#allocation2 + $0x70] sm:$0xff] %vm1368, %v1366
    %1384 = vst.msk [vmem:[#allocation2 + $0x78] sm:$0xff] %vm1368, %v1367
    %1385 = vst.msk [vmem:[#allocation4] sm:$0xff] %vm1368, %v1289
    %1386 = vst.msk [vmem:[#allocation4 + $0x8] sm:$0xff] %vm1368, %v1292
    %1387 = vst.msk [vmem:[#allocation4 + $0x10] sm:$0xff] %vm1368, %v1295
    %1388 = vst.msk [vmem:[#allocation4 + $0x18] sm:$0xff] %vm1368, %v1298
    %1389 = vst.msk [vmem:[#allocation4 + $0x20] sm:$0xff] %vm1368, %v1301
    %1390 = vst.msk [vmem:[#allocation4 + $0x28] sm:$0xff] %vm1368, %v1304
    %1391 = vst.msk [vmem:[#allocation4 + $0x30] sm:$0xff] %vm1368, %v1307
    %1392 = vst.msk [vmem:[#allocation4 + $0x38] sm:$0xff] %vm1368, %v1310
    %1393 = vst.msk [vmem:[#allocation4 + $0x40] sm:$0xff] %vm1368, %v1313
    %1394 = vst.msk [vmem:[#allocation4 + $0x48] sm:$0xff] %vm1368, %v1316
    %1395 = vst.msk [vmem:[#allocation4 + $0x50] sm:$0xff] %vm1368, %v1319
    %1396 = vst.msk [vmem:[#allocation4 + $0x58] sm:$0xff] %vm1368, %v1322
    %1397 = vst.msk [vmem:[#allocation4 + $0x60] sm:$0xff] %vm1368, %v1325
    %1398 = vst.msk [vmem:[#allocation4 + $0x68] sm:$0xff] %vm1368, %v1328
    %1399 = vst.msk [vmem:[#allocation4 + $0x70] sm:$0xff] %vm1368, %v1331
    %1400 = vst.msk [vmem:[#allocation4 + $0x78] sm:$0xff] %vm1368, %v1334
    %v1401 = vld [vmem:[%s5] sm:$0xff]
    %v1402 = vld [vmem:[%s5 + $0x8] sm:$0xff]
    %v1403 = vld [vmem:[%s5 + $0x10] sm:$0xff]
    %v1404 = vld [vmem:[%s5 + $0x18] sm:$0xff]
    %v1405 = vld [vmem:[%s5 + $0x20] sm:$0xff]
    %v1406 = vld [vmem:[%s5 + $0x28] sm:$0xff]
    %v1407 = vld [vmem:[%s5 + $0x30] sm:$0xff]
    %v1408 = vld [vmem:[%s5 + $0x38] sm:$0xff]
    %v1409 = vld [vmem:[%s5 + $0x40] sm:$0xff]
    %v1410 = vld [vmem:[%s5 + $0x48] sm:$0xff]
    %v1411 = vld [vmem:[%s5 + $0x50] sm:$0xff]
    %v1412 = vld [vmem:[%s5 + $0x58] sm:$0xff]
    %v1413 = vld [vmem:[%s5 + $0x60] sm:$0xff]
    %v1414 = vld [vmem:[%s5 + $0x68] sm:$0xff]
    %v1415 = vld [vmem:[%s5 + $0x70] sm:$0xff]
    %v1416 = vld [vmem:[%s5 + $0x78] sm:$0xff]
    %v1417 = vld [vmem:[%s7] sm:$0xff]
    %v1418 = vld [vmem:[%s7 + $0x8] sm:$0xff]
    %v1419 = vld [vmem:[%s7 + $0x10] sm:$0xff]
    %v1420 = vld [vmem:[%s7 + $0x18] sm:$0xff]
    %v1421 = vld [vmem:[%s7 + $0x20] sm:$0xff]
    %v1422 = vld [vmem:[%s7 + $0x28] sm:$0xff]
    %v1423 = vld [vmem:[%s7 + $0x30] sm:$0xff]
    %v1424 = vld [vmem:[%s7 + $0x38] sm:$0xff]
    %v1425 = vld [vmem:[%s7 + $0x40] sm:$0xff]
    %v1426 = vld [vmem:[%s7 + $0x48] sm:$0xff]
    %v1427 = vld [vmem:[%s7 + $0x50] sm:$0xff]
    %v1428 = vld [vmem:[%s7 + $0x58] sm:$0xff]
    %v1429 = vld [vmem:[%s7 + $0x60] sm:$0xff]
    %v1430 = vld [vmem:[%s7 + $0x68] sm:$0xff]
    %v1431 = vld [vmem:[%s7 + $0x70] sm:$0xff]
    %v1432 = vld [vmem:[%s7 + $0x78] sm:$0xff]
    %v1433 = vsel %vm1368, %v1352, -inf
    %1434 = vmax.xlane.f32.xlu0 %v1433
    %v1435 = vpop.xlane.xlu0 %1434
    %v1436 = vsel %vm1368, %v1353, -inf
    %1437 = vmax.xlane.f32.xlu0 %v1436
    %v1438 = vpop.xlane.xlu0 %1437
    %v1439 = vsel %vm1368, %v1354, -inf
    %1440 = vmax.xlane.f32.xlu0 %v1439
    %v1441 = vpop.xlane.xlu0 %1440
    %v1442 = vsel %vm1368, %v1355, -inf
    %1443 = vmax.xlane.f32.xlu0 %v1442
    %v1444 = vpop.xlane.xlu0 %1443
    %v1445 = vsel %vm1368, %v1356, -inf
    %1446 = vmax.xlane.f32.xlu0 %v1445
    %v1447 = vpop.xlane.xlu0 %1446
    %v1448 = vsel %vm1368, %v1357, -inf
    %1449 = vmax.xlane.f32.xlu0 %v1448
    %v1450 = vpop.xlane.xlu0 %1449
    %v1451 = vsel %vm1368, %v1358, -inf
    %1452 = vmax.xlane.f32.xlu0 %v1451
    %v1453 = vpop.xlane.xlu0 %1452
    %v1454 = vsel %vm1368, %v1359, -inf
    %1455 = vmax.xlane.f32.xlu0 %v1454
    %v1456 = vpop.xlane.xlu0 %1455
    %v1457 = vsel %vm1368, %v1360, -inf
    %1458 = vmax.xlane.f32.xlu0 %v1457
    %v1459 = vpop.xlane.xlu0 %1458
    %v1460 = vsel %vm1368, %v1361, -inf
    %1461 = vmax.xlane.f32.xlu0 %v1460
    %v1462 = vpop.xlane.xlu0 %1461
    %v1463 = vsel %vm1368, %v1362, -inf
    %1464 = vmax.xlane.f32.xlu0 %v1463
    %v1465 = vpop.xlane.xlu0 %1464
    %v1466 = vsel %vm1368, %v1363, -inf
    %1467 = vmax.xlane.f32.xlu0 %v1466
    %v1468 = vpop.xlane.xlu0 %1467
    %v1469 = vsel %vm1368, %v1364, -inf
    %1470 = vmax.xlane.f32.xlu0 %v1469
    %v1471 = vpop.xlane.xlu0 %1470
    %v1472 = vsel %vm1368, %v1365, -inf
    %1473 = vmax.xlane.f32.xlu0 %v1472
    %v1474 = vpop.xlane.xlu0 %1473
    %v1475 = vsel %vm1368, %v1366, -inf
    %1476 = vmax.xlane.f32.xlu0 %v1475
    %v1477 = vpop.xlane.xlu0 %1476
    %v1478 = vsel %vm1368, %v1367, -inf
    %1479 = vmax.xlane.f32.xlu0 %v1478
    %v1480 = vpop.xlane.xlu0 %1479
    %v1481 = vsub.f32 %v1352, %v1435
    %v1482 = vsub.f32 %v1353, %v1438
    %v1483 = vsub.f32 %v1354, %v1441
    %v1484 = vsub.f32 %v1355, %v1444
    %v1485 = vsub.f32 %v1356, %v1447
    %v1486 = vsub.f32 %v1357, %v1450
    %v1487 = vsub.f32 %v1358, %v1453
    %v1488 = vsub.f32 %v1359, %v1456
    %v1489 = vsub.f32 %v1360, %v1459
    %v1490 = vsub.f32 %v1361, %v1462
    %v1491 = vsub.f32 %v1362, %v1465
    %v1492 = vsub.f32 %v1363, %v1468
    %v1493 = vsub.f32 %v1364, %v1471
    %v1494 = vsub.f32 %v1365, %v1474
    %v1495 = vsub.f32 %v1366, %v1477
    %v1496 = vsub.f32 %v1367, %v1480
    %v1497 = vmul.f32 %v1481, 1.442695
    %v1498 = vpow.pop %v1497
    %v1499 = vmul.f32 %v1482, 1.442695
    %v1500 = vpow.pop %v1499
    %v1501 = vmul.f32 %v1483, 1.442695
    %v1502 = vpow.pop %v1501
    %v1503 = vmul.f32 %v1484, 1.442695
    %v1504 = vpow.pop %v1503
    %v1505 = vmul.f32 %v1485, 1.442695
    %v1506 = vpow.pop %v1505
    %v1507 = vmul.f32 %v1486, 1.442695
    %v1508 = vpow.pop %v1507
    %v1509 = vmul.f32 %v1487, 1.442695
    %v1510 = vpow.pop %v1509
    %v1511 = vmul.f32 %v1488, 1.442695
    %v1512 = vpow.pop %v1511
    %v1513 = vmul.f32 %v1489, 1.442695
    %v1514 = vpow.pop %v1513
    %v1515 = vmul.f32 %v1490, 1.442695
    %v1516 = vpow.pop %v1515
    %v1517 = vmul.f32 %v1491, 1.442695
    %v1518 = vpow.pop %v1517
    %v1519 = vmul.f32 %v1492, 1.442695
    %v1520 = vpow.pop %v1519
    %v1521 = vmul.f32 %v1493, 1.442695
    %v1522 = vpow.pop %v1521
    %v1523 = vmul.f32 %v1494, 1.442695
    %v1524 = vpow.pop %v1523
    %v1525 = vmul.f32 %v1495, 1.442695
    %v1526 = vpow.pop %v1525
    %v1527 = vmul.f32 %v1496, 1.442695
    %v1528 = vpow.pop %v1527
    %v1529 = vsel %vm1368, %v1498, 0.0
    %1530 = vadd.xlane.f32.xlu0 %v1529
    %v1531 = vpop.xlane.xlu0 %1530
    %v1532 = vsel %vm1368, %v1500, 0.0
    %1533 = vadd.xlane.f32.xlu0 %v1532
    %v1534 = vpop.xlane.xlu0 %1533
    %v1535 = vsel %vm1368, %v1502, 0.0
    %1536 = vadd.xlane.f32.xlu0 %v1535
    %v1537 = vpop.xlane.xlu0 %1536
    %v1538 = vsel %vm1368, %v1504, 0.0
    %1539 = vadd.xlane.f32.xlu0 %v1538
    %v1540 = vpop.xlane.xlu0 %1539
    %v1541 = vsel %vm1368, %v1506, 0.0
    %1542 = vadd.xlane.f32.xlu0 %v1541
    %v1543 = vpop.xlane.xlu0 %1542
    %v1544 = vsel %vm1368, %v1508, 0.0
    %1545 = vadd.xlane.f32.xlu0 %v1544
    %v1546 = vpop.xlane.xlu0 %1545
    %v1547 = vsel %vm1368, %v1510, 0.0
    %1548 = vadd.xlane.f32.xlu0 %v1547
    %v1549 = vpop.xlane.xlu0 %1548
    %v1550 = vsel %vm1368, %v1512, 0.0
    %1551 = vadd.xlane.f32.xlu0 %v1550
    %v1552 = vpop.xlane.xlu0 %1551
    %v1553 = vsel %vm1368, %v1514, 0.0
    %1554 = vadd.xlane.f32.xlu0 %v1553
    %v1555 = vpop.xlane.xlu0 %1554
    %v1556 = vsel %vm1368, %v1516, 0.0
    %1557 = vadd.xlane.f32.xlu0 %v1556
    %v1558 = vpop.xlane.xlu0 %1557
    %v1559 = vsel %vm1368, %v1518, 0.0
    %1560 = vadd.xlane.f32.xlu0 %v1559
    %v1561 = vpop.xlane.xlu0 %1560
    %v1562 = vsel %vm1368, %v1520, 0.0
    %1563 = vadd.xlane.f32.xlu0 %v1562
    %v1564 = vpop.xlane.xlu0 %1563
    %v1565 = vsel %vm1368, %v1522, 0.0
    %1566 = vadd.xlane.f32.xlu0 %v1565
    %v1567 = vpop.xlane.xlu0 %1566
    %v1568 = vsel %vm1368, %v1524, 0.0
    %1569 = vadd.xlane.f32.xlu0 %v1568
    %v1570 = vpop.xlane.xlu0 %1569
    %v1571 = vsel %vm1368, %v1526, 0.0
    %1572 = vadd.xlane.f32.xlu0 %v1571
    %v1573 = vpop.xlane.xlu0 %1572
    %v1574 = vsel %vm1368, %v1528, 0.0
    %1575 = vadd.xlane.f32.xlu0 %v1574
    %v1576 = vpop.xlane.xlu0 %1575
    %v1577 = vrcp.pop %v1531
    %v1578 = vmul.f32 %v1531, %v1577
    %v1579 = vsub.f32 1.0, %v1578
    %v1580 = vmul.f32 %v1577, %v1579
    %v1581 = vadd.f32 %v1577, %v1580
    %vm1582 = vweird.f32 %v1531
    %vm1583 = vweird.f32 %v1577
    %vm1584 = vmor %vm1582, %vm1583
    %v1585 = vsel %vm1584, %v1577, %v1581
    %v1586 = vand.u32 2147483647, %v1531
    %vm1587 = vcmp.eq.f32.partialorder %v1586, 8.507059e+37
    %v1588 = vand.u32 %v1531, 2147483648
    %v1589 = vor.u32 1.1754944e-38, %v1588
    %v1590 = vsel %vm1587, %v1589, %v1585
    %v1591 = vmul.f32 %v1498, %v1590
    %v1592 = vrcp.pop %v1534
    %v1593 = vmul.f32 %v1534, %v1592
    %v1594 = vsub.f32 1.0, %v1593
    %v1595 = vmul.f32 %v1592, %v1594
    %v1596 = vadd.f32 %v1592, %v1595
    %vm1597 = vweird.f32 %v1534
    %vm1598 = vweird.f32 %v1592
    %vm1599 = vmor %vm1597, %vm1598
    %v1600 = vsel %vm1599, %v1592, %v1596
    %v1601 = vand.u32 2147483647, %v1534
    %vm1602 = vcmp.eq.f32.partialorder %v1601, 8.507059e+37
    %v1603 = vand.u32 %v1534, 2147483648
    %v1604 = vor.u32 1.1754944e-38, %v1603
    %v1605 = vsel %vm1602, %v1604, %v1600
    %v1606 = vmul.f32 %v1500, %v1605
    %v1607 = vrcp.pop %v1537
    %v1608 = vmul.f32 %v1537, %v1607
    %v1609 = vsub.f32 1.0, %v1608
    %v1610 = vmul.f32 %v1607, %v1609
    %v1611 = vadd.f32 %v1607, %v1610
    %vm1612 = vweird.f32 %v1537
    %vm1613 = vweird.f32 %v1607
    %vm1614 = vmor %vm1612, %vm1613
    %v1615 = vsel %vm1614, %v1607, %v1611
    %v1616 = vand.u32 2147483647, %v1537
    %vm1617 = vcmp.eq.f32.partialorder %v1616, 8.507059e+37
    %v1618 = vand.u32 %v1537, 2147483648
    %v1619 = vor.u32 1.1754944e-38, %v1618
    %v1620 = vsel %vm1617, %v1619, %v1615
    %v1621 = vmul.f32 %v1502, %v1620
    %v1622 = vrcp.pop %v1540
    %v1623 = vmul.f32 %v1540, %v1622
    %v1624 = vsub.f32 1.0, %v1623
    %v1625 = vmul.f32 %v1622, %v1624
    %v1626 = vadd.f32 %v1622, %v1625
    %vm1627 = vweird.f32 %v1540
    %vm1628 = vweird.f32 %v1622
    %vm1629 = vmor %vm1627, %vm1628
    %v1630 = vsel %vm1629, %v1622, %v1626
    %v1631 = vand.u32 2147483647, %v1540
    %vm1632 = vcmp.eq.f32.partialorder %v1631, 8.507059e+37
    %v1633 = vand.u32 %v1540, 2147483648
    %v1634 = vor.u32 1.1754944e-38, %v1633
    %v1635 = vsel %vm1632, %v1634, %v1630
    %v1636 = vmul.f32 %v1504, %v1635
    %v1637 = vrcp.pop %v1543
    %v1638 = vmul.f32 %v1543, %v1637
    %v1639 = vsub.f32 1.0, %v1638
    %v1640 = vmul.f32 %v1637, %v1639
    %v1641 = vadd.f32 %v1637, %v1640
    %vm1642 = vweird.f32 %v1543
    %vm1643 = vweird.f32 %v1637
    %vm1644 = vmor %vm1642, %vm1643
    %v1645 = vsel %vm1644, %v1637, %v1641
    %v1646 = vand.u32 2147483647, %v1543
    %vm1647 = vcmp.eq.f32.partialorder %v1646, 8.507059e+37
    %v1648 = vand.u32 %v1543, 2147483648
    %v1649 = vor.u32 1.1754944e-38, %v1648
    %v1650 = vsel %vm1647, %v1649, %v1645
    %v1651 = vmul.f32 %v1506, %v1650
    %v1652 = vrcp.pop %v1546
    %v1653 = vmul.f32 %v1546, %v1652
    %v1654 = vsub.f32 1.0, %v1653
    %v1655 = vmul.f32 %v1652, %v1654
    %v1656 = vadd.f32 %v1652, %v1655
    %vm1657 = vweird.f32 %v1546
    %vm1658 = vweird.f32 %v1652
    %vm1659 = vmor %vm1657, %vm1658
    %v1660 = vsel %vm1659, %v1652, %v1656
    %v1661 = vand.u32 2147483647, %v1546
    %vm1662 = vcmp.eq.f32.partialorder %v1661, 8.507059e+37
    %v1663 = vand.u32 %v1546, 2147483648
    %v1664 = vor.u32 1.1754944e-38, %v1663
    %v1665 = vsel %vm1662, %v1664, %v1660
    %v1666 = vmul.f32 %v1508, %v1665
    %v1667 = vrcp.pop %v1549
    %v1668 = vmul.f32 %v1549, %v1667
    %v1669 = vsub.f32 1.0, %v1668
    %v1670 = vmul.f32 %v1667, %v1669
    %v1671 = vadd.f32 %v1667, %v1670
    %vm1672 = vweird.f32 %v1549
    %vm1673 = vweird.f32 %v1667
    %vm1674 = vmor %vm1672, %vm1673
    %v1675 = vsel %vm1674, %v1667, %v1671
    %v1676 = vand.u32 2147483647, %v1549
    %vm1677 = vcmp.eq.f32.partialorder %v1676, 8.507059e+37
    %v1678 = vand.u32 %v1549, 2147483648
    %v1679 = vor.u32 1.1754944e-38, %v1678
    %v1680 = vsel %vm1677, %v1679, %v1675
    %v1681 = vmul.f32 %v1510, %v1680
    %v1682 = vrcp.pop %v1552
    %v1683 = vmul.f32 %v1552, %v1682
    %v1684 = vsub.f32 1.0, %v1683
    %v1685 = vmul.f32 %v1682, %v1684
    %v1686 = vadd.f32 %v1682, %v1685
    %vm1687 = vweird.f32 %v1552
    %vm1688 = vweird.f32 %v1682
    %vm1689 = vmor %vm1687, %vm1688
    %v1690 = vsel %vm1689, %v1682, %v1686
    %v1691 = vand.u32 2147483647, %v1552
    %vm1692 = vcmp.eq.f32.partialorder %v1691, 8.507059e+37
    %v1693 = vand.u32 %v1552, 2147483648
    %v1694 = vor.u32 1.1754944e-38, %v1693
    %v1695 = vsel %vm1692, %v1694, %v1690
    %v1696 = vmul.f32 %v1512, %v1695
    %v1697 = vrcp.pop %v1555
    %v1698 = vmul.f32 %v1555, %v1697
    %v1699 = vsub.f32 1.0, %v1698
    %v1700 = vmul.f32 %v1697, %v1699
    %v1701 = vadd.f32 %v1697, %v1700
    %vm1702 = vweird.f32 %v1555
    %vm1703 = vweird.f32 %v1697
    %vm1704 = vmor %vm1702, %vm1703
    %v1705 = vsel %vm1704, %v1697, %v1701
    %v1706 = vand.u32 2147483647, %v1555
    %vm1707 = vcmp.eq.f32.partialorder %v1706, 8.507059e+37
    %v1708 = vand.u32 %v1555, 2147483648
    %v1709 = vor.u32 1.1754944e-38, %v1708
    %v1710 = vsel %vm1707, %v1709, %v1705
    %v1711 = vmul.f32 %v1514, %v1710
    %v1712 = vrcp.pop %v1558
    %v1713 = vmul.f32 %v1558, %v1712
    %v1714 = vsub.f32 1.0, %v1713
    %v1715 = vmul.f32 %v1712, %v1714
    %v1716 = vadd.f32 %v1712, %v1715
    %vm1717 = vweird.f32 %v1558
    %vm1718 = vweird.f32 %v1712
    %vm1719 = vmor %vm1717, %vm1718
    %v1720 = vsel %vm1719, %v1712, %v1716
    %v1721 = vand.u32 2147483647, %v1558
    %vm1722 = vcmp.eq.f32.partialorder %v1721, 8.507059e+37
    %v1723 = vand.u32 %v1558, 2147483648
    %v1724 = vor.u32 1.1754944e-38, %v1723
    %v1725 = vsel %vm1722, %v1724, %v1720
    %v1726 = vmul.f32 %v1516, %v1725
    %v1727 = vrcp.pop %v1561
    %v1728 = vmul.f32 %v1561, %v1727
    %v1729 = vsub.f32 1.0, %v1728
    %v1730 = vmul.f32 %v1727, %v1729
    %v1731 = vadd.f32 %v1727, %v1730
    %vm1732 = vweird.f32 %v1561
    %vm1733 = vweird.f32 %v1727
    %vm1734 = vmor %vm1732, %vm1733
    %v1735 = vsel %vm1734, %v1727, %v1731
    %v1736 = vand.u32 2147483647, %v1561
    %vm1737 = vcmp.eq.f32.partialorder %v1736, 8.507059e+37
    %v1738 = vand.u32 %v1561, 2147483648
    %v1739 = vor.u32 1.1754944e-38, %v1738
    %v1740 = vsel %vm1737, %v1739, %v1735
    %v1741 = vmul.f32 %v1518, %v1740
    %v1742 = vrcp.pop %v1564
    %v1743 = vmul.f32 %v1564, %v1742
    %v1744 = vsub.f32 1.0, %v1743
    %v1745 = vmul.f32 %v1742, %v1744
    %v1746 = vadd.f32 %v1742, %v1745
    %vm1747 = vweird.f32 %v1564
    %vm1748 = vweird.f32 %v1742
    %vm1749 = vmor %vm1747, %vm1748
    %v1750 = vsel %vm1749, %v1742, %v1746
    %v1751 = vand.u32 2147483647, %v1564
    %vm1752 = vcmp.eq.f32.partialorder %v1751, 8.507059e+37
    %v1753 = vand.u32 %v1564, 2147483648
    %v1754 = vor.u32 1.1754944e-38, %v1753
    %v1755 = vsel %vm1752, %v1754, %v1750
    %v1756 = vmul.f32 %v1520, %v1755
    %v1757 = vrcp.pop %v1567
    %v1758 = vmul.f32 %v1567, %v1757
    %v1759 = vsub.f32 1.0, %v1758
    %v1760 = vmul.f32 %v1757, %v1759
    %v1761 = vadd.f32 %v1757, %v1760
    %vm1762 = vweird.f32 %v1567
    %vm1763 = vweird.f32 %v1757
    %vm1764 = vmor %vm1762, %vm1763
    %v1765 = vsel %vm1764, %v1757, %v1761
    %v1766 = vand.u32 2147483647, %v1567
    %vm1767 = vcmp.eq.f32.partialorder %v1766, 8.507059e+37
    %v1768 = vand.u32 %v1567, 2147483648
    %v1769 = vor.u32 1.1754944e-38, %v1768
    %v1770 = vsel %vm1767, %v1769, %v1765
    %v1771 = vmul.f32 %v1522, %v1770
    %v1772 = vrcp.pop %v1570
    %v1773 = vmul.f32 %v1570, %v1772
    %v1774 = vsub.f32 1.0, %v1773
    %v1775 = vmul.f32 %v1772, %v1774
    %v1776 = vadd.f32 %v1772, %v1775
    %vm1777 = vweird.f32 %v1570
    %vm1778 = vweird.f32 %v1772
    %vm1779 = vmor %vm1777, %vm1778
    %v1780 = vsel %vm1779, %v1772, %v1776
    %v1781 = vand.u32 2147483647, %v1570
    %vm1782 = vcmp.eq.f32.partialorder %v1781, 8.507059e+37
    %v1783 = vand.u32 %v1570, 2147483648
    %v1784 = vor.u32 1.1754944e-38, %v1783
    %v1785 = vsel %vm1782, %v1784, %v1780
    %v1786 = vmul.f32 %v1524, %v1785
    %v1787 = vrcp.pop %v1573
    %v1788 = vmul.f32 %v1573, %v1787
    %v1789 = vsub.f32 1.0, %v1788
    %v1790 = vmul.f32 %v1787, %v1789
    %v1791 = vadd.f32 %v1787, %v1790
    %vm1792 = vweird.f32 %v1573
    %vm1793 = vweird.f32 %v1787
    %vm1794 = vmor %vm1792, %vm1793
    %v1795 = vsel %vm1794, %v1787, %v1791
    %v1796 = vand.u32 2147483647, %v1573
    %vm1797 = vcmp.eq.f32.partialorder %v1796, 8.507059e+37
    %v1798 = vand.u32 %v1573, 2147483648
    %v1799 = vor.u32 1.1754944e-38, %v1798
    %v1800 = vsel %vm1797, %v1799, %v1795
    %v1801 = vmul.f32 %v1526, %v1800
    %v1802 = vrcp.pop %v1576
    %v1803 = vmul.f32 %v1576, %v1802
    %v1804 = vsub.f32 1.0, %v1803
    %v1805 = vmul.f32 %v1802, %v1804
    %v1806 = vadd.f32 %v1802, %v1805
    %vm1807 = vweird.f32 %v1576
    %vm1808 = vweird.f32 %v1802
    %vm1809 = vmor %vm1807, %vm1808
    %v1810 = vsel %vm1809, %v1802, %v1806
    %v1811 = vand.u32 2147483647, %v1576
    %vm1812 = vcmp.eq.f32.partialorder %v1811, 8.507059e+37
    %v1813 = vand.u32 %v1576, 2147483648
    %v1814 = vor.u32 1.1754944e-38, %v1813
    %v1815 = vsel %vm1812, %v1814, %v1810
    %v1816 = vmul.f32 %v1528, %v1815
    %1818 = vset.pattern.permute.xlu0 0
    %1819 = vperm.xlu0 %1818, %v1401
    %v1820 = vpop.permute.xlu0 %1819
    %1823 = vset.pattern.permute.xlu0 0
    %1824 = vperm.xlu0 %1823, %v1402
    %v1825 = vpop.permute.xlu0 %1824
    %1828 = vset.pattern.permute.xlu0 0
    %1829 = vperm.xlu0 %1828, %v1403
    %v1830 = vpop.permute.xlu0 %1829
    %1833 = vset.pattern.permute.xlu0 0
    %1834 = vperm.xlu0 %1833, %v1404
    %v1835 = vpop.permute.xlu0 %1834
    %1838 = vset.pattern.permute.xlu0 0
    %1839 = vperm.xlu0 %1838, %v1405
    %v1840 = vpop.permute.xlu0 %1839
    %1843 = vset.pattern.permute.xlu0 0
    %1844 = vperm.xlu0 %1843, %v1406
    %v1845 = vpop.permute.xlu0 %1844
    %1848 = vset.pattern.permute.xlu0 0
    %1849 = vperm.xlu0 %1848, %v1407
    %v1850 = vpop.permute.xlu0 %1849
    %1853 = vset.pattern.permute.xlu0 0
    %1854 = vperm.xlu0 %1853, %v1408
    %v1855 = vpop.permute.xlu0 %1854
    %1858 = vset.pattern.permute.xlu0 0
    %1859 = vperm.xlu0 %1858, %v1409
    %v1860 = vpop.permute.xlu0 %1859
    %1863 = vset.pattern.permute.xlu0 0
    %1864 = vperm.xlu0 %1863, %v1410
    %v1865 = vpop.permute.xlu0 %1864
    %1868 = vset.pattern.permute.xlu0 0
    %1869 = vperm.xlu0 %1868, %v1411
    %v1870 = vpop.permute.xlu0 %1869
    %1873 = vset.pattern.permute.xlu0 0
    %1874 = vperm.xlu0 %1873, %v1412
    %v1875 = vpop.permute.xlu0 %1874
    %1878 = vset.pattern.permute.xlu0 0
    %1879 = vperm.xlu0 %1878, %v1413
    %v1880 = vpop.permute.xlu0 %1879
    %1883 = vset.pattern.permute.xlu0 0
    %1884 = vperm.xlu0 %1883, %v1414
    %v1885 = vpop.permute.xlu0 %1884
    %1888 = vset.pattern.permute.xlu0 0
    %1889 = vperm.xlu0 %1888, %v1415
    %v1890 = vpop.permute.xlu0 %1889
    %1893 = vset.pattern.permute.xlu0 0
    %1894 = vperm.xlu0 %1893, %v1416
    %v1895 = vpop.permute.xlu0 %1894
    %v1897 = vmul.f32 %v1591, %v1820
    %v1898 = vmul.f32 %v1606, %v1825
    %v1899 = vmul.f32 %v1621, %v1830
    %v1900 = vmul.f32 %v1636, %v1835
    %v1901 = vmul.f32 %v1651, %v1840
    %v1902 = vmul.f32 %v1666, %v1845
    %v1903 = vmul.f32 %v1681, %v1850
    %v1904 = vmul.f32 %v1696, %v1855
    %v1905 = vmul.f32 %v1711, %v1860
    %v1906 = vmul.f32 %v1726, %v1865
    %v1907 = vmul.f32 %v1741, %v1870
    %v1908 = vmul.f32 %v1756, %v1875
    %v1909 = vmul.f32 %v1771, %v1880
    %v1910 = vmul.f32 %v1786, %v1885
    %v1911 = vmul.f32 %v1801, %v1890
    %v1912 = vmul.f32 %v1816, %v1895
    %1914 = vset.pattern.permute.xlu0 0
    %1915 = vperm.xlu0 %1914, %v1417
    %v1916 = vpop.permute.xlu0 %1915
    %1919 = vset.pattern.permute.xlu0 0
    %1920 = vperm.xlu0 %1919, %v1418
    %v1921 = vpop.permute.xlu0 %1920
    %1924 = vset.pattern.permute.xlu0 0
    %1925 = vperm.xlu0 %1924, %v1419
    %v1926 = vpop.permute.xlu0 %1925
    %1929 = vset.pattern.permute.xlu0 0
    %1930 = vperm.xlu0 %1929, %v1420
    %v1931 = vpop.permute.xlu0 %1930
    %1934 = vset.pattern.permute.xlu0 0
    %1935 = vperm.xlu0 %1934, %v1421
    %v1936 = vpop.permute.xlu0 %1935
    %1939 = vset.pattern.permute.xlu0 0
    %1940 = vperm.xlu0 %1939, %v1422
    %v1941 = vpop.permute.xlu0 %1940
    %1944 = vset.pattern.permute.xlu0 0
    %1945 = vperm.xlu0 %1944, %v1423
    %v1946 = vpop.permute.xlu0 %1945
    %1949 = vset.pattern.permute.xlu0 0
    %1950 = vperm.xlu0 %1949, %v1424
    %v1951 = vpop.permute.xlu0 %1950
    %1954 = vset.pattern.permute.xlu0 0
    %1955 = vperm.xlu0 %1954, %v1425
    %v1956 = vpop.permute.xlu0 %1955
    %1959 = vset.pattern.permute.xlu0 0
    %1960 = vperm.xlu0 %1959, %v1426
    %v1961 = vpop.permute.xlu0 %1960
    %1964 = vset.pattern.permute.xlu0 0
    %1965 = vperm.xlu0 %1964, %v1427
    %v1966 = vpop.permute.xlu0 %1965
    %1969 = vset.pattern.permute.xlu0 0
    %1970 = vperm.xlu0 %1969, %v1428
    %v1971 = vpop.permute.xlu0 %1970
    %1974 = vset.pattern.permute.xlu0 0
    %1975 = vperm.xlu0 %1974, %v1429
    %v1976 = vpop.permute.xlu0 %1975
    %1979 = vset.pattern.permute.xlu0 0
    %1980 = vperm.xlu0 %1979, %v1430
    %v1981 = vpop.permute.xlu0 %1980
    %1984 = vset.pattern.permute.xlu0 0
    %1985 = vperm.xlu0 %1984, %v1431
    %v1986 = vpop.permute.xlu0 %1985
    %1989 = vset.pattern.permute.xlu0 0
    %1990 = vperm.xlu0 %1989, %v1432
    %v1991 = vpop.permute.xlu0 %1990
    %v1993 = vadd.f32 %v1916, %v1897
    %v1994 = vadd.f32 %v1921, %v1898
    %v1995 = vadd.f32 %v1926, %v1899
    %v1996 = vadd.f32 %v1931, %v1900
    %v1997 = vadd.f32 %v1936, %v1901
    %v1998 = vadd.f32 %v1941, %v1902
    %v1999 = vadd.f32 %v1946, %v1903
    %v2000 = vadd.f32 %v1951, %v1904
    %v2001 = vadd.f32 %v1956, %v1905
    %v2002 = vadd.f32 %v1961, %v1906
    %v2003 = vadd.f32 %v1966, %v1907
    %v2004 = vadd.f32 %v1971, %v1908
    %v2005 = vadd.f32 %v1976, %v1909
    %v2006 = vadd.f32 %v1981, %v1910
    %v2007 = vadd.f32 %v1986, %v1911
    %v2008 = vadd.f32 %v1991, %v1912
    %v2009 = vsel %vm1368, %v1289, -inf
    %2010 = vmax.xlane.f32.xlu0 %v2009
    %v2011 = vpop.xlane.xlu0 %2010
    %v2012 = vsel %vm1368, %v1292, -inf
    %2013 = vmax.xlane.f32.xlu0 %v2012
    %v2014 = vpop.xlane.xlu0 %2013
    %v2015 = vsel %vm1368, %v1295, -inf
    %2016 = vmax.xlane.f32.xlu0 %v2015
    %v2017 = vpop.xlane.xlu0 %2016
    %v2018 = vsel %vm1368, %v1298, -inf
    %2019 = vmax.xlane.f32.xlu0 %v2018
    %v2020 = vpop.xlane.xlu0 %2019
    %v2021 = vsel %vm1368, %v1301, -inf
    %2022 = vmax.xlane.f32.xlu0 %v2021
    %v2023 = vpop.xlane.xlu0 %2022
    %v2024 = vsel %vm1368, %v1304, -inf
    %2025 = vmax.xlane.f32.xlu0 %v2024
    %v2026 = vpop.xlane.xlu0 %2025
    %v2027 = vsel %vm1368, %v1307, -inf
    %2028 = vmax.xlane.f32.xlu0 %v2027
    %v2029 = vpop.xlane.xlu0 %2028
    %v2030 = vsel %vm1368, %v1310, -inf
    %2031 = vmax.xlane.f32.xlu0 %v2030
    %v2032 = vpop.xlane.xlu0 %2031
    %v2033 = vsel %vm1368, %v1313, -inf
    %2034 = vmax.xlane.f32.xlu0 %v2033
    %v2035 = vpop.xlane.xlu0 %2034
    %v2036 = vsel %vm1368, %v1316, -inf
    %2037 = vmax.xlane.f32.xlu0 %v2036
    %v2038 = vpop.xlane.xlu0 %2037
    %v2039 = vsel %vm1368, %v1319, -inf
    %2040 = vmax.xlane.f32.xlu0 %v2039
    %v2041 = vpop.xlane.xlu0 %2040
    %v2042 = vsel %vm1368, %v1322, -inf
    %2043 = vmax.xlane.f32.xlu0 %v2042
    %v2044 = vpop.xlane.xlu0 %2043
    %v2045 = vsel %vm1368, %v1325, -inf
    %2046 = vmax.xlane.f32.xlu0 %v2045
    %v2047 = vpop.xlane.xlu0 %2046
    %v2048 = vsel %vm1368, %v1328, -inf
    %2049 = vmax.xlane.f32.xlu0 %v2048
    %v2050 = vpop.xlane.xlu0 %2049
    %v2051 = vsel %vm1368, %v1331, -inf
    %2052 = vmax.xlane.f32.xlu0 %v2051
    %v2053 = vpop.xlane.xlu0 %2052
    %v2054 = vsel %vm1368, %v1334, -inf
    %2055 = vmax.xlane.f32.xlu0 %v2054
    %v2056 = vpop.xlane.xlu0 %2055
    %v2057 = vsub.f32 %v1289, %v2011
    %v2058 = vsub.f32 %v1292, %v2014
    %v2059 = vsub.f32 %v1295, %v2017
    %v2060 = vsub.f32 %v1298, %v2020
    %v2061 = vsub.f32 %v1301, %v2023
    %v2062 = vsub.f32 %v1304, %v2026
    %v2063 = vsub.f32 %v1307, %v2029
    %v2064 = vsub.f32 %v1310, %v2032
    %v2065 = vsub.f32 %v1313, %v2035
    %v2066 = vsub.f32 %v1316, %v2038
    %v2067 = vsub.f32 %v1319, %v2041
    %v2068 = vsub.f32 %v1322, %v2044
    %v2069 = vsub.f32 %v1325, %v2047
    %v2070 = vsub.f32 %v1328, %v2050
    %v2071 = vsub.f32 %v1331, %v2053
    %v2072 = vsub.f32 %v1334, %v2056
    %v2073 = vmul.f32 %v2057, 1.442695
    %v2074 = vpow.pop %v2073
    %v2075 = vmul.f32 %v2058, 1.442695
    %v2076 = vpow.pop %v2075
    %v2077 = vmul.f32 %v2059, 1.442695
    %v2078 = vpow.pop %v2077
    %v2079 = vmul.f32 %v2060, 1.442695
    %v2080 = vpow.pop %v2079
    %v2081 = vmul.f32 %v2061, 1.442695
    %v2082 = vpow.pop %v2081
    %v2083 = vmul.f32 %v2062, 1.442695
    %v2084 = vpow.pop %v2083
    %v2085 = vmul.f32 %v2063, 1.442695
    %v2086 = vpow.pop %v2085
    %v2087 = vmul.f32 %v2064, 1.442695
    %v2088 = vpow.pop %v2087
    %v2089 = vmul.f32 %v2065, 1.442695
    %v2090 = vpow.pop %v2089
    %v2091 = vmul.f32 %v2066, 1.442695
    %v2092 = vpow.pop %v2091
    %v2093 = vmul.f32 %v2067, 1.442695
    %v2094 = vpow.pop %v2093
    %v2095 = vmul.f32 %v2068, 1.442695
    %v2096 = vpow.pop %v2095
    %v2097 = vmul.f32 %v2069, 1.442695
    %v2098 = vpow.pop %v2097
    %v2099 = vmul.f32 %v2070, 1.442695
    %v2100 = vpow.pop %v2099
    %v2101 = vmul.f32 %v2071, 1.442695
    %v2102 = vpow.pop %v2101
    %v2103 = vmul.f32 %v2072, 1.442695
    %v2104 = vpow.pop %v2103
    %v2105 = vsel %vm1368, %v2074, 0.0
    %2106 = vadd.xlane.f32.xlu0 %v2105
    %v2107 = vpop.xlane.xlu0 %2106
    %v2108 = vsel %vm1368, %v2076, 0.0
    %2109 = vadd.xlane.f32.xlu0 %v2108
    %v2110 = vpop.xlane.xlu0 %2109
    %v2111 = vsel %vm1368, %v2078, 0.0
    %2112 = vadd.xlane.f32.xlu0 %v2111
    %v2113 = vpop.xlane.xlu0 %2112
    %v2114 = vsel %vm1368, %v2080, 0.0
    %2115 = vadd.xlane.f32.xlu0 %v2114
    %v2116 = vpop.xlane.xlu0 %2115
    %v2117 = vsel %vm1368, %v2082, 0.0
    %2118 = vadd.xlane.f32.xlu0 %v2117
    %v2119 = vpop.xlane.xlu0 %2118
    %v2120 = vsel %vm1368, %v2084, 0.0
    %2121 = vadd.xlane.f32.xlu0 %v2120
    %v2122 = vpop.xlane.xlu0 %2121
    %v2123 = vsel %vm1368, %v2086, 0.0
    %2124 = vadd.xlane.f32.xlu0 %v2123
    %v2125 = vpop.xlane.xlu0 %2124
    %v2126 = vsel %vm1368, %v2088, 0.0
    %2127 = vadd.xlane.f32.xlu0 %v2126
    %v2128 = vpop.xlane.xlu0 %2127
    %v2129 = vsel %vm1368, %v2090, 0.0
    %2130 = vadd.xlane.f32.xlu0 %v2129
    %v2131 = vpop.xlane.xlu0 %2130
    %v2132 = vsel %vm1368, %v2092, 0.0
    %2133 = vadd.xlane.f32.xlu0 %v2132
    %v2134 = vpop.xlane.xlu0 %2133
    %v2135 = vsel %vm1368, %v2094, 0.0
    %2136 = vadd.xlane.f32.xlu0 %v2135
    %v2137 = vpop.xlane.xlu0 %2136
    %v2138 = vsel %vm1368, %v2096, 0.0
    %2139 = vadd.xlane.f32.xlu0 %v2138
    %v2140 = vpop.xlane.xlu0 %2139
    %v2141 = vsel %vm1368, %v2098, 0.0
    %2142 = vadd.xlane.f32.xlu0 %v2141
    %v2143 = vpop.xlane.xlu0 %2142
    %v2144 = vsel %vm1368, %v2100, 0.0
    %2145 = vadd.xlane.f32.xlu0 %v2144
    %v2146 = vpop.xlane.xlu0 %2145
    %v2147 = vsel %vm1368, %v2102, 0.0
    %2148 = vadd.xlane.f32.xlu0 %v2147
    %v2149 = vpop.xlane.xlu0 %2148
    %v2150 = vsel %vm1368, %v2104, 0.0
    %2151 = vadd.xlane.f32.xlu0 %v2150
    %v2152 = vpop.xlane.xlu0 %2151
    %v2153 = vrcp.pop %v2107
    %v2154 = vmul.f32 %v2107, %v2153
    %v2155 = vsub.f32 1.0, %v2154
    %v2156 = vmul.f32 %v2153, %v2155
    %v2157 = vadd.f32 %v2153, %v2156
    %vm2158 = vweird.f32 %v2107
    %vm2159 = vweird.f32 %v2153
    %vm2160 = vmor %vm2158, %vm2159
    %v2161 = vsel %vm2160, %v2153, %v2157
    %v2162 = vand.u32 2147483647, %v2107
    %vm2163 = vcmp.eq.f32.partialorder %v2162, 8.507059e+37
    %v2164 = vand.u32 %v2107, 2147483648
    %v2165 = vor.u32 1.1754944e-38, %v2164
    %v2166 = vsel %vm2163, %v2165, %v2161
    %v2167 = vmul.f32 %v2074, %v2166
    %v2168 = vrcp.pop %v2110
    %v2169 = vmul.f32 %v2110, %v2168
    %v2170 = vsub.f32 1.0, %v2169
    %v2171 = vmul.f32 %v2168, %v2170
    %v2172 = vadd.f32 %v2168, %v2171
    %vm2173 = vweird.f32 %v2110
    %vm2174 = vweird.f32 %v2168
    %vm2175 = vmor %vm2173, %vm2174
    %v2176 = vsel %vm2175, %v2168, %v2172
    %v2177 = vand.u32 2147483647, %v2110
    %vm2178 = vcmp.eq.f32.partialorder %v2177, 8.507059e+37
    %v2179 = vand.u32 %v2110, 2147483648
    %v2180 = vor.u32 1.1754944e-38, %v2179
    %v2181 = vsel %vm2178, %v2180, %v2176
    %v2182 = vmul.f32 %v2076, %v2181
    %v2183 = vrcp.pop %v2113
    %v2184 = vmul.f32 %v2113, %v2183
    %v2185 = vsub.f32 1.0, %v2184
    %v2186 = vmul.f32 %v2183, %v2185
    %v2187 = vadd.f32 %v2183, %v2186
    %vm2188 = vweird.f32 %v2113
    %vm2189 = vweird.f32 %v2183
    %vm2190 = vmor %vm2188, %vm2189
    %v2191 = vsel %vm2190, %v2183, %v2187
    %v2192 = vand.u32 2147483647, %v2113
    %vm2193 = vcmp.eq.f32.partialorder %v2192, 8.507059e+37
    %v2194 = vand.u32 %v2113, 2147483648
    %v2195 = vor.u32 1.1754944e-38, %v2194
    %v2196 = vsel %vm2193, %v2195, %v2191
    %v2197 = vmul.f32 %v2078, %v2196
    %v2198 = vrcp.pop %v2116
    %v2199 = vmul.f32 %v2116, %v2198
    %v2200 = vsub.f32 1.0, %v2199
    %v2201 = vmul.f32 %v2198, %v2200
    %v2202 = vadd.f32 %v2198, %v2201
    %vm2203 = vweird.f32 %v2116
    %vm2204 = vweird.f32 %v2198
    %vm2205 = vmor %vm2203, %vm2204
    %v2206 = vsel %vm2205, %v2198, %v2202
    %v2207 = vand.u32 2147483647, %v2116
    %vm2208 = vcmp.eq.f32.partialorder %v2207, 8.507059e+37
    %v2209 = vand.u32 %v2116, 2147483648
    %v2210 = vor.u32 1.1754944e-38, %v2209
    %v2211 = vsel %vm2208, %v2210, %v2206
    %v2212 = vmul.f32 %v2080, %v2211
    %v2213 = vrcp.pop %v2119
    %v2214 = vmul.f32 %v2119, %v2213
    %v2215 = vsub.f32 1.0, %v2214
    %v2216 = vmul.f32 %v2213, %v2215
    %v2217 = vadd.f32 %v2213, %v2216
    %vm2218 = vweird.f32 %v2119
    %vm2219 = vweird.f32 %v2213
    %vm2220 = vmor %vm2218, %vm2219
    %v2221 = vsel %vm2220, %v2213, %v2217
    %v2222 = vand.u32 2147483647, %v2119
    %vm2223 = vcmp.eq.f32.partialorder %v2222, 8.507059e+37
    %v2224 = vand.u32 %v2119, 2147483648
    %v2225 = vor.u32 1.1754944e-38, %v2224
    %v2226 = vsel %vm2223, %v2225, %v2221
    %v2227 = vmul.f32 %v2082, %v2226
    %v2228 = vrcp.pop %v2122
    %v2229 = vmul.f32 %v2122, %v2228
    %v2230 = vsub.f32 1.0, %v2229
    %v2231 = vmul.f32 %v2228, %v2230
    %v2232 = vadd.f32 %v2228, %v2231
    %vm2233 = vweird.f32 %v2122
    %vm2234 = vweird.f32 %v2228
    %vm2235 = vmor %vm2233, %vm2234
    %v2236 = vsel %vm2235, %v2228, %v2232
    %v2237 = vand.u32 2147483647, %v2122
    %vm2238 = vcmp.eq.f32.partialorder %v2237, 8.507059e+37
    %v2239 = vand.u32 %v2122, 2147483648
    %v2240 = vor.u32 1.1754944e-38, %v2239
    %v2241 = vsel %vm2238, %v2240, %v2236
    %v2242 = vmul.f32 %v2084, %v2241
    %v2243 = vrcp.pop %v2125
    %v2244 = vmul.f32 %v2125, %v2243
    %v2245 = vsub.f32 1.0, %v2244
    %v2246 = vmul.f32 %v2243, %v2245
    %v2247 = vadd.f32 %v2243, %v2246
    %vm2248 = vweird.f32 %v2125
    %vm2249 = vweird.f32 %v2243
    %vm2250 = vmor %vm2248, %vm2249
    %v2251 = vsel %vm2250, %v2243, %v2247
    %v2252 = vand.u32 2147483647, %v2125
    %vm2253 = vcmp.eq.f32.partialorder %v2252, 8.507059e+37
    %v2254 = vand.u32 %v2125, 2147483648
    %v2255 = vor.u32 1.1754944e-38, %v2254
    %v2256 = vsel %vm2253, %v2255, %v2251
    %v2257 = vmul.f32 %v2086, %v2256
    %v2258 = vrcp.pop %v2128
    %v2259 = vmul.f32 %v2128, %v2258
    %v2260 = vsub.f32 1.0, %v2259
    %v2261 = vmul.f32 %v2258, %v2260
    %v2262 = vadd.f32 %v2258, %v2261
    %vm2263 = vweird.f32 %v2128
    %vm2264 = vweird.f32 %v2258
    %vm2265 = vmor %vm2263, %vm2264
    %v2266 = vsel %vm2265, %v2258, %v2262
    %v2267 = vand.u32 2147483647, %v2128
    %vm2268 = vcmp.eq.f32.partialorder %v2267, 8.507059e+37
    %v2269 = vand.u32 %v2128, 2147483648
    %v2270 = vor.u32 1.1754944e-38, %v2269
    %v2271 = vsel %vm2268, %v2270, %v2266
    %v2272 = vmul.f32 %v2088, %v2271
    %v2273 = vrcp.pop %v2131
    %v2274 = vmul.f32 %v2131, %v2273
    %v2275 = vsub.f32 1.0, %v2274
    %v2276 = vmul.f32 %v2273, %v2275
    %v2277 = vadd.f32 %v2273, %v2276
    %vm2278 = vweird.f32 %v2131
    %vm2279 = vweird.f32 %v2273
    %vm2280 = vmor %vm2278, %vm2279
    %v2281 = vsel %vm2280, %v2273, %v2277
    %v2282 = vand.u32 2147483647, %v2131
    %vm2283 = vcmp.eq.f32.partialorder %v2282, 8.507059e+37
    %v2284 = vand.u32 %v2131, 2147483648
    %v2285 = vor.u32 1.1754944e-38, %v2284
    %v2286 = vsel %vm2283, %v2285, %v2281
    %v2287 = vmul.f32 %v2090, %v2286
    %v2288 = vrcp.pop %v2134
    %v2289 = vmul.f32 %v2134, %v2288
    %v2290 = vsub.f32 1.0, %v2289
    %v2291 = vmul.f32 %v2288, %v2290
    %v2292 = vadd.f32 %v2288, %v2291
    %vm2293 = vweird.f32 %v2134
    %vm2294 = vweird.f32 %v2288
    %vm2295 = vmor %vm2293, %vm2294
    %v2296 = vsel %vm2295, %v2288, %v2292
    %v2297 = vand.u32 2147483647, %v2134
    %vm2298 = vcmp.eq.f32.partialorder %v2297, 8.507059e+37
    %v2299 = vand.u32 %v2134, 2147483648
    %v2300 = vor.u32 1.1754944e-38, %v2299
    %v2301 = vsel %vm2298, %v2300, %v2296
    %v2302 = vmul.f32 %v2092, %v2301
    %v2303 = vrcp.pop %v2137
    %v2304 = vmul.f32 %v2137, %v2303
    %v2305 = vsub.f32 1.0, %v2304
    %v2306 = vmul.f32 %v2303, %v2305
    %v2307 = vadd.f32 %v2303, %v2306
    %vm2308 = vweird.f32 %v2137
    %vm2309 = vweird.f32 %v2303
    %vm2310 = vmor %vm2308, %vm2309
    %v2311 = vsel %vm2310, %v2303, %v2307
    %v2312 = vand.u32 2147483647, %v2137
    %vm2313 = vcmp.eq.f32.partialorder %v2312, 8.507059e+37
    %v2314 = vand.u32 %v2137, 2147483648
    %v2315 = vor.u32 1.1754944e-38, %v2314
    %v2316 = vsel %vm2313, %v2315, %v2311
    %v2317 = vmul.f32 %v2094, %v2316
    %v2318 = vrcp.pop %v2140
    %v2319 = vmul.f32 %v2140, %v2318
    %v2320 = vsub.f32 1.0, %v2319
    %v2321 = vmul.f32 %v2318, %v2320
    %v2322 = vadd.f32 %v2318, %v2321
    %vm2323 = vweird.f32 %v2140
    %vm2324 = vweird.f32 %v2318
    %vm2325 = vmor %vm2323, %vm2324
    %v2326 = vsel %vm2325, %v2318, %v2322
    %v2327 = vand.u32 2147483647, %v2140
    %vm2328 = vcmp.eq.f32.partialorder %v2327, 8.507059e+37
    %v2329 = vand.u32 %v2140, 2147483648
    %v2330 = vor.u32 1.1754944e-38, %v2329
    %v2331 = vsel %vm2328, %v2330, %v2326
    %v2332 = vmul.f32 %v2096, %v2331
    %v2333 = vrcp.pop %v2143
    %v2334 = vmul.f32 %v2143, %v2333
    %v2335 = vsub.f32 1.0, %v2334
    %v2336 = vmul.f32 %v2333, %v2335
    %v2337 = vadd.f32 %v2333, %v2336
    %vm2338 = vweird.f32 %v2143
    %vm2339 = vweird.f32 %v2333
    %vm2340 = vmor %vm2338, %vm2339
    %v2341 = vsel %vm2340, %v2333, %v2337
    %v2342 = vand.u32 2147483647, %v2143
    %vm2343 = vcmp.eq.f32.partialorder %v2342, 8.507059e+37
    %v2344 = vand.u32 %v2143, 2147483648
    %v2345 = vor.u32 1.1754944e-38, %v2344
    %v2346 = vsel %vm2343, %v2345, %v2341
    %v2347 = vmul.f32 %v2098, %v2346
    %v2348 = vrcp.pop %v2146
    %v2349 = vmul.f32 %v2146, %v2348
    %v2350 = vsub.f32 1.0, %v2349
    %v2351 = vmul.f32 %v2348, %v2350
    %v2352 = vadd.f32 %v2348, %v2351
    %vm2353 = vweird.f32 %v2146
    %vm2354 = vweird.f32 %v2348
    %vm2355 = vmor %vm2353, %vm2354
    %v2356 = vsel %vm2355, %v2348, %v2352
    %v2357 = vand.u32 2147483647, %v2146
    %vm2358 = vcmp.eq.f32.partialorder %v2357, 8.507059e+37
    %v2359 = vand.u32 %v2146, 2147483648
    %v2360 = vor.u32 1.1754944e-38, %v2359
    %v2361 = vsel %vm2358, %v2360, %v2356
    %v2362 = vmul.f32 %v2100, %v2361
    %v2363 = vrcp.pop %v2149
    %v2364 = vmul.f32 %v2149, %v2363
    %v2365 = vsub.f32 1.0, %v2364
    %v2366 = vmul.f32 %v2363, %v2365
    %v2367 = vadd.f32 %v2363, %v2366
    %vm2368 = vweird.f32 %v2149
    %vm2369 = vweird.f32 %v2363
    %vm2370 = vmor %vm2368, %vm2369
    %v2371 = vsel %vm2370, %v2363, %v2367
    %v2372 = vand.u32 2147483647, %v2149
    %vm2373 = vcmp.eq.f32.partialorder %v2372, 8.507059e+37
    %v2374 = vand.u32 %v2149, 2147483648
    %v2375 = vor.u32 1.1754944e-38, %v2374
    %v2376 = vsel %vm2373, %v2375, %v2371
    %v2377 = vmul.f32 %v2102, %v2376
    %v2378 = vrcp.pop %v2152
    %v2379 = vmul.f32 %v2152, %v2378
    %v2380 = vsub.f32 1.0, %v2379
    %v2381 = vmul.f32 %v2378, %v2380
    %v2382 = vadd.f32 %v2378, %v2381
    %vm2383 = vweird.f32 %v2152
    %vm2384 = vweird.f32 %v2378
    %vm2385 = vmor %vm2383, %vm2384
    %v2386 = vsel %vm2385, %v2378, %v2382
    %v2387 = vand.u32 2147483647, %v2152
    %vm2388 = vcmp.eq.f32.partialorder %v2387, 8.507059e+37
    %v2389 = vand.u32 %v2152, 2147483648
    %v2390 = vor.u32 1.1754944e-38, %v2389
    %v2391 = vsel %vm2388, %v2390, %v2386
    %v2392 = vmul.f32 %v2104, %v2391
    %v2393 = vmul.f32 %v2167, %v1820
    %v2394 = vmul.f32 %v2182, %v1825
    %v2395 = vmul.f32 %v2197, %v1830
    %v2396 = vmul.f32 %v2212, %v1835
    %v2397 = vmul.f32 %v2227, %v1840
    %v2398 = vmul.f32 %v2242, %v1845
    %v2399 = vmul.f32 %v2257, %v1850
    %v2400 = vmul.f32 %v2272, %v1855
    %v2401 = vmul.f32 %v2287, %v1860
    %v2402 = vmul.f32 %v2302, %v1865
    %v2403 = vmul.f32 %v2317, %v1870
    %v2404 = vmul.f32 %v2332, %v1875
    %v2405 = vmul.f32 %v2347, %v1880
    %v2406 = vmul.f32 %v2362, %v1885
    %v2407 = vmul.f32 %v2377, %v1890
    %v2408 = vmul.f32 %v2392, %v1895
    %v2409 = vadd.f32 %v1916, %v2393
    %v2410 = vadd.f32 %v1921, %v2394
    %v2411 = vadd.f32 %v1926, %v2395
    %v2412 = vadd.f32 %v1931, %v2396
    %v2413 = vadd.f32 %v1936, %v2397
    %v2414 = vadd.f32 %v1941, %v2398
    %v2415 = vadd.f32 %v1946, %v2399
    %v2416 = vadd.f32 %v1951, %v2400
    %v2417 = vadd.f32 %v1956, %v2401
    %v2418 = vadd.f32 %v1961, %v2402
    %v2419 = vadd.f32 %v1966, %v2403
    %v2420 = vadd.f32 %v1971, %v2404
    %v2421 = vadd.f32 %v1976, %v2405
    %v2422 = vadd.f32 %v1981, %v2406
    %v2423 = vadd.f32 %v1986, %v2407
    %v2424 = vadd.f32 %v1991, %v2408
    %v2425 = vsel %vm1368, %v1993, 0.0
    %2426 = vadd.xlane.f32.xlu0 %v2425
    %v2427 = vpop.xlane.xlu0 %2426
    %v2428 = vsel %vm1368, %v1994, 0.0
    %2429 = vadd.xlane.f32.xlu0 %v2428
    %v2430 = vpop.xlane.xlu0 %2429
    %v2431 = vsel %vm1368, %v1995, 0.0
    %2432 = vadd.xlane.f32.xlu0 %v2431
    %v2433 = vpop.xlane.xlu0 %2432
    %v2434 = vsel %vm1368, %v1996, 0.0
    %2435 = vadd.xlane.f32.xlu0 %v2434
    %v2436 = vpop.xlane.xlu0 %2435
    %v2437 = vsel %vm1368, %v1997, 0.0
    %2438 = vadd.xlane.f32.xlu0 %v2437
    %v2439 = vpop.xlane.xlu0 %2438
    %v2440 = vsel %vm1368, %v1998, 0.0
    %2441 = vadd.xlane.f32.xlu0 %v2440
    %v2442 = vpop.xlane.xlu0 %2441
    %v2443 = vsel %vm1368, %v1999, 0.0
    %2444 = vadd.xlane.f32.xlu0 %v2443
    %v2445 = vpop.xlane.xlu0 %2444
    %v2446 = vsel %vm1368, %v2000, 0.0
    %2447 = vadd.xlane.f32.xlu0 %v2446
    %v2448 = vpop.xlane.xlu0 %2447
    %v2449 = vsel %vm1368, %v2001, 0.0
    %2450 = vadd.xlane.f32.xlu0 %v2449
    %v2451 = vpop.xlane.xlu0 %2450
    %v2452 = vsel %vm1368, %v2002, 0.0
    %2453 = vadd.xlane.f32.xlu0 %v2452
    %v2454 = vpop.xlane.xlu0 %2453
    %v2455 = vsel %vm1368, %v2003, 0.0
    %2456 = vadd.xlane.f32.xlu0 %v2455
    %v2457 = vpop.xlane.xlu0 %2456
    %v2458 = vsel %vm1368, %v2004, 0.0
    %2459 = vadd.xlane.f32.xlu0 %v2458
    %v2460 = vpop.xlane.xlu0 %2459
    %v2461 = vsel %vm1368, %v2005, 0.0
    %2462 = vadd.xlane.f32.xlu0 %v2461
    %v2463 = vpop.xlane.xlu0 %2462
    %v2464 = vsel %vm1368, %v2006, 0.0
    %2465 = vadd.xlane.f32.xlu0 %v2464
    %v2466 = vpop.xlane.xlu0 %2465
    %v2467 = vsel %vm1368, %v2007, 0.0
    %2468 = vadd.xlane.f32.xlu0 %v2467
    %v2469 = vpop.xlane.xlu0 %2468
    %v2470 = vsel %vm1368, %v2008, 0.0
    %2471 = vadd.xlane.f32.xlu0 %v2470
    %v2472 = vpop.xlane.xlu0 %2471
    %v2473 = vsel %vm1368, %v2409, 0.0
    %2474 = vadd.xlane.f32.xlu0 %v2473
    %v2475 = vpop.xlane.xlu0 %2474
    %v2476 = vsel %vm1368, %v2410, 0.0
    %2477 = vadd.xlane.f32.xlu0 %v2476
    %v2478 = vpop.xlane.xlu0 %2477
    %v2479 = vsel %vm1368, %v2411, 0.0
    %2480 = vadd.xlane.f32.xlu0 %v2479
    %v2481 = vpop.xlane.xlu0 %2480
    %v2482 = vsel %vm1368, %v2412, 0.0
    %2483 = vadd.xlane.f32.xlu0 %v2482
    %v2484 = vpop.xlane.xlu0 %2483
    %v2485 = vsel %vm1368, %v2413, 0.0
    %2486 = vadd.xlane.f32.xlu0 %v2485
    %v2487 = vpop.xlane.xlu0 %2486
    %v2488 = vsel %vm1368, %v2414, 0.0
    %2489 = vadd.xlane.f32.xlu0 %v2488
    %v2490 = vpop.xlane.xlu0 %2489
    %v2491 = vsel %vm1368, %v2415, 0.0
    %2492 = vadd.xlane.f32.xlu0 %v2491
    %v2493 = vpop.xlane.xlu0 %2492
    %v2494 = vsel %vm1368, %v2416, 0.0
    %2495 = vadd.xlane.f32.xlu0 %v2494
    %v2496 = vpop.xlane.xlu0 %2495
    %v2497 = vsel %vm1368, %v2417, 0.0
    %2498 = vadd.xlane.f32.xlu0 %v2497
    %v2499 = vpop.xlane.xlu0 %2498
    %v2500 = vsel %vm1368, %v2418, 0.0
    %2501 = vadd.xlane.f32.xlu0 %v2500
    %v2502 = vpop.xlane.xlu0 %2501
    %v2503 = vsel %vm1368, %v2419, 0.0
    %2504 = vadd.xlane.f32.xlu0 %v2503
    %v2505 = vpop.xlane.xlu0 %2504
    %v2506 = vsel %vm1368, %v2420, 0.0
    %2507 = vadd.xlane.f32.xlu0 %v2506
    %v2508 = vpop.xlane.xlu0 %2507
    %v2509 = vsel %vm1368, %v2421, 0.0
    %2510 = vadd.xlane.f32.xlu0 %v2509
    %v2511 = vpop.xlane.xlu0 %2510
    %v2512 = vsel %vm1368, %v2422, 0.0
    %2513 = vadd.xlane.f32.xlu0 %v2512
    %v2514 = vpop.xlane.xlu0 %2513
    %v2515 = vsel %vm1368, %v2423, 0.0
    %2516 = vadd.xlane.f32.xlu0 %v2515
    %v2517 = vpop.xlane.xlu0 %2516
    %v2518 = vsel %vm1368, %v2424, 0.0
    %2519 = vadd.xlane.f32.xlu0 %v2518
    %v2520 = vpop.xlane.xlu0 %2519
    %v2521 = vadd.f32 %v2427, %v2475
    %v2522 = vadd.f32 %v2430, %v2478
    %v2523 = vadd.f32 %v2433, %v2481
    %v2524 = vadd.f32 %v2436, %v2484
    %v2525 = vadd.f32 %v2439, %v2487
    %v2526 = vadd.f32 %v2442, %v2490
    %v2527 = vadd.f32 %v2445, %v2493
    %v2528 = vadd.f32 %v2448, %v2496
    %v2529 = vadd.f32 %v2451, %v2499
    %v2530 = vadd.f32 %v2454, %v2502
    %v2531 = vadd.f32 %v2457, %v2505
    %v2532 = vadd.f32 %v2460, %v2508
    %v2533 = vadd.f32 %v2463, %v2511
    %v2534 = vadd.f32 %v2466, %v2514
    %v2535 = vadd.f32 %v2469, %v2517
    %v2536 = vadd.f32 %v2472, %v2520
    %vm2537 = vcmp.eq.f32.partialorder %v2521, 0.0
    %vm2538 = vcmp.eq.f32.partialorder %v2522, 0.0
    %vm2539 = vcmp.eq.f32.partialorder %v2523, 0.0
    %vm2540 = vcmp.eq.f32.partialorder %v2524, 0.0
    %vm2541 = vcmp.eq.f32.partialorder %v2525, 0.0
    %vm2542 = vcmp.eq.f32.partialorder %v2526, 0.0
    %vm2543 = vcmp.eq.f32.partialorder %v2527, 0.0
    %vm2544 = vcmp.eq.f32.partialorder %v2528, 0.0
    %vm2545 = vcmp.eq.f32.partialorder %v2529, 0.0
    %vm2546 = vcmp.eq.f32.partialorder %v2530, 0.0
    %vm2547 = vcmp.eq.f32.partialorder %v2531, 0.0
    %vm2548 = vcmp.eq.f32.partialorder %v2532, 0.0
    %vm2549 = vcmp.eq.f32.partialorder %v2533, 0.0
    %vm2550 = vcmp.eq.f32.partialorder %v2534, 0.0
    %vm2551 = vcmp.eq.f32.partialorder %v2535, 0.0
    %vm2552 = vcmp.eq.f32.partialorder %v2536, 0.0
    %v2553 = vsel %vm2537, 1.0, 0.0
    %v2554 = vsel %vm2538, 1.0, 0.0
    %v2555 = vsel %vm2539, 1.0, 0.0
    %v2556 = vsel %vm2540, 1.0, 0.0
    %v2557 = vsel %vm2541, 1.0, 0.0
    %v2558 = vsel %vm2542, 1.0, 0.0
    %v2559 = vsel %vm2543, 1.0, 0.0
    %v2560 = vsel %vm2544, 1.0, 0.0
    %v2561 = vsel %vm2545, 1.0, 0.0
    %v2562 = vsel %vm2546, 1.0, 0.0
    %v2563 = vsel %vm2547, 1.0, 0.0
    %v2564 = vsel %vm2548, 1.0, 0.0
    %v2565 = vsel %vm2549, 1.0, 0.0
    %v2566 = vsel %vm2550, 1.0, 0.0
    %v2567 = vsel %vm2551, 1.0, 0.0
    %v2568 = vsel %vm2552, 1.0, 0.0
    %v2569 = vld [vmem:[%s41] sm:$0xff]
    %v2570 = vld [vmem:[%s41 + $0x8] sm:$0x3]
    %s2571 = scalar_lea.vmem %s41, 16
    %v2572 = vld [vmem:[%s2571] sm:$0xff]
    %v2573 = vld [vmem:[%s2571 + $0x8] sm:$0x3]
    %v2575 = vsel %vm1368, %v2409, 0
    %v2578 = vsel %vm1368, %v2410, 0
    %v2581 = vsel %vm1368, %v2411, 0
    %v2584 = vsel %vm1368, %v2412, 0
    %v2587 = vsel %vm1368, %v2413, 0
    %v2590 = vsel %vm1368, %v2414, 0
    %v2593 = vsel %vm1368, %v2415, 0
    %v2596 = vsel %vm1368, %v2416, 0
    %v2599 = vsel %vm1368, %v2417, 0
    %v2602 = vsel %vm1368, %v2418, 0
    %v2605 = vsel %vm1368, %v2419, 0
    %v2608 = vsel %vm1368, %v2420, 0
    %v2611 = vsel %vm1368, %v2421, 0
    %v2614 = vsel %vm1368, %v2422, 0
    %v2617 = vsel %vm1368, %v2423, 0
    %v2620 = vsel %vm1368, %v2424, 0
    %v2623 = vsel %vm1137, %v2573, 0
    %2625 = vmatpush.msra.mxu0 0.0
    %2626 = vmatpush.msra.mxu0 0.0
    %2627 = vmatpush.msra.mxu0 0.0
    %2628 = vmatpush.msra.mxu0 0.0
    %2629 = vmatpush.msra.mxu0 0.0
    %2630 = vmatpush.msra.mxu0 0.0
    %2631 = vmatpush.msra.mxu0 0.0
    %2632 = vmatpush.msra.mxu0 0.0
    %2633 = vmatpush.msra.mxu0 0.0
    %2634 = vmatpush.msra.mxu0 0.0
    %2635 = vmatpush.msra.mxu0 0.0
    %2636 = vmatpush.msra.mxu0 0.0
    %2637 = vmatpush.msra.mxu0 0.0
    %2638 = vmatpush.msra.mxu0 0.0
    %2639 = vmatpush.msra.mxu0 %v2623
    %2640 = vmatpush.msra.mxu0 %v2572
    %2641 = vmatmul.f32.gmra.mxu0 %v2575
    %v2642 = vpop.f32.mrf.mxu0
    %v2643 = vadd.f32 0.0, %v2642
    %2644 = vmatmul.f32.gmra.mxu0 %v2578
    %v2645 = vpop.f32.mrf.mxu0
    %v2646 = vadd.f32 0.0, %v2645
    %2647 = vmatmul.f32.gmra.mxu0 %v2581
    %v2648 = vpop.f32.mrf.mxu0
    %v2649 = vadd.f32 0.0, %v2648
    %2650 = vmatmul.f32.gmra.mxu0 %v2584
    %v2651 = vpop.f32.mrf.mxu0
    %v2652 = vadd.f32 0.0, %v2651
    %2653 = vmatmul.f32.gmra.mxu0 %v2587
    %v2654 = vpop.f32.mrf.mxu0
    %v2655 = vadd.f32 0.0, %v2654
    %2656 = vmatmul.f32.gmra.mxu0 %v2590
    %v2657 = vpop.f32.mrf.mxu0
    %v2658 = vadd.f32 0.0, %v2657
    %2659 = vmatmul.f32.gmra.mxu0 %v2593
    %v2660 = vpop.f32.mrf.mxu0
    %v2661 = vadd.f32 0.0, %v2660
    %2662 = vmatmul.f32.gmra.mxu0 %v2596
    %v2663 = vpop.f32.mrf.mxu0
    %v2664 = vadd.f32 0.0, %v2663
    %2665 = vmatmul.f32.gmra.mxu0 %v2599
    %v2666 = vpop.f32.mrf.mxu0
    %v2667 = vadd.f32 0.0, %v2666
    %2668 = vmatmul.f32.gmra.mxu0 %v2602
    %v2669 = vpop.f32.mrf.mxu0
    %v2670 = vadd.f32 0.0, %v2669
    %2671 = vmatmul.f32.gmra.mxu0 %v2605
    %v2672 = vpop.f32.mrf.mxu0
    %v2673 = vadd.f32 0.0, %v2672
    %2674 = vmatmul.f32.gmra.mxu0 %v2608
    %v2675 = vpop.f32.mrf.mxu0
    %v2676 = vadd.f32 0.0, %v2675
    %2677 = vmatmul.f32.gmra.mxu0 %v2611
    %v2678 = vpop.f32.mrf.mxu0
    %v2679 = vadd.f32 0.0, %v2678
    %2680 = vmatmul.f32.gmra.mxu0 %v2614
    %v2681 = vpop.f32.mrf.mxu0
    %v2682 = vadd.f32 0.0, %v2681
    %2683 = vmatmul.f32.gmra.mxu0 %v2617
    %v2684 = vpop.f32.mrf.mxu0
    %v2685 = vadd.f32 0.0, %v2684
    %2686 = vmatmul.f32.gmra.mxu0 %v2620
    %v2687 = vpop.f32.mrf.mxu0
    %v2688 = vadd.f32 0.0, %v2687
    %2689 = vdwg.mxu0
    %v2691 = vsel %vm1368, %v1993, 0
    %v2694 = vsel %vm1368, %v1994, 0
    %v2697 = vsel %vm1368, %v1995, 0
    %v2700 = vsel %vm1368, %v1996, 0
    %v2703 = vsel %vm1368, %v1997, 0
    %v2706 = vsel %vm1368, %v1998, 0
    %v2709 = vsel %vm1368, %v1999, 0
    %v2712 = vsel %vm1368, %v2000, 0
    %v2715 = vsel %vm1368, %v2001, 0
    %v2718 = vsel %vm1368, %v2002, 0
    %v2721 = vsel %vm1368, %v2003, 0
    %v2724 = vsel %vm1368, %v2004, 0
    %v2727 = vsel %vm1368, %v2005, 0
    %v2730 = vsel %vm1368, %v2006, 0
    %v2733 = vsel %vm1368, %v2007, 0
    %v2736 = vsel %vm1368, %v2008, 0
    %v2739 = vsel %vm1137, %v2570, 0
    %2741 = vmatpush.msra.mxu0 0.0
    %2742 = vmatpush.msra.mxu0 0.0
    %2743 = vmatpush.msra.mxu0 0.0
    %2744 = vmatpush.msra.mxu0 0.0
    %2745 = vmatpush.msra.mxu0 0.0
    %2746 = vmatpush.msra.mxu0 0.0
    %2747 = vmatpush.msra.mxu0 0.0
    %2748 = vmatpush.msra.mxu0 0.0
    %2749 = vmatpush.msra.mxu0 0.0
    %2750 = vmatpush.msra.mxu0 0.0
    %2751 = vmatpush.msra.mxu0 0.0
    %2752 = vmatpush.msra.mxu0 0.0
    %2753 = vmatpush.msra.mxu0 0.0
    %2754 = vmatpush.msra.mxu0 0.0
    %2755 = vmatpush.msra.mxu0 %v2739
    %2756 = vmatpush.msra.mxu0 %v2569
    %2757 = vmatmul.f32.gmra.mxu0 %v2691
    %v2758 = vpop.f32.mrf.mxu0
    %v2759 = vadd.f32 %v2643, %v2758
    %2760 = vmatmul.f32.gmra.mxu0 %v2694
    %v2761 = vpop.f32.mrf.mxu0
    %v2762 = vadd.f32 %v2646, %v2761
    %2763 = vmatmul.f32.gmra.mxu0 %v2697
    %v2764 = vpop.f32.mrf.mxu0
    %v2765 = vadd.f32 %v2649, %v2764
    %2766 = vmatmul.f32.gmra.mxu0 %v2700
    %v2767 = vpop.f32.mrf.mxu0
    %v2768 = vadd.f32 %v2652, %v2767
    %2769 = vmatmul.f32.gmra.mxu0 %v2703
    %v2770 = vpop.f32.mrf.mxu0
    %v2771 = vadd.f32 %v2655, %v2770
    %2772 = vmatmul.f32.gmra.mxu0 %v2706
    %v2773 = vpop.f32.mrf.mxu0
    %v2774 = vadd.f32 %v2658, %v2773
    %2775 = vmatmul.f32.gmra.mxu0 %v2709
    %v2776 = vpop.f32.mrf.mxu0
    %v2777 = vadd.f32 %v2661, %v2776
    %2778 = vmatmul.f32.gmra.mxu0 %v2712
    %v2779 = vpop.f32.mrf.mxu0
    %v2780 = vadd.f32 %v2664, %v2779
    %2781 = vmatmul.f32.gmra.mxu0 %v2715
    %v2782 = vpop.f32.mrf.mxu0
    %v2783 = vadd.f32 %v2667, %v2782
    %2784 = vmatmul.f32.gmra.mxu0 %v2718
    %v2785 = vpop.f32.mrf.mxu0
    %v2786 = vadd.f32 %v2670, %v2785
    %2787 = vmatmul.f32.gmra.mxu0 %v2721
    %v2788 = vpop.f32.mrf.mxu0
    %v2789 = vadd.f32 %v2673, %v2788
    %2790 = vmatmul.f32.gmra.mxu0 %v2724
    %v2791 = vpop.f32.mrf.mxu0
    %v2792 = vadd.f32 %v2676, %v2791
    %2793 = vmatmul.f32.gmra.mxu0 %v2727
    %v2794 = vpop.f32.mrf.mxu0
    %v2795 = vadd.f32 %v2679, %v2794
    %2796 = vmatmul.f32.gmra.mxu0 %v2730
    %v2797 = vpop.f32.mrf.mxu0
    %v2798 = vadd.f32 %v2682, %v2797
    %2799 = vmatmul.f32.gmra.mxu0 %v2733
    %v2800 = vpop.f32.mrf.mxu0
    %v2801 = vadd.f32 %v2685, %v2800
    %2802 = vmatmul.f32.gmra.mxu0 %v2736
    %v2803 = vpop.f32.mrf.mxu0
    %v2804 = vadd.f32 %v2688, %v2803
    %2805 = vdwg.mxu0
    %v2806 = vld [vmem:[%s43] sm:$0x1]
    %v2808 = vperm.slane %v2806, 0
    %v2810 = vadd.f32 %v2759, %v2808
    %v2811 = vadd.f32 %v2762, %v2808
    %v2812 = vadd.f32 %v2765, %v2808
    %v2813 = vadd.f32 %v2768, %v2808
    %v2814 = vadd.f32 %v2771, %v2808
    %v2815 = vadd.f32 %v2774, %v2808
    %v2816 = vadd.f32 %v2777, %v2808
    %v2817 = vadd.f32 %v2780, %v2808
    %v2818 = vadd.f32 %v2783, %v2808
    %v2819 = vadd.f32 %v2786, %v2808
    %v2820 = vadd.f32 %v2789, %v2808
    %v2821 = vadd.f32 %v2792, %v2808
    %v2822 = vadd.f32 %v2795, %v2808
    %v2823 = vadd.f32 %v2798, %v2808
    %v2824 = vadd.f32 %v2801, %v2808
    %v2825 = vadd.f32 %v2804, %v2808
    %v2826 = vmax.f32 %v2810, 0.0
    %v2827 = vmax.f32 %v2811, 0.0
    %v2828 = vmax.f32 %v2812, 0.0
    %v2829 = vmax.f32 %v2813, 0.0
    %v2830 = vmax.f32 %v2814, 0.0
    %v2831 = vmax.f32 %v2815, 0.0
    %v2832 = vmax.f32 %v2816, 0.0
    %v2833 = vmax.f32 %v2817, 0.0
    %v2834 = vmax.f32 %v2818, 0.0
    %v2835 = vmax.f32 %v2819, 0.0
    %v2836 = vmax.f32 %v2820, 0.0
    %v2837 = vmax.f32 %v2821, 0.0
    %v2838 = vmax.f32 %v2822, 0.0
    %v2839 = vmax.f32 %v2823, 0.0
    %v2840 = vmax.f32 %v2824, 0.0
    %v2841 = vmax.f32 %v2825, 0.0
    %v2842 = vld [vmem:[%s45] sm:$0xff]
    %v2843 = vld [vmem:[%s45 + $0x8] sm:$0xff]
    %v2844 = vld [vmem:[%s45 + $0x10] sm:$0xff]
    %v2845 = vld [vmem:[%s45 + $0x18] sm:$0xff]
    %v2846 = vld [vmem:[%s45 + $0x20] sm:$0xff]
    %v2847 = vld [vmem:[%s45 + $0x28] sm:$0xff]
    %v2848 = vld [vmem:[%s45 + $0x30] sm:$0xff]
    %v2849 = vld [vmem:[%s45 + $0x38] sm:$0xff]
    %v2850 = vld [vmem:[%s45 + $0x40] sm:$0xff]
    %v2851 = vld [vmem:[%s45 + $0x48] sm:$0xff]
    %v2852 = vld [vmem:[%s45 + $0x50] sm:$0xff]
    %v2853 = vld [vmem:[%s45 + $0x58] sm:$0xff]
    %v2854 = vld [vmem:[%s45 + $0x60] sm:$0xff]
    %v2855 = vld [vmem:[%s45 + $0x68] sm:$0xff]
    %v2856 = vld [vmem:[%s45 + $0x70] sm:$0xff]
    %v2857 = vld [vmem:[%s45 + $0x78] sm:$0xff]
    %v2858 = vld [vmem:[%s47] sm:$0x1]
    %v2860 = vperm.slane %v2858, 0
    %2862 = vmatpush.msra.mxu0 %v2857
    %2863 = vmatpush.msra.mxu0 %v2856
    %2864 = vmatpush.msra.mxu0 %v2855
    %2865 = vmatpush.msra.mxu0 %v2854
    %2866 = vmatpush.msra.mxu0 %v2853
    %2867 = vmatpush.msra.mxu0 %v2852
    %2868 = vmatpush.msra.mxu0 %v2851
    %2869 = vmatpush.msra.mxu0 %v2850
    %2870 = vmatpush.msra.mxu0 %v2849
    %2871 = vmatpush.msra.mxu0 %v2848
    %2872 = vmatpush.msra.mxu0 %v2847
    %2873 = vmatpush.msra.mxu0 %v2846
    %2874 = vmatpush.msra.mxu0 %v2845
    %2875 = vmatpush.msra.mxu0 %v2844
    %2876 = vmatpush.msra.mxu0 %v2843
    %2877 = vmatpush.msra.mxu0 %v2842
    %2878 = vmatmul.f32.gmra.mxu0 %v2826
    %v2879 = vpop.f32.mrf.mxu0
    %v2880 = vadd.f32 %v2860, %v2879
    %2881 = vmatmul.f32.gmra.mxu0 %v2827
    %v2882 = vpop.f32.mrf.mxu0
    %v2883 = vadd.f32 %v2860, %v2882
    %2884 = vmatmul.f32.gmra.mxu0 %v2828
    %v2885 = vpop.f32.mrf.mxu0
    %v2886 = vadd.f32 %v2860, %v2885
    %2887 = vmatmul.f32.gmra.mxu0 %v2829
    %v2888 = vpop.f32.mrf.mxu0
    %v2889 = vadd.f32 %v2860, %v2888
    %2890 = vmatmul.f32.gmra.mxu0 %v2830
    %v2891 = vpop.f32.mrf.mxu0
    %v2892 = vadd.f32 %v2860, %v2891
    %2893 = vmatmul.f32.gmra.mxu0 %v2831
    %v2894 = vpop.f32.mrf.mxu0
    %v2895 = vadd.f32 %v2860, %v2894
    %2896 = vmatmul.f32.gmra.mxu0 %v2832
    %v2897 = vpop.f32.mrf.mxu0
    %v2898 = vadd.f32 %v2860, %v2897
    %2899 = vmatmul.f32.gmra.mxu0 %v2833
    %v2900 = vpop.f32.mrf.mxu0
    %v2901 = vadd.f32 %v2860, %v2900
    %2902 = vmatmul.f32.gmra.mxu0 %v2834
    %v2903 = vpop.f32.mrf.mxu0
    %v2904 = vadd.f32 %v2860, %v2903
    %2905 = vmatmul.f32.gmra.mxu0 %v2835
    %v2906 = vpop.f32.mrf.mxu0
    %v2907 = vadd.f32 %v2860, %v2906
    %2908 = vmatmul.f32.gmra.mxu0 %v2836
    %v2909 = vpop.f32.mrf.mxu0
    %v2910 = vadd.f32 %v2860, %v2909
    %2911 = vmatmul.f32.gmra.mxu0 %v2837
    %v2912 = vpop.f32.mrf.mxu0
    %v2913 = vadd.f32 %v2860, %v2912
    %2914 = vmatmul.f32.gmra.mxu0 %v2838
    %v2915 = vpop.f32.mrf.mxu0
    %v2916 = vadd.f32 %v2860, %v2915
    %2917 = vmatmul.f32.gmra.mxu0 %v2839
    %v2918 = vpop.f32.mrf.mxu0
    %v2919 = vadd.f32 %v2860, %v2918
    %2920 = vmatmul.f32.gmra.mxu0 %v2840
    %v2921 = vpop.f32.mrf.mxu0
    %v2922 = vadd.f32 %v2860, %v2921
    %2923 = vmatmul.f32.gmra.mxu0 %v2841
    %v2924 = vpop.f32.mrf.mxu0
    %v2925 = vadd.f32 %v2860, %v2924
    %2926 = vdwg.mxu0
    %v2927 = vld [vmem:[%s33] sm:$0xff]
    %v2928 = vld [vmem:[%s33 + $0x8] sm:$0xff]
    %v2929 = vld [vmem:[%s33 + $0x10] sm:$0xff]
    %v2930 = vld [vmem:[%s33 + $0x18] sm:$0xff]
    %v2931 = vld [vmem:[%s35] sm:$0x1]
    %v2933 = vperm.slane %v2931, 0
    %2935 = vrot.lane.b32.xlu0 %v225, 62
    %v2936 = vpop.permute.xlu0 %2935
    %2937 = vrot.lane.b32.xlu0 %v226, 62
    %v2938 = vpop.permute.xlu0 %2937
    %vm2939 = vcmask 261120
    %v2940 = vsel %vm2939, %v2936, 0
    %v2942 = vsel %vm2939, %v2938, 0
    %2944 = vmatpush.msra.mxu0 0.0
    %2945 = vmatpush.msra.mxu0 0.0
    %2946 = vmatpush.msra.mxu0 0.0
    %2947 = vmatpush.msra.mxu0 0.0
    %2948 = vmatpush.msra.mxu0 0.0
    %2949 = vmatpush.msra.mxu0 0.0
    %2950 = vmatpush.msra.mxu0 0.0
    %2951 = vmatpush.msra.mxu0 0.0
    %2952 = vmatpush.msra.mxu0 0.0
    %2953 = vmatpush.msra.mxu0 0.0
    %2954 = vmatpush.msra.mxu0 0.0
    %2955 = vmatpush.msra.mxu0 0.0
    %2956 = vmatpush.msra.mxu0 %v2930
    %2957 = vmatpush.msra.mxu0 %v2929
    %2958 = vmatpush.msra.mxu0 %v2928
    %2959 = vmatpush.msra.mxu0 %v2927
    %2960 = vmatmul.f32.gmra.mxu0 %v2940
    %v2961 = vpop.f32.mrf.mxu0
    %v2962 = vadd.f32 %v2933, %v2961
    %2963 = vmatmul.f32.gmra.mxu0 %v2942
    %v2964 = vpop.f32.mrf.mxu0
    %v2965 = vadd.f32 %v2933, %v2964
    %2966 = vdwg.mxu0
    %v2967 = vld [vmem:[%s37] sm:$0x1]
    %v2969 = vperm.slane %v2967, 0
    %v2971 = vmul.f32 %v2962, %v2969
    %v2972 = vmul.f32 %v2965, %v2969
    %v2973 = vld [vmem:[%s21] sm:$0xff]
    %v2974 = vld [vmem:[%s21 + $0x8] sm:$0xff]
    %v2975 = vld [vmem:[%s21 + $0x10] sm:$0xff]
    %v2976 = vld [vmem:[%s21 + $0x18] sm:$0xff]
    %v2978 = vsel %vm2939, %v2971, 0
    %v2981 = vsel %vm2939, %v2972, 0
    %2983 = vmatpush.msra.mxu0 0.0
    %2984 = vmatpush.msra.mxu0 0.0
    %2985 = vmatpush.msra.mxu0 0.0
    %2986 = vmatpush.msra.mxu0 0.0
    %2987 = vmatpush.msra.mxu0 0.0
    %2988 = vmatpush.msra.mxu0 0.0
    %2989 = vmatpush.msra.mxu0 0.0
    %2990 = vmatpush.msra.mxu0 0.0
    %2991 = vmatpush.msra.mxu0 0.0
    %2992 = vmatpush.msra.mxu0 0.0
    %2993 = vmatpush.msra.mxu0 0.0
    %2994 = vmatpush.msra.mxu0 0.0
    %2995 = vmatpush.msra.mxu0 %v2976
    %2996 = vmatpush.msra.mxu0 %v2975
    %2997 = vmatpush.msra.mxu0 %v2974
    %2998 = vmatpush.msra.mxu0 %v2973
    %2999 = vmatmul.f32.gmra.mxu0 %v2978
    %v3000 = vpop.f32.mrf.mxu0
    %v3001 = vadd.f32 0.0, %v3000
    %3002 = vmatmul.f32.gmra.mxu0 %v2981
    %v3003 = vpop.f32.mrf.mxu0
    %v3004 = vadd.f32 0.0, %v3003
    %3005 = vdwg.mxu0
    %v3006 = vld [vmem:[%s39] sm:$0x1]
    %v3008 = vperm.slane %v3006, 0
    %v3010 = vmul.f32 %v2962, %v3008
    %v3011 = vmul.f32 %v2965, %v3008
    %v3013 = vsel %vm2939, %v3010, 0
    %v3016 = vsel %vm2939, %v3011, 0
    %3018 = vmatpush.msra.mxu0 0.0
    %3019 = vmatpush.msra.mxu0 0.0
    %3020 = vmatpush.msra.mxu0 0.0
    %3021 = vmatpush.msra.mxu0 0.0
    %3022 = vmatpush.msra.mxu0 0.0
    %3023 = vmatpush.msra.mxu0 0.0
    %3024 = vmatpush.msra.mxu0 0.0
    %3025 = vmatpush.msra.mxu0 0.0
    %3026 = vmatpush.msra.mxu0 0.0
    %3027 = vmatpush.msra.mxu0 0.0
    %3028 = vmatpush.msra.mxu0 0.0
    %3029 = vmatpush.msra.mxu0 0.0
    %3030 = vmatpush.msra.mxu0 %v2976
    %3031 = vmatpush.msra.mxu0 %v2975
    %3032 = vmatpush.msra.mxu0 %v2974
    %3033 = vmatpush.msra.mxu0 %v2973
    %3034 = vmatmul.f32.gmra.mxu0 %v3013
    %v3035 = vpop.f32.mrf.mxu0
    %v3036 = vadd.f32 0.0, %v3035
    %3037 = vmatmul.f32.gmra.mxu0 %v3016
    %v3038 = vpop.f32.mrf.mxu0
    %v3039 = vadd.f32 0.0, %v3038
    %3040 = vdwg.mxu0
    %3041 = vmatpush.msra.mxu0 0.0
    %3042 = vmatpush.msra.mxu0 0.0
    %3043 = vmatpush.msra.mxu0 0.0
    %3044 = vmatpush.msra.mxu0 0.0
    %3045 = vmatpush.msra.mxu0 0.0
    %3046 = vmatpush.msra.mxu0 0.0
    %3047 = vmatpush.msra.mxu0 0.0
    %3048 = vmatpush.msra.mxu0 0.0
    %3049 = vmatpush.msra.mxu0 0.0
    %3050 = vmatpush.msra.mxu0 0.0
    %3051 = vmatpush.msra.mxu0 0.0
    %3052 = vmatpush.msra.mxu0 0.0
    %3053 = vmatpush.msra.mxu0 0.0
    %3054 = vmatpush.msra.mxu0 0.0
    %3055 = vmatpush.msra.mxu0 %v3039
    %3056 = vmatpush.msra.mxu0 %v3036
    %3057 = vmatmul.f32.gmra.mxu0 %v229
    %v3058 = vpop.f32.mrf.mxu0
    %v3059 = vadd.f32 0.0, %v3058
    %3060 = vmatmul.f32.gmra.mxu0 %v232
    %v3061 = vpop.f32.mrf.mxu0
    %v3062 = vadd.f32 0.0, %v3061
    %3063 = vmatmul.f32.gmra.mxu0 %v235
    %v3064 = vpop.f32.mrf.mxu0
    %v3065 = vadd.f32 0.0, %v3064
    %3066 = vmatmul.f32.gmra.mxu0 %v238
    %v3067 = vpop.f32.mrf.mxu0
    %v3068 = vadd.f32 0.0, %v3067
    %3069 = vmatmul.f32.gmra.mxu0 %v241
    %v3070 = vpop.f32.mrf.mxu0
    %v3071 = vadd.f32 0.0, %v3070
    %3072 = vmatmul.f32.gmra.mxu0 %v244
    %v3073 = vpop.f32.mrf.mxu0
    %v3074 = vadd.f32 0.0, %v3073
    %3075 = vmatmul.f32.gmra.mxu0 %v247
    %v3076 = vpop.f32.mrf.mxu0
    %v3077 = vadd.f32 0.0, %v3076
    %3078 = vmatmul.f32.gmra.mxu0 %v250
    %v3079 = vpop.f32.mrf.mxu0
    %v3080 = vadd.f32 0.0, %v3079
    %3081 = vmatmul.f32.gmra.mxu0 %v253
    %v3082 = vpop.f32.mrf.mxu0
    %v3083 = vadd.f32 0.0, %v3082
    %3084 = vmatmul.f32.gmra.mxu0 %v256
    %v3085 = vpop.f32.mrf.mxu0
    %v3086 = vadd.f32 0.0, %v3085
    %3087 = vmatmul.f32.gmra.mxu0 %v259
    %v3088 = vpop.f32.mrf.mxu0
    %v3089 = vadd.f32 0.0, %v3088
    %3090 = vmatmul.f32.gmra.mxu0 %v262
    %v3091 = vpop.f32.mrf.mxu0
    %v3092 = vadd.f32 0.0, %v3091
    %3093 = vmatmul.f32.gmra.mxu0 %v265
    %v3094 = vpop.f32.mrf.mxu0
    %v3095 = vadd.f32 0.0, %v3094
    %3096 = vmatmul.f32.gmra.mxu0 %v268
    %v3097 = vpop.f32.mrf.mxu0
    %v3098 = vadd.f32 0.0, %v3097
    %3099 = vmatmul.f32.gmra.mxu0 %v271
    %v3100 = vpop.f32.mrf.mxu0
    %v3101 = vadd.f32 0.0, %v3100
    %3102 = vmatmul.f32.gmra.mxu0 %v274
    %v3103 = vpop.f32.mrf.mxu0
    %v3104 = vadd.f32 0.0, %v3103
    %3105 = vdwg.mxu0
    %3106 = vmatpush.msra.mxu0 0.0
    %3107 = vmatpush.msra.mxu0 0.0
    %3108 = vmatpush.msra.mxu0 0.0
    %3109 = vmatpush.msra.mxu0 0.0
    %3110 = vmatpush.msra.mxu0 0.0
    %3111 = vmatpush.msra.mxu0 0.0
    %3112 = vmatpush.msra.mxu0 0.0
    %3113 = vmatpush.msra.mxu0 0.0
    %3114 = vmatpush.msra.mxu0 0.0
    %3115 = vmatpush.msra.mxu0 0.0
    %3116 = vmatpush.msra.mxu0 0.0
    %3117 = vmatpush.msra.mxu0 0.0
    %3118 = vmatpush.msra.mxu0 0.0
    %3119 = vmatpush.msra.mxu0 0.0
    %3120 = vmatpush.msra.mxu0 %v3004
    %3121 = vmatpush.msra.mxu0 %v3001
    %3122 = vmatmul.f32.gmra.mxu0 %v350
    %v3123 = vpop.f32.mrf.mxu0
    %v3124 = vadd.f32 %v3059, %v3123
    %3125 = vmatmul.f32.gmra.mxu0 %v353
    %v3126 = vpop.f32.mrf.mxu0
    %v3127 = vadd.f32 %v3062, %v3126
    %3128 = vmatmul.f32.gmra.mxu0 %v356
    %v3129 = vpop.f32.mrf.mxu0
    %v3130 = vadd.f32 %v3065, %v3129
    %3131 = vmatmul.f32.gmra.mxu0 %v359
    %v3132 = vpop.f32.mrf.mxu0
    %v3133 = vadd.f32 %v3068, %v3132
    %3134 = vmatmul.f32.gmra.mxu0 %v362
    %v3135 = vpop.f32.mrf.mxu0
    %v3136 = vadd.f32 %v3071, %v3135
    %3137 = vmatmul.f32.gmra.mxu0 %v365
    %v3138 = vpop.f32.mrf.mxu0
    %v3139 = vadd.f32 %v3074, %v3138
    %3140 = vmatmul.f32.gmra.mxu0 %v368
    %v3141 = vpop.f32.mrf.mxu0
    %v3142 = vadd.f32 %v3077, %v3141
    %3143 = vmatmul.f32.gmra.mxu0 %v371
    %v3144 = vpop.f32.mrf.mxu0
    %v3145 = vadd.f32 %v3080, %v3144
    %3146 = vmatmul.f32.gmra.mxu0 %v374
    %v3147 = vpop.f32.mrf.mxu0
    %v3148 = vadd.f32 %v3083, %v3147
    %3149 = vmatmul.f32.gmra.mxu0 %v377
    %v3150 = vpop.f32.mrf.mxu0
    %v3151 = vadd.f32 %v3086, %v3150
    %3152 = vmatmul.f32.gmra.mxu0 %v380
    %v3153 = vpop.f32.mrf.mxu0
    %v3154 = vadd.f32 %v3089, %v3153
    %3155 = vmatmul.f32.gmra.mxu0 %v383
    %v3156 = vpop.f32.mrf.mxu0
    %v3157 = vadd.f32 %v3092, %v3156
    %3158 = vmatmul.f32.gmra.mxu0 %v386
    %v3159 = vpop.f32.mrf.mxu0
    %v3160 = vadd.f32 %v3095, %v3159
    %3161 = vmatmul.f32.gmra.mxu0 %v389
    %v3162 = vpop.f32.mrf.mxu0
    %v3163 = vadd.f32 %v3098, %v3162
    %3164 = vmatmul.f32.gmra.mxu0 %v392
    %v3165 = vpop.f32.mrf.mxu0
    %v3166 = vadd.f32 %v3101, %v3165
    %3167 = vmatmul.f32.gmra.mxu0 %v395
    %v3168 = vpop.f32.mrf.mxu0
    %v3169 = vadd.f32 %v3104, %v3168
    %3170 = vdwg.mxu0
    %v3171 = vadd.f32 %v3124, %v2880
    %v3172 = vadd.f32 %v3127, %v2883
    %v3173 = vadd.f32 %v3130, %v2886
    %v3174 = vadd.f32 %v3133, %v2889
    %v3175 = vadd.f32 %v3136, %v2892
    %v3176 = vadd.f32 %v3139, %v2895
    %v3177 = vadd.f32 %v3142, %v2898
    %v3178 = vadd.f32 %v3145, %v2901
    %v3179 = vadd.f32 %v3148, %v2904
    %v3180 = vadd.f32 %v3151, %v2907
    %v3181 = vadd.f32 %v3154, %v2910
    %v3182 = vadd.f32 %v3157, %v2913
    %v3183 = vadd.f32 %v3160, %v2916
    %v3184 = vadd.f32 %v3163, %v2919
    %v3185 = vadd.f32 %v3166, %v2922
    %v3186 = vadd.f32 %v3169, %v2925
    %vm3187 = vcmp.ge.f32.partialorder %v3171, 0.0
    %vm3188 = vcmp.ge.f32.partialorder %v3172, 0.0
    %vm3189 = vcmp.ge.f32.partialorder %v3173, 0.0
    %vm3190 = vcmp.ge.f32.partialorder %v3174, 0.0
    %vm3191 = vcmp.ge.f32.partialorder %v3175, 0.0
    %vm3192 = vcmp.ge.f32.partialorder %v3176, 0.0
    %vm3193 = vcmp.ge.f32.partialorder %v3177, 0.0
    %vm3194 = vcmp.ge.f32.partialorder %v3178, 0.0
    %vm3195 = vcmp.ge.f32.partialorder %v3179, 0.0
    %vm3196 = vcmp.ge.f32.partialorder %v3180, 0.0
    %vm3197 = vcmp.ge.f32.partialorder %v3181, 0.0
    %vm3198 = vcmp.ge.f32.partialorder %v3182, 0.0
    %vm3199 = vcmp.ge.f32.partialorder %v3183, 0.0
    %vm3200 = vcmp.ge.f32.partialorder %v3184, 0.0
    %vm3201 = vcmp.ge.f32.partialorder %v3185, 0.0
    %vm3202 = vcmp.ge.f32.partialorder %v3186, 0.0
    %v3203 = vmul.f32 %v3171, 0.01
    %v3204 = vmul.f32 %v3172, 0.01
    %v3205 = vmul.f32 %v3173, 0.01
    %v3206 = vmul.f32 %v3174, 0.01
    %v3207 = vmul.f32 %v3175, 0.01
    %v3208 = vmul.f32 %v3176, 0.01
    %v3209 = vmul.f32 %v3177, 0.01
    %v3210 = vmul.f32 %v3178, 0.01
    %v3211 = vmul.f32 %v3179, 0.01
    %v3212 = vmul.f32 %v3180, 0.01
    %v3213 = vmul.f32 %v3181, 0.01
    %v3214 = vmul.f32 %v3182, 0.01
    %v3215 = vmul.f32 %v3183, 0.01
    %v3216 = vmul.f32 %v3184, 0.01
    %v3217 = vmul.f32 %v3185, 0.01
    %v3218 = vmul.f32 %v3186, 0.01
    %v3219 = vsel %vm3187, %v3171, %v3203
    %v3220 = vsel %vm3188, %v3172, %v3204
    %v3221 = vsel %vm3189, %v3173, %v3205
    %v3222 = vsel %vm3190, %v3174, %v3206
    %v3223 = vsel %vm3191, %v3175, %v3207
    %v3224 = vsel %vm3192, %v3176, %v3208
    %v3225 = vsel %vm3193, %v3177, %v3209
    %v3226 = vsel %vm3194, %v3178, %v3210
    %v3227 = vsel %vm3195, %v3179, %v3211
    %v3228 = vsel %vm3196, %v3180, %v3212
    %v3229 = vsel %vm3197, %v3181, %v3213
    %v3230 = vsel %vm3198, %v3182, %v3214
    %v3231 = vsel %vm3199, %v3183, %v3215
    %v3232 = vsel %vm3200, %v3184, %v3216
    %v3233 = vsel %vm3201, %v3185, %v3217
    %v3234 = vsel %vm3202, %v3186, %v3218
    %v3235 = vld [vmem:[%s15] sm:$0xff]
    %v3236 = vld [vmem:[%s17] sm:$0xff]
    %v3237 = vld [vmem:[%s17 + $0x8] sm:$0xff]
    %v3238 = vld [vmem:[%s17 + $0x10] sm:$0xff]
    %v3239 = vld [vmem:[%s17 + $0x18] sm:$0xff]
    %v3240 = vld [vmem:[%s17 + $0x20] sm:$0xff]
    %v3241 = vld [vmem:[%s17 + $0x28] sm:$0xff]
    %v3242 = vld [vmem:[%s17 + $0x30] sm:$0xff]
    %v3243 = vld [vmem:[%s17 + $0x38] sm:$0xff]
    %v3244 = vld [vmem:[%s51] sm:$0x1]
    %v3246 = vperm.slane %v3244, 0
    %v3248 = vadd.f32 %v3246, 0.0
    %v3249 = vmul.f32 %v2553, %v3236
    %v3250 = vmul.f32 %v2554, %v3237
    %v3251 = vmul.f32 %v2555, %v3238
    %v3252 = vmul.f32 %v2556, %v3239
    %v3253 = vmul.f32 %v2557, %v3240
    %v3254 = vmul.f32 %v2558, %v3241
    %v3255 = vmul.f32 %v2559, %v3242
    %v3256 = vmul.f32 %v2560, %v3243
    %v3258 = vsel %vm195, %v3235, 0
    %3260 = vmatpush.msra.mxu0 0.0
    %3261 = vmatpush.msra.mxu0 0.0
    %3262 = vmatpush.msra.mxu0 0.0
    %3263 = vmatpush.msra.mxu0 0.0
    %3264 = vmatpush.msra.mxu0 0.0
    %3265 = vmatpush.msra.mxu0 0.0
    %3266 = vmatpush.msra.mxu0 0.0
    %3267 = vmatpush.msra.mxu0 0.0
    %3268 = vmatpush.msra.mxu0 %v3256
    %3269 = vmatpush.msra.mxu0 %v3255
    %3270 = vmatpush.msra.mxu0 %v3254
    %3271 = vmatpush.msra.mxu0 %v3253
    %3272 = vmatpush.msra.mxu0 %v3252
    %3273 = vmatpush.msra.mxu0 %v3251
    %3274 = vmatpush.msra.mxu0 %v3250
    %3275 = vmatpush.msra.mxu0 %v3249
    %3276 = vmatmul.f32.gmra.mxu0 %v3258
    %v3277 = vpop.f32.mrf.mxu0
    %v3278 = vadd.f32 0.0, %v3277
    %3279 = vdwg.mxu0
    %3281 = vset.pattern.permute.xlu0 0
    %3282 = vperm.xlu0 %3281, %v3219
    %v3283 = vpop.permute.xlu0 %3282
    %3286 = vset.pattern.permute.xlu0 0
    %3287 = vperm.xlu0 %3286, %v3220
    %v3288 = vpop.permute.xlu0 %3287
    %3291 = vset.pattern.permute.xlu0 0
    %3292 = vperm.xlu0 %3291, %v3221
    %v3293 = vpop.permute.xlu0 %3292
    %3296 = vset.pattern.permute.xlu0 0
    %3297 = vperm.xlu0 %3296, %v3222
    %v3298 = vpop.permute.xlu0 %3297
    %3301 = vset.pattern.permute.xlu0 0
    %3302 = vperm.xlu0 %3301, %v3223
    %v3303 = vpop.permute.xlu0 %3302
    %3306 = vset.pattern.permute.xlu0 0
    %3307 = vperm.xlu0 %3306, %v3224
    %v3308 = vpop.permute.xlu0 %3307
    %3311 = vset.pattern.permute.xlu0 0
    %3312 = vperm.xlu0 %3311, %v3225
    %v3313 = vpop.permute.xlu0 %3312
    %3316 = vset.pattern.permute.xlu0 0
    %3317 = vperm.xlu0 %3316, %v3226
    %v3318 = vpop.permute.xlu0 %3317
    %v3320 = vmul.f32 %v3283, %v3236
    %v3321 = vmul.f32 %v3288, %v3237
    %v3322 = vmul.f32 %v3293, %v3238
    %v3323 = vmul.f32 %v3298, %v3239
    %v3324 = vmul.f32 %v3303, %v3240
    %v3325 = vmul.f32 %v3308, %v3241
    %v3326 = vmul.f32 %v3313, %v3242
    %v3327 = vmul.f32 %v3318, %v3243
    %3328 = vmatpush.msra.mxu0 0.0
    %3329 = vmatpush.msra.mxu0 0.0
    %3330 = vmatpush.msra.mxu0 0.0
    %3331 = vmatpush.msra.mxu0 0.0
    %3332 = vmatpush.msra.mxu0 0.0
    %3333 = vmatpush.msra.mxu0 0.0
    %3334 = vmatpush.msra.mxu0 0.0
    %3335 = vmatpush.msra.mxu0 0.0
    %3336 = vmatpush.msra.mxu0 %v3327
    %3337 = vmatpush.msra.mxu0 %v3326
    %3338 = vmatpush.msra.mxu0 %v3325
    %3339 = vmatpush.msra.mxu0 %v3324
    %3340 = vmatpush.msra.mxu0 %v3323
    %3341 = vmatpush.msra.mxu0 %v3322
    %3342 = vmatpush.msra.mxu0 %v3321
    %3343 = vmatpush.msra.mxu0 %v3320
    %3344 = vmatmul.f32.gmra.mxu0 %v3258
    %v3345 = vpop.f32.mrf.mxu0
    %v3346 = vadd.f32 0.0, %v3345
    %3347 = vdwg.mxu0
    %vm3348 = vcmp.gt.f32.partialorder %v3278, 0.5
    %v3349 = vsel %vm3348, -1e+30, %v3346
    %vm3350 = vcmask 64512
    %v3351 = vsel %vm3350, %v3349, -inf
    %3352 = vmax.xlane.f32.xlu0 %v3351
    %v3353 = vpop.xlane.xlu0 %3352
    %v3354 = vsub.f32 %v3349, %v3353
    %v3355 = vmul.f32 %v3354, 1.442695
    %v3356 = vpow.pop %v3355
    %v3357 = vsel %vm3350, %v3356, 0.0
    %3358 = vadd.xlane.f32.xlu0 %v3357
    %v3359 = vpop.xlane.xlu0 %3358
    %v3360 = vrcp.pop %v3359
    %v3361 = vmul.f32 %v3359, %v3360
    %v3362 = vsub.f32 1.0, %v3361
    %v3363 = vmul.f32 %v3360, %v3362
    %v3364 = vadd.f32 %v3360, %v3363
    %vm3365 = vweird.f32 %v3359
    %vm3366 = vweird.f32 %v3360
    %vm3367 = vmor %vm3365, %vm3366
    %v3368 = vsel %vm3367, %v3360, %v3364
    %v3369 = vand.u32 2147483647, %v3359
    %vm3370 = vcmp.eq.f32.partialorder %v3369, 8.507059e+37
    %v3371 = vand.u32 %v3359, 2147483648
    %v3372 = vor.u32 1.1754944e-38, %v3371
    %v3373 = vsel %vm3370, %v3372, %v3368
    %v3374 = vmul.f32 %v3356, %v3373
    %v3376 = vsel %vm3350, %v3374, 0
    %3378 = vmatpush.msra.mxu0 0.0
    %3379 = vmatpush.msra.mxu0 0.0
    %3380 = vmatpush.msra.mxu0 0.0
    %3381 = vmatpush.msra.mxu0 0.0
    %3382 = vmatpush.msra.mxu0 0.0
    %3383 = vmatpush.msra.mxu0 0.0
    %3384 = vmatpush.msra.mxu0 0.0
    %3385 = vmatpush.msra.mxu0 0.0
    %3386 = vmatpush.msra.mxu0 0.0
    %3387 = vmatpush.msra.mxu0 0.0
    %3388 = vmatpush.msra.mxu0 0.0
    %3389 = vmatpush.msra.mxu0 0.0
    %3390 = vmatpush.msra.mxu0 0.0
    %3391 = vmatpush.msra.mxu0 0.0
    %3392 = vmatpush.msra.mxu0 0.0
    %3393 = vmatpush.msra.mxu0 %v2962
    %3394 = vmatmul.f32.gmra.mxu0 %v3376
    %v3395 = vpop.f32.mrf.mxu0
    %v3396 = vadd.f32 0.0, %v3395
    %3397 = vdwg.mxu0
    %v3398 = vld [vmem:[%s19] sm:$0xff]
    %v3399 = vld [vmem:[%s19 + $0x8] sm:$0xff]
    %v3400 = vld [vmem:[%s49] sm:$0xff]
    %v3401 = vld [vmem:[%s49 + $0x8] sm:$0xff]
    %v3403 = vsel %vm227, %v3396, 0
    %3405 = vmatpush.msra.mxu0 0.0
    %3406 = vmatpush.msra.mxu0 0.0
    %3407 = vmatpush.msra.mxu0 0.0
    %3408 = vmatpush.msra.mxu0 0.0
    %3409 = vmatpush.msra.mxu0 0.0
    %3410 = vmatpush.msra.mxu0 0.0
    %3411 = vmatpush.msra.mxu0 0.0
    %3412 = vmatpush.msra.mxu0 0.0
    %3413 = vmatpush.msra.mxu0 0.0
    %3414 = vmatpush.msra.mxu0 0.0
    %3415 = vmatpush.msra.mxu0 0.0
    %3416 = vmatpush.msra.mxu0 0.0
    %3417 = vmatpush.msra.mxu0 0.0
    %3418 = vmatpush.msra.mxu0 0.0
    %3419 = vmatpush.msra.mxu0 %v3401
    %3420 = vmatpush.msra.mxu0 %v3400
    %3421 = vmatmul.f32.gmra.mxu0 %v3403
    %v3422 = vpop.f32.mrf.mxu0
    %v3423 = vadd.f32 0.0, %v3422
    %3424 = vdwg.mxu0
    %v3426 = vsel %vm3350, %v3398, 0
    %v3429 = vsel %vm3350, %v3399, 0
    %3431 = vmatpush.msra.mxu0 0.0
    %3432 = vmatpush.msra.mxu0 0.0
    %3433 = vmatpush.msra.mxu0 0.0
    %3434 = vmatpush.msra.mxu0 0.0
    %3435 = vmatpush.msra.mxu0 0.0
    %3436 = vmatpush.msra.mxu0 0.0
    %3437 = vmatpush.msra.mxu0 0.0
    %3438 = vmatpush.msra.mxu0 0.0
    %3439 = vmatpush.msra.mxu0 0.0
    %3440 = vmatpush.msra.mxu0 0.0
    %3441 = vmatpush.msra.mxu0 0.0
    %3442 = vmatpush.msra.mxu0 0.0
    %3443 = vmatpush.msra.mxu0 0.0
    %3444 = vmatpush.msra.mxu0 0.0
    %3445 = vmatpush.msra.mxu0 0.0
    %3446 = vmatpush.msra.mxu0 %v3423
    %3447 = vmatmul.f32.gmra.mxu0 %v3426
    %v3448 = vpop.f32.mrf.mxu0
    %v3449 = vadd.f32 0.0, %v3448
    %3450 = vmatmul.f32.gmra.mxu0 %v3429
    %v3451 = vpop.f32.mrf.mxu0
    %v3452 = vadd.f32 0.0, %v3451
    %3453 = vdwg.mxu0
    %v3454 = vadd.f32 %v3248, %v3449
    %v3455 = vadd.f32 %v3248, %v3452
    %3456 = vset.pattern.permute.xlu0 1
    %3457 = vperm.xlu0 %3456, %v3219
    %v3458 = vpop.permute.xlu0 %3457
    %3460 = vset.pattern.permute.xlu0 1
    %3461 = vperm.xlu0 %3460, %v3220
    %v3462 = vpop.permute.xlu0 %3461
    %3464 = vset.pattern.permute.xlu0 1
    %3465 = vperm.xlu0 %3464, %v3221
    %v3466 = vpop.permute.xlu0 %3465
    %3468 = vset.pattern.permute.xlu0 1
    %3469 = vperm.xlu0 %3468, %v3222
    %v3470 = vpop.permute.xlu0 %3469
    %3472 = vset.pattern.permute.xlu0 1
    %3473 = vperm.xlu0 %3472, %v3223
    %v3474 = vpop.permute.xlu0 %3473
    %3476 = vset.pattern.permute.xlu0 1
    %3477 = vperm.xlu0 %3476, %v3224
    %v3478 = vpop.permute.xlu0 %3477
    %3480 = vset.pattern.permute.xlu0 1
    %3481 = vperm.xlu0 %3480, %v3225
    %v3482 = vpop.permute.xlu0 %3481
    %3484 = vset.pattern.permute.xlu0 1
    %3485 = vperm.xlu0 %3484, %v3226
    %v3486 = vpop.permute.xlu0 %3485
    %v3488 = vmul.f32 %v3458, %v3236
    %v3489 = vmul.f32 %v3462, %v3237
    %v3490 = vmul.f32 %v3466, %v3238
    %v3491 = vmul.f32 %v3470, %v3239
    %v3492 = vmul.f32 %v3474, %v3240
    %v3493 = vmul.f32 %v3478, %v3241
    %v3494 = vmul.f32 %v3482, %v3242
    %v3495 = vmul.f32 %v3486, %v3243
    %3496 = vmatpush.msra.mxu0 0.0
    %3497 = vmatpush.msra.mxu0 0.0
    %3498 = vmatpush.msra.mxu0 0.0
    %3499 = vmatpush.msra.mxu0 0.0
    %3500 = vmatpush.msra.mxu0 0.0
    %3501 = vmatpush.msra.mxu0 0.0
    %3502 = vmatpush.msra.mxu0 0.0
    %3503 = vmatpush.msra.mxu0 0.0
    %3504 = vmatpush.msra.mxu0 %v3495
    %3505 = vmatpush.msra.mxu0 %v3494
    %3506 = vmatpush.msra.mxu0 %v3493
    %3507 = vmatpush.msra.mxu0 %v3492
    %3508 = vmatpush.msra.mxu0 %v3491
    %3509 = vmatpush.msra.mxu0 %v3490
    %3510 = vmatpush.msra.mxu0 %v3489
    %3511 = vmatpush.msra.mxu0 %v3488
    %3512 = vmatmul.f32.gmra.mxu0 %v3258
    %v3513 = vpop.f32.mrf.mxu0
    %v3514 = vadd.f32 0.0, %v3513
    %3515 = vdwg.mxu0
    %v3516 = vsel %vm3348, -1e+30, %v3514
    %v3517 = vsel %vm3350, %v3516, -inf
    %3518 = vmax.xlane.f32.xlu0 %v3517
    %v3519 = vpop.xlane.xlu0 %3518
    %v3520 = vsub.f32 %v3516, %v3519
    %v3521 = vmul.f32 %v3520, 1.442695
    %v3522 = vpow.pop %v3521
    %v3523 = vsel %vm3350, %v3522, 0.0
    %3524 = vadd.xlane.f32.xlu0 %v3523
    %v3525 = vpop.xlane.xlu0 %3524
    %v3526 = vrcp.pop %v3525
    %v3527 = vmul.f32 %v3525, %v3526
    %v3528 = vsub.f32 1.0, %v3527
    %v3529 = vmul.f32 %v3526, %v3528
    %v3530 = vadd.f32 %v3526, %v3529
    %vm3531 = vweird.f32 %v3525
    %vm3532 = vweird.f32 %v3526
    %vm3533 = vmor %vm3531, %vm3532
    %v3534 = vsel %vm3533, %v3526, %v3530
    %v3535 = vand.u32 2147483647, %v3525
    %vm3536 = vcmp.eq.f32.partialorder %v3535, 8.507059e+37
    %v3537 = vand.u32 %v3525, 2147483648
    %v3538 = vor.u32 1.1754944e-38, %v3537
    %v3539 = vsel %vm3536, %v3538, %v3534
    %v3540 = vmul.f32 %v3522, %v3539
    %3542 = vrot.lane.b32.xlu0 %v2962, 112
    %v3543 = vpop.permute.xlu0 %3542
    %v3546 = vsel %vm3350, %v3540, 0
    %3548 = vmatpush.msra.mxu0 0.0
    %3549 = vmatpush.msra.mxu0 0.0
    %3550 = vmatpush.msra.mxu0 0.0
    %3551 = vmatpush.msra.mxu0 0.0
    %3552 = vmatpush.msra.mxu0 0.0
    %3553 = vmatpush.msra.mxu0 0.0
    %3554 = vmatpush.msra.mxu0 0.0
    %3555 = vmatpush.msra.mxu0 0.0
    %3556 = vmatpush.msra.mxu0 0.0
    %3557 = vmatpush.msra.mxu0 0.0
    %3558 = vmatpush.msra.mxu0 0.0
    %3559 = vmatpush.msra.mxu0 0.0
    %3560 = vmatpush.msra.mxu0 0.0
    %3561 = vmatpush.msra.mxu0 0.0
    %3562 = vmatpush.msra.mxu0 0.0
    %3563 = vmatpush.msra.mxu0 %v3543
    %3564 = vmatmul.f32.gmra.mxu0 %v3546
    %v3565 = vpop.f32.mrf.mxu0
    %v3566 = vadd.f32 0.0, %v3565
    %3567 = vdwg.mxu0
    %s3568 = scalar_lea.vmem %s49, 16
    %v3569 = vld [vmem:[%s3568] sm:$0xff]
    %v3570 = vld [vmem:[%s3568 + $0x8] sm:$0xff]
    %v3572 = vsel %vm227, %v3566, 0
    %3574 = vmatpush.msra.mxu0 0.0
    %3575 = vmatpush.msra.mxu0 0.0
    %3576 = vmatpush.msra.mxu0 0.0
    %3577 = vmatpush.msra.mxu0 0.0
    %3578 = vmatpush.msra.mxu0 0.0
    %3579 = vmatpush.msra.mxu0 0.0
    %3580 = vmatpush.msra.mxu0 0.0
    %3581 = vmatpush.msra.mxu0 0.0
    %3582 = vmatpush.msra.mxu0 0.0
    %3583 = vmatpush.msra.mxu0 0.0
    %3584 = vmatpush.msra.mxu0 0.0
    %3585 = vmatpush.msra.mxu0 0.0
    %3586 = vmatpush.msra.mxu0 0.0
    %3587 = vmatpush.msra.mxu0 0.0
    %3588 = vmatpush.msra.mxu0 %v3570
    %3589 = vmatpush.msra.mxu0 %v3569
    %3590 = vmatmul.f32.gmra.mxu0 %v3572
    %v3591 = vpop.f32.mrf.mxu0
    %v3592 = vadd.f32 0.0, %v3591
    %3593 = vdwg.mxu0
    %3594 = vmatpush.msra.mxu0 0.0
    %3595 = vmatpush.msra.mxu0 0.0
    %3596 = vmatpush.msra.mxu0 0.0
    %3597 = vmatpush.msra.mxu0 0.0
    %3598 = vmatpush.msra.mxu0 0.0
    %3599 = vmatpush.msra.mxu0 0.0
    %3600 = vmatpush.msra.mxu0 0.0
    %3601 = vmatpush.msra.mxu0 0.0
    %3602 = vmatpush.msra.mxu0 0.0
    %3603 = vmatpush.msra.mxu0 0.0
    %3604 = vmatpush.msra.mxu0 0.0
    %3605 = vmatpush.msra.mxu0 0.0
    %3606 = vmatpush.msra.mxu0 0.0
    %3607 = vmatpush.msra.mxu0 0.0
    %3608 = vmatpush.msra.mxu0 0.0
    %3609 = vmatpush.msra.mxu0 %v3592
    %3610 = vmatmul.f32.gmra.mxu0 %v3426
    %v3611 = vpop.f32.mrf.mxu0
    %v3612 = vadd.f32 0.0, %v3611
    %3613 = vmatmul.f32.gmra.mxu0 %v3429
    %v3614 = vpop.f32.mrf.mxu0
    %v3615 = vadd.f32 0.0, %v3614
    %3616 = vdwg.mxu0
    %v3617 = vadd.f32 %v3454, %v3612
    %v3618 = vadd.f32 %v3455, %v3615
    %v3619 = vmul.f32 %v2561, %v3236
    %v3620 = vmul.f32 %v2562, %v3237
    %v3621 = vmul.f32 %v2563, %v3238
    %v3622 = vmul.f32 %v2564, %v3239
    %v3623 = vmul.f32 %v2565, %v3240
    %v3624 = vmul.f32 %v2566, %v3241
    %v3625 = vmul.f32 %v2567, %v3242
    %v3626 = vmul.f32 %v2568, %v3243
    %3627 = vmatpush.msra.mxu0 0.0
    %3628 = vmatpush.msra.mxu0 0.0
    %3629 = vmatpush.msra.mxu0 0.0
    %3630 = vmatpush.msra.mxu0 0.0
    %3631 = vmatpush.msra.mxu0 0.0
    %3632 = vmatpush.msra.mxu0 0.0
    %3633 = vmatpush.msra.mxu0 0.0
    %3634 = vmatpush.msra.mxu0 0.0
    %3635 = vmatpush.msra.mxu0 %v3626
    %3636 = vmatpush.msra.mxu0 %v3625
    %3637 = vmatpush.msra.mxu0 %v3624
    %3638 = vmatpush.msra.mxu0 %v3623
    %3639 = vmatpush.msra.mxu0 %v3622
    %3640 = vmatpush.msra.mxu0 %v3621
    %3641 = vmatpush.msra.mxu0 %v3620
    %3642 = vmatpush.msra.mxu0 %v3619
    %3643 = vmatmul.f32.gmra.mxu0 %v3258
    %v3644 = vpop.f32.mrf.mxu0
    %v3645 = vadd.f32 0.0, %v3644
    %3646 = vdwg.mxu0
    %3648 = vset.pattern.permute.xlu0 0
    %3649 = vperm.xlu0 %3648, %v3227
    %v3650 = vpop.permute.xlu0 %3649
    %3653 = vset.pattern.permute.xlu0 0
    %3654 = vperm.xlu0 %3653, %v3228
    %v3655 = vpop.permute.xlu0 %3654
    %3658 = vset.pattern.permute.xlu0 0
    %3659 = vperm.xlu0 %3658, %v3229
    %v3660 = vpop.permute.xlu0 %3659
    %3663 = vset.pattern.permute.xlu0 0
    %3664 = vperm.xlu0 %3663, %v3230
    %v3665 = vpop.permute.xlu0 %3664
    %3668 = vset.pattern.permute.xlu0 0
    %3669 = vperm.xlu0 %3668, %v3231
    %v3670 = vpop.permute.xlu0 %3669
    %3673 = vset.pattern.permute.xlu0 0
    %3674 = vperm.xlu0 %3673, %v3232
    %v3675 = vpop.permute.xlu0 %3674
    %3678 = vset.pattern.permute.xlu0 0
    %3679 = vperm.xlu0 %3678, %v3233
    %v3680 = vpop.permute.xlu0 %3679
    %3683 = vset.pattern.permute.xlu0 0
    %3684 = vperm.xlu0 %3683, %v3234
    %v3685 = vpop.permute.xlu0 %3684
    %v3687 = vmul.f32 %v3650, %v3236
    %v3688 = vmul.f32 %v3655, %v3237
    %v3689 = vmul.f32 %v3660, %v3238
    %v3690 = vmul.f32 %v3665, %v3239
    %v3691 = vmul.f32 %v3670, %v3240
    %v3692 = vmul.f32 %v3675, %v3241
    %v3693 = vmul.f32 %v3680, %v3242
    %v3694 = vmul.f32 %v3685, %v3243
    %3695 = vmatpush.msra.mxu0 0.0
    %3696 = vmatpush.msra.mxu0 0.0
    %3697 = vmatpush.msra.mxu0 0.0
    %3698 = vmatpush.msra.mxu0 0.0
    %3699 = vmatpush.msra.mxu0 0.0
    %3700 = vmatpush.msra.mxu0 0.0
    %3701 = vmatpush.msra.mxu0 0.0
    %3702 = vmatpush.msra.mxu0 0.0
    %3703 = vmatpush.msra.mxu0 %v3694
    %3704 = vmatpush.msra.mxu0 %v3693
    %3705 = vmatpush.msra.mxu0 %v3692
    %3706 = vmatpush.msra.mxu0 %v3691
    %3707 = vmatpush.msra.mxu0 %v3690
    %3708 = vmatpush.msra.mxu0 %v3689
    %3709 = vmatpush.msra.mxu0 %v3688
    %3710 = vmatpush.msra.mxu0 %v3687
    %3711 = vmatmul.f32.gmra.mxu0 %v3258
    %v3712 = vpop.f32.mrf.mxu0
    %v3713 = vadd.f32 0.0, %v3712
    %3714 = vdwg.mxu0
    %vm3715 = vcmp.gt.f32.partialorder %v3645, 0.5
    %v3716 = vsel %vm3715, -1e+30, %v3713
    %v3717 = vsel %vm3350, %v3716, -inf
    %3718 = vmax.xlane.f32.xlu0 %v3717
    %v3719 = vpop.xlane.xlu0 %3718
    %v3720 = vsub.f32 %v3716, %v3719
    %v3721 = vmul.f32 %v3720, 1.442695
    %v3722 = vpow.pop %v3721
    %v3723 = vsel %vm3350, %v3722, 0.0
    %3724 = vadd.xlane.f32.xlu0 %v3723
    %v3725 = vpop.xlane.xlu0 %3724
    %v3726 = vrcp.pop %v3725
    %v3727 = vmul.f32 %v3725, %v3726
    %v3728 = vsub.f32 1.0, %v3727
    %v3729 = vmul.f32 %v3726, %v3728
    %v3730 = vadd.f32 %v3726, %v3729
    %vm3731 = vweird.f32 %v3725
    %vm3732 = vweird.f32 %v3726
    %vm3733 = vmor %vm3731, %vm3732
    %v3734 = vsel %vm3733, %v3726, %v3730
    %v3735 = vand.u32 2147483647, %v3725
    %vm3736 = vcmp.eq.f32.partialorder %v3735, 8.507059e+37
    %v3737 = vand.u32 %v3725, 2147483648
    %v3738 = vor.u32 1.1754944e-38, %v3737
    %v3739 = vsel %vm3736, %v3738, %v3734
    %v3740 = vmul.f32 %v3722, %v3739
    %v3742 = vsel %vm3350, %v3740, 0
    %3744 = vmatpush.msra.mxu0 0.0
    %3745 = vmatpush.msra.mxu0 0.0
    %3746 = vmatpush.msra.mxu0 0.0
    %3747 = vmatpush.msra.mxu0 0.0
    %3748 = vmatpush.msra.mxu0 0.0
    %3749 = vmatpush.msra.mxu0 0.0
    %3750 = vmatpush.msra.mxu0 0.0
    %3751 = vmatpush.msra.mxu0 0.0
    %3752 = vmatpush.msra.mxu0 0.0
    %3753 = vmatpush.msra.mxu0 0.0
    %3754 = vmatpush.msra.mxu0 0.0
    %3755 = vmatpush.msra.mxu0 0.0
    %3756 = vmatpush.msra.mxu0 0.0
    %3757 = vmatpush.msra.mxu0 0.0
    %3758 = vmatpush.msra.mxu0 0.0
    %3759 = vmatpush.msra.mxu0 %v2965
    %3760 = vmatmul.f32.gmra.mxu0 %v3742
    %v3761 = vpop.f32.mrf.mxu0
    %v3762 = vadd.f32 0.0, %v3761
    %3763 = vdwg.mxu0
    %s3764 = scalar_lea.vmem %s19, 16
    %v3765 = vld [vmem:[%s3764] sm:$0xff]
    %v3766 = vld [vmem:[%s3764 + $0x8] sm:$0xff]
    %v3768 = vsel %vm227, %v3762, 0
    %3770 = vmatpush.msra.mxu0 0.0
    %3771 = vmatpush.msra.mxu0 0.0
    %3772 = vmatpush.msra.mxu0 0.0
    %3773 = vmatpush.msra.mxu0 0.0
    %3774 = vmatpush.msra.mxu0 0.0
    %3775 = vmatpush.msra.mxu0 0.0
    %3776 = vmatpush.msra.mxu0 0.0
    %3777 = vmatpush.msra.mxu0 0.0
    %3778 = vmatpush.msra.mxu0 0.0
    %3779 = vmatpush.msra.mxu0 0.0
    %3780 = vmatpush.msra.mxu0 0.0
    %3781 = vmatpush.msra.mxu0 0.0
    %3782 = vmatpush.msra.mxu0 0.0
    %3783 = vmatpush.msra.mxu0 0.0
    %3784 = vmatpush.msra.mxu0 %v3401
    %3785 = vmatpush.msra.mxu0 %v3400
    %3786 = vmatmul.f32.gmra.mxu0 %v3768
    %v3787 = vpop.f32.mrf.mxu0
    %v3788 = vadd.f32 0.0, %v3787
    %3789 = vdwg.mxu0
    %v3791 = vsel %vm3350, %v3765, 0
    %v3794 = vsel %vm3350, %v3766, 0
    %3796 = vmatpush.msra.mxu0 0.0
    %3797 = vmatpush.msra.mxu0 0.0
    %3798 = vmatpush.msra.mxu0 0.0
    %3799 = vmatpush.msra.mxu0 0.0
    %3800 = vmatpush.msra.mxu0 0.0
    %3801 = vmatpush.msra.mxu0 0.0
    %3802 = vmatpush.msra.mxu0 0.0
    %3803 = vmatpush.msra.mxu0 0.0
    %3804 = vmatpush.msra.mxu0 0.0
    %3805 = vmatpush.msra.mxu0 0.0
    %3806 = vmatpush.msra.mxu0 0.0
    %3807 = vmatpush.msra.mxu0 0.0
    %3808 = vmatpush.msra.mxu0 0.0
    %3809 = vmatpush.msra.mxu0 0.0
    %3810 = vmatpush.msra.mxu0 0.0
    %3811 = vmatpush.msra.mxu0 %v3788
    %3812 = vmatmul.f32.gmra.mxu0 %v3791
    %v3813 = vpop.f32.mrf.mxu0
    %v3814 = vadd.f32 0.0, %v3813
    %3815 = vmatmul.f32.gmra.mxu0 %v3794
    %v3816 = vpop.f32.mrf.mxu0
    %v3817 = vadd.f32 0.0, %v3816
    %3818 = vdwg.mxu0
    %v3819 = vadd.f32 %v3617, %v3814
    %v3820 = vadd.f32 %v3618, %v3817
    %3821 = vset.pattern.permute.xlu0 1
    %3822 = vperm.xlu0 %3821, %v3227
    %v3823 = vpop.permute.xlu0 %3822
    %3825 = vset.pattern.permute.xlu0 1
    %3826 = vperm.xlu0 %3825, %v3228
    %v3827 = vpop.permute.xlu0 %3826
    %3829 = vset.pattern.permute.xlu0 1
    %3830 = vperm.xlu0 %3829, %v3229
    %v3831 = vpop.permute.xlu0 %3830
    %3833 = vset.pattern.permute.xlu0 1
    %3834 = vperm.xlu0 %3833, %v3230
    %v3835 = vpop.permute.xlu0 %3834
    %3837 = vset.pattern.permute.xlu0 1
    %3838 = vperm.xlu0 %3837, %v3231
    %v3839 = vpop.permute.xlu0 %3838
    %3841 = vset.pattern.permute.xlu0 1
    %3842 = vperm.xlu0 %3841, %v3232
    %v3843 = vpop.permute.xlu0 %3842
    %3845 = vset.pattern.permute.xlu0 1
    %3846 = vperm.xlu0 %3845, %v3233
    %v3847 = vpop.permute.xlu0 %3846
    %3849 = vset.pattern.permute.xlu0 1
    %3850 = vperm.xlu0 %3849, %v3234
    %v3851 = vpop.permute.xlu0 %3850
    %v3853 = vmul.f32 %v3823, %v3236
    %v3854 = vmul.f32 %v3827, %v3237
    %v3855 = vmul.f32 %v3831, %v3238
    %v3856 = vmul.f32 %v3835, %v3239
    %v3857 = vmul.f32 %v3839, %v3240
    %v3858 = vmul.f32 %v3843, %v3241
    %v3859 = vmul.f32 %v3847, %v3242
    %v3860 = vmul.f32 %v3851, %v3243
    %3861 = vmatpush.msra.mxu0 0.0
    %3862 = vmatpush.msra.mxu0 0.0
    %3863 = vmatpush.msra.mxu0 0.0
    %3864 = vmatpush.msra.mxu0 0.0
    %3865 = vmatpush.msra.mxu0 0.0
    %3866 = vmatpush.msra.mxu0 0.0
    %3867 = vmatpush.msra.mxu0 0.0
    %3868 = vmatpush.msra.mxu0 0.0
    %3869 = vmatpush.msra.mxu0 %v3860
    %3870 = vmatpush.msra.mxu0 %v3859
    %3871 = vmatpush.msra.mxu0 %v3858
    %3872 = vmatpush.msra.mxu0 %v3857
    %3873 = vmatpush.msra.mxu0 %v3856
    %3874 = vmatpush.msra.mxu0 %v3855
    %3875 = vmatpush.msra.mxu0 %v3854
    %3876 = vmatpush.msra.mxu0 %v3853
    %3877 = vmatmul.f32.gmra.mxu0 %v3258
    %v3878 = vpop.f32.mrf.mxu0
    %v3879 = vadd.f32 0.0, %v3878
    %3880 = vdwg.mxu0
    %v3881 = vsel %vm3715, -1e+30, %v3879
    %v3882 = vsel %vm3350, %v3881, -inf
    %3883 = vmax.xlane.f32.xlu0 %v3882
    %v3884 = vpop.xlane.xlu0 %3883
    %v3885 = vsub.f32 %v3881, %v3884
    %v3886 = vmul.f32 %v3885, 1.442695
    %v3887 = vpow.pop %v3886
    %v3888 = vsel %vm3350, %v3887, 0.0
    %3889 = vadd.xlane.f32.xlu0 %v3888
    %v3890 = vpop.xlane.xlu0 %3889
    %v3891 = vrcp.pop %v3890
    %v3892 = vmul.f32 %v3890, %v3891
    %v3893 = vsub.f32 1.0, %v3892
    %v3894 = vmul.f32 %v3891, %v3893
    %v3895 = vadd.f32 %v3891, %v3894
    %vm3896 = vweird.f32 %v3890
    %vm3897 = vweird.f32 %v3891
    %vm3898 = vmor %vm3896, %vm3897
    %v3899 = vsel %vm3898, %v3891, %v3895
    %v3900 = vand.u32 2147483647, %v3890
    %vm3901 = vcmp.eq.f32.partialorder %v3900, 8.507059e+37
    %v3902 = vand.u32 %v3890, 2147483648
    %v3903 = vor.u32 1.1754944e-38, %v3902
    %v3904 = vsel %vm3901, %v3903, %v3899
    %v3905 = vmul.f32 %v3887, %v3904
    %3907 = vrot.lane.b32.xlu0 %v2965, 112
    %v3908 = vpop.permute.xlu0 %3907
    %v3911 = vsel %vm3350, %v3905, 0
    %3913 = vmatpush.msra.mxu0 0.0
    %3914 = vmatpush.msra.mxu0 0.0
    %3915 = vmatpush.msra.mxu0 0.0
    %3916 = vmatpush.msra.mxu0 0.0
    %3917 = vmatpush.msra.mxu0 0.0
    %3918 = vmatpush.msra.mxu0 0.0
    %3919 = vmatpush.msra.mxu0 0.0
    %3920 = vmatpush.msra.mxu0 0.0
    %3921 = vmatpush.msra.mxu0 0.0
    %3922 = vmatpush.msra.mxu0 0.0
    %3923 = vmatpush.msra.mxu0 0.0
    %3924 = vmatpush.msra.mxu0 0.0
    %3925 = vmatpush.msra.mxu0 0.0
    %3926 = vmatpush.msra.mxu0 0.0
    %3927 = vmatpush.msra.mxu0 0.0
    %3928 = vmatpush.msra.mxu0 %v3908
    %3929 = vmatmul.f32.gmra.mxu0 %v3911
    %v3930 = vpop.f32.mrf.mxu0
    %v3931 = vadd.f32 0.0, %v3930
    %3932 = vdwg.mxu0
    %v3934 = vsel %vm227, %v3931, 0
    %3936 = vmatpush.msra.mxu0 0.0
    %3937 = vmatpush.msra.mxu0 0.0
    %3938 = vmatpush.msra.mxu0 0.0
    %3939 = vmatpush.msra.mxu0 0.0
    %3940 = vmatpush.msra.mxu0 0.0
    %3941 = vmatpush.msra.mxu0 0.0
    %3942 = vmatpush.msra.mxu0 0.0
    %3943 = vmatpush.msra.mxu0 0.0
    %3944 = vmatpush.msra.mxu0 0.0
    %3945 = vmatpush.msra.mxu0 0.0
    %3946 = vmatpush.msra.mxu0 0.0
    %3947 = vmatpush.msra.mxu0 0.0
    %3948 = vmatpush.msra.mxu0 0.0
    %3949 = vmatpush.msra.mxu0 0.0
    %3950 = vmatpush.msra.mxu0 %v3570
    %3951 = vmatpush.msra.mxu0 %v3569
    %3952 = vmatmul.f32.gmra.mxu0 %v3934
    %v3953 = vpop.f32.mrf.mxu0
    %v3954 = vadd.f32 0.0, %v3953
    %3955 = vdwg.mxu0
    %3956 = vmatpush.msra.mxu0 0.0
    %3957 = vmatpush.msra.mxu0 0.0
    %3958 = vmatpush.msra.mxu0 0.0
    %3959 = vmatpush.msra.mxu0 0.0
    %3960 = vmatpush.msra.mxu0 0.0
    %3961 = vmatpush.msra.mxu0 0.0
    %3962 = vmatpush.msra.mxu0 0.0
    %3963 = vmatpush.msra.mxu0 0.0
    %3964 = vmatpush.msra.mxu0 0.0
    %3965 = vmatpush.msra.mxu0 0.0
    %3966 = vmatpush.msra.mxu0 0.0
    %3967 = vmatpush.msra.mxu0 0.0
    %3968 = vmatpush.msra.mxu0 0.0
    %3969 = vmatpush.msra.mxu0 0.0
    %3970 = vmatpush.msra.mxu0 0.0
    %3971 = vmatpush.msra.mxu0 %v3954
    %3972 = vmatmul.f32.gmra.mxu0 %v3791
    %v3973 = vpop.f32.mrf.mxu0
    %v3974 = vadd.f32 0.0, %v3973
    %3975 = vmatmul.f32.gmra.mxu0 %v3794
    %v3976 = vpop.f32.mrf.mxu0
    %v3977 = vadd.f32 0.0, %v3976
    %3978 = vdwg.mxu0
    %v3979 = vadd.f32 %v3819, %v3974
    %v3980 = vadd.f32 %v3820, %v3977
    %v3981 = vsel %vm2939, %v3979, 0.0
    %3982 = vadd.xlane.f32.xlu0 %v3981
    %v3983 = vpop.xlane.xlu0 %3982
    %v3984 = vsel %vm2939, %v3980, 0.0
    %3985 = vadd.xlane.f32.xlu0 %v3984
    %v3986 = vpop.xlane.xlu0 %3985
    %v3987 = vrcp.pop 32.0
    %v3988 = vmul.f32 32.0, %v3987
    %v3989 = vsub.f32 1.0, %v3988
    %v3990 = vmul.f32 %v3987, %v3989
    %v3991 = vadd.f32 %v3987, %v3990
    %vm3992 = vweird.f32 %v3987
    %v3993 = vsel %vm3992, %v3987, %v3991
    %v3994 = vmul.f32 %v3983, %v3993
    %v3995 = vmul.f32 %v3986, %v3993
    %v3996 = vsub.f32 %v3979, %v3994
    %v3997 = vsub.f32 %v3980, %v3995
    %v3998 = vmul.f32 %v3996, %v3996
    %v3999 = vmul.f32 %v3997, %v3997
    %v4000 = vsel %vm2939, %v3998, 0.0
    %4001 = vadd.xlane.f32.xlu0 %v4000
    %v4002 = vpop.xlane.xlu0 %4001
    %v4003 = vsel %vm2939, %v3999, 0.0
    %4004 = vadd.xlane.f32.xlu0 %v4003
    %v4005 = vpop.xlane.xlu0 %4004
    %v4006 = vrcp.pop 31.0
    %v4007 = vmul.f32 31.0, %v4006
    %v4008 = vsub.f32 1.0, %v4007
    %v4009 = vmul.f32 %v4006, %v4008
    %v4010 = vadd.f32 %v4006, %v4009
    %vm4011 = vweird.f32 %v4006
    %v4012 = vsel %vm4011, %v4006, %v4010
    %v4013 = vmul.f32 %v4002, %v4012
    %v4014 = vmul.f32 %v4005, %v4012
    %v4015 = vrsqrt.pop %v4013
    %v4016 = vmul.f32 %v4015, %v4013
    %v4017 = vmul.f32 %v4016, %v4015
    %v4018 = vmul.f32 0.5, %v4017
    %v4019 = vsub.f32 1.5, %v4018
    %v4020 = vmul.f32 %v4015, %v4019
    %v4021 = vmul.f32 %v4013, %v4020
    %vm4022 = vcmp.eq.f32.partialorder %v4013, inf
    %v4023 = vsel %vm4022, %v4013, %v4021
    %vm4024 = vcmp.eq.f32.partialorder %v4013, 0.0
    %v4025 = vand.u32 %v4013, 2147483648
    %v4026 = vsel %vm4024, %v4025, %v4023
    %v4027 = vrsqrt.pop %v4014
    %v4028 = vmul.f32 %v4027, %v4014
    %v4029 = vmul.f32 %v4028, %v4027
    %v4030 = vmul.f32 0.5, %v4029
    %v4031 = vsub.f32 1.5, %v4030
    %v4032 = vmul.f32 %v4027, %v4031
    %v4033 = vmul.f32 %v4014, %v4032
    %vm4034 = vcmp.eq.f32.partialorder %v4014, inf
    %v4035 = vsel %vm4034, %v4014, %v4033
    %vm4036 = vcmp.eq.f32.partialorder %v4014, 0.0
    %v4037 = vand.u32 %v4014, 2147483648
    %v4038 = vsel %vm4036, %v4037, %v4035
    %v4039 = vld [vmem:[%s53] sm:$0x1]
    %v4041 = vperm.slane %v4039, 0
    %v4043 = vmul.f32 %v4041, %v3996
    %v4044 = vmul.f32 %v4041, %v3997
    %v4045 = vadd.f32 %v4026, 1e-06
    %v4046 = vadd.f32 %v4038, 1e-06
    %v4047 = vrcp.pop %v4045
    %v4048 = vmul.f32 %v4045, %v4047
    %v4049 = vsub.f32 1.0, %v4048
    %v4050 = vmul.f32 %v4047, %v4049
    %v4051 = vadd.f32 %v4047, %v4050
    %vm4052 = vweird.f32 %v4045
    %vm4053 = vweird.f32 %v4047
    %vm4054 = vmor %vm4052, %vm4053
    %v4055 = vsel %vm4054, %v4047, %v4051
    %v4056 = vand.u32 2147483647, %v4045
    %vm4057 = vcmp.eq.f32.partialorder %v4056, 8.507059e+37
    %v4058 = vand.u32 %v4045, 2147483648
    %v4059 = vor.u32 1.1754944e-38, %v4058
    %v4060 = vsel %vm4057, %v4059, %v4055
    %v4061 = vmul.f32 %v4043, %v4060
    %v4062 = vrcp.pop %v4046
    %v4063 = vmul.f32 %v4046, %v4062
    %v4064 = vsub.f32 1.0, %v4063
    %v4065 = vmul.f32 %v4062, %v4064
    %v4066 = vadd.f32 %v4062, %v4065
    %vm4067 = vweird.f32 %v4046
    %vm4068 = vweird.f32 %v4062
    %vm4069 = vmor %vm4067, %vm4068
    %v4070 = vsel %vm4069, %v4062, %v4066
    %v4071 = vand.u32 2147483647, %v4046
    %vm4072 = vcmp.eq.f32.partialorder %v4071, 8.507059e+37
    %v4073 = vand.u32 %v4046, 2147483648
    %v4074 = vor.u32 1.1754944e-38, %v4073
    %v4075 = vsel %vm4072, %v4074, %v4070
    %v4076 = vmul.f32 %v4044, %v4075
    %v4077 = vld [vmem:[%s55] sm:$0x1]
    %v4079 = vperm.slane %v4077, 0
    %v4081 = vadd.f32 %v4061, %v4079
    %v4082 = vadd.f32 %v4076, %v4079
    %v4083 = vmax.f32 %v4081, 0.0
    %v4084 = vmax.f32 %v4082, 0.0
    %v4085 = vld [vmem:[%s13] sm:$0xff]
    %v4086 = vld [vmem:[%s13 + $0x8] sm:$0xff]
    %4087 = vmatpush.msra.mxu0 %v1367
    %4088 = vmatpush.msra.mxu0 %v1366
    %4089 = vmatpush.msra.mxu0 %v1365
    %4090 = vmatpush.msra.mxu0 %v1364
    %4091 = vmatpush.msra.mxu0 %v1363
    %4092 = vmatpush.msra.mxu0 %v1362
    %4093 = vmatpush.msra.mxu0 %v1361
    %4094 = vmatpush.msra.mxu0 %v1360
    %4095 = vmatpush.msra.mxu0 %v1359
    %4096 = vmatpush.msra.mxu0 %v1358
    %4097 = vmatpush.msra.mxu0 %v1357
    %4098 = vmatpush.msra.mxu0 %v1356
    %4099 = vmatpush.msra.mxu0 %v1355
    %4100 = vmatpush.msra.mxu0 %v1354
    %4101 = vmatpush.msra.mxu0 %v1353
    %4102 = vmatpush.msra.mxu0 %v1352
    %4103 = vmatmul.f32.gmra.mxu0 %v4085
    %v4104 = vpop.f32.mrf.mxu0
    %v4105 = vadd.f32 0.0, %v4104
    %4106 = vmatmul.f32.gmra.mxu0 %v4086
    %v4107 = vpop.f32.mrf.mxu0
    %v4108 = vadd.f32 0.0, %v4107
    %4109 = vdwg.mxu0
    %4110 = vmatpush.msra.mxu0 %v1334
    %4111 = vmatpush.msra.mxu0 %v1331
    %4112 = vmatpush.msra.mxu0 %v1328
    %4113 = vmatpush.msra.mxu0 %v1325
    %4114 = vmatpush.msra.mxu0 %v1322
    %4115 = vmatpush.msra.mxu0 %v1319
    %4116 = vmatpush.msra.mxu0 %v1316
    %4117 = vmatpush.msra.mxu0 %v1313
    %4118 = vmatpush.msra.mxu0 %v1310
    %4119 = vmatpush.msra.mxu0 %v1307
    %4120 = vmatpush.msra.mxu0 %v1304
    %4121 = vmatpush.msra.mxu0 %v1301
    %4122 = vmatpush.msra.mxu0 %v1298
    %4123 = vmatpush.msra.mxu0 %v1295
    %4124 = vmatpush.msra.mxu0 %v1292
    %4125 = vmatpush.msra.mxu0 %v1289
    %4126 = vmatmul.f32.gmra.mxu0 %v4085
    %v4127 = vpop.f32.mrf.mxu0
    %v4128 = vadd.f32 0.0, %v4127
    %4129 = vmatmul.f32.gmra.mxu0 %v4086
    %v4130 = vpop.f32.mrf.mxu0
    %v4131 = vadd.f32 0.0, %v4130
    %4132 = vdwg.mxu0
    %v4133 = vld [vmem:[%s59] sm:$0xff]
    %v4134 = vld [vmem:[%s59 + $0x8] sm:$0x3]
    %s4135 = scalar_lea.vmem %s59, 16
    %v4136 = vld [vmem:[%s4135] sm:$0xff]
    %v4137 = vld [vmem:[%s4135 + $0x8] sm:$0x3]
    %v4139 = vsel %vm1368, %v4128, 0
    %v4142 = vsel %vm1368, %v4131, 0
    %v4145 = vsel %vm1137, %v4137, 0
    %4147 = vmatpush.msra.mxu0 0.0
    %4148 = vmatpush.msra.mxu0 0.0
    %4149 = vmatpush.msra.mxu0 0.0
    %4150 = vmatpush.msra.mxu0 0.0
    %4151 = vmatpush.msra.mxu0 0.0
    %4152 = vmatpush.msra.mxu0 0.0
    %4153 = vmatpush.msra.mxu0 0.0
    %4154 = vmatpush.msra.mxu0 0.0
    %4155 = vmatpush.msra.mxu0 0.0
    %4156 = vmatpush.msra.mxu0 0.0
    %4157 = vmatpush.msra.mxu0 0.0
    %4158 = vmatpush.msra.mxu0 0.0
    %4159 = vmatpush.msra.mxu0 0.0
    %4160 = vmatpush.msra.mxu0 0.0
    %4161 = vmatpush.msra.mxu0 %v4145
    %4162 = vmatpush.msra.mxu0 %v4136
    %4163 = vmatmul.f32.gmra.mxu0 %v4139
    %v4164 = vpop.f32.mrf.mxu0
    %v4165 = vadd.f32 0.0, %v4164
    %4166 = vmatmul.f32.gmra.mxu0 %v4142
    %v4167 = vpop.f32.mrf.mxu0
    %v4168 = vadd.f32 0.0, %v4167
    %4169 = vdwg.mxu0
    %v4171 = vsel %vm1368, %v4105, 0
    %v4174 = vsel %vm1368, %v4108, 0
    %v4177 = vsel %vm1137, %v4134, 0
    %4179 = vmatpush.msra.mxu0 0.0
    %4180 = vmatpush.msra.mxu0 0.0
    %4181 = vmatpush.msra.mxu0 0.0
    %4182 = vmatpush.msra.mxu0 0.0
    %4183 = vmatpush.msra.mxu0 0.0
    %4184 = vmatpush.msra.mxu0 0.0
    %4185 = vmatpush.msra.mxu0 0.0
    %4186 = vmatpush.msra.mxu0 0.0
    %4187 = vmatpush.msra.mxu0 0.0
    %4188 = vmatpush.msra.mxu0 0.0
    %4189 = vmatpush.msra.mxu0 0.0
    %4190 = vmatpush.msra.mxu0 0.0
    %4191 = vmatpush.msra.mxu0 0.0
    %4192 = vmatpush.msra.mxu0 0.0
    %4193 = vmatpush.msra.mxu0 %v4177
    %4194 = vmatpush.msra.mxu0 %v4133
    %4195 = vmatmul.f32.gmra.mxu0 %v4171
    %v4196 = vpop.f32.mrf.mxu0
    %v4197 = vadd.f32 %v4165, %v4196
    %4198 = vmatmul.f32.gmra.mxu0 %v4174
    %v4199 = vpop.f32.mrf.mxu0
    %v4200 = vadd.f32 %v4168, %v4199
    %4201 = vdwg.mxu0
    %v4202 = vld [vmem:[%s63] sm:$0xff]
    %v4203 = vld [vmem:[%s63 + $0x8] sm:$0xff]
    %v4204 = vld [vmem:[%s63 + $0x10] sm:$0xff]
    %v4205 = vld [vmem:[%s63 + $0x18] sm:$0xff]
    %v4207 = vsel %vm2939, %v4083, 0
    %v4210 = vsel %vm2939, %v4084, 0
    %4212 = vmatpush.msra.mxu0 0.0
    %4213 = vmatpush.msra.mxu0 0.0
    %4214 = vmatpush.msra.mxu0 0.0
    %4215 = vmatpush.msra.mxu0 0.0
    %4216 = vmatpush.msra.mxu0 0.0
    %4217 = vmatpush.msra.mxu0 0.0
    %4218 = vmatpush.msra.mxu0 0.0
    %4219 = vmatpush.msra.mxu0 0.0
    %4220 = vmatpush.msra.mxu0 0.0
    %4221 = vmatpush.msra.mxu0 0.0
    %4222 = vmatpush.msra.mxu0 0.0
    %4223 = vmatpush.msra.mxu0 0.0
    %4224 = vmatpush.msra.mxu0 %v4205
    %4225 = vmatpush.msra.mxu0 %v4204
    %4226 = vmatpush.msra.mxu0 %v4203
    %4227 = vmatpush.msra.mxu0 %v4202
    %4228 = vmatmul.f32.gmra.mxu0 %v4207
    %v4229 = vpop.f32.mrf.mxu0
    %v4230 = vadd.f32 0.0, %v4229
    %4231 = vmatmul.f32.gmra.mxu0 %v4210
    %v4232 = vpop.f32.mrf.mxu0
    %v4233 = vadd.f32 0.0, %v4232
    %4234 = vdwg.mxu0
    %v4235 = vadd.f32 %v4197, %v4230
    %v4236 = vadd.f32 %v4200, %v4233
    %v4237 = vld [vmem:[%s61] sm:$0xff]
    %v4238 = vld [vmem:[%s61 + $0x8] sm:$0x3]
    %s4239 = scalar_lea.vmem %s61, 16
    %v4240 = vld [vmem:[%s4239] sm:$0xff]
    %v4241 = vld [vmem:[%s4239 + $0x8] sm:$0x3]
    %v4243 = vsel %vm1137, %v4241, 0
    %4245 = vmatpush.msra.mxu0 0.0
    %4246 = vmatpush.msra.mxu0 0.0
    %4247 = vmatpush.msra.mxu0 0.0
    %4248 = vmatpush.msra.mxu0 0.0
    %4249 = vmatpush.msra.mxu0 0.0
    %4250 = vmatpush.msra.mxu0 0.0
    %4251 = vmatpush.msra.mxu0 0.0
    %4252 = vmatpush.msra.mxu0 0.0
    %4253 = vmatpush.msra.mxu0 0.0
    %4254 = vmatpush.msra.mxu0 0.0
    %4255 = vmatpush.msra.mxu0 0.0
    %4256 = vmatpush.msra.mxu0 0.0
    %4257 = vmatpush.msra.mxu0 0.0
    %4258 = vmatpush.msra.mxu0 0.0
    %4259 = vmatpush.msra.mxu0 %v4243
    %4260 = vmatpush.msra.mxu0 %v4240
    %4261 = vmatmul.f32.gmra.mxu0 %v4139
    %v4262 = vpop.f32.mrf.mxu0
    %v4263 = vadd.f32 0.0, %v4262
    %4264 = vmatmul.f32.gmra.mxu0 %v4142
    %v4265 = vpop.f32.mrf.mxu0
    %v4266 = vadd.f32 0.0, %v4265
    %4267 = vdwg.mxu0
    %v4269 = vsel %vm1137, %v4238, 0
    %4271 = vmatpush.msra.mxu0 0.0
    %4272 = vmatpush.msra.mxu0 0.0
    %4273 = vmatpush.msra.mxu0 0.0
    %4274 = vmatpush.msra.mxu0 0.0
    %4275 = vmatpush.msra.mxu0 0.0
    %4276 = vmatpush.msra.mxu0 0.0
    %4277 = vmatpush.msra.mxu0 0.0
    %4278 = vmatpush.msra.mxu0 0.0
    %4279 = vmatpush.msra.mxu0 0.0
    %4280 = vmatpush.msra.mxu0 0.0
    %4281 = vmatpush.msra.mxu0 0.0
    %4282 = vmatpush.msra.mxu0 0.0
    %4283 = vmatpush.msra.mxu0 0.0
    %4284 = vmatpush.msra.mxu0 0.0
    %4285 = vmatpush.msra.mxu0 %v4269
    %4286 = vmatpush.msra.mxu0 %v4237
    %4287 = vmatmul.f32.gmra.mxu0 %v4171
    %v4288 = vpop.f32.mrf.mxu0
    %v4289 = vadd.f32 %v4263, %v4288
    %4290 = vmatmul.f32.gmra.mxu0 %v4174
    %v4291 = vpop.f32.mrf.mxu0
    %v4292 = vadd.f32 %v4266, %v4291
    %4293 = vdwg.mxu0
    %v4294 = vld [vmem:[%s65] sm:$0xff]
    %v4295 = vld [vmem:[%s65 + $0x8] sm:$0xff]
    %v4296 = vld [vmem:[%s65 + $0x10] sm:$0xff]
    %v4297 = vld [vmem:[%s65 + $0x18] sm:$0xff]
    %4298 = vmatpush.msra.mxu0 0.0
    %4299 = vmatpush.msra.mxu0 0.0
    %4300 = vmatpush.msra.mxu0 0.0
    %4301 = vmatpush.msra.mxu0 0.0
    %4302 = vmatpush.msra.mxu0 0.0
    %4303 = vmatpush.msra.mxu0 0.0
    %4304 = vmatpush.msra.mxu0 0.0
    %4305 = vmatpush.msra.mxu0 0.0
    %4306 = vmatpush.msra.mxu0 0.0
    %4307 = vmatpush.msra.mxu0 0.0
    %4308 = vmatpush.msra.mxu0 0.0
    %4309 = vmatpush.msra.mxu0 0.0
    %4310 = vmatpush.msra.mxu0 %v4297
    %4311 = vmatpush.msra.mxu0 %v4296
    %4312 = vmatpush.msra.mxu0 %v4295
    %4313 = vmatpush.msra.mxu0 %v4294
    %4314 = vmatmul.f32.gmra.mxu0 %v4207
    %v4315 = vpop.f32.mrf.mxu0
    %v4316 = vadd.f32 0.0, %v4315
    %4317 = vmatmul.f32.gmra.mxu0 %v4210
    %v4318 = vpop.f32.mrf.mxu0
    %v4319 = vadd.f32 0.0, %v4318
    %4320 = vdwg.mxu0
    %v4321 = vadd.f32 %v4289, %v4316
    %v4322 = vadd.f32 %v4292, %v4319
    %v4323 = vld [vmem:[%s57] sm:$0xff]
    %v4324 = vld [vmem:[%s57 + $0x8] sm:$0x3]
    %s4325 = scalar_lea.vmem %s57, 16
    %v4326 = vld [vmem:[%s4325] sm:$0xff]
    %v4327 = vld [vmem:[%s4325 + $0x8] sm:$0x3]
    %v4329 = vsel %vm1368, %v1289, 0
    %v4332 = vsel %vm1368, %v1292, 0
    %v4335 = vsel %vm1368, %v1295, 0
    %v4338 = vsel %vm1368, %v1298, 0
    %v4341 = vsel %vm1368, %v1301, 0
    %v4344 = vsel %vm1368, %v1304, 0
    %v4347 = vsel %vm1368, %v1307, 0
    %v4350 = vsel %vm1368, %v1310, 0
    %v4353 = vsel %vm1368, %v1313, 0
    %v4356 = vsel %vm1368, %v1316, 0
    %v4359 = vsel %vm1368, %v1319, 0
    %v4362 = vsel %vm1368, %v1322, 0
    %v4365 = vsel %vm1368, %v1325, 0
    %v4368 = vsel %vm1368, %v1328, 0
    %v4371 = vsel %vm1368, %v1331, 0
    %v4374 = vsel %vm1368, %v1334, 0
    %v4377 = vsel %vm1137, %v4327, 0
    %4379 = vmatpush.msra.mxu0 0.0
    %4380 = vmatpush.msra.mxu0 0.0
    %4381 = vmatpush.msra.mxu0 0.0
    %4382 = vmatpush.msra.mxu0 0.0
    %4383 = vmatpush.msra.mxu0 0.0
    %4384 = vmatpush.msra.mxu0 0.0
    %4385 = vmatpush.msra.mxu0 0.0
    %4386 = vmatpush.msra.mxu0 0.0
    %4387 = vmatpush.msra.mxu0 0.0
    %4388 = vmatpush.msra.mxu0 0.0
    %4389 = vmatpush.msra.mxu0 0.0
    %4390 = vmatpush.msra.mxu0 0.0
    %4391 = vmatpush.msra.mxu0 0.0
    %4392 = vmatpush.msra.mxu0 0.0
    %4393 = vmatpush.msra.mxu0 %v4377
    %4394 = vmatpush.msra.mxu0 %v4326
    %4395 = vmatmul.f32.gmra.mxu0 %v4329
    %v4396 = vpop.f32.mrf.mxu0
    %v4397 = vadd.f32 0.0, %v4396
    %4398 = vmatmul.f32.gmra.mxu0 %v4332
    %v4399 = vpop.f32.mrf.mxu0
    %v4400 = vadd.f32 0.0, %v4399
    %4401 = vmatmul.f32.gmra.mxu0 %v4335
    %v4402 = vpop.f32.mrf.mxu0
    %v4403 = vadd.f32 0.0, %v4402
    %4404 = vmatmul.f32.gmra.mxu0 %v4338
    %v4405 = vpop.f32.mrf.mxu0
    %v4406 = vadd.f32 0.0, %v4405
    %4407 = vmatmul.f32.gmra.mxu0 %v4341
    %v4408 = vpop.f32.mrf.mxu0
    %v4409 = vadd.f32 0.0, %v4408
    %4410 = vmatmul.f32.gmra.mxu0 %v4344
    %v4411 = vpop.f32.mrf.mxu0
    %v4412 = vadd.f32 0.0, %v4411
    %4413 = vmatmul.f32.gmra.mxu0 %v4347
    %v4414 = vpop.f32.mrf.mxu0
    %v4415 = vadd.f32 0.0, %v4414
    %4416 = vmatmul.f32.gmra.mxu0 %v4350
    %v4417 = vpop.f32.mrf.mxu0
    %v4418 = vadd.f32 0.0, %v4417
    %4419 = vmatmul.f32.gmra.mxu0 %v4353
    %v4420 = vpop.f32.mrf.mxu0
    %v4421 = vadd.f32 0.0, %v4420
    %4422 = vmatmul.f32.gmra.mxu0 %v4356
    %v4423 = vpop.f32.mrf.mxu0
    %v4424 = vadd.f32 0.0, %v4423
    %4425 = vmatmul.f32.gmra.mxu0 %v4359
    %v4426 = vpop.f32.mrf.mxu0
    %v4427 = vadd.f32 0.0, %v4426
    %4428 = vmatmul.f32.gmra.mxu0 %v4362
    %v4429 = vpop.f32.mrf.mxu0
    %v4430 = vadd.f32 0.0, %v4429
    %4431 = vmatmul.f32.gmra.mxu0 %v4365
    %v4432 = vpop.f32.mrf.mxu0
    %v4433 = vadd.f32 0.0, %v4432
    %4434 = vmatmul.f32.gmra.mxu0 %v4368
    %v4435 = vpop.f32.mrf.mxu0
    %v4436 = vadd.f32 0.0, %v4435
    %4437 = vmatmul.f32.gmra.mxu0 %v4371
    %v4438 = vpop.f32.mrf.mxu0
    %v4439 = vadd.f32 0.0, %v4438
    %4440 = vmatmul.f32.gmra.mxu0 %v4374
    %v4441 = vpop.f32.mrf.mxu0
    %v4442 = vadd.f32 0.0, %v4441
    %4443 = vdwg.mxu0
    %v4445 = vsel %vm1368, %v1352, 0
    %v4448 = vsel %vm1368, %v1353, 0
    %v4451 = vsel %vm1368, %v1354, 0
    %v4454 = vsel %vm1368, %v1355, 0
    %v4457 = vsel %vm1368, %v1356, 0
    %v4460 = vsel %vm1368, %v1357, 0
    %v4463 = vsel %vm1368, %v1358, 0
    %v4466 = vsel %vm1368, %v1359, 0
    %v4469 = vsel %vm1368, %v1360, 0
    %v4472 = vsel %vm1368, %v1361, 0
    %v4475 = vsel %vm1368, %v1362, 0
    %v4478 = vsel %vm1368, %v1363, 0
    %v4481 = vsel %vm1368, %v1364, 0
    %v4484 = vsel %vm1368, %v1365, 0
    %v4487 = vsel %vm1368, %v1366, 0
    %v4490 = vsel %vm1368, %v1367, 0
    %v4493 = vsel %vm1137, %v4324, 0
    %4495 = vmatpush.msra.mxu0 0.0
    %4496 = vmatpush.msra.mxu0 0.0
    %4497 = vmatpush.msra.mxu0 0.0
    %4498 = vmatpush.msra.mxu0 0.0
    %4499 = vmatpush.msra.mxu0 0.0
    %4500 = vmatpush.msra.mxu0 0.0
    %4501 = vmatpush.msra.mxu0 0.0
    %4502 = vmatpush.msra.mxu0 0.0
    %4503 = vmatpush.msra.mxu0 0.0
    %4504 = vmatpush.msra.mxu0 0.0
    %4505 = vmatpush.msra.mxu0 0.0
    %4506 = vmatpush.msra.mxu0 0.0
    %4507 = vmatpush.msra.mxu0 0.0
    %4508 = vmatpush.msra.mxu0 0.0
    %4509 = vmatpush.msra.mxu0 %v4493
    %4510 = vmatpush.msra.mxu0 %v4323
    %4511 = vmatmul.f32.gmra.mxu0 %v4445
    %v4512 = vpop.f32.mrf.mxu0
    %v4513 = vadd.f32 %v4397, %v4512
    %4514 = vmatmul.f32.gmra.mxu0 %v4448
    %v4515 = vpop.f32.mrf.mxu0
    %v4516 = vadd.f32 %v4400, %v4515
    %4517 = vmatmul.f32.gmra.mxu0 %v4451
    %v4518 = vpop.f32.mrf.mxu0
    %v4519 = vadd.f32 %v4403, %v4518
    %4520 = vmatmul.f32.gmra.mxu0 %v4454
    %v4521 = vpop.f32.mrf.mxu0
    %v4522 = vadd.f32 %v4406, %v4521
    %4523 = vmatmul.f32.gmra.mxu0 %v4457
    %v4524 = vpop.f32.mrf.mxu0
    %v4525 = vadd.f32 %v4409, %v4524
    %4526 = vmatmul.f32.gmra.mxu0 %v4460
    %v4527 = vpop.f32.mrf.mxu0
    %v4528 = vadd.f32 %v4412, %v4527
    %4529 = vmatmul.f32.gmra.mxu0 %v4463
    %v4530 = vpop.f32.mrf.mxu0
    %v4531 = vadd.f32 %v4415, %v4530
    %4532 = vmatmul.f32.gmra.mxu0 %v4466
    %v4533 = vpop.f32.mrf.mxu0
    %v4534 = vadd.f32 %v4418, %v4533
    %4535 = vmatmul.f32.gmra.mxu0 %v4469
    %v4536 = vpop.f32.mrf.mxu0
    %v4537 = vadd.f32 %v4421, %v4536
    %4538 = vmatmul.f32.gmra.mxu0 %v4472
    %v4539 = vpop.f32.mrf.mxu0
    %v4540 = vadd.f32 %v4424, %v4539
    %4541 = vmatmul.f32.gmra.mxu0 %v4475
    %v4542 = vpop.f32.mrf.mxu0
    %v4543 = vadd.f32 %v4427, %v4542
    %4544 = vmatmul.f32.gmra.mxu0 %v4478
    %v4545 = vpop.f32.mrf.mxu0
    %v4546 = vadd.f32 %v4430, %v4545
    %4547 = vmatmul.f32.gmra.mxu0 %v4481
    %v4548 = vpop.f32.mrf.mxu0
    %v4549 = vadd.f32 %v4433, %v4548
    %4550 = vmatmul.f32.gmra.mxu0 %v4484
    %v4551 = vpop.f32.mrf.mxu0
    %v4552 = vadd.f32 %v4436, %v4551
    %4553 = vmatmul.f32.gmra.mxu0 %v4487
    %v4554 = vpop.f32.mrf.mxu0
    %v4555 = vadd.f32 %v4439, %v4554
    %4556 = vmatmul.f32.gmra.mxu0 %v4490
    %v4557 = vpop.f32.mrf.mxu0
    %v4558 = vadd.f32 %v4442, %v4557
    %4559 = vdwg.mxu0
    %4560 = vmatpush.msra.mxu0 0.0
    %4561 = vmatpush.msra.mxu0 0.0
    %4562 = vmatpush.msra.mxu0 0.0
    %4563 = vmatpush.msra.mxu0 0.0
    %4564 = vmatpush.msra.mxu0 0.0
    %4565 = vmatpush.msra.mxu0 0.0
    %4566 = vmatpush.msra.mxu0 0.0
    %4567 = vmatpush.msra.mxu0 0.0
    %4568 = vmatpush.msra.mxu0 0.0
    %4569 = vmatpush.msra.mxu0 0.0
    %4570 = vmatpush.msra.mxu0 0.0
    %4571 = vmatpush.msra.mxu0 0.0
    %4572 = vmatpush.msra.mxu0 0.0
    %4573 = vmatpush.msra.mxu0 0.0
    %4574 = vmatpush.msra.mxu0 %v4236
    %4575 = vmatpush.msra.mxu0 %v4235
    %4576 = vmatmul.f32.gmra.mxu0 %v229
    %v4577 = vpop.f32.mrf.mxu0
    %v4578 = vadd.f32 0.0, %v4577
    %4579 = vmatmul.f32.gmra.mxu0 %v232
    %v4580 = vpop.f32.mrf.mxu0
    %v4581 = vadd.f32 0.0, %v4580
    %4582 = vmatmul.f32.gmra.mxu0 %v235
    %v4583 = vpop.f32.mrf.mxu0
    %v4584 = vadd.f32 0.0, %v4583
    %4585 = vmatmul.f32.gmra.mxu0 %v238
    %v4586 = vpop.f32.mrf.mxu0
    %v4587 = vadd.f32 0.0, %v4586
    %4588 = vmatmul.f32.gmra.mxu0 %v241
    %v4589 = vpop.f32.mrf.mxu0
    %v4590 = vadd.f32 0.0, %v4589
    %4591 = vmatmul.f32.gmra.mxu0 %v244
    %v4592 = vpop.f32.mrf.mxu0
    %v4593 = vadd.f32 0.0, %v4592
    %4594 = vmatmul.f32.gmra.mxu0 %v247
    %v4595 = vpop.f32.mrf.mxu0
    %v4596 = vadd.f32 0.0, %v4595
    %4597 = vmatmul.f32.gmra.mxu0 %v250
    %v4598 = vpop.f32.mrf.mxu0
    %v4599 = vadd.f32 0.0, %v4598
    %4600 = vmatmul.f32.gmra.mxu0 %v253
    %v4601 = vpop.f32.mrf.mxu0
    %v4602 = vadd.f32 0.0, %v4601
    %4603 = vmatmul.f32.gmra.mxu0 %v256
    %v4604 = vpop.f32.mrf.mxu0
    %v4605 = vadd.f32 0.0, %v4604
    %4606 = vmatmul.f32.gmra.mxu0 %v259
    %v4607 = vpop.f32.mrf.mxu0
    %v4608 = vadd.f32 0.0, %v4607
    %4609 = vmatmul.f32.gmra.mxu0 %v262
    %v4610 = vpop.f32.mrf.mxu0
    %v4611 = vadd.f32 0.0, %v4610
    %4612 = vmatmul.f32.gmra.mxu0 %v265
    %v4613 = vpop.f32.mrf.mxu0
    %v4614 = vadd.f32 0.0, %v4613
    %4615 = vmatmul.f32.gmra.mxu0 %v268
    %v4616 = vpop.f32.mrf.mxu0
    %v4617 = vadd.f32 0.0, %v4616
    %4618 = vmatmul.f32.gmra.mxu0 %v271
    %v4619 = vpop.f32.mrf.mxu0
    %v4620 = vadd.f32 0.0, %v4619
    %4621 = vmatmul.f32.gmra.mxu0 %v274
    %v4622 = vpop.f32.mrf.mxu0
    %v4623 = vadd.f32 0.0, %v4622
    %4624 = vdwg.mxu0
    %v4625 = vadd.f32 %v4513, %v4578
    %v4626 = vadd.f32 %v4516, %v4581
    %v4627 = vadd.f32 %v4519, %v4584
    %v4628 = vadd.f32 %v4522, %v4587
    %v4629 = vadd.f32 %v4525, %v4590
    %v4630 = vadd.f32 %v4528, %v4593
    %v4631 = vadd.f32 %v4531, %v4596
    %v4632 = vadd.f32 %v4534, %v4599
    %v4633 = vadd.f32 %v4537, %v4602
    %v4634 = vadd.f32 %v4540, %v4605
    %v4635 = vadd.f32 %v4543, %v4608
    %v4636 = vadd.f32 %v4546, %v4611
    %v4637 = vadd.f32 %v4549, %v4614
    %v4638 = vadd.f32 %v4552, %v4617
    %v4639 = vadd.f32 %v4555, %v4620
    %v4640 = vadd.f32 %v4558, %v4623
    %4641 = vmatpush.msra.mxu0 0.0
    %4642 = vmatpush.msra.mxu0 0.0
    %4643 = vmatpush.msra.mxu0 0.0
    %4644 = vmatpush.msra.mxu0 0.0
    %4645 = vmatpush.msra.mxu0 0.0
    %4646 = vmatpush.msra.mxu0 0.0
    %4647 = vmatpush.msra.mxu0 0.0
    %4648 = vmatpush.msra.mxu0 0.0
    %4649 = vmatpush.msra.mxu0 0.0
    %4650 = vmatpush.msra.mxu0 0.0
    %4651 = vmatpush.msra.mxu0 0.0
    %4652 = vmatpush.msra.mxu0 0.0
    %4653 = vmatpush.msra.mxu0 0.0
    %4654 = vmatpush.msra.mxu0 0.0
    %4655 = vmatpush.msra.mxu0 %v4322
    %4656 = vmatpush.msra.mxu0 %v4321
    %4657 = vmatmul.f32.gmra.mxu0 %v350
    %v4658 = vpop.f32.mrf.mxu0
    %v4659 = vadd.f32 0.0, %v4658
    %4660 = vmatmul.f32.gmra.mxu0 %v353
    %v4661 = vpop.f32.mrf.mxu0
    %v4662 = vadd.f32 0.0, %v4661
    %4663 = vmatmul.f32.gmra.mxu0 %v356
    %v4664 = vpop.f32.mrf.mxu0
    %v4665 = vadd.f32 0.0, %v4664
    %4666 = vmatmul.f32.gmra.mxu0 %v359
    %v4667 = vpop.f32.mrf.mxu0
    %v4668 = vadd.f32 0.0, %v4667
    %4669 = vmatmul.f32.gmra.mxu0 %v362
    %v4670 = vpop.f32.mrf.mxu0
    %v4671 = vadd.f32 0.0, %v4670
    %4672 = vmatmul.f32.gmra.mxu0 %v365
    %v4673 = vpop.f32.mrf.mxu0
    %v4674 = vadd.f32 0.0, %v4673
    %4675 = vmatmul.f32.gmra.mxu0 %v368
    %v4676 = vpop.f32.mrf.mxu0
    %v4677 = vadd.f32 0.0, %v4676
    %4678 = vmatmul.f32.gmra.mxu0 %v371
    %v4679 = vpop.f32.mrf.mxu0
    %v4680 = vadd.f32 0.0, %v4679
    %4681 = vmatmul.f32.gmra.mxu0 %v374
    %v4682 = vpop.f32.mrf.mxu0
    %v4683 = vadd.f32 0.0, %v4682
    %4684 = vmatmul.f32.gmra.mxu0 %v377
    %v4685 = vpop.f32.mrf.mxu0
    %v4686 = vadd.f32 0.0, %v4685
    %4687 = vmatmul.f32.gmra.mxu0 %v380
    %v4688 = vpop.f32.mrf.mxu0
    %v4689 = vadd.f32 0.0, %v4688
    %4690 = vmatmul.f32.gmra.mxu0 %v383
    %v4691 = vpop.f32.mrf.mxu0
    %v4692 = vadd.f32 0.0, %v4691
    %4693 = vmatmul.f32.gmra.mxu0 %v386
    %v4694 = vpop.f32.mrf.mxu0
    %v4695 = vadd.f32 0.0, %v4694
    %4696 = vmatmul.f32.gmra.mxu0 %v389
    %v4697 = vpop.f32.mrf.mxu0
    %v4698 = vadd.f32 0.0, %v4697
    %4699 = vmatmul.f32.gmra.mxu0 %v392
    %v4700 = vpop.f32.mrf.mxu0
    %v4701 = vadd.f32 0.0, %v4700
    %4702 = vmatmul.f32.gmra.mxu0 %v395
    %v4703 = vpop.f32.mrf.mxu0
    %v4704 = vadd.f32 0.0, %v4703
    %4705 = vdwg.mxu0
    %v4706 = vadd.f32 %v4625, %v4659
    %v4707 = vadd.f32 %v4626, %v4662
    %v4708 = vadd.f32 %v4627, %v4665
    %v4709 = vadd.f32 %v4628, %v4668
    %v4710 = vadd.f32 %v4629, %v4671
    %v4711 = vadd.f32 %v4630, %v4674
    %v4712 = vadd.f32 %v4631, %v4677
    %v4713 = vadd.f32 %v4632, %v4680
    %v4714 = vadd.f32 %v4633, %v4683
    %v4715 = vadd.f32 %v4634, %v4686
    %v4716 = vadd.f32 %v4635, %v4689
    %v4717 = vadd.f32 %v4636, %v4692
    %v4718 = vadd.f32 %v4637, %v4695
    %v4719 = vadd.f32 %v4638, %v4698
    %v4720 = vadd.f32 %v4639, %v4701
    %v4721 = vadd.f32 %v4640, %v4704
    %v4722 = vld [vmem:[%s67] sm:$0x1]
    %v4724 = vperm.slane %v4722, 0
    %v4726 = vadd.f32 %v4706, %v4724
    %v4727 = vadd.f32 %v4707, %v4724
    %v4728 = vadd.f32 %v4708, %v4724
    %v4729 = vadd.f32 %v4709, %v4724
    %v4730 = vadd.f32 %v4710, %v4724
    %v4731 = vadd.f32 %v4711, %v4724
    %v4732 = vadd.f32 %v4712, %v4724
    %v4733 = vadd.f32 %v4713, %v4724
    %v4734 = vadd.f32 %v4714, %v4724
    %v4735 = vadd.f32 %v4715, %v4724
    %v4736 = vadd.f32 %v4716, %v4724
    %v4737 = vadd.f32 %v4717, %v4724
    %v4738 = vadd.f32 %v4718, %v4724
    %v4739 = vadd.f32 %v4719, %v4724
    %v4740 = vadd.f32 %v4720, %v4724
    %v4741 = vadd.f32 %v4721, %v4724
    %4742 = vst.msk [vmem:[#allocation6] sm:$0xff] %vm1368, %v4726
    %4743 = vst.msk [vmem:[#allocation6 + $0x8] sm:$0xff] %vm1368, %v4727
    %4744 = vst.msk [vmem:[#allocation6 + $0x10] sm:$0xff] %vm1368, %v4728
    %4745 = vst.msk [vmem:[#allocation6 + $0x18] sm:$0xff] %vm1368, %v4729
    %4746 = vst.msk [vmem:[#allocation6 + $0x20] sm:$0xff] %vm1368, %v4730
    %4747 = vst.msk [vmem:[#allocation6 + $0x28] sm:$0xff] %vm1368, %v4731
    %4748 = vst.msk [vmem:[#allocation6 + $0x30] sm:$0xff] %vm1368, %v4732
    %4749 = vst.msk [vmem:[#allocation6 + $0x38] sm:$0xff] %vm1368, %v4733
    %4750 = vst.msk [vmem:[#allocation6 + $0x40] sm:$0xff] %vm1368, %v4734
    %4751 = vst.msk [vmem:[#allocation6 + $0x48] sm:$0xff] %vm1368, %v4735
    %4752 = vst.msk [vmem:[#allocation6 + $0x50] sm:$0xff] %vm1368, %v4736
    %4753 = vst.msk [vmem:[#allocation6 + $0x58] sm:$0xff] %vm1368, %v4737
    %4754 = vst.msk [vmem:[#allocation6 + $0x60] sm:$0xff] %vm1368, %v4738
    %4755 = vst.msk [vmem:[#allocation6 + $0x68] sm:$0xff] %vm1368, %v4739
    %4756 = vst.msk [vmem:[#allocation6 + $0x70] sm:$0xff] %vm1368, %v4740
    %4757 = vst.msk [vmem:[#allocation6 + $0x78] sm:$0xff] %vm1368, %v4741
    // Predicated region
    $region138: #{emcgcn_forward.3} parent=1 // pred_check
      _
    $region139: #{emcgcn_forward.3} parent=1 // pred_check_branch
      %4759 = sbr.rel (0) target = $region141
    $region140: #{emcgcn_forward.3} parent=1 // pred_region
      %4761 = vsyncadd [#allocation3], 0
      %s4762 = sshll.u32 [#allocation2], 4
      %s4763 = int_to_ptr.vmem [resolvable:$true] %s4762
      %s4764 = sshll.u32 %s69, 4
      %s4765 = int_to_ptr.hbm [resolvable:$true] %s4764
      %4770 = dma.vmem_to_hbm [thread:$0]  %s4763, 2048, %s4765, [#allocation3], 128, 128, 8
    $region141: #{emcgcn_forward.3} parent=1 // pred_fallthru
      _
    // Predicated region
    $region142: #{emcgcn_forward.3} parent=1 // pred_check
      _
    $region143: #{emcgcn_forward.3} parent=1 // pred_check_branch
      %4772 = sbr.rel (0) target = $region145
    $region144: #{emcgcn_forward.3} parent=1 // pred_region
      %4774 = vsyncadd [#allocation5], 0
      %s4775 = sshll.u32 [#allocation4], 4
      %s4776 = int_to_ptr.vmem [resolvable:$true] %s4775
      %s4777 = sshll.u32 %s71, 4
      %s4778 = int_to_ptr.hbm [resolvable:$true] %s4777
      %4783 = dma.vmem_to_hbm [thread:$0]  %s4776, 2048, %s4778, [#allocation5], 128, 128, 8
    $region145: #{emcgcn_forward.3} parent=1 // pred_fallthru
      _
    // Predicated region
    $region146: #{emcgcn_forward.3} parent=1 // pred_check
      _
    $region147: #{emcgcn_forward.3} parent=1 // pred_check_branch
      %4785 = sbr.rel (0) target = $region149
    $region148: #{emcgcn_forward.3} parent=1 // pred_region
      %4787 = vsyncadd [#allocation5], 0
      %s4788 = sshll.u32 [#allocation6], 4
      %s4789 = int_to_ptr.vmem [resolvable:$true] %s4788
      %s4790 = sshll.u32 %s73, 4
      %s4791 = int_to_ptr.hbm [resolvable:$true] %s4790
      %4796 = dma.vmem_to_hbm [thread:$0]  %s4789, 2048, %s4791, [#allocation5], 128, 128, 8
    $region149: #{emcgcn_forward.3} parent=1 // pred_fallthru
      _
    // Predicated region
    $region150: #{emcgcn_forward.3} parent=1 // pred_check
      _
    $region151: #{emcgcn_forward.3} parent=1 // pred_check_branch
      %4798 = sbr.rel (0) target = $region153
    $region152: #{emcgcn_forward.3} parent=1 // pred_region
      %4800 = dma.done [#allocation3], 2048
    $region153: #{emcgcn_forward.3} parent=1 // pred_fallthru
      _
    // Predicated region
    $region154: #{emcgcn_forward.3} parent=1 // pred_check
      _
    $region155: #{emcgcn_forward.3} parent=1 // pred_check_branch
      %4802 = sbr.rel (0) target = $region157
    $region156: #{emcgcn_forward.3} parent=1 // pred_region
      %4804 = dma.done [#allocation5], 2048
    $region157: #{emcgcn_forward.3} parent=1 // pred_fallthru
      _
    // Predicated region
    $region158: #{emcgcn_forward.3} parent=1 // pred_check
      _
    $region159: #{emcgcn_forward.3} parent=1 // pred_check_branch
      %4806 = sbr.rel (0) target = $region161
    $region160: #{emcgcn_forward.3} parent=1 // pred_region
      %4808 = dma.done [#allocation5], 2048
    $region161: #{emcgcn_forward.3} parent=1 // pred_fallthru
      _
    %4809 = vsyncpa [#allocation3], 1
    %4810 = vsyncpa [#allocation5], 1

</llo_original>
